<compile_context>
chip_gen: v6e
topology: v6e:2x2x1
jax: 0.10.0
libtpu: 0.0.40
codegen_flags: <defaults>
</compile_context>

<pallas_src>
import functools

import jax
import jax.numpy as jnp
import numpy as np
from jax import lax
from jax.experimental import pallas as pl
from jax.experimental.pallas import tpu as pltpu

RATES = (1, 6, 12, 18)
MAXR = max(RATES)        # 18
PAD_TOP = MAXR           # halo above (H is an untiled dim -> no alignment need)
PAD_LEFT = 32            # halo left, rounded up to bf16 sublane packing (16)
LANE = 128
BN_EPS = 1e-5


def _round_up(x, m):
    return (x + m - 1) // m * m


def aspp_kernel(x_ref, w_ref, bsum_ref, w5_ref, b5_ref, o_ref,
                xpad_ref, patch_ref, acc_ref, *, rates):
    """One (batch, row-strip) grid step.

    x_ref    : (1, H, W, Cin_p)       bf16 unpadded image (channel-padded)
    w_ref    : (4, 9*Cin_p, Cout_p)   bf16 BN-folded 3x3 weights, (ky,kx,cin)-major rows
    bsum_ref : (1, Cout_p)            f32 sum of folded branch biases
    w5_ref   : (Cout_p, Cout_p)       bf16 1x1 weight (input-major)
    b5_ref   : (1, Cout_p)            f32 1x1 bias
    o_ref    : (1, TH, W, Cout_p)     f32 output strip
    xpad_ref : (Hp, Wp, Cin_p)        bf16 zero-ringed halo scratch (per image)
    patch_ref: (TH, W, 9*Cin_p)       bf16 im2col slab scratch
    acc_ref  : (TH*W, Cout_p)         f32 accumulator scratch
    """
    _, th, wout, cout_p = o_ref.shape
    _, hh, ww, cin_p = x_ref.shape
    h = pl.program_id(1)

    # Fill the zero-ringed halo scratch once per image.  The h axis is marked
    # "arbitrary", so all strips of one image run in order on the same core.
    @pl.when(h == 0)
    def _():
        xpad_ref[...] = jnp.zeros_like(xpad_ref)
        xpad_ref[pl.ds(PAD_TOP, hh), pl.ds(PAD_LEFT, ww), :] = x_ref[0]

    # Accumulator initialised with the summed, BN-folded branch bias.
    acc_ref[...] = jnp.broadcast_to(bsum_ref[...], acc_ref.shape)

    row0 = h * th
    for r, d in enumerate(rates):               # static -> fully unrolled
        # im2col: 9 dilated taps -> one lane-concatenated (TH, W, 9*Cin_p) slab.
        t = 0
        for ky in range(3):
            y0 = row0 + PAD_TOP + (ky - 1) * d          # dynamic (outer dim)
            for kx in range(3):
                x0 = PAD_LEFT + (kx - 1) * d            # static (sublane dim)
                patch_ref[:, :, t * cin_p:(t + 1) * cin_p] = (
                    xpad_ref[pl.ds(y0, th), pl.ds(x0, wout), :])
                t += 1
        # One big-K MXU matmul per rate: (TH*W, 9*Cin_p) @ (9*Cin_p, Cout_p)
        acc_ref[...] += jnp.dot(
            patch_ref[...].reshape(th * wout, 9 * cin_p), w_ref[r],
            preferred_element_type=jnp.float32)

    # 1x1 conv: (TH*W, Cout_p) @ (Cout_p, Cout_p) + b5
    y = jnp.dot(acc_ref[...].astype(w5_ref.dtype), w5_ref[...],
                preferred_element_type=jnp.float32) + b5_ref[...]
    o_ref[...] = y.reshape(1, th, wout, cout_p)


def aspp_forward(x_nhwc, w_taps, bsum, w5, b5, *, strip=8):
    """x_nhwc: (N, H, W, Cin_pad) bf16.  Returns (N, H, W, Cout_pad) f32."""
    N, H, W, cin_p = x_nhwc.shape
    cout_p = w5.shape[1]
    th = strip if H % strip == 0 else H
    hp = H + PAD_TOP + MAXR                       # halo-padded scratch height
    wp = _round_up(PAD_LEFT + W + MAXR, 16)       # halo-padded scratch width

    kernel = functools.partial(aspp_kernel, rates=RATES)
    return pl.pallas_call(
        kernel,
        out_shape=jax.ShapeDtypeStruct((N, H, W, cout_p), jnp.float32),
        grid_spec=pltpu.PrefetchScalarGridSpec(
            num_scalar_prefetch=0,
            grid=(N, H // th),
            in_specs=[
                pl.BlockSpec((1, H, W, cin_p), lambda n, h: (n, 0, 0, 0)),
                pl.BlockSpec(w_taps.shape, lambda n, h: (0, 0, 0)),
                pl.BlockSpec(bsum.shape, lambda n, h: (0, 0)),
                pl.BlockSpec(w5.shape, lambda n, h: (0, 0)),
                pl.BlockSpec(b5.shape, lambda n, h: (0, 0)),
            ],
            out_specs=pl.BlockSpec((1, th, W, cout_p), lambda n, h: (n, h, 0, 0)),
            scratch_shapes=[
                pltpu.VMEM((hp, wp, cin_p), x_nhwc.dtype),      # halo image
                pltpu.VMEM((th, W, 9 * cin_p), x_nhwc.dtype),   # im2col slab
                pltpu.VMEM((th * W, cout_p), jnp.float32),      # accumulator
            ],
        ),
        compiler_params=pltpu.CompilerParams(
            # h must be "arbitrary": later strips reuse the halo scratch filled
            # at h == 0; the batch axis shards across megacore TensorCores.
            dimension_semantics=("parallel", "arbitrary"),
            vmem_limit_bytes=32 * 1024 * 1024,
        ),
    )(x_nhwc, w_taps, bsum, w5, b5)


def init_params(key, in_c, out_c):
    """Deterministic synthetic parameters matching the PyTorch module's shapes."""
    keys = jax.random.split(key, 4 * len(RATES) + 2)
    raw = {"w": [], "b": [], "gamma": [], "beta": []}
    i = 0
    for _ in RATES:
        raw["w"].append(0.1 * jax.random.normal(keys[i], (3, 3, in_c, out_c), jnp.float32)); i += 1
        raw["b"].append(0.1 * jax.random.normal(keys[i], (out_c,), jnp.float32)); i += 1
        raw["gamma"].append(1.0 + 0.1 * jax.random.normal(keys[i], (out_c,), jnp.float32)); i += 1
        raw["beta"].append(0.1 * jax.random.normal(keys[i], (out_c,), jnp.float32)); i += 1
    raw["w5"] = 0.1 * jax.random.normal(keys[i], (out_c, out_c), jnp.float32); i += 1  # (cin, cout)
    raw["b5"] = 0.1 * jax.random.normal(keys[i], (out_c,), jnp.float32)
    return raw


def fold_params(raw, in_c, out_c, compute_dtype=jnp.bfloat16):
    """Fold eval-mode BN (mean=0, var=1) into the conv weights and zero-pad
    channels up to the 128-lane width expected by the kernel."""
    cin_p = _round_up(in_c, LANE)
    cout_p = _round_up(out_c, LANE)
    taps, bsum = [], jnp.zeros((out_c,), jnp.float32)
    for i in range(len(RATES)):
        s = raw["gamma"][i] / jnp.sqrt(1.0 + BN_EPS)            # running_var = 1
        w_fold = (raw["w"][i] * s).astype(compute_dtype)        # (3,3,Cin,Cout)
        w_fold = jnp.pad(w_fold, ((0, 0), (0, 0), (0, cin_p - in_c), (0, cout_p - out_c)))
        taps.append(w_fold.reshape(9 * cin_p, cout_p))          # rows: (ky,kx,cin)
        bsum = bsum + s * raw["b"][i] + raw["beta"][i]          # running_mean = 0
    w_taps = jnp.stack(taps, axis=0)                            # (4, 9*Cin_p, Cout_p)
    bsum_p = jnp.pad(bsum, (0, cout_p - out_c)).reshape(1, cout_p)
    w5_p = jnp.pad(raw["w5"].astype(compute_dtype),
                   ((0, cout_p - out_c), (0, cout_p - out_c)))
    b5_p = jnp.pad(raw["b5"], (0, cout_p - out_c)).reshape(1, cout_p)
    return w_taps, bsum_p, w5_p, b5_p


def ref_aspp(x_nhwc, raw):
    """Pure-JAX reference mirroring the PyTorch module (eval-mode BN), f32 HIGHEST."""
    hp = lax.Precision.HIGHEST
    outs = []
    for i, d in enumerate(RATES):
        z = lax.conv_general_dilated(
            x_nhwc, raw["w"][i], window_strides=(1, 1),
            padding=[(d, d), (d, d)], rhs_dilation=(d, d),
            dimension_numbers=("NHWC", "HWIO", "NHWC"), precision=hp,
        ) + raw["b"][i]
        s = raw["gamma"][i] / jnp.sqrt(1.0 + BN_EPS)
        outs.append(s * z + raw["beta"][i])
    xsum = outs[0] + outs[1] + outs[2] + outs[3]
    return jnp.einsum("nhwc,cf->nhwf", xsum, raw["w5"], precision=hp) + raw["b5"]


if __name__ == "__main__":
    in_c, out_c = 4, 8
    N, H, W = 2, 16, 16

    key = jax.random.PRNGKey(0)
    k_param, k_x = jax.random.split(key)
    raw = init_params(k_param, in_c, out_c)
    w_taps, bsum, w5p, b5p = fold_params(raw, in_c, out_c)

    # PyTorch-style NCHW input -> NHWC; round to bf16 once so the kernel and the
    # reference consume bit-identical input values; pad channels to 128 lanes.
    x_nchw = jax.random.normal(k_x, (N, in_c, H, W), jnp.float32)
    x_nhwc = jnp.transpose(x_nchw, (0, 2, 3, 1)).astype(jnp.bfloat16)
    cin_p = _round_up(in_c, LANE)
    x_kernel = jnp.pad(x_nhwc, ((0, 0), (0, 0), (0, 0), (0, cin_p - in_c)))

    out_pad = jax.block_until_ready(aspp_forward(x_kernel, w_taps, bsum, w5p, b5p))
    out = out_pad[..., :out_c]                      # drop lane padding

    ref = jax.block_until_ready(ref_aspp(x_nhwc.astype(jnp.float32), raw))
    # bf16 activations/weights (per the perf review) set the error floor at
    # ~2^-9 relative; an all-f32 build of this kernel matches to ~1e-5.
    np.testing.assert_allclose(np.asarray(out), np.asarray(ref), rtol=2e-2, atol=2e-2)

    print("KERNEL_OK")
</pallas_src>

<mosaic_0001>
module attributes {stable_mosaic.version = 11 : i64} {
  func.func @aspp_kernel(%arg0: i32, %arg1: i32, %arg2: memref<1x16x16x128xbf16, #tpu.memory_space<vmem>>, %arg3: memref<4x1152x128xbf16, #tpu.memory_space<vmem>>, %arg4: memref<1x128xf32, #tpu.memory_space<vmem>>, %arg5: memref<128x128xbf16, #tpu.memory_space<vmem>>, %arg6: memref<1x128xf32, #tpu.memory_space<vmem>>, %arg7: memref<1x8x16x128xf32, #tpu.memory_space<vmem>>, %arg8: memref<52x80x128xbf16, #tpu.memory_space<vmem>>, %arg9: memref<8x16x1152xbf16, #tpu.memory_space<vmem>>, %arg10: memref<128x128xf32, #tpu.memory_space<vmem>>) attributes {dimension_semantics = [#tpu.dimension_semantics<parallel>, #tpu.dimension_semantics<arbitrary>], iteration_bounds = array<i64: 2, 2>, scalar_prefetch = 0 : i64, scratch_operands = 3 : i64, tpu.core_type = #tpu.core_type<tc>, window_params = [{transform_indices = @transform_0, window_bounds = array<i64: 1, 16, 16, 128>}, {pipeline_mode = #tpu.pipeline_mode<synchronous>, transform_indices = @transform_1, window_bounds = array<i64: 4, 1152, 128>}, {pipeline_mode = #tpu.pipeline_mode<synchronous>, transform_indices = @transform_2, window_bounds = array<i64: 1, 128>}, {pipeline_mode = #tpu.pipeline_mode<synchronous>, transform_indices = @transform_3, window_bounds = array<i64: 128, 128>}, {pipeline_mode = #tpu.pipeline_mode<synchronous>, transform_indices = @transform_4, window_bounds = array<i64: 1, 128>}, {transform_indices = @transform_5, window_bounds = array<i64: 1, 8, 16, 128>}]} {
    %c0_i32 = arith.constant 0 : i32
    %0 = arith.cmpi eq, %arg1, %c0_i32 : i32
    %1 = arith.extui %0 : i1 to i32
    %c0_i32_0 = arith.constant 0 : i32
    %2 = arith.cmpi ne, %1, %c0_i32_0 : i32
    scf.if %2 {
      %cst_234 = arith.constant 0.000000e+00 : bf16
      %181 = vector.broadcast %cst_234 : bf16 to vector<52x80x128xbf16>
      %c0_235 = arith.constant 0 : index
      %c0_236 = arith.constant 0 : index
      %c0_237 = arith.constant 0 : index
      %182 = vector.load %arg8[%c0_235, %c0_236, %c0_237] : memref<52x80x128xbf16, #tpu.memory_space<vmem>>, vector<52x80x128xbf16>
      tpu.vector_store %arg8[%c0_235, %c0_236, %c0_237], %181 {strides = array<i32>} : memref<52x80x128xbf16, #tpu.memory_space<vmem>>, vector<52x80x128xbf16>,
      %c0_238 = arith.constant 0 : index
      %c0_239 = arith.constant 0 : index
      %c0_240 = arith.constant 0 : index
      %c0_241 = arith.constant 0 : index
      %183 = vector.load %arg2[%c0_238, %c0_239, %c0_240, %c0_241] : memref<1x16x16x128xbf16, #tpu.memory_space<vmem>>, vector<1x16x16x128xbf16>
      %184 = vector.shape_cast %183 : vector<1x16x16x128xbf16> to vector<16x16x128xbf16>
      %c18 = arith.constant 18 : index
      %c32_242 = arith.constant 32 : index
      %c0_243 = arith.constant 0 : index
      %185 = vector.load %arg8[%c18, %c32_242, %c0_243] : memref<52x80x128xbf16, #tpu.memory_space<vmem>>, vector<16x16x128xbf16>
      tpu.vector_store %arg8[%c18, %c32_242, %c0_243], %184 {strides = array<i32>} : memref<52x80x128xbf16, #tpu.memory_space<vmem>>, vector<16x16x128xbf16>,
    } else {
    }
    %c0 = arith.constant 0 : index
    %c0_1 = arith.constant 0 : index
    %3 = vector.load %arg4[%c0, %c0_1] : memref<1x128xf32, #tpu.memory_space<vmem>>, vector<1x128xf32>
    %4 = vector.shape_cast %3 : vector<1x128xf32> to vector<1x128xf32>
    %5 = vector.broadcast %4 : vector<1x128xf32> to vector<128x128xf32>
    %c0_2 = arith.constant 0 : index
    %c0_3 = arith.constant 0 : index
    %6 = vector.load %arg10[%c0_2, %c0_3] : memref<128x128xf32, #tpu.memory_space<vmem>>, vector<128x128xf32>
    tpu.vector_store %arg10[%c0_2, %c0_3], %5 {strides = array<i32>} : memref<128x128xf32, #tpu.memory_space<vmem>>, vector<128x128xf32>,
    %c8_i32 = arith.constant 8 : i32
    %7 = arith.muli %arg1, %c8_i32 : i32
    %c18_i32 = arith.constant 18 : i32
    %8 = arith.addi %7, %c18_i32 : i32
    %c-1_i32 = arith.constant -1 : i32
    %9 = arith.addi %8, %c-1_i32 : i32
    %10 = arith.index_cast %9 : i32 to index
    %c31 = arith.constant 31 : index
    %c0_4 = arith.constant 0 : index
    %11 = vector.load %arg8[%10, %c31, %c0_4] : memref<52x80x128xbf16, #tpu.memory_space<vmem>>, vector<8x16x128xbf16>
    %c0_5 = arith.constant 0 : index
    %c0_6 = arith.constant 0 : index
    %c0_7 = arith.constant 0 : index
    %12 = vector.load %arg9[%c0_5, %c0_6, %c0_7] : memref<8x16x1152xbf16, #tpu.memory_space<vmem>>, vector<8x16x128xbf16>
    tpu.vector_store %arg9[%c0_5, %c0_6, %c0_7], %11 {strides = array<i32>} : memref<8x16x1152xbf16, #tpu.memory_space<vmem>>, vector<8x16x128xbf16>,
    %13 = arith.index_cast %9 : i32 to index
    %c32 = arith.constant 32 : index
    %c0_8 = arith.constant 0 : index
    %14 = vector.load %arg8[%13, %c32, %c0_8] : memref<52x80x128xbf16, #tpu.memory_space<vmem>>, vector<8x16x128xbf16>
    %c0_9 = arith.constant 0 : index
    %c0_10 = arith.constant 0 : index
    %c128 = arith.constant 128 : index
    %15 = vector.load %arg9[%c0_9, %c0_10, %c128] : memref<8x16x1152xbf16, #tpu.memory_space<vmem>>, vector<8x16x128xbf16>
    tpu.vector_store %arg9[%c0_9, %c0_10, %c128], %14 {strides = array<i32>} : memref<8x16x1152xbf16, #tpu.memory_space<vmem>>, vector<8x16x128xbf16>,
    %16 = arith.index_cast %9 : i32 to index
    %c33 = arith.constant 33 : index
    %c0_11 = arith.constant 0 : index
    %17 = vector.load %arg8[%16, %c33, %c0_11] : memref<52x80x128xbf16, #tpu.memory_space<vmem>>, vector<8x16x128xbf16>
    %c0_12 = arith.constant 0 : index
    %c0_13 = arith.constant 0 : index
    %c256 = arith.constant 256 : index
    %18 = vector.load %arg9[%c0_12, %c0_13, %c256] : memref<8x16x1152xbf16, #tpu.memory_space<vmem>>, vector<8x16x128xbf16>
    tpu.vector_store %arg9[%c0_12, %c0_13, %c256], %17 {strides = array<i32>} : memref<8x16x1152xbf16, #tpu.memory_space<vmem>>, vector<8x16x128xbf16>,
    %c18_i32_14 = arith.constant 18 : i32
    %19 = arith.addi %7, %c18_i32_14 : i32
    %c0_i32_15 = arith.constant 0 : i32
    %20 = arith.addi %19, %c0_i32_15 : i32
    %21 = arith.index_cast %20 : i32 to index
    %c31_16 = arith.constant 31 : index
    %c0_17 = arith.constant 0 : index
    %22 = vector.load %arg8[%21, %c31_16, %c0_17] : memref<52x80x128xbf16, #tpu.memory_space<vmem>>, vector<8x16x128xbf16>
    %c0_18 = arith.constant 0 : index
    %c0_19 = arith.constant 0 : index
    %c384 = arith.constant 384 : index
    %23 = vector.load %arg9[%c0_18, %c0_19, %c384] : memref<8x16x1152xbf16, #tpu.memory_space<vmem>>, vector<8x16x128xbf16>
    tpu.vector_store %arg9[%c0_18, %c0_19, %c384], %22 {strides = array<i32>} : memref<8x16x1152xbf16, #tpu.memory_space<vmem>>, vector<8x16x128xbf16>,
    %24 = arith.index_cast %20 : i32 to index
    %c32_20 = arith.constant 32 : index
    %c0_21 = arith.constant 0 : index
    %25 = vector.load %arg8[%24, %c32_20, %c0_21] : memref<52x80x128xbf16, #tpu.memory_space<vmem>>, vector<8x16x128xbf16>
    %c0_22 = arith.constant 0 : index
    %c0_23 = arith.constant 0 : index
    %c512 = arith.constant 512 : index
    %26 = vector.load %arg9[%c0_22, %c0_23, %c512] : memref<8x16x1152xbf16, #tpu.memory_space<vmem>>, vector<8x16x128xbf16>
    tpu.vector_store %arg9[%c0_22, %c0_23, %c512], %25 {strides = array<i32>} : memref<8x16x1152xbf16, #tpu.memory_space<vmem>>, vector<8x16x128xbf16>,
    %27 = arith.index_cast %20 : i32 to index
    %c33_24 = arith.constant 33 : index
    %c0_25 = arith.constant 0 : index
    %28 = vector.load %arg8[%27, %c33_24, %c0_25] : memref<52x80x128xbf16, #tpu.memory_space<vmem>>, vector<8x16x128xbf16>
    %c0_26 = arith.constant 0 : index
    %c0_27 = arith.constant 0 : index
    %c640 = arith.constant 640 : index
    %29 = vector.load %arg9[%c0_26, %c0_27, %c640] : memref<8x16x1152xbf16, #tpu.memory_space<vmem>>, vector<8x16x128xbf16>
    tpu.vector_store %arg9[%c0_26, %c0_27, %c640], %28 {strides = array<i32>} : memref<8x16x1152xbf16, #tpu.memory_space<vmem>>, vector<8x16x128xbf16>,
    %c18_i32_28 = arith.constant 18 : i32
    %30 = arith.addi %7, %c18_i32_28 : i32
    %c1_i32 = arith.constant 1 : i32
    %31 = arith.addi %30, %c1_i32 : i32
    %32 = arith.index_cast %31 : i32 to index
    %c31_29 = arith.constant 31 : index
    %c0_30 = arith.constant 0 : index
    %33 = vector.load %arg8[%32, %c31_29, %c0_30] : memref<52x80x128xbf16, #tpu.memory_space<vmem>>, vector<8x16x128xbf16>
    %c0_31 = arith.constant 0 : index
    %c0_32 = arith.constant 0 : index
    %c768 = arith.constant 768 : index
    %34 = vector.load %arg9[%c0_31, %c0_32, %c768] : memref<8x16x1152xbf16, #tpu.memory_space<vmem>>, vector<8x16x128xbf16>
    tpu.vector_store %arg9[%c0_31, %c0_32, %c768], %33 {strides = array<i32>} : memref<8x16x1152xbf16, #tpu.memory_space<vmem>>, vector<8x16x128xbf16>,
    %35 = arith.index_cast %31 : i32 to index
    %c32_33 = arith.constant 32 : index
    %c0_34 = arith.constant 0 : index
    %36 = vector.load %arg8[%35, %c32_33, %c0_34] : memref<52x80x128xbf16, #tpu.memory_space<vmem>>, vector<8x16x128xbf16>
    %c0_35 = arith.constant 0 : index
    %c0_36 = arith.constant 0 : index
    %c896 = arith.constant 896 : index
    %37 = vector.load %arg9[%c0_35, %c0_36, %c896] : memref<8x16x1152xbf16, #tpu.memory_space<vmem>>, vector<8x16x128xbf16>
    tpu.vector_store %arg9[%c0_35, %c0_36, %c896], %36 {strides = array<i32>} : memref<8x16x1152xbf16, #tpu.memory_space<vmem>>, vector<8x16x128xbf16>,
    %38 = arith.index_cast %31 : i32 to index
    %c33_37 = arith.constant 33 : index
    %c0_38 = arith.constant 0 : index
    %39 = vector.load %arg8[%38, %c33_37, %c0_38] : memref<52x80x128xbf16, #tpu.memory_space<vmem>>, vector<8x16x128xbf16>
    %c0_39 = arith.constant 0 : index
    %c0_40 = arith.constant 0 : index
    %c1024 = arith.constant 1024 : index
    %40 = vector.load %arg9[%c0_39, %c0_40, %c1024] : memref<8x16x1152xbf16, #tpu.memory_space<vmem>>, vector<8x16x128xbf16>
    tpu.vector_store %arg9[%c0_39, %c0_40, %c1024], %39 {strides = array<i32>} : memref<8x16x1152xbf16, #tpu.memory_space<vmem>>, vector<8x16x128xbf16>,
    %c0_41 = arith.constant 0 : index
    %c0_42 = arith.constant 0 : index
    %41 = vector.load %arg10[%c0_41, %c0_42] : memref<128x128xf32, #tpu.memory_space<vmem>>, vector<128x128xf32>
    %c0_43 = arith.constant 0 : index
    %c0_44 = arith.constant 0 : index
    %c0_45 = arith.constant 0 : index
    %42 = vector.load %arg9[%c0_43, %c0_44, %c0_45] : memref<8x16x1152xbf16, #tpu.memory_space<vmem>>, vector<8x16x1152xbf16>
    %43 = vector.shape_cast %42 : vector<8x16x1152xbf16> to vector<128x1152xbf16>
    %c0_46 = arith.constant 0 : index
    %c0_47 = arith.constant 0 : index
    %c0_48 = arith.constant 0 : index
    %44 = vector.load %arg3[%c0_46, %c0_47, %c0_48] : memref<4x1152x128xbf16, #tpu.memory_space<vmem>>, vector<1x1152x128xbf16>
    %45 = vector.shape_cast %44 : vector<1x1152x128xbf16> to vector<1152x128xbf16>
    %cst = arith.constant dense<0.000000e+00> : vector<128x128xf32>
    %46 = tpu.matmul %43, %45, %cst {dimension_numbers = #tpu.dot_dimension_numbers<[1], [0], [0], [1], [0, 0, 1, 1], [], []>} : vector<128x1152xbf16>, vector<1152x128xbf16>, vector<128x128xf32> -> vector<128x128xf32>
    %47 = arith.addf %41, %46 : vector<128x128xf32>
    %c0_49 = arith.constant 0 : index
    %c0_50 = arith.constant 0 : index
    %48 = vector.load %arg10[%c0_49, %c0_50] : memref<128x128xf32, #tpu.memory_space<vmem>>, vector<128x128xf32>
    tpu.vector_store %arg10[%c0_49, %c0_50], %47 {strides = array<i32>} : memref<128x128xf32, #tpu.memory_space<vmem>>, vector<128x128xf32>,
    %c18_i32_51 = arith.constant 18 : i32
    %49 = arith.addi %7, %c18_i32_51 : i32
    %c-6_i32 = arith.constant -6 : i32
    %50 = arith.addi %49, %c-6_i32 : i32
    %51 = arith.index_cast %50 : i32 to index
    %c26 = arith.constant 26 : index
    %c0_52 = arith.constant 0 : index
    %52 = vector.load %arg8[%51, %c26, %c0_52] : memref<52x80x128xbf16, #tpu.memory_space<vmem>>, vector<8x16x128xbf16>
    %c0_53 = arith.constant 0 : index
    %c0_54 = arith.constant 0 : index
    %c0_55 = arith.constant 0 : index
    %53 = vector.load %arg9[%c0_53, %c0_54, %c0_55] : memref<8x16x1152xbf16, #tpu.memory_space<vmem>>, vector<8x16x128xbf16>
    tpu.vector_store %arg9[%c0_53, %c0_54, %c0_55], %52 {strides = array<i32>} : memref<8x16x1152xbf16, #tpu.memory_space<vmem>>, vector<8x16x128xbf16>,
    %54 = arith.index_cast %50 : i32 to index
    %c32_56 = arith.constant 32 : index
    %c0_57 = arith.constant 0 : index
    %55 = vector.load %arg8[%54, %c32_56, %c0_57] : memref<52x80x128xbf16, #tpu.memory_space<vmem>>, vector<8x16x128xbf16>
    %c0_58 = arith.constant 0 : index
    %c0_59 = arith.constant 0 : index
    %c128_60 = arith.constant 128 : index
    %56 = vector.load %arg9[%c0_58, %c0_59, %c128_60] : memref<8x16x1152xbf16, #tpu.memory_space<vmem>>, vector<8x16x128xbf16>
    tpu.vector_store %arg9[%c0_58, %c0_59, %c128_60], %55 {strides = array<i32>} : memref<8x16x1152xbf16, #tpu.memory_space<vmem>>, vector<8x16x128xbf16>,
    %57 = arith.index_cast %50 : i32 to index
    %c38 = arith.constant 38 : index
    %c0_61 = arith.constant 0 : index
    %58 = vector.load %arg8[%57, %c38, %c0_61] : memref<52x80x128xbf16, #tpu.memory_space<vmem>>, vector<8x16x128xbf16>
    %c0_62 = arith.constant 0 : index
    %c0_63 = arith.constant 0 : index
    %c256_64 = arith.constant 256 : index
    %59 = vector.load %arg9[%c0_62, %c0_63, %c256_64] : memref<8x16x1152xbf16, #tpu.memory_space<vmem>>, vector<8x16x128xbf16>
    tpu.vector_store %arg9[%c0_62, %c0_63, %c256_64], %58 {strides = array<i32>} : memref<8x16x1152xbf16, #tpu.memory_space<vmem>>, vector<8x16x128xbf16>,
    %c18_i32_65 = arith.constant 18 : i32
    %60 = arith.addi %7, %c18_i32_65 : i32
    %c0_i32_66 = arith.constant 0 : i32
    %61 = arith.addi %60, %c0_i32_66 : i32
    %62 = arith.index_cast %61 : i32 to index
    %c26_67 = arith.constant 26 : index
    %c0_68 = arith.constant 0 : index
    %63 = vector.load %arg8[%62, %c26_67, %c0_68] : memref<52x80x128xbf16, #tpu.memory_space<vmem>>, vector<8x16x128xbf16>
    %c0_69 = arith.constant 0 : index
    %c0_70 = arith.constant 0 : index
    %c384_71 = arith.constant 384 : index
    %64 = vector.load %arg9[%c0_69, %c0_70, %c384_71] : memref<8x16x1152xbf16, #tpu.memory_space<vmem>>, vector<8x16x128xbf16>
    tpu.vector_store %arg9[%c0_69, %c0_70, %c384_71], %63 {strides = array<i32>} : memref<8x16x1152xbf16, #tpu.memory_space<vmem>>, vector<8x16x128xbf16>,
    %65 = arith.index_cast %61 : i32 to index
    %c32_72 = arith.constant 32 : index
    %c0_73 = arith.constant 0 : index
    %66 = vector.load %arg8[%65, %c32_72, %c0_73] : memref<52x80x128xbf16, #tpu.memory_space<vmem>>, vector<8x16x128xbf16>
    %c0_74 = arith.constant 0 : index
    %c0_75 = arith.constant 0 : index
    %c512_76 = arith.constant 512 : index
    %67 = vector.load %arg9[%c0_74, %c0_75, %c512_76] : memref<8x16x1152xbf16, #tpu.memory_space<vmem>>, vector<8x16x128xbf16>
    tpu.vector_store %arg9[%c0_74, %c0_75, %c512_76], %66 {strides = array<i32>} : memref<8x16x1152xbf16, #tpu.memory_space<vmem>>, vector<8x16x128xbf16>,
    %68 = arith.index_cast %61 : i32 to index
    %c38_77 = arith.constant 38 : index
    %c0_78 = arith.constant 0 : index
    %69 = vector.load %arg8[%68, %c38_77, %c0_78] : memref<52x80x128xbf16, #tpu.memory_space<vmem>>, vector<8x16x128xbf16>
    %c0_79 = arith.constant 0 : index
    %c0_80 = arith.constant 0 : index
    %c640_81 = arith.constant 640 : index
    %70 = vector.load %arg9[%c0_79, %c0_80, %c640_81] : memref<8x16x1152xbf16, #tpu.memory_space<vmem>>, vector<8x16x128xbf16>
    tpu.vector_store %arg9[%c0_79, %c0_80, %c640_81], %69 {strides = array<i32>} : memref<8x16x1152xbf16, #tpu.memory_space<vmem>>, vector<8x16x128xbf16>,
    %c18_i32_82 = arith.constant 18 : i32
    %71 = arith.addi %7, %c18_i32_82 : i32
    %c6_i32 = arith.constant 6 : i32
    %72 = arith.addi %71, %c6_i32 : i32
    %73 = arith.index_cast %72 : i32 to index
    %c26_83 = arith.constant 26 : index
    %c0_84 = arith.constant 0 : index
    %74 = vector.load %arg8[%73, %c26_83, %c0_84] : memref<52x80x128xbf16, #tpu.memory_space<vmem>>, vector<8x16x128xbf16>
    %c0_85 = arith.constant 0 : index
    %c0_86 = arith.constant 0 : index
    %c768_87 = arith.constant 768 : index
    %75 = vector.load %arg9[%c0_85, %c0_86, %c768_87] : memref<8x16x1152xbf16, #tpu.memory_space<vmem>>, vector<8x16x128xbf16>
    tpu.vector_store %arg9[%c0_85, %c0_86, %c768_87], %74 {strides = array<i32>} : memref<8x16x1152xbf16, #tpu.memory_space<vmem>>, vector<8x16x128xbf16>,
    %76 = arith.index_cast %72 : i32 to index
    %c32_88 = arith.constant 32 : index
    %c0_89 = arith.constant 0 : index
    %77 = vector.load %arg8[%76, %c32_88, %c0_89] : memref<52x80x128xbf16, #tpu.memory_space<vmem>>, vector<8x16x128xbf16>
    %c0_90 = arith.constant 0 : index
    %c0_91 = arith.constant 0 : index
    %c896_92 = arith.constant 896 : index
    %78 = vector.load %arg9[%c0_90, %c0_91, %c896_92] : memref<8x16x1152xbf16, #tpu.memory_space<vmem>>, vector<8x16x128xbf16>
    tpu.vector_store %arg9[%c0_90, %c0_91, %c896_92], %77 {strides = array<i32>} : memref<8x16x1152xbf16, #tpu.memory_space<vmem>>, vector<8x16x128xbf16>,
    %79 = arith.index_cast %72 : i32 to index
    %c38_93 = arith.constant 38 : index
    %c0_94 = arith.constant 0 : index
    %80 = vector.load %arg8[%79, %c38_93, %c0_94] : memref<52x80x128xbf16, #tpu.memory_space<vmem>>, vector<8x16x128xbf16>
    %c0_95 = arith.constant 0 : index
    %c0_96 = arith.constant 0 : index
    %c1024_97 = arith.constant 1024 : index
    %81 = vector.load %arg9[%c0_95, %c0_96, %c1024_97] : memref<8x16x1152xbf16, #tpu.memory_space<vmem>>, vector<8x16x128xbf16>
    tpu.vector_store %arg9[%c0_95, %c0_96, %c1024_97], %80 {strides = array<i32>} : memref<8x16x1152xbf16, #tpu.memory_space<vmem>>, vector<8x16x128xbf16>,
    %c0_98 = arith.constant 0 : index
    %c0_99 = arith.constant 0 : index
    %82 = vector.load %arg10[%c0_98, %c0_99] : memref<128x128xf32, #tpu.memory_space<vmem>>, vector<128x128xf32>
    %c0_100 = arith.constant 0 : index
    %c0_101 = arith.constant 0 : index
    %c0_102 = arith.constant 0 : index
    %83 = vector.load %arg9[%c0_100, %c0_101, %c0_102] : memref<8x16x1152xbf16, #tpu.memory_space<vmem>>, vector<8x16x1152xbf16>
    %84 = vector.shape_cast %83 : vector<8x16x1152xbf16> to vector<128x1152xbf16>
    %c1 = arith.constant 1 : index
    %c0_103 = arith.constant 0 : index
    %c0_104 = arith.constant 0 : index
    %85 = vector.load %arg3[%c1, %c0_103, %c0_104] : memref<4x1152x128xbf16, #tpu.memory_space<vmem>>, vector<1x1152x128xbf16>
    %86 = vector.shape_cast %85 : vector<1x1152x128xbf16> to vector<1152x128xbf16>
    %cst_105 = arith.constant dense<0.000000e+00> : vector<128x128xf32>
    %87 = tpu.matmul %84, %86, %cst_105 {dimension_numbers = #tpu.dot_dimension_numbers<[1], [0], [0], [1], [0, 0, 1, 1], [], []>} : vector<128x1152xbf16>, vector<1152x128xbf16>, vector<128x128xf32> -> vector<128x128xf32>
    %88 = arith.addf %82, %87 : vector<128x128xf32>
    %c0_106 = arith.constant 0 : index
    %c0_107 = arith.constant 0 : index
    %89 = vector.load %arg10[%c0_106, %c0_107] : memref<128x128xf32, #tpu.memory_space<vmem>>, vector<128x128xf32>
    tpu.vector_store %arg10[%c0_106, %c0_107], %88 {strides = array<i32>} : memref<128x128xf32, #tpu.memory_space<vmem>>, vector<128x128xf32>,
    %c18_i32_108 = arith.constant 18 : i32
    %90 = arith.addi %7, %c18_i32_108 : i32
    %c-12_i32 = arith.constant -12 : i32
    %91 = arith.addi %90, %c-12_i32 : i32
    %92 = arith.index_cast %91 : i32 to index
    %c20 = arith.constant 20 : index
    %c0_109 = arith.constant 0 : index
    %93 = vector.load %arg8[%92, %c20, %c0_109] : memref<52x80x128xbf16, #tpu.memory_space<vmem>>, vector<8x16x128xbf16>
    %c0_110 = arith.constant 0 : index
    %c0_111 = arith.constant 0 : index
    %c0_112 = arith.constant 0 : index
    %94 = vector.load %arg9[%c0_110, %c0_111, %c0_112] : memref<8x16x1152xbf16, #tpu.memory_space<vmem>>, vector<8x16x128xbf16>
    tpu.vector_store %arg9[%c0_110, %c0_111, %c0_112], %93 {strides = array<i32>} : memref<8x16x1152xbf16, #tpu.memory_space<vmem>>, vector<8x16x128xbf16>,
    %95 = arith.index_cast %91 : i32 to index
    %c32_113 = arith.constant 32 : index
    %c0_114 = arith.constant 0 : index
    %96 = vector.load %arg8[%95, %c32_113, %c0_114] : memref<52x80x128xbf16, #tpu.memory_space<vmem>>, vector<8x16x128xbf16>
    %c0_115 = arith.constant 0 : index
    %c0_116 = arith.constant 0 : index
    %c128_117 = arith.constant 128 : index
    %97 = vector.load %arg9[%c0_115, %c0_116, %c128_117] : memref<8x16x1152xbf16, #tpu.memory_space<vmem>>, vector<8x16x128xbf16>
    tpu.vector_store %arg9[%c0_115, %c0_116, %c128_117], %96 {strides = array<i32>} : memref<8x16x1152xbf16, #tpu.memory_space<vmem>>, vector<8x16x128xbf16>,
    %98 = arith.index_cast %91 : i32 to index
    %c44 = arith.constant 44 : index
    %c0_118 = arith.constant 0 : index
    %99 = vector.load %arg8[%98, %c44, %c0_118] : memref<52x80x128xbf16, #tpu.memory_space<vmem>>, vector<8x16x128xbf16>
    %c0_119 = arith.constant 0 : index
    %c0_120 = arith.constant 0 : index
    %c256_121 = arith.constant 256 : index
    %100 = vector.load %arg9[%c0_119, %c0_120, %c256_121] : memref<8x16x1152xbf16, #tpu.memory_space<vmem>>, vector<8x16x128xbf16>
    tpu.vector_store %arg9[%c0_119, %c0_120, %c256_121], %99 {strides = array<i32>} : memref<8x16x1152xbf16, #tpu.memory_space<vmem>>, vector<8x16x128xbf16>,
    %c18_i32_122 = arith.constant 18 : i32
    %101 = arith.addi %7, %c18_i32_122 : i32
    %c0_i32_123 = arith.constant 0 : i32
    %102 = arith.addi %101, %c0_i32_123 : i32
    %103 = arith.index_cast %102 : i32 to index
    %c20_124 = arith.constant 20 : index
    %c0_125 = arith.constant 0 : index
    %104 = vector.load %arg8[%103, %c20_124, %c0_125] : memref<52x80x128xbf16, #tpu.memory_space<vmem>>, vector<8x16x128xbf16>
    %c0_126 = arith.constant 0 : index
    %c0_127 = arith.constant 0 : index
    %c384_128 = arith.constant 384 : index
    %105 = vector.load %arg9[%c0_126, %c0_127, %c384_128] : memref<8x16x1152xbf16, #tpu.memory_space<vmem>>, vector<8x16x128xbf16>
    tpu.vector_store %arg9[%c0_126, %c0_127, %c384_128], %104 {strides = array<i32>} : memref<8x16x1152xbf16, #tpu.memory_space<vmem>>, vector<8x16x128xbf16>,
    %106 = arith.index_cast %102 : i32 to index
    %c32_129 = arith.constant 32 : index
    %c0_130 = arith.constant 0 : index
    %107 = vector.load %arg8[%106, %c32_129, %c0_130] : memref<52x80x128xbf16, #tpu.memory_space<vmem>>, vector<8x16x128xbf16>
    %c0_131 = arith.constant 0 : index
    %c0_132 = arith.constant 0 : index
    %c512_133 = arith.constant 512 : index
    %108 = vector.load %arg9[%c0_131, %c0_132, %c512_133] : memref<8x16x1152xbf16, #tpu.memory_space<vmem>>, vector<8x16x128xbf16>
    tpu.vector_store %arg9[%c0_131, %c0_132, %c512_133], %107 {strides = array<i32>} : memref<8x16x1152xbf16, #tpu.memory_space<vmem>>, vector<8x16x128xbf16>,
    %109 = arith.index_cast %102 : i32 to index
    %c44_134 = arith.constant 44 : index
    %c0_135 = arith.constant 0 : index
    %110 = vector.load %arg8[%109, %c44_134, %c0_135] : memref<52x80x128xbf16, #tpu.memory_space<vmem>>, vector<8x16x128xbf16>
    %c0_136 = arith.constant 0 : index
    %c0_137 = arith.constant 0 : index
    %c640_138 = arith.constant 640 : index
    %111 = vector.load %arg9[%c0_136, %c0_137, %c640_138] : memref<8x16x1152xbf16, #tpu.memory_space<vmem>>, vector<8x16x128xbf16>
    tpu.vector_store %arg9[%c0_136, %c0_137, %c640_138], %110 {strides = array<i32>} : memref<8x16x1152xbf16, #tpu.memory_space<vmem>>, vector<8x16x128xbf16>,
    %c18_i32_139 = arith.constant 18 : i32
    %112 = arith.addi %7, %c18_i32_139 : i32
    %c12_i32 = arith.constant 12 : i32
    %113 = arith.addi %112, %c12_i32 : i32
    %114 = arith.index_cast %113 : i32 to index
    %c20_140 = arith.constant 20 : index
    %c0_141 = arith.constant 0 : index
    %115 = vector.load %arg8[%114, %c20_140, %c0_141] : memref<52x80x128xbf16, #tpu.memory_space<vmem>>, vector<8x16x128xbf16>
    %c0_142 = arith.constant 0 : index
    %c0_143 = arith.constant 0 : index
    %c768_144 = arith.constant 768 : index
    %116 = vector.load %arg9[%c0_142, %c0_143, %c768_144] : memref<8x16x1152xbf16, #tpu.memory_space<vmem>>, vector<8x16x128xbf16>
    tpu.vector_store %arg9[%c0_142, %c0_143, %c768_144], %115 {strides = array<i32>} : memref<8x16x1152xbf16, #tpu.memory_space<vmem>>, vector<8x16x128xbf16>,
    %117 = arith.index_cast %113 : i32 to index
    %c32_145 = arith.constant 32 : index
    %c0_146 = arith.constant 0 : index
    %118 = vector.load %arg8[%117, %c32_145, %c0_146] : memref<52x80x128xbf16, #tpu.memory_space<vmem>>, vector<8x16x128xbf16>
    %c0_147 = arith.constant 0 : index
    %c0_148 = arith.constant 0 : index
    %c896_149 = arith.constant 896 : index
    %119 = vector.load %arg9[%c0_147, %c0_148, %c896_149] : memref<8x16x1152xbf16, #tpu.memory_space<vmem>>, vector<8x16x128xbf16>
    tpu.vector_store %arg9[%c0_147, %c0_148, %c896_149], %118 {strides = array<i32>} : memref<8x16x1152xbf16, #tpu.memory_space<vmem>>, vector<8x16x128xbf16>,
    %120 = arith.index_cast %113 : i32 to index
    %c44_150 = arith.constant 44 : index
    %c0_151 = arith.constant 0 : index
    %121 = vector.load %arg8[%120, %c44_150, %c0_151] : memref<52x80x128xbf16, #tpu.memory_space<vmem>>, vector<8x16x128xbf16>
    %c0_152 = arith.constant 0 : index
    %c0_153 = arith.constant 0 : index
    %c1024_154 = arith.constant 1024 : index
    %122 = vector.load %arg9[%c0_152, %c0_153, %c1024_154] : memref<8x16x1152xbf16, #tpu.memory_space<vmem>>, vector<8x16x128xbf16>
    tpu.vector_store %arg9[%c0_152, %c0_153, %c1024_154], %121 {strides = array<i32>} : memref<8x16x1152xbf16, #tpu.memory_space<vmem>>, vector<8x16x128xbf16>,
    %c0_155 = arith.constant 0 : index
    %c0_156 = arith.constant 0 : index
    %123 = vector.load %arg10[%c0_155, %c0_156] : memref<128x128xf32, #tpu.memory_space<vmem>>, vector<128x128xf32>
    %c0_157 = arith.constant 0 : index
    %c0_158 = arith.constant 0 : index
    %c0_159 = arith.constant 0 : index
    %124 = vector.load %arg9[%c0_157, %c0_158, %c0_159] : memref<8x16x1152xbf16, #tpu.memory_space<vmem>>, vector<8x16x1152xbf16>
    %125 = vector.shape_cast %124 : vector<8x16x1152xbf16> to vector<128x1152xbf16>
    %c2 = arith.constant 2 : index
    %c0_160 = arith.constant 0 : index
    %c0_161 = arith.constant 0 : index
    %126 = vector.load %arg3[%c2, %c0_160, %c0_161] : memref<4x1152x128xbf16, #tpu.memory_space<vmem>>, vector<1x1152x128xbf16>
    %127 = vector.shape_cast %126 : vector<1x1152x128xbf16> to vector<1152x128xbf16>
    %cst_162 = arith.constant dense<0.000000e+00> : vector<128x128xf32>
    %128 = tpu.matmul %125, %127, %cst_162 {dimension_numbers = #tpu.dot_dimension_numbers<[1], [0], [0], [1], [0, 0, 1, 1], [], []>} : vector<128x1152xbf16>, vector<1152x128xbf16>, vector<128x128xf32> -> vector<128x128xf32>
    %129 = arith.addf %123, %128 : vector<128x128xf32>
    %c0_163 = arith.constant 0 : index
    %c0_164 = arith.constant 0 : index
    %130 = vector.load %arg10[%c0_163, %c0_164] : memref<128x128xf32, #tpu.memory_space<vmem>>, vector<128x128xf32>
    tpu.vector_store %arg10[%c0_163, %c0_164], %129 {strides = array<i32>} : memref<128x128xf32, #tpu.memory_space<vmem>>, vector<128x128xf32>,
    %c18_i32_165 = arith.constant 18 : i32
    %131 = arith.addi %7, %c18_i32_165 : i32
    %c-18_i32 = arith.constant -18 : i32
    %132 = arith.addi %131, %c-18_i32 : i32
    %133 = arith.index_cast %132 : i32 to index
    %c14 = arith.constant 14 : index
    %c0_166 = arith.constant 0 : index
    %134 = vector.load %arg8[%133, %c14, %c0_166] : memref<52x80x128xbf16, #tpu.memory_space<vmem>>, vector<8x16x128xbf16>
    %c0_167 = arith.constant 0 : index
    %c0_168 = arith.constant 0 : index
    %c0_169 = arith.constant 0 : index
    %135 = vector.load %arg9[%c0_167, %c0_168, %c0_169] : memref<8x16x1152xbf16, #tpu.memory_space<vmem>>, vector<8x16x128xbf16>
    tpu.vector_store %arg9[%c0_167, %c0_168, %c0_169], %134 {strides = array<i32>} : memref<8x16x1152xbf16, #tpu.memory_space<vmem>>, vector<8x16x128xbf16>,
    %136 = arith.index_cast %132 : i32 to index
    %c32_170 = arith.constant 32 : index
    %c0_171 = arith.constant 0 : index
    %137 = vector.load %arg8[%136, %c32_170, %c0_171] : memref<52x80x128xbf16, #tpu.memory_space<vmem>>, vector<8x16x128xbf16>
    %c0_172 = arith.constant 0 : index
    %c0_173 = arith.constant 0 : index
    %c128_174 = arith.constant 128 : index
    %138 = vector.load %arg9[%c0_172, %c0_173, %c128_174] : memref<8x16x1152xbf16, #tpu.memory_space<vmem>>, vector<8x16x128xbf16>
    tpu.vector_store %arg9[%c0_172, %c0_173, %c128_174], %137 {strides = array<i32>} : memref<8x16x1152xbf16, #tpu.memory_space<vmem>>, vector<8x16x128xbf16>,
    %139 = arith.index_cast %132 : i32 to index
    %c50 = arith.constant 50 : index
    %c0_175 = arith.constant 0 : index
    %140 = vector.load %arg8[%139, %c50, %c0_175] : memref<52x80x128xbf16, #tpu.memory_space<vmem>>, vector<8x16x128xbf16>
    %c0_176 = arith.constant 0 : index
    %c0_177 = arith.constant 0 : index
    %c256_178 = arith.constant 256 : index
    %141 = vector.load %arg9[%c0_176, %c0_177, %c256_178] : memref<8x16x1152xbf16, #tpu.memory_space<vmem>>, vector<8x16x128xbf16>
    tpu.vector_store %arg9[%c0_176, %c0_177, %c256_178], %140 {strides = array<i32>} : memref<8x16x1152xbf16, #tpu.memory_space<vmem>>, vector<8x16x128xbf16>,
    %c18_i32_179 = arith.constant 18 : i32
    %142 = arith.addi %7, %c18_i32_179 : i32
    %c0_i32_180 = arith.constant 0 : i32
    %143 = arith.addi %142, %c0_i32_180 : i32
    %144 = arith.index_cast %143 : i32 to index
    %c14_181 = arith.constant 14 : index
    %c0_182 = arith.constant 0 : index
    %145 = vector.load %arg8[%144, %c14_181, %c0_182] : memref<52x80x128xbf16, #tpu.memory_space<vmem>>, vector<8x16x128xbf16>
    %c0_183 = arith.constant 0 : index
    %c0_184 = arith.constant 0 : index
    %c384_185 = arith.constant 384 : index
    %146 = vector.load %arg9[%c0_183, %c0_184, %c384_185] : memref<8x16x1152xbf16, #tpu.memory_space<vmem>>, vector<8x16x128xbf16>
    tpu.vector_store %arg9[%c0_183, %c0_184, %c384_185], %145 {strides = array<i32>} : memref<8x16x1152xbf16, #tpu.memory_space<vmem>>, vector<8x16x128xbf16>,
    %147 = arith.index_cast %143 : i32 to index
    %c32_186 = arith.constant 32 : index
    %c0_187 = arith.constant 0 : index
    %148 = vector.load %arg8[%147, %c32_186, %c0_187] : memref<52x80x128xbf16, #tpu.memory_space<vmem>>, vector<8x16x128xbf16>
    %c0_188 = arith.constant 0 : index
    %c0_189 = arith.constant 0 : index
    %c512_190 = arith.constant 512 : index
    %149 = vector.load %arg9[%c0_188, %c0_189, %c512_190] : memref<8x16x1152xbf16, #tpu.memory_space<vmem>>, vector<8x16x128xbf16>
    tpu.vector_store %arg9[%c0_188, %c0_189, %c512_190], %148 {strides = array<i32>} : memref<8x16x1152xbf16, #tpu.memory_space<vmem>>, vector<8x16x128xbf16>,
    %150 = arith.index_cast %143 : i32 to index
    %c50_191 = arith.constant 50 : index
    %c0_192 = arith.constant 0 : index
    %151 = vector.load %arg8[%150, %c50_191, %c0_192] : memref<52x80x128xbf16, #tpu.memory_space<vmem>>, vector<8x16x128xbf16>
    %c0_193 = arith.constant 0 : index
    %c0_194 = arith.constant 0 : index
    %c640_195 = arith.constant 640 : index
    %152 = vector.load %arg9[%c0_193, %c0_194, %c640_195] : memref<8x16x1152xbf16, #tpu.memory_space<vmem>>, vector<8x16x128xbf16>
    tpu.vector_store %arg9[%c0_193, %c0_194, %c640_195], %151 {strides = array<i32>} : memref<8x16x1152xbf16, #tpu.memory_space<vmem>>, vector<8x16x128xbf16>,
    %c18_i32_196 = arith.constant 18 : i32
    %153 = arith.addi %7, %c18_i32_196 : i32
    %c18_i32_197 = arith.constant 18 : i32
    %154 = arith.addi %153, %c18_i32_197 : i32
    %155 = arith.index_cast %154 : i32 to index
    %c14_198 = arith.constant 14 : index
    %c0_199 = arith.constant 0 : index
    %156 = vector.load %arg8[%155, %c14_198, %c0_199] : memref<52x80x128xbf16, #tpu.memory_space<vmem>>, vector<8x16x128xbf16>
    %c0_200 = arith.constant 0 : index
    %c0_201 = arith.constant 0 : index
    %c768_202 = arith.constant 768 : index
    %157 = vector.load %arg9[%c0_200, %c0_201, %c768_202] : memref<8x16x1152xbf16, #tpu.memory_space<vmem>>, vector<8x16x128xbf16>
    tpu.vector_store %arg9[%c0_200, %c0_201, %c768_202], %156 {strides = array<i32>} : memref<8x16x1152xbf16, #tpu.memory_space<vmem>>, vector<8x16x128xbf16>,
    %158 = arith.index_cast %154 : i32 to index
    %c32_203 = arith.constant 32 : index
    %c0_204 = arith.constant 0 : index
    %159 = vector.load %arg8[%158, %c32_203, %c0_204] : memref<52x80x128xbf16, #tpu.memory_space<vmem>>, vector<8x16x128xbf16>
    %c0_205 = arith.constant 0 : index
    %c0_206 = arith.constant 0 : index
    %c896_207 = arith.constant 896 : index
    %160 = vector.load %arg9[%c0_205, %c0_206, %c896_207] : memref<8x16x1152xbf16, #tpu.memory_space<vmem>>, vector<8x16x128xbf16>
    tpu.vector_store %arg9[%c0_205, %c0_206, %c896_207], %159 {strides = array<i32>} : memref<8x16x1152xbf16, #tpu.memory_space<vmem>>, vector<8x16x128xbf16>,
    %161 = arith.index_cast %154 : i32 to index
    %c50_208 = arith.constant 50 : index
    %c0_209 = arith.constant 0 : index
    %162 = vector.load %arg8[%161, %c50_208, %c0_209] : memref<52x80x128xbf16, #tpu.memory_space<vmem>>, vector<8x16x128xbf16>
    %c0_210 = arith.constant 0 : index
    %c0_211 = arith.constant 0 : index
    %c1024_212 = arith.constant 1024 : index
    %163 = vector.load %arg9[%c0_210, %c0_211, %c1024_212] : memref<8x16x1152xbf16, #tpu.memory_space<vmem>>, vector<8x16x128xbf16>
    tpu.vector_store %arg9[%c0_210, %c0_211, %c1024_212], %162 {strides = array<i32>} : memref<8x16x1152xbf16, #tpu.memory_space<vmem>>, vector<8x16x128xbf16>,
    %c0_213 = arith.constant 0 : index
    %c0_214 = arith.constant 0 : index
    %164 = vector.load %arg10[%c0_213, %c0_214] : memref<128x128xf32, #tpu.memory_space<vmem>>, vector<128x128xf32>
    %c0_215 = arith.constant 0 : index
    %c0_216 = arith.constant 0 : index
    %c0_217 = arith.constant 0 : index
    %165 = vector.load %arg9[%c0_215, %c0_216, %c0_217] : memref<8x16x1152xbf16, #tpu.memory_space<vmem>>, vector<8x16x1152xbf16>
    %166 = vector.shape_cast %165 : vector<8x16x1152xbf16> to vector<128x1152xbf16>
    %c3 = arith.constant 3 : index
    %c0_218 = arith.constant 0 : index
    %c0_219 = arith.constant 0 : index
    %167 = vector.load %arg3[%c3, %c0_218, %c0_219] : memref<4x1152x128xbf16, #tpu.memory_space<vmem>>, vector<1x1152x128xbf16>
    %168 = vector.shape_cast %167 : vector<1x1152x128xbf16> to vector<1152x128xbf16>
    %cst_220 = arith.constant dense<0.000000e+00> : vector<128x128xf32>
    %169 = tpu.matmul %166, %168, %cst_220 {dimension_numbers = #tpu.dot_dimension_numbers<[1], [0], [0], [1], [0, 0, 1, 1], [], []>} : vector<128x1152xbf16>, vector<1152x128xbf16>, vector<128x128xf32> -> vector<128x128xf32>
    %170 = arith.addf %164, %169 : vector<128x128xf32>
    %c0_221 = arith.constant 0 : index
    %c0_222 = arith.constant 0 : index
    %171 = vector.load %arg10[%c0_221, %c0_222] : memref<128x128xf32, #tpu.memory_space<vmem>>, vector<128x128xf32>
    tpu.vector_store %arg10[%c0_221, %c0_222], %170 {strides = array<i32>} : memref<128x128xf32, #tpu.memory_space<vmem>>, vector<128x128xf32>,
    %c0_223 = arith.constant 0 : index
    %c0_224 = arith.constant 0 : index
    %172 = vector.load %arg10[%c0_223, %c0_224] : memref<128x128xf32, #tpu.memory_space<vmem>>, vector<128x128xf32>
    %173 = arith.truncf %172 : vector<128x128xf32> to vector<128x128xbf16>
    %c0_225 = arith.constant 0 : index
    %c0_226 = arith.constant 0 : index
    %174 = vector.load %arg5[%c0_225, %c0_226] : memref<128x128xbf16, #tpu.memory_space<vmem>>, vector<128x128xbf16>
    %cst_227 = arith.constant dense<0.000000e+00> : vector<128x128xf32>
    %175 = tpu.matmul %173, %174, %cst_227 {dimension_numbers = #tpu.dot_dimension_numbers<[1], [0], [0], [1], [0, 0, 1, 1], [], []>} : vector<128x128xbf16>, vector<128x128xbf16>, vector<128x128xf32> -> vector<128x128xf32>
    %c0_228 = arith.constant 0 : index
    %c0_229 = arith.constant 0 : index
    %176 = vector.load %arg6[%c0_228, %c0_229] : memref<1x128xf32, #tpu.memory_space<vmem>>, vector<1x128xf32>
    %177 = vector.broadcast %176 : vector<1x128xf32> to vector<128x128xf32>
    %178 = arith.addf %175, %177 : vector<128x128xf32>
    %179 = vector.shape_cast %178 : vector<128x128xf32> to vector<1x8x16x128xf32>
    %c0_230 = arith.constant 0 : index
    %c0_231 = arith.constant 0 : index
    %c0_232 = arith.constant 0 : index
    %c0_233 = arith.constant 0 : index
    %180 = vector.load %arg7[%c0_230, %c0_231, %c0_232, %c0_233] : memref<1x8x16x128xf32, #tpu.memory_space<vmem>>, vector<1x8x16x128xf32>
    tpu.vector_store %arg7[%c0_230, %c0_231, %c0_232, %c0_233], %179 {strides = array<i32>} : memref<1x8x16x128xf32, #tpu.memory_space<vmem>>, vector<1x8x16x128xf32>,
    return
  }
  func.func @transform_0(%arg0: i32, %arg1: i32) -> (i32, i32, i32, i32) {
    %c0_i32 = arith.constant 0 : i32
    %c0_i32_0 = arith.constant 0 : i32
    %c0_i32_1 = arith.constant 0 : i32
    %c0_i32_2 = arith.constant 0 : i32
    return %arg0, %c0_i32, %c0_i32_0, %c0_i32_1 : i32, i32, i32, i32
  }
  func.func @transform_1(%arg0: i32, %arg1: i32) -> (i32, i32, i32) {
    %c0_i32 = arith.constant 0 : i32
    %c0_i32_0 = arith.constant 0 : i32
    %c0_i32_1 = arith.constant 0 : i32
    %c0_i32_2 = arith.constant 0 : i32
    return %c0_i32, %c0_i32_0, %c0_i32_1 : i32, i32, i32
  }
  func.func @transform_2(%arg0: i32, %arg1: i32) -> (i32, i32) {
    %c0_i32 = arith.constant 0 : i32
    %c0_i32_0 = arith.constant 0 : i32
    %c0_i32_1 = arith.constant 0 : i32
    return %c0_i32, %c0_i32_0 : i32, i32
  }
  func.func @transform_3(%arg0: i32, %arg1: i32) -> (i32, i32) {
    %c0_i32 = arith.constant 0 : i32
    %c0_i32_0 = arith.constant 0 : i32
    %c0_i32_1 = arith.constant 0 : i32
    return %c0_i32, %c0_i32_0 : i32, i32
  }
  func.func @transform_4(%arg0: i32, %arg1: i32) -> (i32, i32) {
    %c0_i32 = arith.constant 0 : i32
    %c0_i32_0 = arith.constant 0 : i32
    %c0_i32_1 = arith.constant 0 : i32
    return %c0_i32, %c0_i32_0 : i32, i32
  }
  func.func @transform_5(%arg0: i32, %arg1: i32) -> (i32, i32, i32, i32) {
    %c0_i32 = arith.constant 0 : i32
    %c0_i32_0 = arith.constant 0 : i32
    %c0_i32_1 = arith.constant 0 : i32
    return %arg0, %arg1, %c0_i32, %c0_i32_0 : i32, i32, i32, i32
  }
}

</mosaic_0001>

<llo_original>
// kernel: tpu_custom_call.1
$region0: #{tpu_custom_call.1}
  #allocation0 [shape = 'u32[]', space=smem, size = 0x4, offset = 0x4, fixed_abs, tag = 'smem constant byte address 0x4 - core index']
  #allocation1 [shape = 'u32[144,128]{1,0:T(1,128)}', space=vmem, size = 0x12000, scoped, tag = 'internal scratch']
  #allocation2 [shape = 'bf16[52,80,128]{2,1,0:T(8,128)(2,1)}', space=vmem, size = 0x104000, scoped, tag = 'scratch operand']
  #allocation3 [shape = 'bf16[8,16,1152]{2,1,0:T(8,128)(2,1)}', space=vmem, size = 0x48000, scoped, tag = 'scratch operand']
  #allocation4 [shape = 'f32[128,128]{1,0:T(8,128)}', space=vmem, size = 0x10000, scoped, tag = 'scratch operand']
  %s0 = inlined_call_operand.hbm [shape: bf16[2,16,16,128], index: 0, kind: input, shape index: {}]
  %s1 = inlined_call_operand.hbm [shape: bf16[4,1152,128], index: 1, kind: input, shape index: {}]
  %s2 = inlined_call_operand.hbm [shape: f32[1,128], index: 2, kind: input, shape index: {}]
  %s3 = inlined_call_operand.hbm [shape: bf16[128,128], index: 3, kind: input, shape index: {}]
  %s4 = inlined_call_operand.hbm [shape: f32[1,128], index: 4, kind: input, shape index: {}]
  %s5 = inlined_call_operand.hbm [shape: f32[2,16,16,128], index: 5, kind: output, shape index: {}]
  %s6 = sld [smem:[#allocation0]]
  $region77: #{tpu_custom_call.1} parent=0
    _
  %s8 = ssub.s32 1, %s6
  %s9 = scalar_select 0, %s8, %s6
  $region1: #{tpu_custom_call.1} parent=0
    #allocation5 [shape = 'u8[131072]{0}', space=vmem, size = 0x20000, scoped, tag = 'input window, operand 0']
    #allocation6 [shape = 's32[2]{0}', space=sflag, size = 0x8, scoped, tag = 'scoped memory for tpu_custom_call.1']
    #allocation7 [shape = 's32[2]{0}', space=sflag, size = 0x8, scoped, tag = 'scoped memory for tpu_custom_call.1']
    #allocation8 [shape = 'u8[1179648]{0}', space=vmem, size = 0x120000, scoped, tag = 'input window, operand 1, single buffered']
    #allocation9 [shape = 's32[1]{0}', space=sflag, size = 0x4, scoped, tag = 'scoped memory for tpu_custom_call.1']
    #allocation10 [shape = 'u8[512]{0}', space=vmem, size = 0x400, scoped, tag = 'input window, operand 2, single buffered']
    #allocation11 [shape = 'u8[32768]{0}', space=vmem, size = 0x8000, scoped, tag = 'input window, operand 3, single buffered']
    #allocation12 [shape = 's32[1]{0}', space=sflag, size = 0x4, scoped, tag = 'scoped memory for tpu_custom_call.1']
    #allocation13 [shape = 'u8[512]{0}', space=vmem, size = 0x400, scoped, tag = 'input window, operand 4, single buffered']
    #allocation14 [shape = 'u8[131072]{0}', space=vmem, size = 0x20000, scoped, tag = 'output window, operand 0']
    %10 = vsyncpa [#allocation6], 0
    %s11 = scalar_lea.sflag [#allocation6], 1
    %12 = vsyncpa %s11, 0
    %13 = vsyncpa [#allocation9], 0
    %14 = vsyncpa [#allocation12], 0
    %15 = vsyncpa [#allocation7], 0
    %s16 = scalar_lea.sflag [#allocation7], 1
    %17 = vsyncpa %s16, 0
    loop: start=0, step=1, limit=6
    $region2: #{tpu_custom_call.1} parent=1 // loop_pre_header
      _
    $region3: #{tpu_custom_call.1} parent=1 // loop_header
      %s19 = sphi 0, %s23
      %p20 = scmp.ge.s32.totalorder %s19, 6
      %s26 = sphi 0, %s38
      %s27 = sphi 0, %s34
      %s28 = sphi 0, %s26
      %s29 = sphi 0, %s27
      %s30 = sphi 0, %s28
      %s31 = sphi 0, %s29
      %s41 = sphi 0, %s43
      %s44 = sphi 0, %s41
      %s45 = sphi 0, %s44
      %s61 = sphi 0, %s45
      %s65 = sphi 0, %s65
      %s67 = sphi 0, %s65
      %s68 = sphi 0, %s67
      %s82 = sphi 0, %s68
      %s86 = sphi 0, %s86
      %s88 = sphi 0, %s86
      %s89 = sphi 0, %s88
      %s103 = sphi 0, %s89
      %s107 = sphi 0, %s107
      %s109 = sphi 0, %s107
      %s110 = sphi 0, %s109
      %s124 = sphi 0, %s110
      %s128 = sphi 0, %s128
      %s130 = sphi 0, %s128
      %s131 = sphi 0, %s130
      %s145 = sphi 0, %s131
      %s153 = sphi 0, %s155
      %s156 = sphi 0, %s153
      %s157 = sphi 0, %s156
      %s173 = sphi 0, %s157
    $region4: #{tpu_custom_call.1} parent=1 // loop_header_branch
      %22 = sbr.rel (%p20) target = $region8
    $region5: #{tpu_custom_call.1} parent=1 // loop_body
      %s24 = ssub.s32 %s19, 1
      %s25 = ssub.s32 %s19, 2
      %s32 = sadd.s32 1, %s27
      %p33 = scmp.ge.s32.totalorder %s32, 2
      %s34 = scalar_select %p33, 0, %s32
      %s35 = sadd.s32 1, %s26
      %s36 = scalar_select %p33, %s35, %s26
      %p37 = scmp.ge.s32.totalorder %s36, 2
      %s38 = scalar_select %p37, 0, %s36
      %s39 = ssub.s32 %s26, %s38
      %p40 = scmp.eq.s32.totalorder %s39, 0
      %s42 = sadd.s32 %s41, 1
      %s43 = scalar_select %p40, %s41, %s42
      %p46 = pneg %p40
      %p47 = scmp.eq.s32.totalorder %s19, 3
      %p48 = por %p46, %p47
      %p49 = scmp.ne.s32.totalorder %s41, %s44
      %p50 = scmp.eq.s32.totalorder %s19, 0
      %p51 = por %p49, %p50
      %p52 = scmp.ne.s32.totalorder %s41, %s44
      %p53 = scmp.eq.s32.totalorder %s24, 3
      %p54 = por %p52, %p53
      %p55 = scmp.ne.s32.totalorder %s44, %s45
      %p56 = scmp.eq.s32.totalorder %s24, 0
      %p57 = por %p55, %p56
      %p58 = scmp.ne.s32.totalorder %s44, %s45
      %p59 = scmp.eq.s32.totalorder %s25, 3
      %p60 = por %p58, %p59
      %p62 = scmp.ne.s32.totalorder %s45, %s61
      %p63 = scmp.eq.s32.totalorder %s25, 0
      %p64 = por %p62, %p63
      %s66 = sadd.s32 %s65, 1
      %p69 = scmp.eq.s32.totalorder %s19, 3
      %p70 = scmp.ne.s32.totalorder %s65, %s67
      %p71 = scmp.eq.s32.totalorder %s19, 0
      %p72 = por %p70, %p71
      %p73 = scmp.ne.s32.totalorder %s65, %s67
      %p74 = scmp.eq.s32.totalorder %s24, 3
      %p75 = por %p73, %p74
      %p76 = scmp.ne.s32.totalorder %s67, %s68
      %p77 = scmp.eq.s32.totalorder %s24, 0
      %p78 = por %p76, %p77
      %p79 = scmp.ne.s32.totalorder %s67, %s68
      %p80 = scmp.eq.s32.totalorder %s25, 3
      %p81 = por %p79, %p80
      %p83 = scmp.ne.s32.totalorder %s68, %s82
      %p84 = scmp.eq.s32.totalorder %s25, 0
      %p85 = por %p83, %p84
      %s87 = sadd.s32 %s86, 1
      %p90 = scmp.eq.s32.totalorder %s19, 3
      %p91 = scmp.ne.s32.totalorder %s86, %s88
      %p92 = scmp.eq.s32.totalorder %s19, 0
      %p93 = por %p91, %p92
      %p94 = scmp.ne.s32.totalorder %s86, %s88
      %p95 = scmp.eq.s32.totalorder %s24, 3
      %p96 = por %p94, %p95
      %p97 = scmp.ne.s32.totalorder %s88, %s89
      %p98 = scmp.eq.s32.totalorder %s24, 0
      %p99 = por %p97, %p98
      %p100 = scmp.ne.s32.totalorder %s88, %s89
      %p101 = scmp.eq.s32.totalorder %s25, 3
      %p102 = por %p100, %p101
      %p104 = scmp.ne.s32.totalorder %s89, %s103
      %p105 = scmp.eq.s32.totalorder %s25, 0
      %p106 = por %p104, %p105
      %s108 = sadd.s32 %s107, 1
      %p111 = scmp.eq.s32.totalorder %s19, 3
      %p112 = scmp.ne.s32.totalorder %s107, %s109
      %p113 = scmp.eq.s32.totalorder %s19, 0
      %p114 = por %p112, %p113
      %p115 = scmp.ne.s32.totalorder %s107, %s109
      %p116 = scmp.eq.s32.totalorder %s24, 3
      %p117 = por %p115, %p116
      %p118 = scmp.ne.s32.totalorder %s109, %s110
      %p119 = scmp.eq.s32.totalorder %s24, 0
      %p120 = por %p118, %p119
      %p121 = scmp.ne.s32.totalorder %s109, %s110
      %p122 = scmp.eq.s32.totalorder %s25, 3
      %p123 = por %p121, %p122
      %p125 = scmp.ne.s32.totalorder %s110, %s124
      %p126 = scmp.eq.s32.totalorder %s25, 0
      %p127 = por %p125, %p126
      %s129 = sadd.s32 %s128, 1
      %p132 = scmp.eq.s32.totalorder %s19, 3
      %p133 = scmp.ne.s32.totalorder %s128, %s130
      %p134 = scmp.eq.s32.totalorder %s19, 0
      %p135 = por %p133, %p134
      %p136 = scmp.ne.s32.totalorder %s128, %s130
      %p137 = scmp.eq.s32.totalorder %s24, 3
      %p138 = por %p136, %p137
      %p139 = scmp.ne.s32.totalorder %s130, %s131
      %p140 = scmp.eq.s32.totalorder %s24, 0
      %p141 = por %p139, %p140
      %p142 = scmp.ne.s32.totalorder %s130, %s131
      %p143 = scmp.eq.s32.totalorder %s25, 3
      %p144 = por %p142, %p143
      %p146 = scmp.ne.s32.totalorder %s131, %s145
      %p147 = scmp.eq.s32.totalorder %s25, 0
      %p148 = por %p146, %p147
      %s149 = ssub.s32 %s26, %s38
      %s150 = ssub.s32 %s27, %s34
      %s151 = sor.u32 %s149, %s150
      %p152 = scmp.eq.s32.totalorder %s151, 0
      %s154 = sadd.s32 %s153, 1
      %s155 = scalar_select %p152, %s153, %s154
      %p158 = pneg %p152
      %p159 = scmp.eq.s32.totalorder %s19, 3
      %p160 = por %p158, %p159
      %p161 = scmp.ne.s32.totalorder %s153, %s156
      %p162 = scmp.eq.s32.totalorder %s19, 0
      %p163 = por %p161, %p162
      %p164 = scmp.ne.s32.totalorder %s153, %s156
      %p165 = scmp.eq.s32.totalorder %s24, 3
      %p166 = por %p164, %p165
      %p167 = scmp.ne.s32.totalorder %s156, %s157
      %p168 = scmp.eq.s32.totalorder %s24, 0
      %p169 = por %p167, %p168
      %p170 = scmp.ne.s32.totalorder %s156, %s157
      %p171 = scmp.eq.s32.totalorder %s25, 3
      %p172 = por %p170, %p171
      %p174 = scmp.ne.s32.totalorder %s157, %s173
      %p175 = scmp.eq.s32.totalorder %s25, 0
      %p176 = por %p174, %p175
      %p177 = scmp.le.s32.totalorder 1, %s19
      %p178 = scmp.lt.s32.totalorder %s19, 5
      %p179 = pnand %p177, %p178
      %p180 = pneg %p179
      // Predicated region
      $region9: #{tpu_custom_call.1} parent=5 // pred_check
        _
      $region10: #{tpu_custom_call.1} parent=5 // pred_check_branch
        %182 = sbr.rel (%p179) target = $region12
      $region11: #{tpu_custom_call.1} parent=5 // pred_region
        %s183 = ssub.s32 %s19, 1
        // Predicated region
        $region13: #{tpu_custom_call.1} parent=11 // pred_check
          %p184 = pneg %p78
        $region14: #{tpu_custom_call.1} parent=11 // pred_check_branch
          %186 = sbr.rel (%p184) target = $region16
        $region15: #{tpu_custom_call.1} parent=11 // pred_region
          %s188 = ssub.s32 36864, 36864
          %189 = vsyncadd [#allocation9], %s188
          %s190 = sshll.u32 [#allocation8], 4
          %s191 = int_to_ptr.vmem [resolvable:$true] %s190
          %196 = dma.hbm_to_vmem [thread:$0]  %s1, 36864, %s191, [#allocation9], 64, 64, 4
        $region16: #{tpu_custom_call.1} parent=11 // pred_fallthru
          _
        // Predicated region
        $region17: #{tpu_custom_call.1} parent=11 // pred_check
          %p197 = pneg %p99
        $region18: #{tpu_custom_call.1} parent=11 // pred_check_branch
          %199 = sbr.rel (%p197) target = $region20
        $region19: #{tpu_custom_call.1} parent=11 // pred_region
          %s201 = ssub.s32 16, 16
          %202 = vsyncadd [#allocation9], %s201
          %s204 = sshll.u32 [#allocation10], 4
          %s205 = int_to_ptr.vmem [resolvable:$true] %s204
          %207 = dma.hbm_to_vmem [thread:$0]  %s2, 16, %s205, [#allocation9]
        $region20: #{tpu_custom_call.1} parent=11 // pred_fallthru
          _
        // Predicated region
        $region21: #{tpu_custom_call.1} parent=11 // pred_check
          %p208 = pneg %p120
        $region22: #{tpu_custom_call.1} parent=11 // pred_check_branch
          %210 = sbr.rel (%p208) target = $region24
        $region23: #{tpu_custom_call.1} parent=11 // pred_region
          %s212 = ssub.s32 1024, 1024
          %213 = vsyncadd [#allocation12], %s212
          %s214 = sshll.u32 [#allocation11], 4
          %s215 = int_to_ptr.vmem [resolvable:$true] %s214
          %220 = dma.hbm_to_vmem [thread:$0]  %s3, 1024, %s215, [#allocation12], 64, 64, 4
        $region24: #{tpu_custom_call.1} parent=11 // pred_fallthru
          _
        // Predicated region
        $region25: #{tpu_custom_call.1} parent=11 // pred_check
          %p221 = pneg %p141
        $region26: #{tpu_custom_call.1} parent=11 // pred_check_branch
          %223 = sbr.rel (%p221) target = $region28
        $region27: #{tpu_custom_call.1} parent=11 // pred_region
          %s225 = ssub.s32 16, 16
          %226 = vsyncadd [#allocation12], %s225
          %s228 = sshll.u32 [#allocation13], 4
          %s229 = int_to_ptr.vmem [resolvable:$true] %s228
          %231 = dma.hbm_to_vmem [thread:$0]  %s4, 16, %s229, [#allocation12]
        $region28: #{tpu_custom_call.1} parent=11 // pred_fallthru
          _
      $region12: #{tpu_custom_call.1} parent=5 // pred_fallthru
        _
      %p232 = scmp.lt.s32.totalorder %s19, 4
      // Predicated region
      $region29: #{tpu_custom_call.1} parent=5 // pred_check
        %p233 = pneg %p232
      $region30: #{tpu_custom_call.1} parent=5 // pred_check_branch
        %235 = sbr.rel (%p233) target = $region32
      $region31: #{tpu_custom_call.1} parent=5 // pred_region
        // Predicated region
        $region33: #{tpu_custom_call.1} parent=31 // pred_check
          %p236 = pneg %p51
        $region34: #{tpu_custom_call.1} parent=31 // pred_check_branch
          %238 = sbr.rel (%p236) target = $region36
        $region35: #{tpu_custom_call.1} parent=31 // pred_region
          %s239 = sand.u32 %s41, 1
          %s240 = scalar_lea.sflag [#allocation6], %s239
          %s241 = sand.u32 %s41, 1
          %s242 = smul.addr %s241, 128
          %s243 = scalar_lea.vmem [#allocation5], %s242
          %s245 = ssub.s32 2048, 2048
          %246 = vsyncadd %s240, %s245
          %s247 = smul.addr %s26, 32
          %s248 = smul.addr %s247, 64
          %s249 = scalar_lea.hbm %s0, %s248
          %s250 = sshll.u32 %s243, 4
          %s251 = int_to_ptr.vmem [resolvable:$true] %s250
          %256 = dma.hbm_to_vmem [thread:$0]  %s249, 2048, %s251, %s240, 64, 64, 4
        $region36: #{tpu_custom_call.1} parent=31 // pred_fallthru
          _
      $region32: #{tpu_custom_call.1} parent=5 // pred_fallthru
        _
      %p257 = scmp.le.s32.totalorder 1, %s19
      %p258 = scmp.lt.s32.totalorder %s19, 5
      %p259 = pnand %p257, %p258
      %p260 = pneg %p259
      // Predicated region
      $region37: #{tpu_custom_call.1} parent=5 // pred_check
        _
      $region38: #{tpu_custom_call.1} parent=5 // pred_check_branch
        %262 = sbr.rel (%p259) target = $region40
      $region39: #{tpu_custom_call.1} parent=5 // pred_region
        %s263 = ssub.s32 %s19, 1
        %s264 = sand.u32 %s44, 1
        %s265 = scalar_lea.sflag [#allocation6], %s264
        %s266 = sand.u32 %s44, 1
        %s267 = smul.addr %s266, 128
        %s268 = scalar_lea.vmem [#allocation5], %s267
        // Predicated region
        $region41: #{tpu_custom_call.1} parent=39 // pred_check
          %p269 = pneg %p57
        $region42: #{tpu_custom_call.1} parent=39 // pred_check_branch
          %271 = sbr.rel (%p269) target = $region44
        $region43: #{tpu_custom_call.1} parent=39 // pred_region
          %272 = dma.done %s265, 2048
        $region44: #{tpu_custom_call.1} parent=39 // pred_fallthru
          _
        // Predicated region
        $region45: #{tpu_custom_call.1} parent=39 // pred_check
          %p273 = pneg %p78
        $region46: #{tpu_custom_call.1} parent=39 // pred_check_branch
          %275 = sbr.rel (%p273) target = $region48
        $region47: #{tpu_custom_call.1} parent=39 // pred_region
          %276 = dma.done [#allocation9], 36864
        $region48: #{tpu_custom_call.1} parent=39 // pred_fallthru
          _
        // Predicated region
        $region49: #{tpu_custom_call.1} parent=39 // pred_check
          %p277 = pneg %p99
        $region50: #{tpu_custom_call.1} parent=39 // pred_check_branch
          %279 = sbr.rel (%p277) target = $region52
        $region51: #{tpu_custom_call.1} parent=39 // pred_region
          %280 = dma.done [#allocation9], 16
        $region52: #{tpu_custom_call.1} parent=39 // pred_fallthru
          _
        // Predicated region
        $region53: #{tpu_custom_call.1} parent=39 // pred_check
          %p281 = pneg %p120
        $region54: #{tpu_custom_call.1} parent=39 // pred_check_branch
          %283 = sbr.rel (%p281) target = $region56
        $region55: #{tpu_custom_call.1} parent=39 // pred_region
          %284 = dma.done [#allocation12], 1024
        $region56: #{tpu_custom_call.1} parent=39 // pred_fallthru
          _
        // Predicated region
        $region57: #{tpu_custom_call.1} parent=39 // pred_check
          %p285 = pneg %p141
        $region58: #{tpu_custom_call.1} parent=39 // pred_check_branch
          %287 = sbr.rel (%p285) target = $region60
        $region59: #{tpu_custom_call.1} parent=39 // pred_region
          %288 = dma.done [#allocation12], 16
        $region60: #{tpu_custom_call.1} parent=39 // pred_fallthru
          _
        %s289 = sand.u32 %s44, 1
        %s290 = scalar_lea.sflag [#allocation6], %s289
        %s291 = sand.u32 %s44, 1
        %s292 = smul.addr %s291, 128
        %s293 = scalar_lea.vmem [#allocation5], %s292
        %p294 = pneg %p57
        %p295 = pneg %p54
        %p296 = pneg %p78
        %p297 = pneg %p75
        %p298 = pneg %p99
        %p299 = pneg %p96
        %p300 = pneg %p120
        %p301 = pneg %p117
        %p302 = pneg %p141
        %p303 = pneg %p138
        %p304 = pneg %p169
        %p305 = pneg %p166
        %s306 = sand.u32 %s156, 1
        %s307 = scalar_lea.sflag [#allocation7], %s306
        %s308 = sand.u32 %s156, 1
        %s309 = smul.addr %s308, 128
        %s310 = scalar_lea.vmem [#allocation14], %s309
        %s311 = smul.u32 8, %s29
        %p313 = scmp.eq.s32.totalorder %s29, 0
        // Predicated region
        $region61: #{tpu_custom_call.1} parent=39 // pred_check
          %p314 = pneg %p313
        $region62: #{tpu_custom_call.1} parent=39 // pred_check_branch
          %316 = sbr.rel (%p314) target = $region64
        $region63: #{tpu_custom_call.1} parent=39 // pred_region
          %317 = vst [vmem:[#allocation2] sm:$0xf] 0
          %318 = vst [vmem:[#allocation2 + $0x4] sm:$0xf] 0
          %319 = vst [vmem:[#allocation2 + $0x8] sm:$0xf] 0
          %320 = vst [vmem:[#allocation2 + $0xc] sm:$0xf] 0
          %321 = vst [vmem:[#allocation2 + $0x10] sm:$0xf] 0
          %322 = vst [vmem:[#allocation2 + $0x14] sm:$0xf] 0
          %323 = vst [vmem:[#allocation2 + $0x18] sm:$0xf] 0
          %324 = vst [vmem:[#allocation2 + $0x1c] sm:$0xf] 0
          %325 = vst [vmem:[#allocation2 + $0x20] sm:$0xf] 0
          %326 = vst [vmem:[#allocation2 + $0x24] sm:$0xf] 0
          %327 = vst [vmem:[#allocation2 + $0x28] sm:$0xf] 0
          %328 = vst [vmem:[#allocation2 + $0x2c] sm:$0xf] 0
          %329 = vst [vmem:[#allocation2 + $0x30] sm:$0xf] 0
          %330 = vst [vmem:[#allocation2 + $0x34] sm:$0xf] 0
          %331 = vst [vmem:[#allocation2 + $0x38] sm:$0xf] 0
          %332 = vst [vmem:[#allocation2 + $0x3c] sm:$0xf] 0
          %333 = vst [vmem:[#allocation2 + $0x40] sm:$0xf] 0
          %334 = vst [vmem:[#allocation2 + $0x44] sm:$0xf] 0
          %335 = vst [vmem:[#allocation2 + $0x48] sm:$0xf] 0
          %336 = vst [vmem:[#allocation2 + $0x4c] sm:$0xf] 0
          %337 = vst [vmem:[#allocation2 + $0x50] sm:$0xf] 0
          %338 = vst [vmem:[#allocation2 + $0x54] sm:$0xf] 0
          %339 = vst [vmem:[#allocation2 + $0x58] sm:$0xf] 0
          %340 = vst [vmem:[#allocation2 + $0x5c] sm:$0xf] 0
          %341 = vst [vmem:[#allocation2 + $0x60] sm:$0xf] 0
          %342 = vst [vmem:[#allocation2 + $0x64] sm:$0xf] 0
          %343 = vst [vmem:[#allocation2 + $0x68] sm:$0xf] 0
          %344 = vst [vmem:[#allocation2 + $0x6c] sm:$0xf] 0
          %345 = vst [vmem:[#allocation2 + $0x70] sm:$0xf] 0
          %346 = vst [vmem:[#allocation2 + $0x74] sm:$0xf] 0
          %347 = vst [vmem:[#allocation2 + $0x78] sm:$0xf] 0
          %348 = vst [vmem:[#allocation2 + $0x7c] sm:$0xf] 0
          %349 = vst [vmem:[#allocation2 + $0x80] sm:$0xf] 0
          %350 = vst [vmem:[#allocation2 + $0x84] sm:$0xf] 0
          %351 = vst [vmem:[#allocation2 + $0x88] sm:$0xf] 0
          %352 = vst [vmem:[#allocation2 + $0x8c] sm:$0xf] 0
          %353 = vst [vmem:[#allocation2 + $0x90] sm:$0xf] 0
          %354 = vst [vmem:[#allocation2 + $0x94] sm:$0xf] 0
          %355 = vst [vmem:[#allocation2 + $0x98] sm:$0xf] 0
          %356 = vst [vmem:[#allocation2 + $0x9c] sm:$0xf] 0
          %357 = vst [vmem:[#allocation2 + $0xa0] sm:$0xf] 0
          %358 = vst [vmem:[#allocation2 + $0xa4] sm:$0xf] 0
          %359 = vst [vmem:[#allocation2 + $0xa8] sm:$0xf] 0
          %360 = vst [vmem:[#allocation2 + $0xac] sm:$0xf] 0
          %361 = vst [vmem:[#allocation2 + $0xb0] sm:$0xf] 0
          %362 = vst [vmem:[#allocation2 + $0xb4] sm:$0xf] 0
          %363 = vst [vmem:[#allocation2 + $0xb8] sm:$0xf] 0
          %364 = vst [vmem:[#allocation2 + $0xbc] sm:$0xf] 0
          %365 = vst [vmem:[#allocation2 + $0xc0] sm:$0xf] 0
          %366 = vst [vmem:[#allocation2 + $0xc4] sm:$0xf] 0
          %367 = vst [vmem:[#allocation2 + $0xc8] sm:$0xf] 0
          %368 = vst [vmem:[#allocation2 + $0xcc] sm:$0xf] 0
          %369 = vst [vmem:[#allocation2 + $0xd0] sm:$0xf] 0
          %370 = vst [vmem:[#allocation2 + $0xd4] sm:$0xf] 0
          %371 = vst [vmem:[#allocation2 + $0xd8] sm:$0xf] 0
          %372 = vst [vmem:[#allocation2 + $0xdc] sm:$0xf] 0
          %373 = vst [vmem:[#allocation2 + $0xe0] sm:$0xf] 0
          %374 = vst [vmem:[#allocation2 + $0xe4] sm:$0xf] 0
          %375 = vst [vmem:[#allocation2 + $0xe8] sm:$0xf] 0
          %376 = vst [vmem:[#allocation2 + $0xec] sm:$0xf] 0
          %377 = vst [vmem:[#allocation2 + $0xf0] sm:$0xf] 0
          %378 = vst [vmem:[#allocation2 + $0xf4] sm:$0xf] 0
          %379 = vst [vmem:[#allocation2 + $0xf8] sm:$0xf] 0
          %380 = vst [vmem:[#allocation2 + $0xfc] sm:$0xf] 0
          %381 = vst [vmem:[#allocation2 + $0x100] sm:$0xf] 0
          %382 = vst [vmem:[#allocation2 + $0x104] sm:$0xf] 0
          %383 = vst [vmem:[#allocation2 + $0x108] sm:$0xf] 0
          %384 = vst [vmem:[#allocation2 + $0x10c] sm:$0xf] 0
          %385 = vst [vmem:[#allocation2 + $0x110] sm:$0xf] 0
          %386 = vst [vmem:[#allocation2 + $0x114] sm:$0xf] 0
          %387 = vst [vmem:[#allocation2 + $0x118] sm:$0xf] 0
          %388 = vst [vmem:[#allocation2 + $0x11c] sm:$0xf] 0
          %389 = vst [vmem:[#allocation2 + $0x120] sm:$0xf] 0
          %390 = vst [vmem:[#allocation2 + $0x124] sm:$0xf] 0
          %391 = vst [vmem:[#allocation2 + $0x128] sm:$0xf] 0
          %392 = vst [vmem:[#allocation2 + $0x12c] sm:$0xf] 0
          %393 = vst [vmem:[#allocation2 + $0x130] sm:$0xf] 0
          %394 = vst [vmem:[#allocation2 + $0x134] sm:$0xf] 0
          %395 = vst [vmem:[#allocation2 + $0x138] sm:$0xf] 0
          %396 = vst [vmem:[#allocation2 + $0x13c] sm:$0xf] 0
          %397 = vst [vmem:[#allocation2 + $0x140] sm:$0xf] 0
          %398 = vst [vmem:[#allocation2 + $0x144] sm:$0xf] 0
          %399 = vst [vmem:[#allocation2 + $0x148] sm:$0xf] 0
          %400 = vst [vmem:[#allocation2 + $0x14c] sm:$0xf] 0
          %401 = vst [vmem:[#allocation2 + $0x150] sm:$0xf] 0
          %402 = vst [vmem:[#allocation2 + $0x154] sm:$0xf] 0
          %403 = vst [vmem:[#allocation2 + $0x158] sm:$0xf] 0
          %404 = vst [vmem:[#allocation2 + $0x15c] sm:$0xf] 0
          %405 = vst [vmem:[#allocation2 + $0x160] sm:$0xf] 0
          %406 = vst [vmem:[#allocation2 + $0x164] sm:$0xf] 0
          %407 = vst [vmem:[#allocation2 + $0x168] sm:$0xf] 0
          %408 = vst [vmem:[#allocation2 + $0x16c] sm:$0xf] 0
          %409 = vst [vmem:[#allocation2 + $0x170] sm:$0xf] 0
          %410 = vst [vmem:[#allocation2 + $0x174] sm:$0xf] 0
          %411 = vst [vmem:[#allocation2 + $0x178] sm:$0xf] 0
          %412 = vst [vmem:[#allocation2 + $0x17c] sm:$0xf] 0
          %413 = vst [vmem:[#allocation2 + $0x180] sm:$0xf] 0
          %414 = vst [vmem:[#allocation2 + $0x184] sm:$0xf] 0
          %415 = vst [vmem:[#allocation2 + $0x188] sm:$0xf] 0
          %416 = vst [vmem:[#allocation2 + $0x18c] sm:$0xf] 0
          %417 = vst [vmem:[#allocation2 + $0x190] sm:$0xf] 0
          %418 = vst [vmem:[#allocation2 + $0x194] sm:$0xf] 0
          %419 = vst [vmem:[#allocation2 + $0x198] sm:$0xf] 0
          %420 = vst [vmem:[#allocation2 + $0x19c] sm:$0xf] 0
          %421 = vst [vmem:[#allocation2 + $0x1a0] sm:$0xf] 0
          %422 = vst [vmem:[#allocation2 + $0x1a4] sm:$0xf] 0
          %423 = vst [vmem:[#allocation2 + $0x1a8] sm:$0xf] 0
          %424 = vst [vmem:[#allocation2 + $0x1ac] sm:$0xf] 0
          %425 = vst [vmem:[#allocation2 + $0x1b0] sm:$0xf] 0
          %426 = vst [vmem:[#allocation2 + $0x1b4] sm:$0xf] 0
          %427 = vst [vmem:[#allocation2 + $0x1b8] sm:$0xf] 0
          %428 = vst [vmem:[#allocation2 + $0x1bc] sm:$0xf] 0
          %429 = vst [vmem:[#allocation2 + $0x1c0] sm:$0xf] 0
          %430 = vst [vmem:[#allocation2 + $0x1c4] sm:$0xf] 0
          %431 = vst [vmem:[#allocation2 + $0x1c8] sm:$0xf] 0
          %432 = vst [vmem:[#allocation2 + $0x1cc] sm:$0xf] 0
          %433 = vst [vmem:[#allocation2 + $0x1d0] sm:$0xf] 0
          %434 = vst [vmem:[#allocation2 + $0x1d4] sm:$0xf] 0
          %435 = vst [vmem:[#allocation2 + $0x1d8] sm:$0xf] 0
          %436 = vst [vmem:[#allocation2 + $0x1dc] sm:$0xf] 0
          %437 = vst [vmem:[#allocation2 + $0x1e0] sm:$0xf] 0
          %438 = vst [vmem:[#allocation2 + $0x1e4] sm:$0xf] 0
          %439 = vst [vmem:[#allocation2 + $0x1e8] sm:$0xf] 0
          %440 = vst [vmem:[#allocation2 + $0x1ec] sm:$0xf] 0
          %441 = vst [vmem:[#allocation2 + $0x1f0] sm:$0xf] 0
          %442 = vst [vmem:[#allocation2 + $0x1f4] sm:$0xf] 0
          %443 = vst [vmem:[#allocation2 + $0x1f8] sm:$0xf] 0
          %444 = vst [vmem:[#allocation2 + $0x1fc] sm:$0xf] 0
          %445 = vst [vmem:[#allocation2 + $0x200] sm:$0xf] 0
          %446 = vst [vmem:[#allocation2 + $0x204] sm:$0xf] 0
          %447 = vst [vmem:[#allocation2 + $0x208] sm:$0xf] 0
          %448 = vst [vmem:[#allocation2 + $0x20c] sm:$0xf] 0
          %449 = vst [vmem:[#allocation2 + $0x210] sm:$0xf] 0
          %450 = vst [vmem:[#allocation2 + $0x214] sm:$0xf] 0
          %451 = vst [vmem:[#allocation2 + $0x218] sm:$0xf] 0
          %452 = vst [vmem:[#allocation2 + $0x21c] sm:$0xf] 0
          %453 = vst [vmem:[#allocation2 + $0x220] sm:$0xf] 0
          %454 = vst [vmem:[#allocation2 + $0x224] sm:$0xf] 0
          %455 = vst [vmem:[#allocation2 + $0x228] sm:$0xf] 0
          %456 = vst [vmem:[#allocation2 + $0x22c] sm:$0xf] 0
          %457 = vst [vmem:[#allocation2 + $0x230] sm:$0xf] 0
          %458 = vst [vmem:[#allocation2 + $0x234] sm:$0xf] 0
          %459 = vst [vmem:[#allocation2 + $0x238] sm:$0xf] 0
          %460 = vst [vmem:[#allocation2 + $0x23c] sm:$0xf] 0
          %461 = vst [vmem:[#allocation2 + $0x240] sm:$0xf] 0
          %462 = vst [vmem:[#allocation2 + $0x244] sm:$0xf] 0
          %463 = vst [vmem:[#allocation2 + $0x248] sm:$0xf] 0
          %464 = vst [vmem:[#allocation2 + $0x24c] sm:$0xf] 0
          %465 = vst [vmem:[#allocation2 + $0x250] sm:$0xf] 0
          %466 = vst [vmem:[#allocation2 + $0x254] sm:$0xf] 0
          %467 = vst [vmem:[#allocation2 + $0x258] sm:$0xf] 0
          %468 = vst [vmem:[#allocation2 + $0x25c] sm:$0xf] 0
          %469 = vst [vmem:[#allocation2 + $0x260] sm:$0xf] 0
          %470 = vst [vmem:[#allocation2 + $0x264] sm:$0xf] 0
          %471 = vst [vmem:[#allocation2 + $0x268] sm:$0xf] 0
          %472 = vst [vmem:[#allocation2 + $0x26c] sm:$0xf] 0
          %473 = vst [vmem:[#allocation2 + $0x270] sm:$0xf] 0
          %474 = vst [vmem:[#allocation2 + $0x274] sm:$0xf] 0
          %475 = vst [vmem:[#allocation2 + $0x278] sm:$0xf] 0
          %476 = vst [vmem:[#allocation2 + $0x27c] sm:$0xf] 0
          %477 = vst [vmem:[#allocation2 + $0x280] sm:$0xf] 0
          %478 = vst [vmem:[#allocation2 + $0x284] sm:$0xf] 0
          %479 = vst [vmem:[#allocation2 + $0x288] sm:$0xf] 0
          %480 = vst [vmem:[#allocation2 + $0x28c] sm:$0xf] 0
          %481 = vst [vmem:[#allocation2 + $0x290] sm:$0xf] 0
          %482 = vst [vmem:[#allocation2 + $0x294] sm:$0xf] 0
          %483 = vst [vmem:[#allocation2 + $0x298] sm:$0xf] 0
          %484 = vst [vmem:[#allocation2 + $0x29c] sm:$0xf] 0
          %485 = vst [vmem:[#allocation2 + $0x2a0] sm:$0xf] 0
          %486 = vst [vmem:[#allocation2 + $0x2a4] sm:$0xf] 0
          %487 = vst [vmem:[#allocation2 + $0x2a8] sm:$0xf] 0
          %488 = vst [vmem:[#allocation2 + $0x2ac] sm:$0xf] 0
          %489 = vst [vmem:[#allocation2 + $0x2b0] sm:$0xf] 0
          %490 = vst [vmem:[#allocation2 + $0x2b4] sm:$0xf] 0
          %491 = vst [vmem:[#allocation2 + $0x2b8] sm:$0xf] 0
          %492 = vst [vmem:[#allocation2 + $0x2bc] sm:$0xf] 0
          %493 = vst [vmem:[#allocation2 + $0x2c0] sm:$0xf] 0
          %494 = vst [vmem:[#allocation2 + $0x2c4] sm:$0xf] 0
          %495 = vst [vmem:[#allocation2 + $0x2c8] sm:$0xf] 0
          %496 = vst [vmem:[#allocation2 + $0x2cc] sm:$0xf] 0
          %497 = vst [vmem:[#allocation2 + $0x2d0] sm:$0xf] 0
          %498 = vst [vmem:[#allocation2 + $0x2d4] sm:$0xf] 0
          %499 = vst [vmem:[#allocation2 + $0x2d8] sm:$0xf] 0
          %500 = vst [vmem:[#allocation2 + $0x2dc] sm:$0xf] 0
          %501 = vst [vmem:[#allocation2 + $0x2e0] sm:$0xf] 0
          %502 = vst [vmem:[#allocation2 + $0x2e4] sm:$0xf] 0
          %503 = vst [vmem:[#allocation2 + $0x2e8] sm:$0xf] 0
          %504 = vst [vmem:[#allocation2 + $0x2ec] sm:$0xf] 0
          %505 = vst [vmem:[#allocation2 + $0x2f0] sm:$0xf] 0
          %506 = vst [vmem:[#allocation2 + $0x2f4] sm:$0xf] 0
          %507 = vst [vmem:[#allocation2 + $0x2f8] sm:$0xf] 0
          %508 = vst [vmem:[#allocation2 + $0x2fc] sm:$0xf] 0
          %509 = vst [vmem:[#allocation2 + $0x300] sm:$0xf] 0
          %510 = vst [vmem:[#allocation2 + $0x304] sm:$0xf] 0
          %511 = vst [vmem:[#allocation2 + $0x308] sm:$0xf] 0
          %512 = vst [vmem:[#allocation2 + $0x30c] sm:$0xf] 0
          %513 = vst [vmem:[#allocation2 + $0x310] sm:$0xf] 0
          %514 = vst [vmem:[#allocation2 + $0x314] sm:$0xf] 0
          %515 = vst [vmem:[#allocation2 + $0x318] sm:$0xf] 0
          %516 = vst [vmem:[#allocation2 + $0x31c] sm:$0xf] 0
          %517 = vst [vmem:[#allocation2 + $0x320] sm:$0xf] 0
          %518 = vst [vmem:[#allocation2 + $0x324] sm:$0xf] 0
          %519 = vst [vmem:[#allocation2 + $0x328] sm:$0xf] 0
          %520 = vst [vmem:[#allocation2 + $0x32c] sm:$0xf] 0
          %521 = vst [vmem:[#allocation2 + $0x330] sm:$0xf] 0
          %522 = vst [vmem:[#allocation2 + $0x334] sm:$0xf] 0
          %523 = vst [vmem:[#allocation2 + $0x338] sm:$0xf] 0
          %524 = vst [vmem:[#allocation2 + $0x33c] sm:$0xf] 0
          %525 = vst [vmem:[#allocation2 + $0x340] sm:$0xf] 0
          %526 = vst [vmem:[#allocation2 + $0x344] sm:$0xf] 0
          %527 = vst [vmem:[#allocation2 + $0x348] sm:$0xf] 0
          %528 = vst [vmem:[#allocation2 + $0x34c] sm:$0xf] 0
          %529 = vst [vmem:[#allocation2 + $0x350] sm:$0xf] 0
          %530 = vst [vmem:[#allocation2 + $0x354] sm:$0xf] 0
          %531 = vst [vmem:[#allocation2 + $0x358] sm:$0xf] 0
          %532 = vst [vmem:[#allocation2 + $0x35c] sm:$0xf] 0
          %533 = vst [vmem:[#allocation2 + $0x360] sm:$0xf] 0
          %534 = vst [vmem:[#allocation2 + $0x364] sm:$0xf] 0
          %535 = vst [vmem:[#allocation2 + $0x368] sm:$0xf] 0
          %536 = vst [vmem:[#allocation2 + $0x36c] sm:$0xf] 0
          %537 = vst [vmem:[#allocation2 + $0x370] sm:$0xf] 0
          %538 = vst [vmem:[#allocation2 + $0x374] sm:$0xf] 0
          %539 = vst [vmem:[#allocation2 + $0x378] sm:$0xf] 0
          %540 = vst [vmem:[#allocation2 + $0x37c] sm:$0xf] 0
          %541 = vst [vmem:[#allocation2 + $0x380] sm:$0xf] 0
          %542 = vst [vmem:[#allocation2 + $0x384] sm:$0xf] 0
          %543 = vst [vmem:[#allocation2 + $0x388] sm:$0xf] 0
          %544 = vst [vmem:[#allocation2 + $0x38c] sm:$0xf] 0
          %545 = vst [vmem:[#allocation2 + $0x390] sm:$0xf] 0
          %546 = vst [vmem:[#allocation2 + $0x394] sm:$0xf] 0
          %547 = vst [vmem:[#allocation2 + $0x398] sm:$0xf] 0
          %548 = vst [vmem:[#allocation2 + $0x39c] sm:$0xf] 0
          %549 = vst [vmem:[#allocation2 + $0x3a0] sm:$0xf] 0
          %550 = vst [vmem:[#allocation2 + $0x3a4] sm:$0xf] 0
          %551 = vst [vmem:[#allocation2 + $0x3a8] sm:$0xf] 0
          %552 = vst [vmem:[#allocation2 + $0x3ac] sm:$0xf] 0
          %553 = vst [vmem:[#allocation2 + $0x3b0] sm:$0xf] 0
          %554 = vst [vmem:[#allocation2 + $0x3b4] sm:$0xf] 0
          %555 = vst [vmem:[#allocation2 + $0x3b8] sm:$0xf] 0
          %556 = vst [vmem:[#allocation2 + $0x3bc] sm:$0xf] 0
          %557 = vst [vmem:[#allocation2 + $0x3c0] sm:$0xf] 0
          %558 = vst [vmem:[#allocation2 + $0x3c4] sm:$0xf] 0
          %559 = vst [vmem:[#allocation2 + $0x3c8] sm:$0xf] 0
          %560 = vst [vmem:[#allocation2 + $0x3cc] sm:$0xf] 0
          %561 = vst [vmem:[#allocation2 + $0x3d0] sm:$0xf] 0
          %562 = vst [vmem:[#allocation2 + $0x3d4] sm:$0xf] 0
          %563 = vst [vmem:[#allocation2 + $0x3d8] sm:$0xf] 0
          %564 = vst [vmem:[#allocation2 + $0x3dc] sm:$0xf] 0
          %565 = vst [vmem:[#allocation2 + $0x3e0] sm:$0xf] 0
          %566 = vst [vmem:[#allocation2 + $0x3e4] sm:$0xf] 0
          %567 = vst [vmem:[#allocation2 + $0x3e8] sm:$0xf] 0
          %568 = vst [vmem:[#allocation2 + $0x3ec] sm:$0xf] 0
          %569 = vst [vmem:[#allocation2 + $0x3f0] sm:$0xf] 0
          %570 = vst [vmem:[#allocation2 + $0x3f4] sm:$0xf] 0
          %571 = vst [vmem:[#allocation2 + $0x3f8] sm:$0xf] 0
          %572 = vst [vmem:[#allocation2 + $0x3fc] sm:$0xf] 0
          %573 = vst [vmem:[#allocation2 + $0x400] sm:$0xf] 0
          %574 = vst [vmem:[#allocation2 + $0x404] sm:$0xf] 0
          %575 = vst [vmem:[#allocation2 + $0x408] sm:$0xf] 0
          %576 = vst [vmem:[#allocation2 + $0x40c] sm:$0xf] 0
          %577 = vst [vmem:[#allocation2 + $0x410] sm:$0xf] 0
          %578 = vst [vmem:[#allocation2 + $0x414] sm:$0xf] 0
          %579 = vst [vmem:[#allocation2 + $0x418] sm:$0xf] 0
          %580 = vst [vmem:[#allocation2 + $0x41c] sm:$0xf] 0
          %581 = vst [vmem:[#allocation2 + $0x420] sm:$0xf] 0
          %582 = vst [vmem:[#allocation2 + $0x424] sm:$0xf] 0
          %583 = vst [vmem:[#allocation2 + $0x428] sm:$0xf] 0
          %584 = vst [vmem:[#allocation2 + $0x42c] sm:$0xf] 0
          %585 = vst [vmem:[#allocation2 + $0x430] sm:$0xf] 0
          %586 = vst [vmem:[#allocation2 + $0x434] sm:$0xf] 0
          %587 = vst [vmem:[#allocation2 + $0x438] sm:$0xf] 0
          %588 = vst [vmem:[#allocation2 + $0x43c] sm:$0xf] 0
          %589 = vst [vmem:[#allocation2 + $0x440] sm:$0xf] 0
          %590 = vst [vmem:[#allocation2 + $0x444] sm:$0xf] 0
          %591 = vst [vmem:[#allocation2 + $0x448] sm:$0xf] 0
          %592 = vst [vmem:[#allocation2 + $0x44c] sm:$0xf] 0
          %593 = vst [vmem:[#allocation2 + $0x450] sm:$0xf] 0
          %594 = vst [vmem:[#allocation2 + $0x454] sm:$0xf] 0
          %595 = vst [vmem:[#allocation2 + $0x458] sm:$0xf] 0
          %596 = vst [vmem:[#allocation2 + $0x45c] sm:$0xf] 0
          %597 = vst [vmem:[#allocation2 + $0x460] sm:$0xf] 0
          %598 = vst [vmem:[#allocation2 + $0x464] sm:$0xf] 0
          %599 = vst [vmem:[#allocation2 + $0x468] sm:$0xf] 0
          %600 = vst [vmem:[#allocation2 + $0x46c] sm:$0xf] 0
          %601 = vst [vmem:[#allocation2 + $0x470] sm:$0xf] 0
          %602 = vst [vmem:[#allocation2 + $0x474] sm:$0xf] 0
          %603 = vst [vmem:[#allocation2 + $0x478] sm:$0xf] 0
          %604 = vst [vmem:[#allocation2 + $0x47c] sm:$0xf] 0
          %605 = vst [vmem:[#allocation2 + $0x480] sm:$0xf] 0
          %606 = vst [vmem:[#allocation2 + $0x484] sm:$0xf] 0
          %607 = vst [vmem:[#allocation2 + $0x488] sm:$0xf] 0
          %608 = vst [vmem:[#allocation2 + $0x48c] sm:$0xf] 0
          %609 = vst [vmem:[#allocation2 + $0x490] sm:$0xf] 0
          %610 = vst [vmem:[#allocation2 + $0x494] sm:$0xf] 0
          %611 = vst [vmem:[#allocation2 + $0x498] sm:$0xf] 0
          %612 = vst [vmem:[#allocation2 + $0x49c] sm:$0xf] 0
          %613 = vst [vmem:[#allocation2 + $0x4a0] sm:$0xf] 0
          %614 = vst [vmem:[#allocation2 + $0x4a4] sm:$0xf] 0
          %615 = vst [vmem:[#allocation2 + $0x4a8] sm:$0xf] 0
          %616 = vst [vmem:[#allocation2 + $0x4ac] sm:$0xf] 0
          %617 = vst [vmem:[#allocation2 + $0x4b0] sm:$0xf] 0
          %618 = vst [vmem:[#allocation2 + $0x4b4] sm:$0xf] 0
          %619 = vst [vmem:[#allocation2 + $0x4b8] sm:$0xf] 0
          %620 = vst [vmem:[#allocation2 + $0x4bc] sm:$0xf] 0
          %621 = vst [vmem:[#allocation2 + $0x4c0] sm:$0xf] 0
          %622 = vst [vmem:[#allocation2 + $0x4c4] sm:$0xf] 0
          %623 = vst [vmem:[#allocation2 + $0x4c8] sm:$0xf] 0
          %624 = vst [vmem:[#allocation2 + $0x4cc] sm:$0xf] 0
          %625 = vst [vmem:[#allocation2 + $0x4d0] sm:$0xf] 0
          %626 = vst [vmem:[#allocation2 + $0x4d4] sm:$0xf] 0
          %627 = vst [vmem:[#allocation2 + $0x4d8] sm:$0xf] 0
          %628 = vst [vmem:[#allocation2 + $0x4dc] sm:$0xf] 0
          %629 = vst [vmem:[#allocation2 + $0x4e0] sm:$0xf] 0
          %630 = vst [vmem:[#allocation2 + $0x4e4] sm:$0xf] 0
          %631 = vst [vmem:[#allocation2 + $0x4e8] sm:$0xf] 0
          %632 = vst [vmem:[#allocation2 + $0x4ec] sm:$0xf] 0
          %633 = vst [vmem:[#allocation2 + $0x4f0] sm:$0xf] 0
          %634 = vst [vmem:[#allocation2 + $0x4f4] sm:$0xf] 0
          %635 = vst [vmem:[#allocation2 + $0x4f8] sm:$0xf] 0
          %636 = vst [vmem:[#allocation2 + $0x4fc] sm:$0xf] 0
          %637 = vst [vmem:[#allocation2 + $0x500] sm:$0xf] 0
          %638 = vst [vmem:[#allocation2 + $0x504] sm:$0xf] 0
          %639 = vst [vmem:[#allocation2 + $0x508] sm:$0xf] 0
          %640 = vst [vmem:[#allocation2 + $0x50c] sm:$0xf] 0
          %641 = vst [vmem:[#allocation2 + $0x510] sm:$0xf] 0
          %642 = vst [vmem:[#allocation2 + $0x514] sm:$0xf] 0
          %643 = vst [vmem:[#allocation2 + $0x518] sm:$0xf] 0
          %644 = vst [vmem:[#allocation2 + $0x51c] sm:$0xf] 0
          %645 = vst [vmem:[#allocation2 + $0x520] sm:$0xf] 0
          %646 = vst [vmem:[#allocation2 + $0x524] sm:$0xf] 0
          %647 = vst [vmem:[#allocation2 + $0x528] sm:$0xf] 0
          %648 = vst [vmem:[#allocation2 + $0x52c] sm:$0xf] 0
          %649 = vst [vmem:[#allocation2 + $0x530] sm:$0xf] 0
          %650 = vst [vmem:[#allocation2 + $0x534] sm:$0xf] 0
          %651 = vst [vmem:[#allocation2 + $0x538] sm:$0xf] 0
          %652 = vst [vmem:[#allocation2 + $0x53c] sm:$0xf] 0
          %653 = vst [vmem:[#allocation2 + $0x540] sm:$0xf] 0
          %654 = vst [vmem:[#allocation2 + $0x544] sm:$0xf] 0
          %655 = vst [vmem:[#allocation2 + $0x548] sm:$0xf] 0
          %656 = vst [vmem:[#allocation2 + $0x54c] sm:$0xf] 0
          %657 = vst [vmem:[#allocation2 + $0x550] sm:$0xf] 0
          %658 = vst [vmem:[#allocation2 + $0x554] sm:$0xf] 0
          %659 = vst [vmem:[#allocation2 + $0x558] sm:$0xf] 0
          %660 = vst [vmem:[#allocation2 + $0x55c] sm:$0xf] 0
          %661 = vst [vmem:[#allocation2 + $0x560] sm:$0xf] 0
          %662 = vst [vmem:[#allocation2 + $0x564] sm:$0xf] 0
          %663 = vst [vmem:[#allocation2 + $0x568] sm:$0xf] 0
          %664 = vst [vmem:[#allocation2 + $0x56c] sm:$0xf] 0
          %665 = vst [vmem:[#allocation2 + $0x570] sm:$0xf] 0
          %666 = vst [vmem:[#allocation2 + $0x574] sm:$0xf] 0
          %667 = vst [vmem:[#allocation2 + $0x578] sm:$0xf] 0
          %668 = vst [vmem:[#allocation2 + $0x57c] sm:$0xf] 0
          %669 = vst [vmem:[#allocation2 + $0x580] sm:$0xf] 0
          %670 = vst [vmem:[#allocation2 + $0x584] sm:$0xf] 0
          %671 = vst [vmem:[#allocation2 + $0x588] sm:$0xf] 0
          %672 = vst [vmem:[#allocation2 + $0x58c] sm:$0xf] 0
          %673 = vst [vmem:[#allocation2 + $0x590] sm:$0xf] 0
          %674 = vst [vmem:[#allocation2 + $0x594] sm:$0xf] 0
          %675 = vst [vmem:[#allocation2 + $0x598] sm:$0xf] 0
          %676 = vst [vmem:[#allocation2 + $0x59c] sm:$0xf] 0
          %677 = vst [vmem:[#allocation2 + $0x5a0] sm:$0xf] 0
          %678 = vst [vmem:[#allocation2 + $0x5a4] sm:$0xf] 0
          %679 = vst [vmem:[#allocation2 + $0x5a8] sm:$0xf] 0
          %680 = vst [vmem:[#allocation2 + $0x5ac] sm:$0xf] 0
          %681 = vst [vmem:[#allocation2 + $0x5b0] sm:$0xf] 0
          %682 = vst [vmem:[#allocation2 + $0x5b4] sm:$0xf] 0
          %683 = vst [vmem:[#allocation2 + $0x5b8] sm:$0xf] 0
          %684 = vst [vmem:[#allocation2 + $0x5bc] sm:$0xf] 0
          %685 = vst [vmem:[#allocation2 + $0x5c0] sm:$0xf] 0
          %686 = vst [vmem:[#allocation2 + $0x5c4] sm:$0xf] 0
          %687 = vst [vmem:[#allocation2 + $0x5c8] sm:$0xf] 0
          %688 = vst [vmem:[#allocation2 + $0x5cc] sm:$0xf] 0
          %689 = vst [vmem:[#allocation2 + $0x5d0] sm:$0xf] 0
          %690 = vst [vmem:[#allocation2 + $0x5d4] sm:$0xf] 0
          %691 = vst [vmem:[#allocation2 + $0x5d8] sm:$0xf] 0
          %692 = vst [vmem:[#allocation2 + $0x5dc] sm:$0xf] 0
          %693 = vst [vmem:[#allocation2 + $0x5e0] sm:$0xf] 0
          %694 = vst [vmem:[#allocation2 + $0x5e4] sm:$0xf] 0
          %695 = vst [vmem:[#allocation2 + $0x5e8] sm:$0xf] 0
          %696 = vst [vmem:[#allocation2 + $0x5ec] sm:$0xf] 0
          %697 = vst [vmem:[#allocation2 + $0x5f0] sm:$0xf] 0
          %698 = vst [vmem:[#allocation2 + $0x5f4] sm:$0xf] 0
          %699 = vst [vmem:[#allocation2 + $0x5f8] sm:$0xf] 0
          %700 = vst [vmem:[#allocation2 + $0x5fc] sm:$0xf] 0
          %701 = vst [vmem:[#allocation2 + $0x600] sm:$0xf] 0
          %702 = vst [vmem:[#allocation2 + $0x604] sm:$0xf] 0
          %703 = vst [vmem:[#allocation2 + $0x608] sm:$0xf] 0
          %704 = vst [vmem:[#allocation2 + $0x60c] sm:$0xf] 0
          %705 = vst [vmem:[#allocation2 + $0x610] sm:$0xf] 0
          %706 = vst [vmem:[#allocation2 + $0x614] sm:$0xf] 0
          %707 = vst [vmem:[#allocation2 + $0x618] sm:$0xf] 0
          %708 = vst [vmem:[#allocation2 + $0x61c] sm:$0xf] 0
          %709 = vst [vmem:[#allocation2 + $0x620] sm:$0xf] 0
          %710 = vst [vmem:[#allocation2 + $0x624] sm:$0xf] 0
          %711 = vst [vmem:[#allocation2 + $0x628] sm:$0xf] 0
          %712 = vst [vmem:[#allocation2 + $0x62c] sm:$0xf] 0
          %713 = vst [vmem:[#allocation2 + $0x630] sm:$0xf] 0
          %714 = vst [vmem:[#allocation2 + $0x634] sm:$0xf] 0
          %715 = vst [vmem:[#allocation2 + $0x638] sm:$0xf] 0
          %716 = vst [vmem:[#allocation2 + $0x63c] sm:$0xf] 0
          %717 = vst [vmem:[#allocation2 + $0x640] sm:$0xf] 0
          %718 = vst [vmem:[#allocation2 + $0x644] sm:$0xf] 0
          %719 = vst [vmem:[#allocation2 + $0x648] sm:$0xf] 0
          %720 = vst [vmem:[#allocation2 + $0x64c] sm:$0xf] 0
          %721 = vst [vmem:[#allocation2 + $0x650] sm:$0xf] 0
          %722 = vst [vmem:[#allocation2 + $0x654] sm:$0xf] 0
          %723 = vst [vmem:[#allocation2 + $0x658] sm:$0xf] 0
          %724 = vst [vmem:[#allocation2 + $0x65c] sm:$0xf] 0
          %725 = vst [vmem:[#allocation2 + $0x660] sm:$0xf] 0
          %726 = vst [vmem:[#allocation2 + $0x664] sm:$0xf] 0
          %727 = vst [vmem:[#allocation2 + $0x668] sm:$0xf] 0
          %728 = vst [vmem:[#allocation2 + $0x66c] sm:$0xf] 0
          %729 = vst [vmem:[#allocation2 + $0x670] sm:$0xf] 0
          %730 = vst [vmem:[#allocation2 + $0x674] sm:$0xf] 0
          %731 = vst [vmem:[#allocation2 + $0x678] sm:$0xf] 0
          %732 = vst [vmem:[#allocation2 + $0x67c] sm:$0xf] 0
          %733 = vst [vmem:[#allocation2 + $0x680] sm:$0xf] 0
          %734 = vst [vmem:[#allocation2 + $0x684] sm:$0xf] 0
          %735 = vst [vmem:[#allocation2 + $0x688] sm:$0xf] 0
          %736 = vst [vmem:[#allocation2 + $0x68c] sm:$0xf] 0
          %737 = vst [vmem:[#allocation2 + $0x690] sm:$0xf] 0
          %738 = vst [vmem:[#allocation2 + $0x694] sm:$0xf] 0
          %739 = vst [vmem:[#allocation2 + $0x698] sm:$0xf] 0
          %740 = vst [vmem:[#allocation2 + $0x69c] sm:$0xf] 0
          %741 = vst [vmem:[#allocation2 + $0x6a0] sm:$0xf] 0
          %742 = vst [vmem:[#allocation2 + $0x6a4] sm:$0xf] 0
          %743 = vst [vmem:[#allocation2 + $0x6a8] sm:$0xf] 0
          %744 = vst [vmem:[#allocation2 + $0x6ac] sm:$0xf] 0
          %745 = vst [vmem:[#allocation2 + $0x6b0] sm:$0xf] 0
          %746 = vst [vmem:[#allocation2 + $0x6b4] sm:$0xf] 0
          %747 = vst [vmem:[#allocation2 + $0x6b8] sm:$0xf] 0
          %748 = vst [vmem:[#allocation2 + $0x6bc] sm:$0xf] 0
          %749 = vst [vmem:[#allocation2 + $0x6c0] sm:$0xf] 0
          %750 = vst [vmem:[#allocation2 + $0x6c4] sm:$0xf] 0
          %751 = vst [vmem:[#allocation2 + $0x6c8] sm:$0xf] 0
          %752 = vst [vmem:[#allocation2 + $0x6cc] sm:$0xf] 0
          %753 = vst [vmem:[#allocation2 + $0x6d0] sm:$0xf] 0
          %754 = vst [vmem:[#allocation2 + $0x6d4] sm:$0xf] 0
          %755 = vst [vmem:[#allocation2 + $0x6d8] sm:$0xf] 0
          %756 = vst [vmem:[#allocation2 + $0x6dc] sm:$0xf] 0
          %757 = vst [vmem:[#allocation2 + $0x6e0] sm:$0xf] 0
          %758 = vst [vmem:[#allocation2 + $0x6e4] sm:$0xf] 0
          %759 = vst [vmem:[#allocation2 + $0x6e8] sm:$0xf] 0
          %760 = vst [vmem:[#allocation2 + $0x6ec] sm:$0xf] 0
          %761 = vst [vmem:[#allocation2 + $0x6f0] sm:$0xf] 0
          %762 = vst [vmem:[#allocation2 + $0x6f4] sm:$0xf] 0
          %763 = vst [vmem:[#allocation2 + $0x6f8] sm:$0xf] 0
          %764 = vst [vmem:[#allocation2 + $0x6fc] sm:$0xf] 0
          %765 = vst [vmem:[#allocation2 + $0x700] sm:$0xf] 0
          %766 = vst [vmem:[#allocation2 + $0x704] sm:$0xf] 0
          %767 = vst [vmem:[#allocation2 + $0x708] sm:$0xf] 0
          %768 = vst [vmem:[#allocation2 + $0x70c] sm:$0xf] 0
          %769 = vst [vmem:[#allocation2 + $0x710] sm:$0xf] 0
          %770 = vst [vmem:[#allocation2 + $0x714] sm:$0xf] 0
          %771 = vst [vmem:[#allocation2 + $0x718] sm:$0xf] 0
          %772 = vst [vmem:[#allocation2 + $0x71c] sm:$0xf] 0
          %773 = vst [vmem:[#allocation2 + $0x720] sm:$0xf] 0
          %774 = vst [vmem:[#allocation2 + $0x724] sm:$0xf] 0
          %775 = vst [vmem:[#allocation2 + $0x728] sm:$0xf] 0
          %776 = vst [vmem:[#allocation2 + $0x72c] sm:$0xf] 0
          %777 = vst [vmem:[#allocation2 + $0x730] sm:$0xf] 0
          %778 = vst [vmem:[#allocation2 + $0x734] sm:$0xf] 0
          %779 = vst [vmem:[#allocation2 + $0x738] sm:$0xf] 0
          %780 = vst [vmem:[#allocation2 + $0x73c] sm:$0xf] 0
          %781 = vst [vmem:[#allocation2 + $0x740] sm:$0xf] 0
          %782 = vst [vmem:[#allocation2 + $0x744] sm:$0xf] 0
          %783 = vst [vmem:[#allocation2 + $0x748] sm:$0xf] 0
          %784 = vst [vmem:[#allocation2 + $0x74c] sm:$0xf] 0
          %785 = vst [vmem:[#allocation2 + $0x750] sm:$0xf] 0
          %786 = vst [vmem:[#allocation2 + $0x754] sm:$0xf] 0
          %787 = vst [vmem:[#allocation2 + $0x758] sm:$0xf] 0
          %788 = vst [vmem:[#allocation2 + $0x75c] sm:$0xf] 0
          %789 = vst [vmem:[#allocation2 + $0x760] sm:$0xf] 0
          %790 = vst [vmem:[#allocation2 + $0x764] sm:$0xf] 0
          %791 = vst [vmem:[#allocation2 + $0x768] sm:$0xf] 0
          %792 = vst [vmem:[#allocation2 + $0x76c] sm:$0xf] 0
          %793 = vst [vmem:[#allocation2 + $0x770] sm:$0xf] 0
          %794 = vst [vmem:[#allocation2 + $0x774] sm:$0xf] 0
          %795 = vst [vmem:[#allocation2 + $0x778] sm:$0xf] 0
          %796 = vst [vmem:[#allocation2 + $0x77c] sm:$0xf] 0
          %797 = vst [vmem:[#allocation2 + $0x780] sm:$0xf] 0
          %798 = vst [vmem:[#allocation2 + $0x784] sm:$0xf] 0
          %799 = vst [vmem:[#allocation2 + $0x788] sm:$0xf] 0
          %800 = vst [vmem:[#allocation2 + $0x78c] sm:$0xf] 0
          %801 = vst [vmem:[#allocation2 + $0x790] sm:$0xf] 0
          %802 = vst [vmem:[#allocation2 + $0x794] sm:$0xf] 0
          %803 = vst [vmem:[#allocation2 + $0x798] sm:$0xf] 0
          %804 = vst [vmem:[#allocation2 + $0x79c] sm:$0xf] 0
          %805 = vst [vmem:[#allocation2 + $0x7a0] sm:$0xf] 0
          %806 = vst [vmem:[#allocation2 + $0x7a4] sm:$0xf] 0
          %807 = vst [vmem:[#allocation2 + $0x7a8] sm:$0xf] 0
          %808 = vst [vmem:[#allocation2 + $0x7ac] sm:$0xf] 0
          %809 = vst [vmem:[#allocation2 + $0x7b0] sm:$0xf] 0
          %810 = vst [vmem:[#allocation2 + $0x7b4] sm:$0xf] 0
          %811 = vst [vmem:[#allocation2 + $0x7b8] sm:$0xf] 0
          %812 = vst [vmem:[#allocation2 + $0x7bc] sm:$0xf] 0
          %813 = vst [vmem:[#allocation2 + $0x7c0] sm:$0xf] 0
          %814 = vst [vmem:[#allocation2 + $0x7c4] sm:$0xf] 0
          %815 = vst [vmem:[#allocation2 + $0x7c8] sm:$0xf] 0
          %816 = vst [vmem:[#allocation2 + $0x7cc] sm:$0xf] 0
          %817 = vst [vmem:[#allocation2 + $0x7d0] sm:$0xf] 0
          %818 = vst [vmem:[#allocation2 + $0x7d4] sm:$0xf] 0
          %819 = vst [vmem:[#allocation2 + $0x7d8] sm:$0xf] 0
          %820 = vst [vmem:[#allocation2 + $0x7dc] sm:$0xf] 0
          %821 = vst [vmem:[#allocation2 + $0x7e0] sm:$0xf] 0
          %822 = vst [vmem:[#allocation2 + $0x7e4] sm:$0xf] 0
          %823 = vst [vmem:[#allocation2 + $0x7e8] sm:$0xf] 0
          %824 = vst [vmem:[#allocation2 + $0x7ec] sm:$0xf] 0
          %825 = vst [vmem:[#allocation2 + $0x7f0] sm:$0xf] 0
          %826 = vst [vmem:[#allocation2 + $0x7f4] sm:$0xf] 0
          %827 = vst [vmem:[#allocation2 + $0x7f8] sm:$0xf] 0
          %828 = vst [vmem:[#allocation2 + $0x7fc] sm:$0xf] 0
          %829 = vst [vmem:[#allocation2 + $0x800] sm:$0xf] 0
          %830 = vst [vmem:[#allocation2 + $0x804] sm:$0xf] 0
          %831 = vst [vmem:[#allocation2 + $0x808] sm:$0xf] 0
          %832 = vst [vmem:[#allocation2 + $0x80c] sm:$0xf] 0
          %833 = vst [vmem:[#allocation2 + $0x810] sm:$0xf] 0
          %834 = vst [vmem:[#allocation2 + $0x814] sm:$0xf] 0
          %835 = vst [vmem:[#allocation2 + $0x818] sm:$0xf] 0
          %836 = vst [vmem:[#allocation2 + $0x81c] sm:$0xf] 0
          %v837 = vld [vmem:[%s268] sm:$0xf]
          %v838 = vld [vmem:[%s268 + $0x4] sm:$0xf]
          %v839 = vld [vmem:[%s268 + $0x8] sm:$0xf]
          %v840 = vld [vmem:[%s268 + $0xc] sm:$0xf]
          %v841 = vld [vmem:[%s268 + $0x10] sm:$0xf]
          %v842 = vld [vmem:[%s268 + $0x14] sm:$0xf]
          %v843 = vld [vmem:[%s268 + $0x18] sm:$0xf]
          %v844 = vld [vmem:[%s268 + $0x1c] sm:$0xf]
          %v845 = vld [vmem:[%s268 + $0x20] sm:$0xf]
          %v846 = vld [vmem:[%s268 + $0x24] sm:$0xf]
          %v847 = vld [vmem:[%s268 + $0x28] sm:$0xf]
          %v848 = vld [vmem:[%s268 + $0x2c] sm:$0xf]
          %v849 = vld [vmem:[%s268 + $0x30] sm:$0xf]
          %v850 = vld [vmem:[%s268 + $0x34] sm:$0xf]
          %v851 = vld [vmem:[%s268 + $0x38] sm:$0xf]
          %v852 = vld [vmem:[%s268 + $0x3c] sm:$0xf]
          %v853 = vld [vmem:[%s268 + $0x40] sm:$0xf]
          %v854 = vld [vmem:[%s268 + $0x44] sm:$0xf]
          %v855 = vld [vmem:[%s268 + $0x48] sm:$0xf]
          %v856 = vld [vmem:[%s268 + $0x4c] sm:$0xf]
          %v857 = vld [vmem:[%s268 + $0x50] sm:$0xf]
          %v858 = vld [vmem:[%s268 + $0x54] sm:$0xf]
          %v859 = vld [vmem:[%s268 + $0x58] sm:$0xf]
          %v860 = vld [vmem:[%s268 + $0x5c] sm:$0xf]
          %v861 = vld [vmem:[%s268 + $0x60] sm:$0xf]
          %v862 = vld [vmem:[%s268 + $0x64] sm:$0xf]
          %v863 = vld [vmem:[%s268 + $0x68] sm:$0xf]
          %v864 = vld [vmem:[%s268 + $0x6c] sm:$0xf]
          %v865 = vld [vmem:[%s268 + $0x70] sm:$0xf]
          %v866 = vld [vmem:[%s268 + $0x74] sm:$0xf]
          %v867 = vld [vmem:[%s268 + $0x78] sm:$0xf]
          %v868 = vld [vmem:[%s268 + $0x7c] sm:$0xf]
          %s869 = scalar_lea.vmem [#allocation2], 720
          %870 = vst [vmem:[%s869 + $0x10] sm:$0xf] %v837
          %871 = vst [vmem:[%s869 + $0x14] sm:$0xf] %v838
          %872 = vst [vmem:[%s869 + $0x38] sm:$0xf] %v839
          %873 = vst [vmem:[%s869 + $0x3c] sm:$0xf] %v840
          %874 = vst [vmem:[%s869 + $0x60] sm:$0xf] %v841
          %875 = vst [vmem:[%s869 + $0x64] sm:$0xf] %v842
          %876 = vst [vmem:[%s869 + $0x88] sm:$0xf] %v843
          %877 = vst [vmem:[%s869 + $0x8c] sm:$0xf] %v844
          %878 = vst [vmem:[%s869 + $0xb0] sm:$0xf] %v845
          %879 = vst [vmem:[%s869 + $0xb4] sm:$0xf] %v846
          %880 = vst [vmem:[%s869 + $0xd8] sm:$0xf] %v847
          %881 = vst [vmem:[%s869 + $0xdc] sm:$0xf] %v848
          %882 = vst [vmem:[%s869 + $0x100] sm:$0xf] %v849
          %883 = vst [vmem:[%s869 + $0x104] sm:$0xf] %v850
          %884 = vst [vmem:[%s869 + $0x128] sm:$0xf] %v851
          %885 = vst [vmem:[%s869 + $0x12c] sm:$0xf] %v852
          %886 = vst [vmem:[%s869 + $0x150] sm:$0xf] %v853
          %887 = vst [vmem:[%s869 + $0x154] sm:$0xf] %v854
          %888 = vst [vmem:[%s869 + $0x178] sm:$0xf] %v855
          %889 = vst [vmem:[%s869 + $0x17c] sm:$0xf] %v856
          %890 = vst [vmem:[%s869 + $0x1a0] sm:$0xf] %v857
          %891 = vst [vmem:[%s869 + $0x1a4] sm:$0xf] %v858
          %892 = vst [vmem:[%s869 + $0x1c8] sm:$0xf] %v859
          %893 = vst [vmem:[%s869 + $0x1cc] sm:$0xf] %v860
          %894 = vst [vmem:[%s869 + $0x1f0] sm:$0xf] %v861
          %895 = vst [vmem:[%s869 + $0x1f4] sm:$0xf] %v862
          %896 = vst [vmem:[%s869 + $0x218] sm:$0xf] %v863
          %897 = vst [vmem:[%s869 + $0x21c] sm:$0xf] %v864
          %898 = vst [vmem:[%s869 + $0x240] sm:$0xf] %v865
          %899 = vst [vmem:[%s869 + $0x244] sm:$0xf] %v866
          %900 = vst [vmem:[%s869 + $0x268] sm:$0xf] %v867
          %901 = vst [vmem:[%s869 + $0x26c] sm:$0xf] %v868
        $region64: #{tpu_custom_call.1} parent=39 // pred_fallthru
          _
        %v902 = vld [vmem:[#allocation10] sm:$0x1]
        %v904 = vlaneseq
        %v905 = vshrl.u32 %v904, 7
        %v906 = vsub.s32 0, %v905
        %v907 = vrot.slane %v902, %v906
        %909 = vst [vmem:[#allocation4] sm:$0xff] %v907
        %910 = vst [vmem:[#allocation4 + $0x8] sm:$0xff] %v907
        %911 = vst [vmem:[#allocation4 + $0x10] sm:$0xff] %v907
        %912 = vst [vmem:[#allocation4 + $0x18] sm:$0xff] %v907
        %913 = vst [vmem:[#allocation4 + $0x20] sm:$0xff] %v907
        %914 = vst [vmem:[#allocation4 + $0x28] sm:$0xff] %v907
        %915 = vst [vmem:[#allocation4 + $0x30] sm:$0xff] %v907
        %916 = vst [vmem:[#allocation4 + $0x38] sm:$0xff] %v907
        %917 = vst [vmem:[#allocation4 + $0x40] sm:$0xff] %v907
        %918 = vst [vmem:[#allocation4 + $0x48] sm:$0xff] %v907
        %919 = vst [vmem:[#allocation4 + $0x50] sm:$0xff] %v907
        %920 = vst [vmem:[#allocation4 + $0x58] sm:$0xff] %v907
        %921 = vst [vmem:[#allocation4 + $0x60] sm:$0xff] %v907
        %922 = vst [vmem:[#allocation4 + $0x68] sm:$0xff] %v907
        %923 = vst [vmem:[#allocation4 + $0x70] sm:$0xff] %v907
        %924 = vst [vmem:[#allocation4 + $0x78] sm:$0xff] %v907
        %s925 = smul.u32 %s29, 8
        %s926 = sadd.s32 %s925, 17
        %s927 = smul.u32 %s926, 10
        %s928 = smul.addr %s927, 4
        %s929 = scalar_lea.vmem [#allocation2], %s928
        %v930 = vld [vmem:[%s929 + $0xc] sm:$0x8]
        %v931 = vld [vmem:[%s929 + $0x10] sm:$0xf]
        %v932 = vld [vmem:[%s929 + $0x14] sm:$0xf]
        %v933 = vld [vmem:[%s929 + $0x34] sm:$0x8]
        %v934 = vld [vmem:[%s929 + $0x38] sm:$0xf]
        %v935 = vld [vmem:[%s929 + $0x3c] sm:$0xf]
        %v936 = vld [vmem:[%s929 + $0x5c] sm:$0x8]
        %v937 = vld [vmem:[%s929 + $0x60] sm:$0xf]
        %v938 = vld [vmem:[%s929 + $0x64] sm:$0xf]
        %v939 = vld [vmem:[%s929 + $0x84] sm:$0x8]
        %v940 = vld [vmem:[%s929 + $0x88] sm:$0xf]
        %v941 = vld [vmem:[%s929 + $0x8c] sm:$0xf]
        %v942 = vld [vmem:[%s929 + $0xac] sm:$0x8]
        %v943 = vld [vmem:[%s929 + $0xb0] sm:$0xf]
        %v944 = vld [vmem:[%s929 + $0xb4] sm:$0xf]
        %v945 = vld [vmem:[%s929 + $0xd4] sm:$0x8]
        %v946 = vld [vmem:[%s929 + $0xd8] sm:$0xf]
        %v947 = vld [vmem:[%s929 + $0xdc] sm:$0xf]
        %v948 = vld [vmem:[%s929 + $0xfc] sm:$0x8]
        %v949 = vld [vmem:[%s929 + $0x100] sm:$0xf]
        %v950 = vld [vmem:[%s929 + $0x104] sm:$0xf]
        %v951 = vld [vmem:[%s929 + $0x124] sm:$0x8]
        %v952 = vld [vmem:[%s929 + $0x128] sm:$0xf]
        %v953 = vld [vmem:[%s929 + $0x12c] sm:$0xf]
        %vm954 = vsmask.f32 256
        %vm955 = vsmask.f32 4368
        %vm956 = vmor %vm954, %vm955
        %v958 = vshrl.u32 %v930, 16
        %v960 = vrot.slane %v958, 7
        %v961 = vrot.slane %v960, 4
        %v963 = vshrl.u32 %v931, 16
        %v965 = vrot.slane %v963, 7
        %v966 = vshll.u32 %v931, 16
        %v968 = vor.u32 %v965, %v966
        %v969 = vsel %vm956, %v961, %v968
        %v970 = vrot.slane %v965, 4
        %v972 = vshrl.u32 %v932, 16
        %v974 = vrot.slane %v972, 7
        %v975 = vshll.u32 %v932, 16
        %v977 = vor.u32 %v974, %v975
        %v978 = vsel %vm956, %v970, %v977
        %v980 = vshrl.u32 %v933, 16
        %v982 = vrot.slane %v980, 7
        %v983 = vrot.slane %v982, 4
        %v985 = vshrl.u32 %v934, 16
        %v987 = vrot.slane %v985, 7
        %v988 = vshll.u32 %v934, 16
        %v990 = vor.u32 %v987, %v988
        %v991 = vsel %vm956, %v983, %v990
        %v992 = vrot.slane %v987, 4
        %v994 = vshrl.u32 %v935, 16
        %v996 = vrot.slane %v994, 7
        %v997 = vshll.u32 %v935, 16
        %v999 = vor.u32 %v996, %v997
        %v1000 = vsel %vm956, %v992, %v999
        %v1002 = vshrl.u32 %v936, 16
        %v1004 = vrot.slane %v1002, 7
        %v1005 = vrot.slane %v1004, 4
        %v1007 = vshrl.u32 %v937, 16
        %v1009 = vrot.slane %v1007, 7
        %v1010 = vshll.u32 %v937, 16
        %v1012 = vor.u32 %v1009, %v1010
        %v1013 = vsel %vm956, %v1005, %v1012
        %v1014 = vrot.slane %v1009, 4
        %v1016 = vshrl.u32 %v938, 16
        %v1018 = vrot.slane %v1016, 7
        %v1019 = vshll.u32 %v938, 16
        %v1021 = vor.u32 %v1018, %v1019
        %v1022 = vsel %vm956, %v1014, %v1021
        %v1024 = vshrl.u32 %v939, 16
        %v1026 = vrot.slane %v1024, 7
        %v1027 = vrot.slane %v1026, 4
        %v1029 = vshrl.u32 %v940, 16
        %v1031 = vrot.slane %v1029, 7
        %v1032 = vshll.u32 %v940, 16
        %v1034 = vor.u32 %v1031, %v1032
        %v1035 = vsel %vm956, %v1027, %v1034
        %v1036 = vrot.slane %v1031, 4
        %v1038 = vshrl.u32 %v941, 16
        %v1040 = vrot.slane %v1038, 7
        %v1041 = vshll.u32 %v941, 16
        %v1043 = vor.u32 %v1040, %v1041
        %v1044 = vsel %vm956, %v1036, %v1043
        %v1046 = vshrl.u32 %v942, 16
        %v1048 = vrot.slane %v1046, 7
        %v1049 = vrot.slane %v1048, 4
        %v1051 = vshrl.u32 %v943, 16
        %v1053 = vrot.slane %v1051, 7
        %v1054 = vshll.u32 %v943, 16
        %v1056 = vor.u32 %v1053, %v1054
        %v1057 = vsel %vm956, %v1049, %v1056
        %v1058 = vrot.slane %v1053, 4
        %v1060 = vshrl.u32 %v944, 16
        %v1062 = vrot.slane %v1060, 7
        %v1063 = vshll.u32 %v944, 16
        %v1065 = vor.u32 %v1062, %v1063
        %v1066 = vsel %vm956, %v1058, %v1065
        %v1068 = vshrl.u32 %v945, 16
        %v1070 = vrot.slane %v1068, 7
        %v1071 = vrot.slane %v1070, 4
        %v1073 = vshrl.u32 %v946, 16
        %v1075 = vrot.slane %v1073, 7
        %v1076 = vshll.u32 %v946, 16
        %v1078 = vor.u32 %v1075, %v1076
        %v1079 = vsel %vm956, %v1071, %v1078
        %v1080 = vrot.slane %v1075, 4
        %v1082 = vshrl.u32 %v947, 16
        %v1084 = vrot.slane %v1082, 7
        %v1085 = vshll.u32 %v947, 16
        %v1087 = vor.u32 %v1084, %v1085
        %v1088 = vsel %vm956, %v1080, %v1087
        %v1090 = vshrl.u32 %v948, 16
        %v1092 = vrot.slane %v1090, 7
        %v1093 = vrot.slane %v1092, 4
        %v1095 = vshrl.u32 %v949, 16
        %v1097 = vrot.slane %v1095, 7
        %v1098 = vshll.u32 %v949, 16
        %v1100 = vor.u32 %v1097, %v1098
        %v1101 = vsel %vm956, %v1093, %v1100
        %v1102 = vrot.slane %v1097, 4
        %v1104 = vshrl.u32 %v950, 16
        %v1106 = vrot.slane %v1104, 7
        %v1107 = vshll.u32 %v950, 16
        %v1109 = vor.u32 %v1106, %v1107
        %v1110 = vsel %vm956, %v1102, %v1109
        %v1112 = vshrl.u32 %v951, 16
        %v1114 = vrot.slane %v1112, 7
        %v1115 = vrot.slane %v1114, 4
        %v1117 = vshrl.u32 %v952, 16
        %v1119 = vrot.slane %v1117, 7
        %v1120 = vshll.u32 %v952, 16
        %v1122 = vor.u32 %v1119, %v1120
        %v1123 = vsel %vm956, %v1115, %v1122
        %v1124 = vrot.slane %v1119, 4
        %v1126 = vshrl.u32 %v953, 16
        %v1128 = vrot.slane %v1126, 7
        %v1129 = vshll.u32 %v953, 16
        %v1131 = vor.u32 %v1128, %v1129
        %v1132 = vsel %vm956, %v1124, %v1131
        %1149 = vst [vmem:[#allocation3] sm:$0xf] %v969
        %1150 = vst [vmem:[#allocation3 + $0x24] sm:$0xf] %v978
        %1151 = vst [vmem:[#allocation3 + $0x48] sm:$0xf] %v991
        %1152 = vst [vmem:[#allocation3 + $0x6c] sm:$0xf] %v1000
        %1153 = vst [vmem:[#allocation3 + $0x90] sm:$0xf] %v1013
        %1154 = vst [vmem:[#allocation3 + $0xb4] sm:$0xf] %v1022
        %1155 = vst [vmem:[#allocation3 + $0xd8] sm:$0xf] %v1035
        %1156 = vst [vmem:[#allocation3 + $0xfc] sm:$0xf] %v1044
        %1157 = vst [vmem:[#allocation3 + $0x120] sm:$0xf] %v1057
        %1158 = vst [vmem:[#allocation3 + $0x144] sm:$0xf] %v1066
        %1159 = vst [vmem:[#allocation3 + $0x168] sm:$0xf] %v1079
        %1160 = vst [vmem:[#allocation3 + $0x18c] sm:$0xf] %v1088
        %1161 = vst [vmem:[#allocation3 + $0x1b0] sm:$0xf] %v1101
        %1162 = vst [vmem:[#allocation3 + $0x1d4] sm:$0xf] %v1110
        %1163 = vst [vmem:[#allocation3 + $0x1f8] sm:$0xf] %v1123
        %1164 = vst [vmem:[#allocation3 + $0x21c] sm:$0xf] %v1132
        %v1165 = vld [vmem:[%s929 + $0x10] sm:$0xf]
        %v1166 = vld [vmem:[%s929 + $0x14] sm:$0xf]
        %v1167 = vld [vmem:[%s929 + $0x38] sm:$0xf]
        %v1168 = vld [vmem:[%s929 + $0x3c] sm:$0xf]
        %v1169 = vld [vmem:[%s929 + $0x60] sm:$0xf]
        %v1170 = vld [vmem:[%s929 + $0x64] sm:$0xf]
        %v1171 = vld [vmem:[%s929 + $0x88] sm:$0xf]
        %v1172 = vld [vmem:[%s929 + $0x8c] sm:$0xf]
        %v1173 = vld [vmem:[%s929 + $0xb0] sm:$0xf]
        %v1174 = vld [vmem:[%s929 + $0xb4] sm:$0xf]
        %v1175 = vld [vmem:[%s929 + $0xd8] sm:$0xf]
        %v1176 = vld [vmem:[%s929 + $0xdc] sm:$0xf]
        %v1177 = vld [vmem:[%s929 + $0x100] sm:$0xf]
        %v1178 = vld [vmem:[%s929 + $0x104] sm:$0xf]
        %v1179 = vld [vmem:[%s929 + $0x128] sm:$0xf]
        %v1180 = vld [vmem:[%s929 + $0x12c] sm:$0xf]
        %1181 = vst [vmem:[#allocation3 + $0x4] sm:$0xf] %v1165
        %1182 = vst [vmem:[#allocation3 + $0x28] sm:$0xf] %v1166
        %1183 = vst [vmem:[#allocation3 + $0x4c] sm:$0xf] %v1167
        %1184 = vst [vmem:[#allocation3 + $0x70] sm:$0xf] %v1168
        %1185 = vst [vmem:[#allocation3 + $0x94] sm:$0xf] %v1169
        %1186 = vst [vmem:[#allocation3 + $0xb8] sm:$0xf] %v1170
        %1187 = vst [vmem:[#allocation3 + $0xdc] sm:$0xf] %v1171
        %1188 = vst [vmem:[#allocation3 + $0x100] sm:$0xf] %v1172
        %1189 = vst [vmem:[#allocation3 + $0x124] sm:$0xf] %v1173
        %1190 = vst [vmem:[#allocation3 + $0x148] sm:$0xf] %v1174
        %1191 = vst [vmem:[#allocation3 + $0x16c] sm:$0xf] %v1175
        %1192 = vst [vmem:[#allocation3 + $0x190] sm:$0xf] %v1176
        %1193 = vst [vmem:[#allocation3 + $0x1b4] sm:$0xf] %v1177
        %1194 = vst [vmem:[#allocation3 + $0x1d8] sm:$0xf] %v1178
        %1195 = vst [vmem:[#allocation3 + $0x1fc] sm:$0xf] %v1179
        %1196 = vst [vmem:[#allocation3 + $0x220] sm:$0xf] %v1180
        %v1197 = vld [vmem:[%s929 + $0x10] sm:$0xf]
        %v1198 = vld [vmem:[%s929 + $0x14] sm:$0xf]
        %v1199 = vld [vmem:[%s929 + $0x18] sm:$0x1]
        %v1200 = vld [vmem:[%s929 + $0x38] sm:$0xf]
        %v1201 = vld [vmem:[%s929 + $0x3c] sm:$0xf]
        %v1202 = vld [vmem:[%s929 + $0x40] sm:$0x1]
        %v1203 = vld [vmem:[%s929 + $0x60] sm:$0xf]
        %v1204 = vld [vmem:[%s929 + $0x64] sm:$0xf]
        %v1205 = vld [vmem:[%s929 + $0x68] sm:$0x1]
        %v1206 = vld [vmem:[%s929 + $0x88] sm:$0xf]
        %v1207 = vld [vmem:[%s929 + $0x8c] sm:$0xf]
        %v1208 = vld [vmem:[%s929 + $0x90] sm:$0x1]
        %v1209 = vld [vmem:[%s929 + $0xb0] sm:$0xf]
        %v1210 = vld [vmem:[%s929 + $0xb4] sm:$0xf]
        %v1211 = vld [vmem:[%s929 + $0xb8] sm:$0x1]
        %v1212 = vld [vmem:[%s929 + $0xd8] sm:$0xf]
        %v1213 = vld [vmem:[%s929 + $0xdc] sm:$0xf]
        %v1214 = vld [vmem:[%s929 + $0xe0] sm:$0x1]
        %v1215 = vld [vmem:[%s929 + $0x100] sm:$0xf]
        %v1216 = vld [vmem:[%s929 + $0x104] sm:$0xf]
        %v1217 = vld [vmem:[%s929 + $0x108] sm:$0x1]
        %v1218 = vld [vmem:[%s929 + $0x128] sm:$0xf]
        %v1219 = vld [vmem:[%s929 + $0x12c] sm:$0xf]
        %v1220 = vld [vmem:[%s929 + $0x130] sm:$0x1]
        %vm1221 = vsmask.f32 3328
        %vm1222 = vsmask.f32 7440
        %vm1223 = vmor %vm1221, %vm1222
        %v1225 = vshrl.u32 %v1197, 16
        %v1227 = vrot.slane %v1225, 4
        %v1228 = vshll.u32 %v1197, 16
        %v1230 = vrot.slane %v1228, 5
        %v1231 = vor.u32 %v1227, %v1230
        %v1232 = vrot.slane %v1231, 4
        %v1234 = vshll.u32 %v1198, 16
        %v1236 = vrot.slane %v1234, 5
        %v1237 = vsel %vm1223, %v1232, %v1236
        %v1238 = vshrl.u32 %v1198, 16
        %v1240 = vrot.slane %v1238, 4
        %v1241 = vor.u32 %v1240, %v1236
        %v1242 = vrot.slane %v1241, 4
        %v1244 = vshll.u32 %v1199, 16
        %v1246 = vrot.slane %v1244, 5
        %v1247 = vsel %vm1223, %v1242, %v1246
        %v1249 = vshrl.u32 %v1200, 16
        %v1251 = vrot.slane %v1249, 4
        %v1252 = vshll.u32 %v1200, 16
        %v1254 = vrot.slane %v1252, 5
        %v1255 = vor.u32 %v1251, %v1254
        %v1256 = vrot.slane %v1255, 4
        %v1258 = vshll.u32 %v1201, 16
        %v1260 = vrot.slane %v1258, 5
        %v1261 = vsel %vm1223, %v1256, %v1260
        %v1262 = vshrl.u32 %v1201, 16
        %v1264 = vrot.slane %v1262, 4
        %v1265 = vor.u32 %v1264, %v1260
        %v1266 = vrot.slane %v1265, 4
        %v1268 = vshll.u32 %v1202, 16
        %v1270 = vrot.slane %v1268, 5
        %v1271 = vsel %vm1223, %v1266, %v1270
        %v1273 = vshrl.u32 %v1203, 16
        %v1275 = vrot.slane %v1273, 4
        %v1276 = vshll.u32 %v1203, 16
        %v1278 = vrot.slane %v1276, 5
        %v1279 = vor.u32 %v1275, %v1278
        %v1280 = vrot.slane %v1279, 4
        %v1282 = vshll.u32 %v1204, 16
        %v1284 = vrot.slane %v1282, 5
        %v1285 = vsel %vm1223, %v1280, %v1284
        %v1286 = vshrl.u32 %v1204, 16
        %v1288 = vrot.slane %v1286, 4
        %v1289 = vor.u32 %v1288, %v1284
        %v1290 = vrot.slane %v1289, 4
        %v1292 = vshll.u32 %v1205, 16
        %v1294 = vrot.slane %v1292, 5
        %v1295 = vsel %vm1223, %v1290, %v1294
        %v1297 = vshrl.u32 %v1206, 16
        %v1299 = vrot.slane %v1297, 4
        %v1300 = vshll.u32 %v1206, 16
        %v1302 = vrot.slane %v1300, 5
        %v1303 = vor.u32 %v1299, %v1302
        %v1304 = vrot.slane %v1303, 4
        %v1306 = vshll.u32 %v1207, 16
        %v1308 = vrot.slane %v1306, 5
        %v1309 = vsel %vm1223, %v1304, %v1308
        %v1310 = vshrl.u32 %v1207, 16
        %v1312 = vrot.slane %v1310, 4
        %v1313 = vor.u32 %v1312, %v1308
        %v1314 = vrot.slane %v1313, 4
        %v1316 = vshll.u32 %v1208, 16
        %v1318 = vrot.slane %v1316, 5
        %v1319 = vsel %vm1223, %v1314, %v1318
        %v1321 = vshrl.u32 %v1209, 16
        %v1323 = vrot.slane %v1321, 4
        %v1324 = vshll.u32 %v1209, 16
        %v1326 = vrot.slane %v1324, 5
        %v1327 = vor.u32 %v1323, %v1326
        %v1328 = vrot.slane %v1327, 4
        %v1330 = vshll.u32 %v1210, 16
        %v1332 = vrot.slane %v1330, 5
        %v1333 = vsel %vm1223, %v1328, %v1332
        %v1334 = vshrl.u32 %v1210, 16
        %v1336 = vrot.slane %v1334, 4
        %v1337 = vor.u32 %v1336, %v1332
        %v1338 = vrot.slane %v1337, 4
        %v1340 = vshll.u32 %v1211, 16
        %v1342 = vrot.slane %v1340, 5
        %v1343 = vsel %vm1223, %v1338, %v1342
        %v1345 = vshrl.u32 %v1212, 16
        %v1347 = vrot.slane %v1345, 4
        %v1348 = vshll.u32 %v1212, 16
        %v1350 = vrot.slane %v1348, 5
        %v1351 = vor.u32 %v1347, %v1350
        %v1352 = vrot.slane %v1351, 4
        %v1354 = vshll.u32 %v1213, 16
        %v1356 = vrot.slane %v1354, 5
        %v1357 = vsel %vm1223, %v1352, %v1356
        %v1358 = vshrl.u32 %v1213, 16
        %v1360 = vrot.slane %v1358, 4
        %v1361 = vor.u32 %v1360, %v1356
        %v1362 = vrot.slane %v1361, 4
        %v1364 = vshll.u32 %v1214, 16
        %v1366 = vrot.slane %v1364, 5
        %v1367 = vsel %vm1223, %v1362, %v1366
        %v1369 = vshrl.u32 %v1215, 16
        %v1371 = vrot.slane %v1369, 4
        %v1372 = vshll.u32 %v1215, 16
        %v1374 = vrot.slane %v1372, 5
        %v1375 = vor.u32 %v1371, %v1374
        %v1376 = vrot.slane %v1375, 4
        %v1378 = vshll.u32 %v1216, 16
        %v1380 = vrot.slane %v1378, 5
        %v1381 = vsel %vm1223, %v1376, %v1380
        %v1382 = vshrl.u32 %v1216, 16
        %v1384 = vrot.slane %v1382, 4
        %v1385 = vor.u32 %v1384, %v1380
        %v1386 = vrot.slane %v1385, 4
        %v1388 = vshll.u32 %v1217, 16
        %v1390 = vrot.slane %v1388, 5
        %v1391 = vsel %vm1223, %v1386, %v1390
        %v1393 = vshrl.u32 %v1218, 16
        %v1395 = vrot.slane %v1393, 4
        %v1396 = vshll.u32 %v1218, 16
        %v1398 = vrot.slane %v1396, 5
        %v1399 = vor.u32 %v1395, %v1398
        %v1400 = vrot.slane %v1399, 4
        %v1402 = vshll.u32 %v1219, 16
        %v1404 = vrot.slane %v1402, 5
        %v1405 = vsel %vm1223, %v1400, %v1404
        %v1406 = vshrl.u32 %v1219, 16
        %v1408 = vrot.slane %v1406, 4
        %v1409 = vor.u32 %v1408, %v1404
        %v1410 = vrot.slane %v1409, 4
        %v1412 = vshll.u32 %v1220, 16
        %v1414 = vrot.slane %v1412, 5
        %v1415 = vsel %vm1223, %v1410, %v1414
        %1432 = vst [vmem:[#allocation3 + $0x8] sm:$0xf] %v1237
        %1433 = vst [vmem:[#allocation3 + $0x2c] sm:$0xf] %v1247
        %1434 = vst [vmem:[#allocation3 + $0x50] sm:$0xf] %v1261
        %1435 = vst [vmem:[#allocation3 + $0x74] sm:$0xf] %v1271
        %1436 = vst [vmem:[#allocation3 + $0x98] sm:$0xf] %v1285
        %1437 = vst [vmem:[#allocation3 + $0xbc] sm:$0xf] %v1295
        %1438 = vst [vmem:[#allocation3 + $0xe0] sm:$0xf] %v1309
        %1439 = vst [vmem:[#allocation3 + $0x104] sm:$0xf] %v1319
        %1440 = vst [vmem:[#allocation3 + $0x128] sm:$0xf] %v1333
        %1441 = vst [vmem:[#allocation3 + $0x14c] sm:$0xf] %v1343
        %1442 = vst [vmem:[#allocation3 + $0x170] sm:$0xf] %v1357
        %1443 = vst [vmem:[#allocation3 + $0x194] sm:$0xf] %v1367
        %1444 = vst [vmem:[#allocation3 + $0x1b8] sm:$0xf] %v1381
        %1445 = vst [vmem:[#allocation3 + $0x1dc] sm:$0xf] %v1391
        %1446 = vst [vmem:[#allocation3 + $0x200] sm:$0xf] %v1405
        %1447 = vst [vmem:[#allocation3 + $0x224] sm:$0xf] %v1415
        %s1448 = sadd.s32 %s925, 18
        %s1449 = smul.u32 %s1448, 10
        %s1450 = smul.addr %s1449, 4
        %s1451 = scalar_lea.vmem [#allocation2], %s1450
        %v1452 = vld [vmem:[%s1451 + $0xc] sm:$0x8]
        %v1453 = vld [vmem:[%s1451 + $0x10] sm:$0xf]
        %v1454 = vld [vmem:[%s1451 + $0x14] sm:$0xf]
        %v1455 = vld [vmem:[%s1451 + $0x34] sm:$0x8]
        %v1456 = vld [vmem:[%s1451 + $0x38] sm:$0xf]
        %v1457 = vld [vmem:[%s1451 + $0x3c] sm:$0xf]
        %v1458 = vld [vmem:[%s1451 + $0x5c] sm:$0x8]
        %v1459 = vld [vmem:[%s1451 + $0x60] sm:$0xf]
        %v1460 = vld [vmem:[%s1451 + $0x64] sm:$0xf]
        %v1461 = vld [vmem:[%s1451 + $0x84] sm:$0x8]
        %v1462 = vld [vmem:[%s1451 + $0x88] sm:$0xf]
        %v1463 = vld [vmem:[%s1451 + $0x8c] sm:$0xf]
        %v1464 = vld [vmem:[%s1451 + $0xac] sm:$0x8]
        %v1465 = vld [vmem:[%s1451 + $0xb0] sm:$0xf]
        %v1466 = vld [vmem:[%s1451 + $0xb4] sm:$0xf]
        %v1467 = vld [vmem:[%s1451 + $0xd4] sm:$0x8]
        %v1468 = vld [vmem:[%s1451 + $0xd8] sm:$0xf]
        %v1469 = vld [vmem:[%s1451 + $0xdc] sm:$0xf]
        %v1470 = vld [vmem:[%s1451 + $0xfc] sm:$0x8]
        %v1471 = vld [vmem:[%s1451 + $0x100] sm:$0xf]
        %v1472 = vld [vmem:[%s1451 + $0x104] sm:$0xf]
        %v1473 = vld [vmem:[%s1451 + $0x124] sm:$0x8]
        %v1474 = vld [vmem:[%s1451 + $0x128] sm:$0xf]
        %v1475 = vld [vmem:[%s1451 + $0x12c] sm:$0xf]
        %v1477 = vshrl.u32 %v1452, 16
        %v1479 = vrot.slane %v1477, 7
        %v1480 = vrot.slane %v1479, 4
        %v1482 = vshrl.u32 %v1453, 16
        %v1484 = vrot.slane %v1482, 7
        %v1485 = vshll.u32 %v1453, 16
        %v1487 = vor.u32 %v1484, %v1485
        %v1488 = vsel %vm956, %v1480, %v1487
        %v1489 = vrot.slane %v1484, 4
        %v1491 = vshrl.u32 %v1454, 16
        %v1493 = vrot.slane %v1491, 7
        %v1494 = vshll.u32 %v1454, 16
        %v1496 = vor.u32 %v1493, %v1494
        %v1497 = vsel %vm956, %v1489, %v1496
        %v1499 = vshrl.u32 %v1455, 16
        %v1501 = vrot.slane %v1499, 7
        %v1502 = vrot.slane %v1501, 4
        %v1504 = vshrl.u32 %v1456, 16
        %v1506 = vrot.slane %v1504, 7
        %v1507 = vshll.u32 %v1456, 16
        %v1509 = vor.u32 %v1506, %v1507
        %v1510 = vsel %vm956, %v1502, %v1509
        %v1511 = vrot.slane %v1506, 4
        %v1513 = vshrl.u32 %v1457, 16
        %v1515 = vrot.slane %v1513, 7
        %v1516 = vshll.u32 %v1457, 16
        %v1518 = vor.u32 %v1515, %v1516
        %v1519 = vsel %vm956, %v1511, %v1518
        %v1521 = vshrl.u32 %v1458, 16
        %v1523 = vrot.slane %v1521, 7
        %v1524 = vrot.slane %v1523, 4
        %v1526 = vshrl.u32 %v1459, 16
        %v1528 = vrot.slane %v1526, 7
        %v1529 = vshll.u32 %v1459, 16
        %v1531 = vor.u32 %v1528, %v1529
        %v1532 = vsel %vm956, %v1524, %v1531
        %v1533 = vrot.slane %v1528, 4
        %v1535 = vshrl.u32 %v1460, 16
        %v1537 = vrot.slane %v1535, 7
        %v1538 = vshll.u32 %v1460, 16
        %v1540 = vor.u32 %v1537, %v1538
        %v1541 = vsel %vm956, %v1533, %v1540
        %v1543 = vshrl.u32 %v1461, 16
        %v1545 = vrot.slane %v1543, 7
        %v1546 = vrot.slane %v1545, 4
        %v1548 = vshrl.u32 %v1462, 16
        %v1550 = vrot.slane %v1548, 7
        %v1551 = vshll.u32 %v1462, 16
        %v1553 = vor.u32 %v1550, %v1551
        %v1554 = vsel %vm956, %v1546, %v1553
        %v1555 = vrot.slane %v1550, 4
        %v1557 = vshrl.u32 %v1463, 16
        %v1559 = vrot.slane %v1557, 7
        %v1560 = vshll.u32 %v1463, 16
        %v1562 = vor.u32 %v1559, %v1560
        %v1563 = vsel %vm956, %v1555, %v1562
        %v1565 = vshrl.u32 %v1464, 16
        %v1567 = vrot.slane %v1565, 7
        %v1568 = vrot.slane %v1567, 4
        %v1570 = vshrl.u32 %v1465, 16
        %v1572 = vrot.slane %v1570, 7
        %v1573 = vshll.u32 %v1465, 16
        %v1575 = vor.u32 %v1572, %v1573
        %v1576 = vsel %vm956, %v1568, %v1575
        %v1577 = vrot.slane %v1572, 4
        %v1579 = vshrl.u32 %v1466, 16
        %v1581 = vrot.slane %v1579, 7
        %v1582 = vshll.u32 %v1466, 16
        %v1584 = vor.u32 %v1581, %v1582
        %v1585 = vsel %vm956, %v1577, %v1584
        %v1587 = vshrl.u32 %v1467, 16
        %v1589 = vrot.slane %v1587, 7
        %v1590 = vrot.slane %v1589, 4
        %v1592 = vshrl.u32 %v1468, 16
        %v1594 = vrot.slane %v1592, 7
        %v1595 = vshll.u32 %v1468, 16
        %v1597 = vor.u32 %v1594, %v1595
        %v1598 = vsel %vm956, %v1590, %v1597
        %v1599 = vrot.slane %v1594, 4
        %v1601 = vshrl.u32 %v1469, 16
        %v1603 = vrot.slane %v1601, 7
        %v1604 = vshll.u32 %v1469, 16
        %v1606 = vor.u32 %v1603, %v1604
        %v1607 = vsel %vm956, %v1599, %v1606
        %v1609 = vshrl.u32 %v1470, 16
        %v1611 = vrot.slane %v1609, 7
        %v1612 = vrot.slane %v1611, 4
        %v1614 = vshrl.u32 %v1471, 16
        %v1616 = vrot.slane %v1614, 7
        %v1617 = vshll.u32 %v1471, 16
        %v1619 = vor.u32 %v1616, %v1617
        %v1620 = vsel %vm956, %v1612, %v1619
        %v1621 = vrot.slane %v1616, 4
        %v1623 = vshrl.u32 %v1472, 16
        %v1625 = vrot.slane %v1623, 7
        %v1626 = vshll.u32 %v1472, 16
        %v1628 = vor.u32 %v1625, %v1626
        %v1629 = vsel %vm956, %v1621, %v1628
        %v1631 = vshrl.u32 %v1473, 16
        %v1633 = vrot.slane %v1631, 7
        %v1634 = vrot.slane %v1633, 4
        %v1636 = vshrl.u32 %v1474, 16
        %v1638 = vrot.slane %v1636, 7
        %v1639 = vshll.u32 %v1474, 16
        %v1641 = vor.u32 %v1638, %v1639
        %v1642 = vsel %vm956, %v1634, %v1641
        %v1643 = vrot.slane %v1638, 4
        %v1645 = vshrl.u32 %v1475, 16
        %v1647 = vrot.slane %v1645, 7
        %v1648 = vshll.u32 %v1475, 16
        %v1650 = vor.u32 %v1647, %v1648
        %v1651 = vsel %vm956, %v1643, %v1650
        %1668 = vst [vmem:[#allocation3 + $0xc] sm:$0xf] %v1488
        %1669 = vst [vmem:[#allocation3 + $0x30] sm:$0xf] %v1497
        %1670 = vst [vmem:[#allocation3 + $0x54] sm:$0xf] %v1510
        %1671 = vst [vmem:[#allocation3 + $0x78] sm:$0xf] %v1519
        %1672 = vst [vmem:[#allocation3 + $0x9c] sm:$0xf] %v1532
        %1673 = vst [vmem:[#allocation3 + $0xc0] sm:$0xf] %v1541
        %1674 = vst [vmem:[#allocation3 + $0xe4] sm:$0xf] %v1554
        %1675 = vst [vmem:[#allocation3 + $0x108] sm:$0xf] %v1563
        %1676 = vst [vmem:[#allocation3 + $0x12c] sm:$0xf] %v1576
        %1677 = vst [vmem:[#allocation3 + $0x150] sm:$0xf] %v1585
        %1678 = vst [vmem:[#allocation3 + $0x174] sm:$0xf] %v1598
        %1679 = vst [vmem:[#allocation3 + $0x198] sm:$0xf] %v1607
        %1680 = vst [vmem:[#allocation3 + $0x1bc] sm:$0xf] %v1620
        %1681 = vst [vmem:[#allocation3 + $0x1e0] sm:$0xf] %v1629
        %1682 = vst [vmem:[#allocation3 + $0x204] sm:$0xf] %v1642
        %1683 = vst [vmem:[#allocation3 + $0x228] sm:$0xf] %v1651
        %v1684 = vld [vmem:[%s1451 + $0x10] sm:$0xf]
        %v1685 = vld [vmem:[%s1451 + $0x14] sm:$0xf]
        %v1686 = vld [vmem:[%s1451 + $0x38] sm:$0xf]
        %v1687 = vld [vmem:[%s1451 + $0x3c] sm:$0xf]
        %v1688 = vld [vmem:[%s1451 + $0x60] sm:$0xf]
        %v1689 = vld [vmem:[%s1451 + $0x64] sm:$0xf]
        %v1690 = vld [vmem:[%s1451 + $0x88] sm:$0xf]
        %v1691 = vld [vmem:[%s1451 + $0x8c] sm:$0xf]
        %v1692 = vld [vmem:[%s1451 + $0xb0] sm:$0xf]
        %v1693 = vld [vmem:[%s1451 + $0xb4] sm:$0xf]
        %v1694 = vld [vmem:[%s1451 + $0xd8] sm:$0xf]
        %v1695 = vld [vmem:[%s1451 + $0xdc] sm:$0xf]
        %v1696 = vld [vmem:[%s1451 + $0x100] sm:$0xf]
        %v1697 = vld [vmem:[%s1451 + $0x104] sm:$0xf]
        %v1698 = vld [vmem:[%s1451 + $0x128] sm:$0xf]
        %v1699 = vld [vmem:[%s1451 + $0x12c] sm:$0xf]
        %1700 = vst [vmem:[#allocation3 + $0x10] sm:$0xf] %v1684
        %1701 = vst [vmem:[#allocation3 + $0x34] sm:$0xf] %v1685
        %1702 = vst [vmem:[#allocation3 + $0x58] sm:$0xf] %v1686
        %1703 = vst [vmem:[#allocation3 + $0x7c] sm:$0xf] %v1687
        %1704 = vst [vmem:[#allocation3 + $0xa0] sm:$0xf] %v1688
        %1705 = vst [vmem:[#allocation3 + $0xc4] sm:$0xf] %v1689
        %1706 = vst [vmem:[#allocation3 + $0xe8] sm:$0xf] %v1690
        %1707 = vst [vmem:[#allocation3 + $0x10c] sm:$0xf] %v1691
        %1708 = vst [vmem:[#allocation3 + $0x130] sm:$0xf] %v1692
        %1709 = vst [vmem:[#allocation3 + $0x154] sm:$0xf] %v1693
        %1710 = vst [vmem:[#allocation3 + $0x178] sm:$0xf] %v1694
        %1711 = vst [vmem:[#allocation3 + $0x19c] sm:$0xf] %v1695
        %1712 = vst [vmem:[#allocation3 + $0x1c0] sm:$0xf] %v1696
        %1713 = vst [vmem:[#allocation3 + $0x1e4] sm:$0xf] %v1697
        %1714 = vst [vmem:[#allocation3 + $0x208] sm:$0xf] %v1698
        %1715 = vst [vmem:[#allocation3 + $0x22c] sm:$0xf] %v1699
        %v1716 = vld [vmem:[%s1451 + $0x10] sm:$0xf]
        %v1717 = vld [vmem:[%s1451 + $0x14] sm:$0xf]
        %v1718 = vld [vmem:[%s1451 + $0x18] sm:$0x1]
        %v1719 = vld [vmem:[%s1451 + $0x38] sm:$0xf]
        %v1720 = vld [vmem:[%s1451 + $0x3c] sm:$0xf]
        %v1721 = vld [vmem:[%s1451 + $0x40] sm:$0x1]
        %v1722 = vld [vmem:[%s1451 + $0x60] sm:$0xf]
        %v1723 = vld [vmem:[%s1451 + $0x64] sm:$0xf]
        %v1724 = vld [vmem:[%s1451 + $0x68] sm:$0x1]
        %v1725 = vld [vmem:[%s1451 + $0x88] sm:$0xf]
        %v1726 = vld [vmem:[%s1451 + $0x8c] sm:$0xf]
        %v1727 = vld [vmem:[%s1451 + $0x90] sm:$0x1]
        %v1728 = vld [vmem:[%s1451 + $0xb0] sm:$0xf]
        %v1729 = vld [vmem:[%s1451 + $0xb4] sm:$0xf]
        %v1730 = vld [vmem:[%s1451 + $0xb8] sm:$0x1]
        %v1731 = vld [vmem:[%s1451 + $0xd8] sm:$0xf]
        %v1732 = vld [vmem:[%s1451 + $0xdc] sm:$0xf]
        %v1733 = vld [vmem:[%s1451 + $0xe0] sm:$0x1]
        %v1734 = vld [vmem:[%s1451 + $0x100] sm:$0xf]
        %v1735 = vld [vmem:[%s1451 + $0x104] sm:$0xf]
        %v1736 = vld [vmem:[%s1451 + $0x108] sm:$0x1]
        %v1737 = vld [vmem:[%s1451 + $0x128] sm:$0xf]
        %v1738 = vld [vmem:[%s1451 + $0x12c] sm:$0xf]
        %v1739 = vld [vmem:[%s1451 + $0x130] sm:$0x1]
        %v1741 = vshrl.u32 %v1716, 16
        %v1743 = vrot.slane %v1741, 4
        %v1744 = vshll.u32 %v1716, 16
        %v1746 = vrot.slane %v1744, 5
        %v1747 = vor.u32 %v1743, %v1746
        %v1748 = vrot.slane %v1747, 4
        %v1750 = vshll.u32 %v1717, 16
        %v1752 = vrot.slane %v1750, 5
        %v1753 = vsel %vm1223, %v1748, %v1752
        %v1754 = vshrl.u32 %v1717, 16
        %v1756 = vrot.slane %v1754, 4
        %v1757 = vor.u32 %v1756, %v1752
        %v1758 = vrot.slane %v1757, 4
        %v1760 = vshll.u32 %v1718, 16
        %v1762 = vrot.slane %v1760, 5
        %v1763 = vsel %vm1223, %v1758, %v1762
        %v1765 = vshrl.u32 %v1719, 16
        %v1767 = vrot.slane %v1765, 4
        %v1768 = vshll.u32 %v1719, 16
        %v1770 = vrot.slane %v1768, 5
        %v1771 = vor.u32 %v1767, %v1770
        %v1772 = vrot.slane %v1771, 4
        %v1774 = vshll.u32 %v1720, 16
        %v1776 = vrot.slane %v1774, 5
        %v1777 = vsel %vm1223, %v1772, %v1776
        %v1778 = vshrl.u32 %v1720, 16
        %v1780 = vrot.slane %v1778, 4
        %v1781 = vor.u32 %v1780, %v1776
        %v1782 = vrot.slane %v1781, 4
        %v1784 = vshll.u32 %v1721, 16
        %v1786 = vrot.slane %v1784, 5
        %v1787 = vsel %vm1223, %v1782, %v1786
        %v1789 = vshrl.u32 %v1722, 16
        %v1791 = vrot.slane %v1789, 4
        %v1792 = vshll.u32 %v1722, 16
        %v1794 = vrot.slane %v1792, 5
        %v1795 = vor.u32 %v1791, %v1794
        %v1796 = vrot.slane %v1795, 4
        %v1798 = vshll.u32 %v1723, 16
        %v1800 = vrot.slane %v1798, 5
        %v1801 = vsel %vm1223, %v1796, %v1800
        %v1802 = vshrl.u32 %v1723, 16
        %v1804 = vrot.slane %v1802, 4
        %v1805 = vor.u32 %v1804, %v1800
        %v1806 = vrot.slane %v1805, 4
        %v1808 = vshll.u32 %v1724, 16
        %v1810 = vrot.slane %v1808, 5
        %v1811 = vsel %vm1223, %v1806, %v1810
        %v1813 = vshrl.u32 %v1725, 16
        %v1815 = vrot.slane %v1813, 4
        %v1816 = vshll.u32 %v1725, 16
        %v1818 = vrot.slane %v1816, 5
        %v1819 = vor.u32 %v1815, %v1818
        %v1820 = vrot.slane %v1819, 4
        %v1822 = vshll.u32 %v1726, 16
        %v1824 = vrot.slane %v1822, 5
        %v1825 = vsel %vm1223, %v1820, %v1824
        %v1826 = vshrl.u32 %v1726, 16
        %v1828 = vrot.slane %v1826, 4
        %v1829 = vor.u32 %v1828, %v1824
        %v1830 = vrot.slane %v1829, 4
        %v1832 = vshll.u32 %v1727, 16
        %v1834 = vrot.slane %v1832, 5
        %v1835 = vsel %vm1223, %v1830, %v1834
        %v1837 = vshrl.u32 %v1728, 16
        %v1839 = vrot.slane %v1837, 4
        %v1840 = vshll.u32 %v1728, 16
        %v1842 = vrot.slane %v1840, 5
        %v1843 = vor.u32 %v1839, %v1842
        %v1844 = vrot.slane %v1843, 4
        %v1846 = vshll.u32 %v1729, 16
        %v1848 = vrot.slane %v1846, 5
        %v1849 = vsel %vm1223, %v1844, %v1848
        %v1850 = vshrl.u32 %v1729, 16
        %v1852 = vrot.slane %v1850, 4
        %v1853 = vor.u32 %v1852, %v1848
        %v1854 = vrot.slane %v1853, 4
        %v1856 = vshll.u32 %v1730, 16
        %v1858 = vrot.slane %v1856, 5
        %v1859 = vsel %vm1223, %v1854, %v1858
        %v1861 = vshrl.u32 %v1731, 16
        %v1863 = vrot.slane %v1861, 4
        %v1864 = vshll.u32 %v1731, 16
        %v1866 = vrot.slane %v1864, 5
        %v1867 = vor.u32 %v1863, %v1866
        %v1868 = vrot.slane %v1867, 4
        %v1870 = vshll.u32 %v1732, 16
        %v1872 = vrot.slane %v1870, 5
        %v1873 = vsel %vm1223, %v1868, %v1872
        %v1874 = vshrl.u32 %v1732, 16
        %v1876 = vrot.slane %v1874, 4
        %v1877 = vor.u32 %v1876, %v1872
        %v1878 = vrot.slane %v1877, 4
        %v1880 = vshll.u32 %v1733, 16
        %v1882 = vrot.slane %v1880, 5
        %v1883 = vsel %vm1223, %v1878, %v1882
        %v1885 = vshrl.u32 %v1734, 16
        %v1887 = vrot.slane %v1885, 4
        %v1888 = vshll.u32 %v1734, 16
        %v1890 = vrot.slane %v1888, 5
        %v1891 = vor.u32 %v1887, %v1890
        %v1892 = vrot.slane %v1891, 4
        %v1894 = vshll.u32 %v1735, 16
        %v1896 = vrot.slane %v1894, 5
        %v1897 = vsel %vm1223, %v1892, %v1896
        %v1898 = vshrl.u32 %v1735, 16
        %v1900 = vrot.slane %v1898, 4
        %v1901 = vor.u32 %v1900, %v1896
        %v1902 = vrot.slane %v1901, 4
        %v1904 = vshll.u32 %v1736, 16
        %v1906 = vrot.slane %v1904, 5
        %v1907 = vsel %vm1223, %v1902, %v1906
        %v1909 = vshrl.u32 %v1737, 16
        %v1911 = vrot.slane %v1909, 4
        %v1912 = vshll.u32 %v1737, 16
        %v1914 = vrot.slane %v1912, 5
        %v1915 = vor.u32 %v1911, %v1914
        %v1916 = vrot.slane %v1915, 4
        %v1918 = vshll.u32 %v1738, 16
        %v1920 = vrot.slane %v1918, 5
        %v1921 = vsel %vm1223, %v1916, %v1920
        %v1922 = vshrl.u32 %v1738, 16
        %v1924 = vrot.slane %v1922, 4
        %v1925 = vor.u32 %v1924, %v1920
        %v1926 = vrot.slane %v1925, 4
        %v1928 = vshll.u32 %v1739, 16
        %v1930 = vrot.slane %v1928, 5
        %v1931 = vsel %vm1223, %v1926, %v1930
        %1948 = vst [vmem:[#allocation3 + $0x14] sm:$0xf] %v1753
        %1949 = vst [vmem:[#allocation3 + $0x38] sm:$0xf] %v1763
        %1950 = vst [vmem:[#allocation3 + $0x5c] sm:$0xf] %v1777
        %1951 = vst [vmem:[#allocation3 + $0x80] sm:$0xf] %v1787
        %1952 = vst [vmem:[#allocation3 + $0xa4] sm:$0xf] %v1801
        %1953 = vst [vmem:[#allocation3 + $0xc8] sm:$0xf] %v1811
        %1954 = vst [vmem:[#allocation3 + $0xec] sm:$0xf] %v1825
        %1955 = vst [vmem:[#allocation3 + $0x110] sm:$0xf] %v1835
        %1956 = vst [vmem:[#allocation3 + $0x134] sm:$0xf] %v1849
        %1957 = vst [vmem:[#allocation3 + $0x158] sm:$0xf] %v1859
        %1958 = vst [vmem:[#allocation3 + $0x17c] sm:$0xf] %v1873
        %1959 = vst [vmem:[#allocation3 + $0x1a0] sm:$0xf] %v1883
        %1960 = vst [vmem:[#allocation3 + $0x1c4] sm:$0xf] %v1897
        %1961 = vst [vmem:[#allocation3 + $0x1e8] sm:$0xf] %v1907
        %1962 = vst [vmem:[#allocation3 + $0x20c] sm:$0xf] %v1921
        %1963 = vst [vmem:[#allocation3 + $0x230] sm:$0xf] %v1931
        %s1964 = sadd.s32 %s925, 19
        %s1965 = smul.u32 %s1964, 10
        %s1966 = smul.addr %s1965, 4
        %s1967 = scalar_lea.vmem [#allocation2], %s1966
        %v1968 = vld [vmem:[%s1967 + $0xc] sm:$0x8]
        %v1969 = vld [vmem:[%s1967 + $0x10] sm:$0xf]
        %v1970 = vld [vmem:[%s1967 + $0x14] sm:$0xf]
        %v1971 = vld [vmem:[%s1967 + $0x34] sm:$0x8]
        %v1972 = vld [vmem:[%s1967 + $0x38] sm:$0xf]
        %v1973 = vld [vmem:[%s1967 + $0x3c] sm:$0xf]
        %v1974 = vld [vmem:[%s1967 + $0x5c] sm:$0x8]
        %v1975 = vld [vmem:[%s1967 + $0x60] sm:$0xf]
        %v1976 = vld [vmem:[%s1967 + $0x64] sm:$0xf]
        %v1977 = vld [vmem:[%s1967 + $0x84] sm:$0x8]
        %v1978 = vld [vmem:[%s1967 + $0x88] sm:$0xf]
        %v1979 = vld [vmem:[%s1967 + $0x8c] sm:$0xf]
        %v1980 = vld [vmem:[%s1967 + $0xac] sm:$0x8]
        %v1981 = vld [vmem:[%s1967 + $0xb0] sm:$0xf]
        %v1982 = vld [vmem:[%s1967 + $0xb4] sm:$0xf]
        %v1983 = vld [vmem:[%s1967 + $0xd4] sm:$0x8]
        %v1984 = vld [vmem:[%s1967 + $0xd8] sm:$0xf]
        %v1985 = vld [vmem:[%s1967 + $0xdc] sm:$0xf]
        %v1986 = vld [vmem:[%s1967 + $0xfc] sm:$0x8]
        %v1987 = vld [vmem:[%s1967 + $0x100] sm:$0xf]
        %v1988 = vld [vmem:[%s1967 + $0x104] sm:$0xf]
        %v1989 = vld [vmem:[%s1967 + $0x124] sm:$0x8]
        %v1990 = vld [vmem:[%s1967 + $0x128] sm:$0xf]
        %v1991 = vld [vmem:[%s1967 + $0x12c] sm:$0xf]
        %v1993 = vshrl.u32 %v1968, 16
        %v1995 = vrot.slane %v1993, 7
        %v1996 = vrot.slane %v1995, 4
        %v1998 = vshrl.u32 %v1969, 16
        %v2000 = vrot.slane %v1998, 7
        %v2001 = vshll.u32 %v1969, 16
        %v2003 = vor.u32 %v2000, %v2001
        %v2004 = vsel %vm956, %v1996, %v2003
        %v2005 = vrot.slane %v2000, 4
        %v2007 = vshrl.u32 %v1970, 16
        %v2009 = vrot.slane %v2007, 7
        %v2010 = vshll.u32 %v1970, 16
        %v2012 = vor.u32 %v2009, %v2010
        %v2013 = vsel %vm956, %v2005, %v2012
        %v2015 = vshrl.u32 %v1971, 16
        %v2017 = vrot.slane %v2015, 7
        %v2018 = vrot.slane %v2017, 4
        %v2020 = vshrl.u32 %v1972, 16
        %v2022 = vrot.slane %v2020, 7
        %v2023 = vshll.u32 %v1972, 16
        %v2025 = vor.u32 %v2022, %v2023
        %v2026 = vsel %vm956, %v2018, %v2025
        %v2027 = vrot.slane %v2022, 4
        %v2029 = vshrl.u32 %v1973, 16
        %v2031 = vrot.slane %v2029, 7
        %v2032 = vshll.u32 %v1973, 16
        %v2034 = vor.u32 %v2031, %v2032
        %v2035 = vsel %vm956, %v2027, %v2034
        %v2037 = vshrl.u32 %v1974, 16
        %v2039 = vrot.slane %v2037, 7
        %v2040 = vrot.slane %v2039, 4
        %v2042 = vshrl.u32 %v1975, 16
        %v2044 = vrot.slane %v2042, 7
        %v2045 = vshll.u32 %v1975, 16
        %v2047 = vor.u32 %v2044, %v2045
        %v2048 = vsel %vm956, %v2040, %v2047
        %v2049 = vrot.slane %v2044, 4
        %v2051 = vshrl.u32 %v1976, 16
        %v2053 = vrot.slane %v2051, 7
        %v2054 = vshll.u32 %v1976, 16
        %v2056 = vor.u32 %v2053, %v2054
        %v2057 = vsel %vm956, %v2049, %v2056
        %v2059 = vshrl.u32 %v1977, 16
        %v2061 = vrot.slane %v2059, 7
        %v2062 = vrot.slane %v2061, 4
        %v2064 = vshrl.u32 %v1978, 16
        %v2066 = vrot.slane %v2064, 7
        %v2067 = vshll.u32 %v1978, 16
        %v2069 = vor.u32 %v2066, %v2067
        %v2070 = vsel %vm956, %v2062, %v2069
        %v2071 = vrot.slane %v2066, 4
        %v2073 = vshrl.u32 %v1979, 16
        %v2075 = vrot.slane %v2073, 7
        %v2076 = vshll.u32 %v1979, 16
        %v2078 = vor.u32 %v2075, %v2076
        %v2079 = vsel %vm956, %v2071, %v2078
        %v2081 = vshrl.u32 %v1980, 16
        %v2083 = vrot.slane %v2081, 7
        %v2084 = vrot.slane %v2083, 4
        %v2086 = vshrl.u32 %v1981, 16
        %v2088 = vrot.slane %v2086, 7
        %v2089 = vshll.u32 %v1981, 16
        %v2091 = vor.u32 %v2088, %v2089
        %v2092 = vsel %vm956, %v2084, %v2091
        %v2093 = vrot.slane %v2088, 4
        %v2095 = vshrl.u32 %v1982, 16
        %v2097 = vrot.slane %v2095, 7
        %v2098 = vshll.u32 %v1982, 16
        %v2100 = vor.u32 %v2097, %v2098
        %v2101 = vsel %vm956, %v2093, %v2100
        %v2103 = vshrl.u32 %v1983, 16
        %v2105 = vrot.slane %v2103, 7
        %v2106 = vrot.slane %v2105, 4
        %v2108 = vshrl.u32 %v1984, 16
        %v2110 = vrot.slane %v2108, 7
        %v2111 = vshll.u32 %v1984, 16
        %v2113 = vor.u32 %v2110, %v2111
        %v2114 = vsel %vm956, %v2106, %v2113
        %v2115 = vrot.slane %v2110, 4
        %v2117 = vshrl.u32 %v1985, 16
        %v2119 = vrot.slane %v2117, 7
        %v2120 = vshll.u32 %v1985, 16
        %v2122 = vor.u32 %v2119, %v2120
        %v2123 = vsel %vm956, %v2115, %v2122
        %v2125 = vshrl.u32 %v1986, 16
        %v2127 = vrot.slane %v2125, 7
        %v2128 = vrot.slane %v2127, 4
        %v2130 = vshrl.u32 %v1987, 16
        %v2132 = vrot.slane %v2130, 7
        %v2133 = vshll.u32 %v1987, 16
        %v2135 = vor.u32 %v2132, %v2133
        %v2136 = vsel %vm956, %v2128, %v2135
        %v2137 = vrot.slane %v2132, 4
        %v2139 = vshrl.u32 %v1988, 16
        %v2141 = vrot.slane %v2139, 7
        %v2142 = vshll.u32 %v1988, 16
        %v2144 = vor.u32 %v2141, %v2142
        %v2145 = vsel %vm956, %v2137, %v2144
        %v2147 = vshrl.u32 %v1989, 16
        %v2149 = vrot.slane %v2147, 7
        %v2150 = vrot.slane %v2149, 4
        %v2152 = vshrl.u32 %v1990, 16
        %v2154 = vrot.slane %v2152, 7
        %v2155 = vshll.u32 %v1990, 16
        %v2157 = vor.u32 %v2154, %v2155
        %v2158 = vsel %vm956, %v2150, %v2157
        %v2159 = vrot.slane %v2154, 4
        %v2161 = vshrl.u32 %v1991, 16
        %v2163 = vrot.slane %v2161, 7
        %v2164 = vshll.u32 %v1991, 16
        %v2166 = vor.u32 %v2163, %v2164
        %v2167 = vsel %vm956, %v2159, %v2166
        %2184 = vst [vmem:[#allocation3 + $0x18] sm:$0xf] %v2004
        %2185 = vst [vmem:[#allocation3 + $0x3c] sm:$0xf] %v2013
        %2186 = vst [vmem:[#allocation3 + $0x60] sm:$0xf] %v2026
        %2187 = vst [vmem:[#allocation3 + $0x84] sm:$0xf] %v2035
        %2188 = vst [vmem:[#allocation3 + $0xa8] sm:$0xf] %v2048
        %2189 = vst [vmem:[#allocation3 + $0xcc] sm:$0xf] %v2057
        %2190 = vst [vmem:[#allocation3 + $0xf0] sm:$0xf] %v2070
        %2191 = vst [vmem:[#allocation3 + $0x114] sm:$0xf] %v2079
        %2192 = vst [vmem:[#allocation3 + $0x138] sm:$0xf] %v2092
        %2193 = vst [vmem:[#allocation3 + $0x15c] sm:$0xf] %v2101
        %2194 = vst [vmem:[#allocation3 + $0x180] sm:$0xf] %v2114
        %2195 = vst [vmem:[#allocation3 + $0x1a4] sm:$0xf] %v2123
        %2196 = vst [vmem:[#allocation3 + $0x1c8] sm:$0xf] %v2136
        %2197 = vst [vmem:[#allocation3 + $0x1ec] sm:$0xf] %v2145
        %2198 = vst [vmem:[#allocation3 + $0x210] sm:$0xf] %v2158
        %2199 = vst [vmem:[#allocation3 + $0x234] sm:$0xf] %v2167
        %v2200 = vld [vmem:[%s1967 + $0x10] sm:$0xf]
        %v2201 = vld [vmem:[%s1967 + $0x14] sm:$0xf]
        %v2202 = vld [vmem:[%s1967 + $0x38] sm:$0xf]
        %v2203 = vld [vmem:[%s1967 + $0x3c] sm:$0xf]
        %v2204 = vld [vmem:[%s1967 + $0x60] sm:$0xf]
        %v2205 = vld [vmem:[%s1967 + $0x64] sm:$0xf]
        %v2206 = vld [vmem:[%s1967 + $0x88] sm:$0xf]
        %v2207 = vld [vmem:[%s1967 + $0x8c] sm:$0xf]
        %v2208 = vld [vmem:[%s1967 + $0xb0] sm:$0xf]
        %v2209 = vld [vmem:[%s1967 + $0xb4] sm:$0xf]
        %v2210 = vld [vmem:[%s1967 + $0xd8] sm:$0xf]
        %v2211 = vld [vmem:[%s1967 + $0xdc] sm:$0xf]
        %v2212 = vld [vmem:[%s1967 + $0x100] sm:$0xf]
        %v2213 = vld [vmem:[%s1967 + $0x104] sm:$0xf]
        %v2214 = vld [vmem:[%s1967 + $0x128] sm:$0xf]
        %v2215 = vld [vmem:[%s1967 + $0x12c] sm:$0xf]
        %2216 = vst [vmem:[#allocation3 + $0x1c] sm:$0xf] %v2200
        %2217 = vst [vmem:[#allocation3 + $0x40] sm:$0xf] %v2201
        %2218 = vst [vmem:[#allocation3 + $0x64] sm:$0xf] %v2202
        %2219 = vst [vmem:[#allocation3 + $0x88] sm:$0xf] %v2203
        %2220 = vst [vmem:[#allocation3 + $0xac] sm:$0xf] %v2204
        %2221 = vst [vmem:[#allocation3 + $0xd0] sm:$0xf] %v2205
        %2222 = vst [vmem:[#allocation3 + $0xf4] sm:$0xf] %v2206
        %2223 = vst [vmem:[#allocation3 + $0x118] sm:$0xf] %v2207
        %2224 = vst [vmem:[#allocation3 + $0x13c] sm:$0xf] %v2208
        %2225 = vst [vmem:[#allocation3 + $0x160] sm:$0xf] %v2209
        %2226 = vst [vmem:[#allocation3 + $0x184] sm:$0xf] %v2210
        %2227 = vst [vmem:[#allocation3 + $0x1a8] sm:$0xf] %v2211
        %2228 = vst [vmem:[#allocation3 + $0x1cc] sm:$0xf] %v2212
        %2229 = vst [vmem:[#allocation3 + $0x1f0] sm:$0xf] %v2213
        %2230 = vst [vmem:[#allocation3 + $0x214] sm:$0xf] %v2214
        %2231 = vst [vmem:[#allocation3 + $0x238] sm:$0xf] %v2215
        %v2232 = vld [vmem:[%s1967 + $0x10] sm:$0xf]
        %v2233 = vld [vmem:[%s1967 + $0x14] sm:$0xf]
        %v2234 = vld [vmem:[%s1967 + $0x18] sm:$0x1]
        %v2235 = vld [vmem:[%s1967 + $0x38] sm:$0xf]
        %v2236 = vld [vmem:[%s1967 + $0x3c] sm:$0xf]
        %v2237 = vld [vmem:[%s1967 + $0x40] sm:$0x1]
        %v2238 = vld [vmem:[%s1967 + $0x60] sm:$0xf]
        %v2239 = vld [vmem:[%s1967 + $0x64] sm:$0xf]
        %v2240 = vld [vmem:[%s1967 + $0x68] sm:$0x1]
        %v2241 = vld [vmem:[%s1967 + $0x88] sm:$0xf]
        %v2242 = vld [vmem:[%s1967 + $0x8c] sm:$0xf]
        %v2243 = vld [vmem:[%s1967 + $0x90] sm:$0x1]
        %v2244 = vld [vmem:[%s1967 + $0xb0] sm:$0xf]
        %v2245 = vld [vmem:[%s1967 + $0xb4] sm:$0xf]
        %v2246 = vld [vmem:[%s1967 + $0xb8] sm:$0x1]
        %v2247 = vld [vmem:[%s1967 + $0xd8] sm:$0xf]
        %v2248 = vld [vmem:[%s1967 + $0xdc] sm:$0xf]
        %v2249 = vld [vmem:[%s1967 + $0xe0] sm:$0x1]
        %v2250 = vld [vmem:[%s1967 + $0x100] sm:$0xf]
        %v2251 = vld [vmem:[%s1967 + $0x104] sm:$0xf]
        %v2252 = vld [vmem:[%s1967 + $0x108] sm:$0x1]
        %v2253 = vld [vmem:[%s1967 + $0x128] sm:$0xf]
        %v2254 = vld [vmem:[%s1967 + $0x12c] sm:$0xf]
        %v2255 = vld [vmem:[%s1967 + $0x130] sm:$0x1]
        %v2257 = vshrl.u32 %v2232, 16
        %v2259 = vrot.slane %v2257, 4
        %v2260 = vshll.u32 %v2232, 16
        %v2262 = vrot.slane %v2260, 5
        %v2263 = vor.u32 %v2259, %v2262
        %v2264 = vrot.slane %v2263, 4
        %v2266 = vshll.u32 %v2233, 16
        %v2268 = vrot.slane %v2266, 5
        %v2269 = vsel %vm1223, %v2264, %v2268
        %v2270 = vshrl.u32 %v2233, 16
        %v2272 = vrot.slane %v2270, 4
        %v2273 = vor.u32 %v2272, %v2268
        %v2274 = vrot.slane %v2273, 4
        %v2276 = vshll.u32 %v2234, 16
        %v2278 = vrot.slane %v2276, 5
        %v2279 = vsel %vm1223, %v2274, %v2278
        %v2281 = vshrl.u32 %v2235, 16
        %v2283 = vrot.slane %v2281, 4
        %v2284 = vshll.u32 %v2235, 16
        %v2286 = vrot.slane %v2284, 5
        %v2287 = vor.u32 %v2283, %v2286
        %v2288 = vrot.slane %v2287, 4
        %v2290 = vshll.u32 %v2236, 16
        %v2292 = vrot.slane %v2290, 5
        %v2293 = vsel %vm1223, %v2288, %v2292
        %v2294 = vshrl.u32 %v2236, 16
        %v2296 = vrot.slane %v2294, 4
        %v2297 = vor.u32 %v2296, %v2292
        %v2298 = vrot.slane %v2297, 4
        %v2300 = vshll.u32 %v2237, 16
        %v2302 = vrot.slane %v2300, 5
        %v2303 = vsel %vm1223, %v2298, %v2302
        %v2305 = vshrl.u32 %v2238, 16
        %v2307 = vrot.slane %v2305, 4
        %v2308 = vshll.u32 %v2238, 16
        %v2310 = vrot.slane %v2308, 5
        %v2311 = vor.u32 %v2307, %v2310
        %v2312 = vrot.slane %v2311, 4
        %v2314 = vshll.u32 %v2239, 16
        %v2316 = vrot.slane %v2314, 5
        %v2317 = vsel %vm1223, %v2312, %v2316
        %v2318 = vshrl.u32 %v2239, 16
        %v2320 = vrot.slane %v2318, 4
        %v2321 = vor.u32 %v2320, %v2316
        %v2322 = vrot.slane %v2321, 4
        %v2324 = vshll.u32 %v2240, 16
        %v2326 = vrot.slane %v2324, 5
        %v2327 = vsel %vm1223, %v2322, %v2326
        %v2329 = vshrl.u32 %v2241, 16
        %v2331 = vrot.slane %v2329, 4
        %v2332 = vshll.u32 %v2241, 16
        %v2334 = vrot.slane %v2332, 5
        %v2335 = vor.u32 %v2331, %v2334
        %v2336 = vrot.slane %v2335, 4
        %v2338 = vshll.u32 %v2242, 16
        %v2340 = vrot.slane %v2338, 5
        %v2341 = vsel %vm1223, %v2336, %v2340
        %v2342 = vshrl.u32 %v2242, 16
        %v2344 = vrot.slane %v2342, 4
        %v2345 = vor.u32 %v2344, %v2340
        %v2346 = vrot.slane %v2345, 4
        %v2348 = vshll.u32 %v2243, 16
        %v2350 = vrot.slane %v2348, 5
        %v2351 = vsel %vm1223, %v2346, %v2350
        %v2353 = vshrl.u32 %v2244, 16
        %v2355 = vrot.slane %v2353, 4
        %v2356 = vshll.u32 %v2244, 16
        %v2358 = vrot.slane %v2356, 5
        %v2359 = vor.u32 %v2355, %v2358
        %v2360 = vrot.slane %v2359, 4
        %v2362 = vshll.u32 %v2245, 16
        %v2364 = vrot.slane %v2362, 5
        %v2365 = vsel %vm1223, %v2360, %v2364
        %v2366 = vshrl.u32 %v2245, 16
        %v2368 = vrot.slane %v2366, 4
        %v2369 = vor.u32 %v2368, %v2364
        %v2370 = vrot.slane %v2369, 4
        %v2372 = vshll.u32 %v2246, 16
        %v2374 = vrot.slane %v2372, 5
        %v2375 = vsel %vm1223, %v2370, %v2374
        %v2377 = vshrl.u32 %v2247, 16
        %v2379 = vrot.slane %v2377, 4
        %v2380 = vshll.u32 %v2247, 16
        %v2382 = vrot.slane %v2380, 5
        %v2383 = vor.u32 %v2379, %v2382
        %v2384 = vrot.slane %v2383, 4
        %v2386 = vshll.u32 %v2248, 16
        %v2388 = vrot.slane %v2386, 5
        %v2389 = vsel %vm1223, %v2384, %v2388
        %v2390 = vshrl.u32 %v2248, 16
        %v2392 = vrot.slane %v2390, 4
        %v2393 = vor.u32 %v2392, %v2388
        %v2394 = vrot.slane %v2393, 4
        %v2396 = vshll.u32 %v2249, 16
        %v2398 = vrot.slane %v2396, 5
        %v2399 = vsel %vm1223, %v2394, %v2398
        %v2401 = vshrl.u32 %v2250, 16
        %v2403 = vrot.slane %v2401, 4
        %v2404 = vshll.u32 %v2250, 16
        %v2406 = vrot.slane %v2404, 5
        %v2407 = vor.u32 %v2403, %v2406
        %v2408 = vrot.slane %v2407, 4
        %v2410 = vshll.u32 %v2251, 16
        %v2412 = vrot.slane %v2410, 5
        %v2413 = vsel %vm1223, %v2408, %v2412
        %v2414 = vshrl.u32 %v2251, 16
        %v2416 = vrot.slane %v2414, 4
        %v2417 = vor.u32 %v2416, %v2412
        %v2418 = vrot.slane %v2417, 4
        %v2420 = vshll.u32 %v2252, 16
        %v2422 = vrot.slane %v2420, 5
        %v2423 = vsel %vm1223, %v2418, %v2422
        %v2425 = vshrl.u32 %v2253, 16
        %v2427 = vrot.slane %v2425, 4
        %v2428 = vshll.u32 %v2253, 16
        %v2430 = vrot.slane %v2428, 5
        %v2431 = vor.u32 %v2427, %v2430
        %v2432 = vrot.slane %v2431, 4
        %v2434 = vshll.u32 %v2254, 16
        %v2436 = vrot.slane %v2434, 5
        %v2437 = vsel %vm1223, %v2432, %v2436
        %v2438 = vshrl.u32 %v2254, 16
        %v2440 = vrot.slane %v2438, 4
        %v2441 = vor.u32 %v2440, %v2436
        %v2442 = vrot.slane %v2441, 4
        %v2444 = vshll.u32 %v2255, 16
        %v2446 = vrot.slane %v2444, 5
        %v2447 = vsel %vm1223, %v2442, %v2446
        %2464 = vst [vmem:[#allocation3 + $0x20] sm:$0xf] %v2269
        %2465 = vst [vmem:[#allocation3 + $0x44] sm:$0xf] %v2279
        %2466 = vst [vmem:[#allocation3 + $0x68] sm:$0xf] %v2293
        %2467 = vst [vmem:[#allocation3 + $0x8c] sm:$0xf] %v2303
        %2468 = vst [vmem:[#allocation3 + $0xb0] sm:$0xf] %v2317
        %2469 = vst [vmem:[#allocation3 + $0xd4] sm:$0xf] %v2327
        %2470 = vst [vmem:[#allocation3 + $0xf8] sm:$0xf] %v2341
        %2471 = vst [vmem:[#allocation3 + $0x11c] sm:$0xf] %v2351
        %2472 = vst [vmem:[#allocation3 + $0x140] sm:$0xf] %v2365
        %2473 = vst [vmem:[#allocation3 + $0x164] sm:$0xf] %v2375
        %2474 = vst [vmem:[#allocation3 + $0x188] sm:$0xf] %v2389
        %2475 = vst [vmem:[#allocation3 + $0x1ac] sm:$0xf] %v2399
        %2476 = vst [vmem:[#allocation3 + $0x1d0] sm:$0xf] %v2413
        %2477 = vst [vmem:[#allocation3 + $0x1f4] sm:$0xf] %v2423
        %2478 = vst [vmem:[#allocation3 + $0x218] sm:$0xf] %v2437
        %2479 = vst [vmem:[#allocation3 + $0x23c] sm:$0xf] %v2447
        %v2480 = vld [vmem:[#allocation4] sm:$0xff]
        %v2481 = vld [vmem:[#allocation4 + $0x8] sm:$0xff]
        %v2482 = vld [vmem:[#allocation4 + $0x10] sm:$0xff]
        %v2483 = vld [vmem:[#allocation4 + $0x18] sm:$0xff]
        %v2484 = vld [vmem:[#allocation4 + $0x20] sm:$0xff]
        %v2485 = vld [vmem:[#allocation4 + $0x28] sm:$0xff]
        %v2486 = vld [vmem:[#allocation4 + $0x30] sm:$0xff]
        %v2487 = vld [vmem:[#allocation4 + $0x38] sm:$0xff]
        %v2488 = vld [vmem:[#allocation4 + $0x40] sm:$0xff]
        %v2489 = vld [vmem:[#allocation4 + $0x48] sm:$0xff]
        %v2490 = vld [vmem:[#allocation4 + $0x50] sm:$0xff]
        %v2491 = vld [vmem:[#allocation4 + $0x58] sm:$0xff]
        %v2492 = vld [vmem:[#allocation4 + $0x60] sm:$0xff]
        %v2493 = vld [vmem:[#allocation4 + $0x68] sm:$0xff]
        %v2494 = vld [vmem:[#allocation4 + $0x70] sm:$0xff]
        %v2495 = vld [vmem:[#allocation4 + $0x78] sm:$0xff]
        %v2496 = vld [vmem:[#allocation3] sm:$0xff]
        %v2497 = vld [vmem:[#allocation3 + $0x8] sm:$0xff]
        %v2498 = vld [vmem:[#allocation3 + $0x10] sm:$0xff]
        %v2499 = vld [vmem:[#allocation3 + $0x18] sm:$0xff]
        %v2500 = vld [vmem:[#allocation3 + $0x20] sm:$0xf]
        %v2501 = vld [vmem:[#allocation3 + $0x24] sm:$0xff]
        %v2502 = vld [vmem:[#allocation3 + $0x2c] sm:$0xff]
        %v2503 = vld [vmem:[#allocation3 + $0x34] sm:$0xff]
        %v2504 = vld [vmem:[#allocation3 + $0x3c] sm:$0xff]
        %v2505 = vld [vmem:[#allocation3 + $0x44] sm:$0xf]
        %v2506 = vld [vmem:[#allocation3 + $0x48] sm:$0xff]
        %v2507 = vld [vmem:[#allocation3 + $0x50] sm:$0xff]
        %v2508 = vld [vmem:[#allocation3 + $0x58] sm:$0xff]
        %v2509 = vld [vmem:[#allocation3 + $0x60] sm:$0xff]
        %v2510 = vld [vmem:[#allocation3 + $0x68] sm:$0xf]
        %v2511 = vld [vmem:[#allocation3 + $0x6c] sm:$0xff]
        %v2512 = vld [vmem:[#allocation3 + $0x74] sm:$0xff]
        %v2513 = vld [vmem:[#allocation3 + $0x7c] sm:$0xff]
        %v2514 = vld [vmem:[#allocation3 + $0x84] sm:$0xff]
        %v2515 = vld [vmem:[#allocation3 + $0x8c] sm:$0xf]
        %v2516 = vld [vmem:[#allocation3 + $0x90] sm:$0xff]
        %v2517 = vld [vmem:[#allocation3 + $0x98] sm:$0xff]
        %v2518 = vld [vmem:[#allocation3 + $0xa0] sm:$0xff]
        %v2519 = vld [vmem:[#allocation3 + $0xa8] sm:$0xff]
        %v2520 = vld [vmem:[#allocation3 + $0xb0] sm:$0xf]
        %v2521 = vld [vmem:[#allocation3 + $0xb4] sm:$0xff]
        %v2522 = vld [vmem:[#allocation3 + $0xbc] sm:$0xff]
        %v2523 = vld [vmem:[#allocation3 + $0xc4] sm:$0xff]
        %v2524 = vld [vmem:[#allocation3 + $0xcc] sm:$0xff]
        %v2525 = vld [vmem:[#allocation3 + $0xd4] sm:$0xf]
        %v2526 = vld [vmem:[#allocation3 + $0xd8] sm:$0xff]
        %v2527 = vld [vmem:[#allocation3 + $0xe0] sm:$0xff]
        %v2528 = vld [vmem:[#allocation3 + $0xe8] sm:$0xff]
        %v2529 = vld [vmem:[#allocation3 + $0xf0] sm:$0xff]
        %v2530 = vld [vmem:[#allocation3 + $0xf8] sm:$0xf]
        %v2531 = vld [vmem:[#allocation3 + $0xfc] sm:$0xff]
        %v2532 = vld [vmem:[#allocation3 + $0x104] sm:$0xff]
        %v2533 = vld [vmem:[#allocation3 + $0x10c] sm:$0xff]
        %v2534 = vld [vmem:[#allocation3 + $0x114] sm:$0xff]
        %v2535 = vld [vmem:[#allocation3 + $0x11c] sm:$0xf]
        %v2536 = vld [vmem:[#allocation3 + $0x120] sm:$0xff]
        %v2537 = vld [vmem:[#allocation3 + $0x128] sm:$0xff]
        %v2538 = vld [vmem:[#allocation3 + $0x130] sm:$0xff]
        %v2539 = vld [vmem:[#allocation3 + $0x138] sm:$0xff]
        %v2540 = vld [vmem:[#allocation3 + $0x140] sm:$0xf]
        %v2541 = vld [vmem:[#allocation3 + $0x144] sm:$0xff]
        %v2542 = vld [vmem:[#allocation3 + $0x14c] sm:$0xff]
        %v2543 = vld [vmem:[#allocation3 + $0x154] sm:$0xff]
        %v2544 = vld [vmem:[#allocation3 + $0x15c] sm:$0xff]
        %v2545 = vld [vmem:[#allocation3 + $0x164] sm:$0xf]
        %v2546 = vld [vmem:[#allocation3 + $0x168] sm:$0xff]
        %v2547 = vld [vmem:[#allocation3 + $0x170] sm:$0xff]
        %v2548 = vld [vmem:[#allocation3 + $0x178] sm:$0xff]
        %v2549 = vld [vmem:[#allocation3 + $0x180] sm:$0xff]
        %v2550 = vld [vmem:[#allocation3 + $0x188] sm:$0xf]
        %v2551 = vld [vmem:[#allocation3 + $0x18c] sm:$0xff]
        %v2552 = vld [vmem:[#allocation3 + $0x194] sm:$0xff]
        %v2553 = vld [vmem:[#allocation3 + $0x19c] sm:$0xff]
        %v2554 = vld [vmem:[#allocation3 + $0x1a4] sm:$0xff]
        %v2555 = vld [vmem:[#allocation3 + $0x1ac] sm:$0xf]
        %v2556 = vld [vmem:[#allocation3 + $0x1b0] sm:$0xff]
        %v2557 = vld [vmem:[#allocation3 + $0x1b8] sm:$0xff]
        %v2558 = vld [vmem:[#allocation3 + $0x1c0] sm:$0xff]
        %v2559 = vld [vmem:[#allocation3 + $0x1c8] sm:$0xff]
        %v2560 = vld [vmem:[#allocation3 + $0x1d0] sm:$0xf]
        %v2561 = vld [vmem:[#allocation3 + $0x1d4] sm:$0xff]
        %v2562 = vld [vmem:[#allocation3 + $0x1dc] sm:$0xff]
        %v2563 = vld [vmem:[#allocation3 + $0x1e4] sm:$0xff]
        %v2564 = vld [vmem:[#allocation3 + $0x1ec] sm:$0xff]
        %v2565 = vld [vmem:[#allocation3 + $0x1f4] sm:$0xf]
        %v2566 = vld [vmem:[#allocation3 + $0x1f8] sm:$0xff]
        %v2567 = vld [vmem:[#allocation3 + $0x200] sm:$0xff]
        %v2568 = vld [vmem:[#allocation3 + $0x208] sm:$0xff]
        %v2569 = vld [vmem:[#allocation3 + $0x210] sm:$0xff]
        %v2570 = vld [vmem:[#allocation3 + $0x218] sm:$0xf]
        %v2571 = vld [vmem:[#allocation3 + $0x21c] sm:$0xff]
        %v2572 = vld [vmem:[#allocation3 + $0x224] sm:$0xff]
        %v2573 = vld [vmem:[#allocation3 + $0x22c] sm:$0xff]
        %v2574 = vld [vmem:[#allocation3 + $0x234] sm:$0xff]
        %v2575 = vld [vmem:[#allocation3 + $0x23c] sm:$0xf]
        %v2576 = vld [vmem:[#allocation8] sm:$0xf]
        %v2577 = vld [vmem:[#allocation8 + $0x4] sm:$0xf]
        %v2578 = vld [vmem:[#allocation8 + $0x8] sm:$0xf]
        %v2579 = vld [vmem:[#allocation8 + $0xc] sm:$0xf]
        %v2580 = vld [vmem:[#allocation8 + $0x10] sm:$0xf]
        %v2581 = vld [vmem:[#allocation8 + $0x14] sm:$0xf]
        %v2582 = vld [vmem:[#allocation8 + $0x18] sm:$0xf]
        %v2583 = vld [vmem:[#allocation8 + $0x1c] sm:$0xf]
        %v2584 = vld [vmem:[#allocation8 + $0x20] sm:$0xf]
        %v2585 = vld [vmem:[#allocation8 + $0x24] sm:$0xf]
        %v2586 = vld [vmem:[#allocation8 + $0x28] sm:$0xf]
        %v2587 = vld [vmem:[#allocation8 + $0x2c] sm:$0xf]
        %v2588 = vld [vmem:[#allocation8 + $0x30] sm:$0xf]
        %v2589 = vld [vmem:[#allocation8 + $0x34] sm:$0xf]
        %v2590 = vld [vmem:[#allocation8 + $0x38] sm:$0xf]
        %v2591 = vld [vmem:[#allocation8 + $0x3c] sm:$0xf]
        %v2592 = vld [vmem:[#allocation8 + $0x40] sm:$0xf]
        %v2593 = vld [vmem:[#allocation8 + $0x44] sm:$0xf]
        %v2594 = vld [vmem:[#allocation8 + $0x48] sm:$0xf]
        %v2595 = vld [vmem:[#allocation8 + $0x4c] sm:$0xf]
        %v2596 = vld [vmem:[#allocation8 + $0x50] sm:$0xf]
        %v2597 = vld [vmem:[#allocation8 + $0x54] sm:$0xf]
        %v2598 = vld [vmem:[#allocation8 + $0x58] sm:$0xf]
        %v2599 = vld [vmem:[#allocation8 + $0x5c] sm:$0xf]
        %v2600 = vld [vmem:[#allocation8 + $0x60] sm:$0xf]
        %v2601 = vld [vmem:[#allocation8 + $0x64] sm:$0xf]
        %v2602 = vld [vmem:[#allocation8 + $0x68] sm:$0xf]
        %v2603 = vld [vmem:[#allocation8 + $0x6c] sm:$0xf]
        %v2604 = vld [vmem:[#allocation8 + $0x70] sm:$0xf]
        %v2605 = vld [vmem:[#allocation8 + $0x74] sm:$0xf]
        %v2606 = vld [vmem:[#allocation8 + $0x78] sm:$0xf]
        %v2607 = vld [vmem:[#allocation8 + $0x7c] sm:$0xf]
        %v2608 = vld [vmem:[#allocation8 + $0x80] sm:$0xf]
        %v2609 = vld [vmem:[#allocation8 + $0x84] sm:$0xf]
        %v2610 = vld [vmem:[#allocation8 + $0x88] sm:$0xf]
        %v2611 = vld [vmem:[#allocation8 + $0x8c] sm:$0xf]
        %v2612 = vld [vmem:[#allocation8 + $0x90] sm:$0xf]
        %v2613 = vld [vmem:[#allocation8 + $0x94] sm:$0xf]
        %v2614 = vld [vmem:[#allocation8 + $0x98] sm:$0xf]
        %v2615 = vld [vmem:[#allocation8 + $0x9c] sm:$0xf]
        %v2616 = vld [vmem:[#allocation8 + $0xa0] sm:$0xf]
        %v2617 = vld [vmem:[#allocation8 + $0xa4] sm:$0xf]
        %v2618 = vld [vmem:[#allocation8 + $0xa8] sm:$0xf]
        %v2619 = vld [vmem:[#allocation8 + $0xac] sm:$0xf]
        %v2620 = vld [vmem:[#allocation8 + $0xb0] sm:$0xf]
        %v2621 = vld [vmem:[#allocation8 + $0xb4] sm:$0xf]
        %v2622 = vld [vmem:[#allocation8 + $0xb8] sm:$0xf]
        %v2623 = vld [vmem:[#allocation8 + $0xbc] sm:$0xf]
        %v2624 = vld [vmem:[#allocation8 + $0xc0] sm:$0xf]
        %v2625 = vld [vmem:[#allocation8 + $0xc4] sm:$0xf]
        %v2626 = vld [vmem:[#allocation8 + $0xc8] sm:$0xf]
        %v2627 = vld [vmem:[#allocation8 + $0xcc] sm:$0xf]
        %v2628 = vld [vmem:[#allocation8 + $0xd0] sm:$0xf]
        %v2629 = vld [vmem:[#allocation8 + $0xd4] sm:$0xf]
        %v2630 = vld [vmem:[#allocation8 + $0xd8] sm:$0xf]
        %v2631 = vld [vmem:[#allocation8 + $0xdc] sm:$0xf]
        %v2632 = vld [vmem:[#allocation8 + $0xe0] sm:$0xf]
        %v2633 = vld [vmem:[#allocation8 + $0xe4] sm:$0xf]
        %v2634 = vld [vmem:[#allocation8 + $0xe8] sm:$0xf]
        %v2635 = vld [vmem:[#allocation8 + $0xec] sm:$0xf]
        %v2636 = vld [vmem:[#allocation8 + $0xf0] sm:$0xf]
        %v2637 = vld [vmem:[#allocation8 + $0xf4] sm:$0xf]
        %v2638 = vld [vmem:[#allocation8 + $0xf8] sm:$0xf]
        %v2639 = vld [vmem:[#allocation8 + $0xfc] sm:$0xf]
        %v2640 = vld [vmem:[#allocation8 + $0x100] sm:$0xf]
        %v2641 = vld [vmem:[#allocation8 + $0x104] sm:$0xf]
        %v2642 = vld [vmem:[#allocation8 + $0x108] sm:$0xf]
        %v2643 = vld [vmem:[#allocation8 + $0x10c] sm:$0xf]
        %v2644 = vld [vmem:[#allocation8 + $0x110] sm:$0xf]
        %v2645 = vld [vmem:[#allocation8 + $0x114] sm:$0xf]
        %v2646 = vld [vmem:[#allocation8 + $0x118] sm:$0xf]
        %v2647 = vld [vmem:[#allocation8 + $0x11c] sm:$0xf]
        %v2648 = vld [vmem:[#allocation8 + $0x120] sm:$0xf]
        %v2649 = vld [vmem:[#allocation8 + $0x124] sm:$0xf]
        %v2650 = vld [vmem:[#allocation8 + $0x128] sm:$0xf]
        %v2651 = vld [vmem:[#allocation8 + $0x12c] sm:$0xf]
        %v2652 = vld [vmem:[#allocation8 + $0x130] sm:$0xf]
        %v2653 = vld [vmem:[#allocation8 + $0x134] sm:$0xf]
        %v2654 = vld [vmem:[#allocation8 + $0x138] sm:$0xf]
        %v2655 = vld [vmem:[#allocation8 + $0x13c] sm:$0xf]
        %v2656 = vld [vmem:[#allocation8 + $0x140] sm:$0xf]
        %v2657 = vld [vmem:[#allocation8 + $0x144] sm:$0xf]
        %v2658 = vld [vmem:[#allocation8 + $0x148] sm:$0xf]
        %v2659 = vld [vmem:[#allocation8 + $0x14c] sm:$0xf]
        %v2660 = vld [vmem:[#allocation8 + $0x150] sm:$0xf]
        %v2661 = vld [vmem:[#allocation8 + $0x154] sm:$0xf]
        %v2662 = vld [vmem:[#allocation8 + $0x158] sm:$0xf]
        %v2663 = vld [vmem:[#allocation8 + $0x15c] sm:$0xf]
        %v2664 = vld [vmem:[#allocation8 + $0x160] sm:$0xf]
        %v2665 = vld [vmem:[#allocation8 + $0x164] sm:$0xf]
        %v2666 = vld [vmem:[#allocation8 + $0x168] sm:$0xf]
        %v2667 = vld [vmem:[#allocation8 + $0x16c] sm:$0xf]
        %v2668 = vld [vmem:[#allocation8 + $0x170] sm:$0xf]
        %v2669 = vld [vmem:[#allocation8 + $0x174] sm:$0xf]
        %v2670 = vld [vmem:[#allocation8 + $0x178] sm:$0xf]
        %v2671 = vld [vmem:[#allocation8 + $0x17c] sm:$0xf]
        %v2672 = vld [vmem:[#allocation8 + $0x180] sm:$0xf]
        %v2673 = vld [vmem:[#allocation8 + $0x184] sm:$0xf]
        %v2674 = vld [vmem:[#allocation8 + $0x188] sm:$0xf]
        %v2675 = vld [vmem:[#allocation8 + $0x18c] sm:$0xf]
        %v2676 = vld [vmem:[#allocation8 + $0x190] sm:$0xf]
        %v2677 = vld [vmem:[#allocation8 + $0x194] sm:$0xf]
        %v2678 = vld [vmem:[#allocation8 + $0x198] sm:$0xf]
        %v2679 = vld [vmem:[#allocation8 + $0x19c] sm:$0xf]
        %v2680 = vld [vmem:[#allocation8 + $0x1a0] sm:$0xf]
        %v2681 = vld [vmem:[#allocation8 + $0x1a4] sm:$0xf]
        %v2682 = vld [vmem:[#allocation8 + $0x1a8] sm:$0xf]
        %v2683 = vld [vmem:[#allocation8 + $0x1ac] sm:$0xf]
        %v2684 = vld [vmem:[#allocation8 + $0x1b0] sm:$0xf]
        %v2685 = vld [vmem:[#allocation8 + $0x1b4] sm:$0xf]
        %v2686 = vld [vmem:[#allocation8 + $0x1b8] sm:$0xf]
        %v2687 = vld [vmem:[#allocation8 + $0x1bc] sm:$0xf]
        %v2688 = vld [vmem:[#allocation8 + $0x1c0] sm:$0xf]
        %v2689 = vld [vmem:[#allocation8 + $0x1c4] sm:$0xf]
        %v2690 = vld [vmem:[#allocation8 + $0x1c8] sm:$0xf]
        %v2691 = vld [vmem:[#allocation8 + $0x1cc] sm:$0xf]
        %v2692 = vld [vmem:[#allocation8 + $0x1d0] sm:$0xf]
        %v2693 = vld [vmem:[#allocation8 + $0x1d4] sm:$0xf]
        %v2694 = vld [vmem:[#allocation8 + $0x1d8] sm:$0xf]
        %v2695 = vld [vmem:[#allocation8 + $0x1dc] sm:$0xf]
        %v2696 = vld [vmem:[#allocation8 + $0x1e0] sm:$0xf]
        %v2697 = vld [vmem:[#allocation8 + $0x1e4] sm:$0xf]
        %v2698 = vld [vmem:[#allocation8 + $0x1e8] sm:$0xf]
        %v2699 = vld [vmem:[#allocation8 + $0x1ec] sm:$0xf]
        %v2700 = vld [vmem:[#allocation8 + $0x1f0] sm:$0xf]
        %v2701 = vld [vmem:[#allocation8 + $0x1f4] sm:$0xf]
        %v2702 = vld [vmem:[#allocation8 + $0x1f8] sm:$0xf]
        %v2703 = vld [vmem:[#allocation8 + $0x1fc] sm:$0xf]
        %v2704 = vld [vmem:[#allocation8 + $0x200] sm:$0xf]
        %v2705 = vld [vmem:[#allocation8 + $0x204] sm:$0xf]
        %v2706 = vld [vmem:[#allocation8 + $0x208] sm:$0xf]
        %v2707 = vld [vmem:[#allocation8 + $0x20c] sm:$0xf]
        %v2708 = vld [vmem:[#allocation8 + $0x210] sm:$0xf]
        %v2709 = vld [vmem:[#allocation8 + $0x214] sm:$0xf]
        %v2710 = vld [vmem:[#allocation8 + $0x218] sm:$0xf]
        %v2711 = vld [vmem:[#allocation8 + $0x21c] sm:$0xf]
        %v2712 = vld [vmem:[#allocation8 + $0x220] sm:$0xf]
        %v2713 = vld [vmem:[#allocation8 + $0x224] sm:$0xf]
        %v2714 = vld [vmem:[#allocation8 + $0x228] sm:$0xf]
        %v2715 = vld [vmem:[#allocation8 + $0x22c] sm:$0xf]
        %v2716 = vld [vmem:[#allocation8 + $0x230] sm:$0xf]
        %v2717 = vld [vmem:[#allocation8 + $0x234] sm:$0xf]
        %v2718 = vld [vmem:[#allocation8 + $0x238] sm:$0xf]
        %v2719 = vld [vmem:[#allocation8 + $0x23c] sm:$0xf]
        %v2800 = vunpack.c.l.b16 %v2496
        %v2801 = vunpack.c.h.b16 %v2496
        %v2802 = vunpack.c.l.b16 %v2497
        %v2803 = vunpack.c.h.b16 %v2497
        %v2804 = vunpack.c.l.b16 %v2498
        %v2805 = vunpack.c.h.b16 %v2498
        %v2806 = vunpack.c.l.b16 %v2499
        %v2807 = vunpack.c.h.b16 %v2499
        %v2808 = vunpack.c.l.b16 %v2500
        %v2809 = vunpack.c.l.b16 %v2501
        %v2810 = vunpack.c.h.b16 %v2501
        %v2811 = vunpack.c.l.b16 %v2502
        %v2812 = vunpack.c.h.b16 %v2502
        %v2813 = vunpack.c.l.b16 %v2503
        %v2814 = vunpack.c.h.b16 %v2503
        %v2815 = vunpack.c.l.b16 %v2504
        %v2816 = vunpack.c.h.b16 %v2504
        %v2817 = vunpack.c.l.b16 %v2505
        %v2818 = vunpack.c.l.b16 %v2506
        %v2819 = vunpack.c.h.b16 %v2506
        %v2820 = vunpack.c.l.b16 %v2507
        %v2821 = vunpack.c.h.b16 %v2507
        %v2822 = vunpack.c.l.b16 %v2508
        %v2823 = vunpack.c.h.b16 %v2508
        %v2824 = vunpack.c.l.b16 %v2509
        %v2825 = vunpack.c.h.b16 %v2509
        %v2826 = vunpack.c.l.b16 %v2510
        %v2827 = vunpack.c.l.b16 %v2511
        %v2828 = vunpack.c.h.b16 %v2511
        %v2829 = vunpack.c.l.b16 %v2512
        %v2830 = vunpack.c.h.b16 %v2512
        %v2831 = vunpack.c.l.b16 %v2513
        %v2832 = vunpack.c.h.b16 %v2513
        %v2833 = vunpack.c.l.b16 %v2514
        %v2834 = vunpack.c.h.b16 %v2514
        %v2835 = vunpack.c.l.b16 %v2515
        %v2836 = vunpack.c.l.b16 %v2516
        %v2837 = vunpack.c.h.b16 %v2516
        %v2838 = vunpack.c.l.b16 %v2517
        %v2839 = vunpack.c.h.b16 %v2517
        %v2840 = vunpack.c.l.b16 %v2518
        %v2841 = vunpack.c.h.b16 %v2518
        %v2842 = vunpack.c.l.b16 %v2519
        %v2843 = vunpack.c.h.b16 %v2519
        %v2844 = vunpack.c.l.b16 %v2520
        %v2845 = vunpack.c.l.b16 %v2521
        %v2846 = vunpack.c.h.b16 %v2521
        %v2847 = vunpack.c.l.b16 %v2522
        %v2848 = vunpack.c.h.b16 %v2522
        %v2849 = vunpack.c.l.b16 %v2523
        %v2850 = vunpack.c.h.b16 %v2523
        %v2851 = vunpack.c.l.b16 %v2524
        %v2852 = vunpack.c.h.b16 %v2524
        %v2853 = vunpack.c.l.b16 %v2525
        %v2854 = vunpack.c.l.b16 %v2526
        %v2855 = vunpack.c.h.b16 %v2526
        %v2856 = vunpack.c.l.b16 %v2527
        %v2857 = vunpack.c.h.b16 %v2527
        %v2858 = vunpack.c.l.b16 %v2528
        %v2859 = vunpack.c.h.b16 %v2528
        %v2860 = vunpack.c.l.b16 %v2529
        %v2861 = vunpack.c.h.b16 %v2529
        %v2862 = vunpack.c.l.b16 %v2530
        %v2863 = vunpack.c.l.b16 %v2531
        %v2864 = vunpack.c.h.b16 %v2531
        %v2865 = vunpack.c.l.b16 %v2532
        %v2866 = vunpack.c.h.b16 %v2532
        %v2867 = vunpack.c.l.b16 %v2533
        %v2868 = vunpack.c.h.b16 %v2533
        %v2869 = vunpack.c.l.b16 %v2534
        %v2870 = vunpack.c.h.b16 %v2534
        %v2871 = vunpack.c.l.b16 %v2535
        %v2872 = vunpack.c.l.b16 %v2536
        %v2873 = vunpack.c.h.b16 %v2536
        %v2874 = vunpack.c.l.b16 %v2537
        %v2875 = vunpack.c.h.b16 %v2537
        %v2876 = vunpack.c.l.b16 %v2538
        %v2877 = vunpack.c.h.b16 %v2538
        %v2878 = vunpack.c.l.b16 %v2539
        %v2879 = vunpack.c.h.b16 %v2539
        %v2880 = vunpack.c.l.b16 %v2540
        %v2881 = vunpack.c.l.b16 %v2541
        %v2882 = vunpack.c.h.b16 %v2541
        %v2883 = vunpack.c.l.b16 %v2542
        %v2884 = vunpack.c.h.b16 %v2542
        %v2885 = vunpack.c.l.b16 %v2543
        %v2886 = vunpack.c.h.b16 %v2543
        %v2887 = vunpack.c.l.b16 %v2544
        %v2888 = vunpack.c.h.b16 %v2544
        %v2889 = vunpack.c.l.b16 %v2545
        %v2890 = vunpack.c.l.b16 %v2546
        %v2891 = vunpack.c.h.b16 %v2546
        %v2892 = vunpack.c.l.b16 %v2547
        %v2893 = vunpack.c.h.b16 %v2547
        %v2894 = vunpack.c.l.b16 %v2548
        %v2895 = vunpack.c.h.b16 %v2548
        %v2896 = vunpack.c.l.b16 %v2549
        %v2897 = vunpack.c.h.b16 %v2549
        %v2898 = vunpack.c.l.b16 %v2550
        %v2899 = vunpack.c.l.b16 %v2551
        %v2900 = vunpack.c.h.b16 %v2551
        %v2901 = vunpack.c.l.b16 %v2552
        %v2902 = vunpack.c.h.b16 %v2552
        %v2903 = vunpack.c.l.b16 %v2553
        %v2904 = vunpack.c.h.b16 %v2553
        %v2905 = vunpack.c.l.b16 %v2554
        %v2906 = vunpack.c.h.b16 %v2554
        %v2907 = vunpack.c.l.b16 %v2555
        %v2908 = vunpack.c.l.b16 %v2556
        %v2909 = vunpack.c.h.b16 %v2556
        %v2910 = vunpack.c.l.b16 %v2557
        %v2911 = vunpack.c.h.b16 %v2557
        %v2912 = vunpack.c.l.b16 %v2558
        %v2913 = vunpack.c.h.b16 %v2558
        %v2914 = vunpack.c.l.b16 %v2559
        %v2915 = vunpack.c.h.b16 %v2559
        %v2916 = vunpack.c.l.b16 %v2560
        %v2917 = vunpack.c.l.b16 %v2561
        %v2918 = vunpack.c.h.b16 %v2561
        %v2919 = vunpack.c.l.b16 %v2562
        %v2920 = vunpack.c.h.b16 %v2562
        %v2921 = vunpack.c.l.b16 %v2563
        %v2922 = vunpack.c.h.b16 %v2563
        %v2923 = vunpack.c.l.b16 %v2564
        %v2924 = vunpack.c.h.b16 %v2564
        %v2925 = vunpack.c.l.b16 %v2565
        %v2926 = vunpack.c.l.b16 %v2566
        %v2927 = vunpack.c.h.b16 %v2566
        %v2928 = vunpack.c.l.b16 %v2567
        %v2929 = vunpack.c.h.b16 %v2567
        %v2930 = vunpack.c.l.b16 %v2568
        %v2931 = vunpack.c.h.b16 %v2568
        %v2932 = vunpack.c.l.b16 %v2569
        %v2933 = vunpack.c.h.b16 %v2569
        %v2934 = vunpack.c.l.b16 %v2570
        %v2935 = vunpack.c.l.b16 %v2571
        %v2936 = vunpack.c.h.b16 %v2571
        %v2937 = vunpack.c.l.b16 %v2572
        %v2938 = vunpack.c.h.b16 %v2572
        %v2939 = vunpack.c.l.b16 %v2573
        %v2940 = vunpack.c.h.b16 %v2573
        %v2941 = vunpack.c.l.b16 %v2574
        %v2942 = vunpack.c.h.b16 %v2574
        %v2943 = vunpack.c.l.b16 %v2575
        %v2944 = vpack.c.b16 %v2809, %v2800
        %v2945 = vpack.c.b16 %v2810, %v2801
        %v2946 = vpack.c.b16 %v2811, %v2802
        %v2947 = vpack.c.b16 %v2812, %v2803
        %v2948 = vpack.c.b16 %v2813, %v2804
        %v2949 = vpack.c.b16 %v2814, %v2805
        %v2950 = vpack.c.b16 %v2815, %v2806
        %v2951 = vpack.c.b16 %v2816, %v2807
        %v2952 = vpack.c.b16 %v2817, %v2808
        %v2953 = vpack.c.b16 %v2827, %v2818
        %v2954 = vpack.c.b16 %v2828, %v2819
        %v2955 = vpack.c.b16 %v2829, %v2820
        %v2956 = vpack.c.b16 %v2830, %v2821
        %v2957 = vpack.c.b16 %v2831, %v2822
        %v2958 = vpack.c.b16 %v2832, %v2823
        %v2959 = vpack.c.b16 %v2833, %v2824
        %v2960 = vpack.c.b16 %v2834, %v2825
        %v2961 = vpack.c.b16 %v2835, %v2826
        %v2962 = vpack.c.b16 %v2845, %v2836
        %v2963 = vpack.c.b16 %v2846, %v2837
        %v2964 = vpack.c.b16 %v2847, %v2838
        %v2965 = vpack.c.b16 %v2848, %v2839
        %v2966 = vpack.c.b16 %v2849, %v2840
        %v2967 = vpack.c.b16 %v2850, %v2841
        %v2968 = vpack.c.b16 %v2851, %v2842
        %v2969 = vpack.c.b16 %v2852, %v2843
        %v2970 = vpack.c.b16 %v2853, %v2844
        %v2971 = vpack.c.b16 %v2863, %v2854
        %v2972 = vpack.c.b16 %v2864, %v2855
        %v2973 = vpack.c.b16 %v2865, %v2856
        %v2974 = vpack.c.b16 %v2866, %v2857
        %v2975 = vpack.c.b16 %v2867, %v2858
        %v2976 = vpack.c.b16 %v2868, %v2859
        %v2977 = vpack.c.b16 %v2869, %v2860
        %v2978 = vpack.c.b16 %v2870, %v2861
        %v2979 = vpack.c.b16 %v2871, %v2862
        %v2980 = vpack.c.b16 %v2881, %v2872
        %v2981 = vpack.c.b16 %v2882, %v2873
        %v2982 = vpack.c.b16 %v2883, %v2874
        %v2983 = vpack.c.b16 %v2884, %v2875
        %v2984 = vpack.c.b16 %v2885, %v2876
        %v2985 = vpack.c.b16 %v2886, %v2877
        %v2986 = vpack.c.b16 %v2887, %v2878
        %v2987 = vpack.c.b16 %v2888, %v2879
        %v2988 = vpack.c.b16 %v2889, %v2880
        %v2989 = vpack.c.b16 %v2899, %v2890
        %v2990 = vpack.c.b16 %v2900, %v2891
        %v2991 = vpack.c.b16 %v2901, %v2892
        %v2992 = vpack.c.b16 %v2902, %v2893
        %v2993 = vpack.c.b16 %v2903, %v2894
        %v2994 = vpack.c.b16 %v2904, %v2895
        %v2995 = vpack.c.b16 %v2905, %v2896
        %v2996 = vpack.c.b16 %v2906, %v2897
        %v2997 = vpack.c.b16 %v2907, %v2898
        %v2998 = vpack.c.b16 %v2917, %v2908
        %v2999 = vpack.c.b16 %v2918, %v2909
        %v3000 = vpack.c.b16 %v2919, %v2910
        %v3001 = vpack.c.b16 %v2920, %v2911
        %v3002 = vpack.c.b16 %v2921, %v2912
        %v3003 = vpack.c.b16 %v2922, %v2913
        %v3004 = vpack.c.b16 %v2923, %v2914
        %v3005 = vpack.c.b16 %v2924, %v2915
        %v3006 = vpack.c.b16 %v2925, %v2916
        %v3007 = vpack.c.b16 %v2935, %v2926
        %v3008 = vpack.c.b16 %v2936, %v2927
        %v3009 = vpack.c.b16 %v2937, %v2928
        %v3010 = vpack.c.b16 %v2938, %v2929
        %v3011 = vpack.c.b16 %v2939, %v2930
        %v3012 = vpack.c.b16 %v2940, %v2931
        %v3013 = vpack.c.b16 %v2941, %v2932
        %v3014 = vpack.c.b16 %v2942, %v2933
        %v3015 = vpack.c.b16 %v2943, %v2934
        %v3232 = vunpack.c.l.b16 %v2576
        %v3233 = vunpack.c.l.b16 %v2577
        %v3234 = vunpack.c.l.b16 %v2578
        %v3235 = vunpack.c.l.b16 %v2579
        %v3236 = vunpack.c.l.b16 %v2580
        %v3237 = vunpack.c.l.b16 %v2581
        %v3238 = vunpack.c.l.b16 %v2582
        %v3239 = vunpack.c.l.b16 %v2583
        %v3240 = vunpack.c.l.b16 %v2584
        %v3241 = vunpack.c.l.b16 %v2585
        %v3242 = vunpack.c.l.b16 %v2586
        %v3243 = vunpack.c.l.b16 %v2587
        %v3244 = vunpack.c.l.b16 %v2588
        %v3245 = vunpack.c.l.b16 %v2589
        %v3246 = vunpack.c.l.b16 %v2590
        %v3247 = vunpack.c.l.b16 %v2591
        %v3248 = vunpack.c.l.b16 %v2592
        %v3249 = vunpack.c.l.b16 %v2593
        %v3250 = vunpack.c.l.b16 %v2594
        %v3251 = vunpack.c.l.b16 %v2595
        %v3252 = vunpack.c.l.b16 %v2596
        %v3253 = vunpack.c.l.b16 %v2597
        %v3254 = vunpack.c.l.b16 %v2598
        %v3255 = vunpack.c.l.b16 %v2599
        %v3256 = vunpack.c.l.b16 %v2600
        %v3257 = vunpack.c.l.b16 %v2601
        %v3258 = vunpack.c.l.b16 %v2602
        %v3259 = vunpack.c.l.b16 %v2603
        %v3260 = vunpack.c.l.b16 %v2604
        %v3261 = vunpack.c.l.b16 %v2605
        %v3262 = vunpack.c.l.b16 %v2606
        %v3263 = vunpack.c.l.b16 %v2607
        %v3264 = vunpack.c.l.b16 %v2608
        %v3265 = vunpack.c.l.b16 %v2609
        %v3266 = vunpack.c.l.b16 %v2610
        %v3267 = vunpack.c.l.b16 %v2611
        %v3268 = vunpack.c.l.b16 %v2612
        %v3269 = vunpack.c.l.b16 %v2613
        %v3270 = vunpack.c.l.b16 %v2614
        %v3271 = vunpack.c.l.b16 %v2615
        %v3272 = vunpack.c.l.b16 %v2616
        %v3273 = vunpack.c.l.b16 %v2617
        %v3274 = vunpack.c.l.b16 %v2618
        %v3275 = vunpack.c.l.b16 %v2619
        %v3276 = vunpack.c.l.b16 %v2620
        %v3277 = vunpack.c.l.b16 %v2621
        %v3278 = vunpack.c.l.b16 %v2622
        %v3279 = vunpack.c.l.b16 %v2623
        %v3280 = vunpack.c.l.b16 %v2624
        %v3281 = vunpack.c.l.b16 %v2625
        %v3282 = vunpack.c.l.b16 %v2626
        %v3283 = vunpack.c.l.b16 %v2627
        %v3284 = vunpack.c.l.b16 %v2628
        %v3285 = vunpack.c.l.b16 %v2629
        %v3286 = vunpack.c.l.b16 %v2630
        %v3287 = vunpack.c.l.b16 %v2631
        %v3288 = vunpack.c.l.b16 %v2632
        %v3289 = vunpack.c.l.b16 %v2633
        %v3290 = vunpack.c.l.b16 %v2634
        %v3291 = vunpack.c.l.b16 %v2635
        %v3292 = vunpack.c.l.b16 %v2636
        %v3293 = vunpack.c.l.b16 %v2637
        %v3294 = vunpack.c.l.b16 %v2638
        %v3295 = vunpack.c.l.b16 %v2639
        %v3296 = vunpack.c.l.b16 %v2640
        %v3297 = vunpack.c.l.b16 %v2641
        %v3298 = vunpack.c.l.b16 %v2642
        %v3299 = vunpack.c.l.b16 %v2643
        %v3300 = vunpack.c.l.b16 %v2644
        %v3301 = vunpack.c.l.b16 %v2645
        %v3302 = vunpack.c.l.b16 %v2646
        %v3303 = vunpack.c.l.b16 %v2647
        %v3304 = vunpack.c.l.b16 %v2648
        %v3305 = vunpack.c.l.b16 %v2649
        %v3306 = vunpack.c.l.b16 %v2650
        %v3307 = vunpack.c.l.b16 %v2651
        %v3308 = vunpack.c.l.b16 %v2652
        %v3309 = vunpack.c.l.b16 %v2653
        %v3310 = vunpack.c.l.b16 %v2654
        %v3311 = vunpack.c.l.b16 %v2655
        %v3312 = vunpack.c.l.b16 %v2656
        %v3313 = vunpack.c.l.b16 %v2657
        %v3314 = vunpack.c.l.b16 %v2658
        %v3315 = vunpack.c.l.b16 %v2659
        %v3316 = vunpack.c.l.b16 %v2660
        %v3317 = vunpack.c.l.b16 %v2661
        %v3318 = vunpack.c.l.b16 %v2662
        %v3319 = vunpack.c.l.b16 %v2663
        %v3320 = vunpack.c.l.b16 %v2664
        %v3321 = vunpack.c.l.b16 %v2665
        %v3322 = vunpack.c.l.b16 %v2666
        %v3323 = vunpack.c.l.b16 %v2667
        %v3324 = vunpack.c.l.b16 %v2668
        %v3325 = vunpack.c.l.b16 %v2669
        %v3326 = vunpack.c.l.b16 %v2670
        %v3327 = vunpack.c.l.b16 %v2671
        %v3328 = vunpack.c.l.b16 %v2672
        %v3329 = vunpack.c.l.b16 %v2673
        %v3330 = vunpack.c.l.b16 %v2674
        %v3331 = vunpack.c.l.b16 %v2675
        %v3332 = vunpack.c.l.b16 %v2676
        %v3333 = vunpack.c.l.b16 %v2677
        %v3334 = vunpack.c.l.b16 %v2678
        %v3335 = vunpack.c.l.b16 %v2679
        %v3336 = vunpack.c.l.b16 %v2680
        %v3337 = vunpack.c.l.b16 %v2681
        %v3338 = vunpack.c.l.b16 %v2682
        %v3339 = vunpack.c.l.b16 %v2683
        %v3340 = vunpack.c.l.b16 %v2684
        %v3341 = vunpack.c.l.b16 %v2685
        %v3342 = vunpack.c.l.b16 %v2686
        %v3343 = vunpack.c.l.b16 %v2687
        %v3344 = vunpack.c.l.b16 %v2688
        %v3345 = vunpack.c.l.b16 %v2689
        %v3346 = vunpack.c.l.b16 %v2690
        %v3347 = vunpack.c.l.b16 %v2691
        %v3348 = vunpack.c.l.b16 %v2692
        %v3349 = vunpack.c.l.b16 %v2693
        %v3350 = vunpack.c.l.b16 %v2694
        %v3351 = vunpack.c.l.b16 %v2695
        %v3352 = vunpack.c.l.b16 %v2696
        %v3353 = vunpack.c.l.b16 %v2697
        %v3354 = vunpack.c.l.b16 %v2698
        %v3355 = vunpack.c.l.b16 %v2699
        %v3356 = vunpack.c.l.b16 %v2700
        %v3357 = vunpack.c.l.b16 %v2701
        %v3358 = vunpack.c.l.b16 %v2702
        %v3359 = vunpack.c.l.b16 %v2703
        %v3360 = vunpack.c.l.b16 %v2704
        %v3361 = vunpack.c.l.b16 %v2705
        %v3362 = vunpack.c.l.b16 %v2706
        %v3363 = vunpack.c.l.b16 %v2707
        %v3364 = vunpack.c.l.b16 %v2708
        %v3365 = vunpack.c.l.b16 %v2709
        %v3366 = vunpack.c.l.b16 %v2710
        %v3367 = vunpack.c.l.b16 %v2711
        %v3368 = vunpack.c.l.b16 %v2712
        %v3369 = vunpack.c.l.b16 %v2713
        %v3370 = vunpack.c.l.b16 %v2714
        %v3371 = vunpack.c.l.b16 %v2715
        %v3372 = vunpack.c.l.b16 %v2716
        %v3373 = vunpack.c.l.b16 %v2717
        %v3374 = vunpack.c.l.b16 %v2718
        %v3375 = vunpack.c.l.b16 %v2719
        %v3376 = vpack.c.b16 %v3233, %v3232
        %v3377 = vpack.c.b16 %v3235, %v3234
        %v3378 = vpack.c.b16 %v3237, %v3236
        %v3379 = vpack.c.b16 %v3239, %v3238
        %v3380 = vpack.c.b16 %v3241, %v3240
        %v3381 = vpack.c.b16 %v3243, %v3242
        %v3382 = vpack.c.b16 %v3245, %v3244
        %v3383 = vpack.c.b16 %v3247, %v3246
        %v3384 = vpack.c.b16 %v3249, %v3248
        %v3385 = vpack.c.b16 %v3251, %v3250
        %v3386 = vpack.c.b16 %v3253, %v3252
        %v3387 = vpack.c.b16 %v3255, %v3254
        %v3388 = vpack.c.b16 %v3257, %v3256
        %v3389 = vpack.c.b16 %v3259, %v3258
        %v3390 = vpack.c.b16 %v3261, %v3260
        %v3391 = vpack.c.b16 %v3263, %v3262
        %v3392 = vpack.c.b16 %v3265, %v3264
        %v3393 = vpack.c.b16 %v3267, %v3266
        %v3394 = vpack.c.b16 %v3269, %v3268
        %v3395 = vpack.c.b16 %v3271, %v3270
        %v3396 = vpack.c.b16 %v3273, %v3272
        %v3397 = vpack.c.b16 %v3275, %v3274
        %v3398 = vpack.c.b16 %v3277, %v3276
        %v3399 = vpack.c.b16 %v3279, %v3278
        %v3400 = vpack.c.b16 %v3281, %v3280
        %v3401 = vpack.c.b16 %v3283, %v3282
        %v3402 = vpack.c.b16 %v3285, %v3284
        %v3403 = vpack.c.b16 %v3287, %v3286
        %v3404 = vpack.c.b16 %v3289, %v3288
        %v3405 = vpack.c.b16 %v3291, %v3290
        %v3406 = vpack.c.b16 %v3293, %v3292
        %v3407 = vpack.c.b16 %v3295, %v3294
        %v3408 = vpack.c.b16 %v3297, %v3296
        %v3409 = vpack.c.b16 %v3299, %v3298
        %v3410 = vpack.c.b16 %v3301, %v3300
        %v3411 = vpack.c.b16 %v3303, %v3302
        %v3412 = vpack.c.b16 %v3305, %v3304
        %v3413 = vpack.c.b16 %v3307, %v3306
        %v3414 = vpack.c.b16 %v3309, %v3308
        %v3415 = vpack.c.b16 %v3311, %v3310
        %v3416 = vpack.c.b16 %v3313, %v3312
        %v3417 = vpack.c.b16 %v3315, %v3314
        %v3418 = vpack.c.b16 %v3317, %v3316
        %v3419 = vpack.c.b16 %v3319, %v3318
        %v3420 = vpack.c.b16 %v3321, %v3320
        %v3421 = vpack.c.b16 %v3323, %v3322
        %v3422 = vpack.c.b16 %v3325, %v3324
        %v3423 = vpack.c.b16 %v3327, %v3326
        %v3424 = vpack.c.b16 %v3329, %v3328
        %v3425 = vpack.c.b16 %v3331, %v3330
        %v3426 = vpack.c.b16 %v3333, %v3332
        %v3427 = vpack.c.b16 %v3335, %v3334
        %v3428 = vpack.c.b16 %v3337, %v3336
        %v3429 = vpack.c.b16 %v3339, %v3338
        %v3430 = vpack.c.b16 %v3341, %v3340
        %v3431 = vpack.c.b16 %v3343, %v3342
        %v3432 = vpack.c.b16 %v3345, %v3344
        %v3433 = vpack.c.b16 %v3347, %v3346
        %v3434 = vpack.c.b16 %v3349, %v3348
        %v3435 = vpack.c.b16 %v3351, %v3350
        %v3436 = vpack.c.b16 %v3353, %v3352
        %v3437 = vpack.c.b16 %v3355, %v3354
        %v3438 = vpack.c.b16 %v3357, %v3356
        %v3439 = vpack.c.b16 %v3359, %v3358
        %v3440 = vpack.c.b16 %v3361, %v3360
        %v3441 = vpack.c.b16 %v3363, %v3362
        %v3442 = vpack.c.b16 %v3365, %v3364
        %v3443 = vpack.c.b16 %v3367, %v3366
        %v3444 = vpack.c.b16 %v3369, %v3368
        %v3445 = vpack.c.b16 %v3371, %v3370
        %v3446 = vpack.c.b16 %v3373, %v3372
        %v3447 = vpack.c.b16 %v3375, %v3374
        %3520 = vmatprep.subr.bf16.mxu0 0
        %3521 = vmatpush1.bf16.msra.mxu0 %v3383
        %3522 = vmatprep.subr.bf16.mxu0 0
        %3523 = vmatpush1.bf16.msra.mxu0 %v3382
        %3524 = vmatprep.subr.bf16.mxu0 0
        %3525 = vmatpush1.bf16.msra.mxu0 %v3381
        %3526 = vmatprep.subr.bf16.mxu0 0
        %3527 = vmatpush1.bf16.msra.mxu0 %v3380
        %3528 = vmatprep.subr.bf16.mxu0 0
        %3529 = vmatpush1.bf16.msra.mxu0 %v3379
        %3530 = vmatprep.subr.bf16.mxu0 0
        %3531 = vmatpush1.bf16.msra.mxu0 %v3378
        %3532 = vmatprep.subr.bf16.mxu0 0
        %3533 = vmatpush1.bf16.msra.mxu0 %v3377
        %3534 = vmatprep.subr.bf16.mxu0 0
        %3535 = vmatpush1.bf16.msra.mxu0 %v3376
        %3536 = vmatprep.subr.bf16.mxu0 0
        %3537 = vmatpush2.bf16.msra.mxu0 %v3391
        %3538 = vmatprep.subr.bf16.mxu0 0
        %3539 = vmatpush2.bf16.msra.mxu0 %v3390
        %3540 = vmatprep.subr.bf16.mxu0 0
        %3541 = vmatpush2.bf16.msra.mxu0 %v3389
        %3542 = vmatprep.subr.bf16.mxu0 0
        %3543 = vmatpush2.bf16.msra.mxu0 %v3388
        %3544 = vmatprep.subr.bf16.mxu0 0
        %3545 = vmatpush2.bf16.msra.mxu0 %v3387
        %3546 = vmatprep.subr.bf16.mxu0 0
        %3547 = vmatpush2.bf16.msra.mxu0 %v3386
        %3548 = vmatprep.subr.bf16.mxu0 0
        %3549 = vmatpush2.bf16.msra.mxu0 %v3385
        %3550 = vmatprep.subr.bf16.mxu0 0
        %3551 = vmatpush2.bf16.msra.mxu0 %v3384
        %3552 = vmatprep.mubr.bf16.mxu0 %v2945
        %3553 = vmatmul.mubr.bf16.gmra.mxu0 %v2944
        %v3554 = vpop.f32.mrf.mxu0
        %v3555 = vadd.f32 0.0, %v3554
        %v3556 = vpop.f32.mrf.mxu0
        %v3557 = vpop.f32.mrf.mxu0
        %v3558 = vadd.f32 0.0, %v3557
        %v3559 = vpop.f32.mrf.mxu0
        %3560 = vmatprep.mubr.bf16.mxu0 %v2954
        %3561 = vmatmul.mubr.bf16.gmra.mxu0 %v2953
        %v3562 = vpop.f32.mrf.mxu0
        %v3563 = vadd.f32 0.0, %v3562
        %v3564 = vpop.f32.mrf.mxu0
        %v3565 = vpop.f32.mrf.mxu0
        %v3566 = vadd.f32 0.0, %v3565
        %v3567 = vpop.f32.mrf.mxu0
        %3568 = vmatprep.mubr.bf16.mxu0 %v2963
        %3569 = vmatmul.mubr.bf16.gmra.mxu0 %v2962
        %v3570 = vpop.f32.mrf.mxu0
        %v3571 = vadd.f32 0.0, %v3570
        %v3572 = vpop.f32.mrf.mxu0
        %v3573 = vpop.f32.mrf.mxu0
        %v3574 = vadd.f32 0.0, %v3573
        %v3575 = vpop.f32.mrf.mxu0
        %3576 = vmatprep.mubr.bf16.mxu0 %v2972
        %3577 = vmatmul.mubr.bf16.gmra.mxu0 %v2971
        %v3578 = vpop.f32.mrf.mxu0
        %v3579 = vadd.f32 0.0, %v3578
        %v3580 = vpop.f32.mrf.mxu0
        %v3581 = vpop.f32.mrf.mxu0
        %v3582 = vadd.f32 0.0, %v3581
        %v3583 = vpop.f32.mrf.mxu0
        %3584 = vmatprep.mubr.bf16.mxu0 %v2981
        %3585 = vmatmul.mubr.bf16.gmra.mxu0 %v2980
        %v3586 = vpop.f32.mrf.mxu0
        %v3587 = vadd.f32 0.0, %v3586
        %v3588 = vpop.f32.mrf.mxu0
        %v3589 = vpop.f32.mrf.mxu0
        %v3590 = vadd.f32 0.0, %v3589
        %v3591 = vpop.f32.mrf.mxu0
        %3592 = vmatprep.mubr.bf16.mxu0 %v2990
        %3593 = vmatmul.mubr.bf16.gmra.mxu0 %v2989
        %v3594 = vpop.f32.mrf.mxu0
        %v3595 = vadd.f32 0.0, %v3594
        %v3596 = vpop.f32.mrf.mxu0
        %v3597 = vpop.f32.mrf.mxu0
        %v3598 = vadd.f32 0.0, %v3597
        %v3599 = vpop.f32.mrf.mxu0
        %3600 = vmatprep.mubr.bf16.mxu0 %v2999
        %3601 = vmatmul.mubr.bf16.gmra.mxu0 %v2998
        %v3602 = vpop.f32.mrf.mxu0
        %v3603 = vadd.f32 0.0, %v3602
        %v3604 = vpop.f32.mrf.mxu0
        %v3605 = vpop.f32.mrf.mxu0
        %v3606 = vadd.f32 0.0, %v3605
        %v3607 = vpop.f32.mrf.mxu0
        %3608 = vmatprep.mubr.bf16.mxu0 %v3008
        %3609 = vmatmul.mubr.bf16.gmra.mxu0 %v3007
        %v3610 = vpop.f32.mrf.mxu0
        %v3611 = vadd.f32 0.0, %v3610
        %v3612 = vpop.f32.mrf.mxu0
        %v3613 = vpop.f32.mrf.mxu0
        %v3614 = vadd.f32 0.0, %v3613
        %v3615 = vpop.f32.mrf.mxu0
        %3616 = vdwg.mxu0
        %3617 = vmatprep.subr.bf16.mxu0 0
        %3618 = vmatpush1.bf16.msra.mxu0 %v3399
        %3619 = vmatprep.subr.bf16.mxu0 0
        %3620 = vmatpush1.bf16.msra.mxu0 %v3398
        %3621 = vmatprep.subr.bf16.mxu0 0
        %3622 = vmatpush1.bf16.msra.mxu0 %v3397
        %3623 = vmatprep.subr.bf16.mxu0 0
        %3624 = vmatpush1.bf16.msra.mxu0 %v3396
        %3625 = vmatprep.subr.bf16.mxu0 0
        %3626 = vmatpush1.bf16.msra.mxu0 %v3395
        %3627 = vmatprep.subr.bf16.mxu0 0
        %3628 = vmatpush1.bf16.msra.mxu0 %v3394
        %3629 = vmatprep.subr.bf16.mxu0 0
        %3630 = vmatpush1.bf16.msra.mxu0 %v3393
        %3631 = vmatprep.subr.bf16.mxu0 0
        %3632 = vmatpush1.bf16.msra.mxu0 %v3392
        %3633 = vmatprep.subr.bf16.mxu0 0
        %3634 = vmatpush2.bf16.msra.mxu0 %v3407
        %3635 = vmatprep.subr.bf16.mxu0 0
        %3636 = vmatpush2.bf16.msra.mxu0 %v3406
        %3637 = vmatprep.subr.bf16.mxu0 0
        %3638 = vmatpush2.bf16.msra.mxu0 %v3405
        %3639 = vmatprep.subr.bf16.mxu0 0
        %3640 = vmatpush2.bf16.msra.mxu0 %v3404
        %3641 = vmatprep.subr.bf16.mxu0 0
        %3642 = vmatpush2.bf16.msra.mxu0 %v3403
        %3643 = vmatprep.subr.bf16.mxu0 0
        %3644 = vmatpush2.bf16.msra.mxu0 %v3402
        %3645 = vmatprep.subr.bf16.mxu0 0
        %3646 = vmatpush2.bf16.msra.mxu0 %v3401
        %3647 = vmatprep.subr.bf16.mxu0 0
        %3648 = vmatpush2.bf16.msra.mxu0 %v3400
        %3649 = vmatprep.mubr.bf16.mxu0 %v2947
        %3650 = vmatmul.mubr.bf16.gmra.mxu0 %v2946
        %v3651 = vpop.f32.mrf.mxu0
        %v3652 = vadd.f32 %v3555, %v3651
        %v3653 = vpop.f32.mrf.mxu0
        %v3654 = vpop.f32.mrf.mxu0
        %v3655 = vadd.f32 %v3558, %v3654
        %v3656 = vpop.f32.mrf.mxu0
        %3657 = vmatprep.mubr.bf16.mxu0 %v2956
        %3658 = vmatmul.mubr.bf16.gmra.mxu0 %v2955
        %v3659 = vpop.f32.mrf.mxu0
        %v3660 = vadd.f32 %v3563, %v3659
        %v3661 = vpop.f32.mrf.mxu0
        %v3662 = vpop.f32.mrf.mxu0
        %v3663 = vadd.f32 %v3566, %v3662
        %v3664 = vpop.f32.mrf.mxu0
        %3665 = vmatprep.mubr.bf16.mxu0 %v2965
        %3666 = vmatmul.mubr.bf16.gmra.mxu0 %v2964
        %v3667 = vpop.f32.mrf.mxu0
        %v3668 = vadd.f32 %v3571, %v3667
        %v3669 = vpop.f32.mrf.mxu0
        %v3670 = vpop.f32.mrf.mxu0
        %v3671 = vadd.f32 %v3574, %v3670
        %v3672 = vpop.f32.mrf.mxu0
        %3673 = vmatprep.mubr.bf16.mxu0 %v2974
        %3674 = vmatmul.mubr.bf16.gmra.mxu0 %v2973
        %v3675 = vpop.f32.mrf.mxu0
        %v3676 = vadd.f32 %v3579, %v3675
        %v3677 = vpop.f32.mrf.mxu0
        %v3678 = vpop.f32.mrf.mxu0
        %v3679 = vadd.f32 %v3582, %v3678
        %v3680 = vpop.f32.mrf.mxu0
        %3681 = vmatprep.mubr.bf16.mxu0 %v2983
        %3682 = vmatmul.mubr.bf16.gmra.mxu0 %v2982
        %v3683 = vpop.f32.mrf.mxu0
        %v3684 = vadd.f32 %v3587, %v3683
        %v3685 = vpop.f32.mrf.mxu0
        %v3686 = vpop.f32.mrf.mxu0
        %v3687 = vadd.f32 %v3590, %v3686
        %v3688 = vpop.f32.mrf.mxu0
        %3689 = vmatprep.mubr.bf16.mxu0 %v2992
        %3690 = vmatmul.mubr.bf16.gmra.mxu0 %v2991
        %v3691 = vpop.f32.mrf.mxu0
        %v3692 = vadd.f32 %v3595, %v3691
        %v3693 = vpop.f32.mrf.mxu0
        %v3694 = vpop.f32.mrf.mxu0
        %v3695 = vadd.f32 %v3598, %v3694
        %v3696 = vpop.f32.mrf.mxu0
        %3697 = vmatprep.mubr.bf16.mxu0 %v3001
        %3698 = vmatmul.mubr.bf16.gmra.mxu0 %v3000
        %v3699 = vpop.f32.mrf.mxu0
        %v3700 = vadd.f32 %v3603, %v3699
        %v3701 = vpop.f32.mrf.mxu0
        %v3702 = vpop.f32.mrf.mxu0
        %v3703 = vadd.f32 %v3606, %v3702
        %v3704 = vpop.f32.mrf.mxu0
        %3705 = vmatprep.mubr.bf16.mxu0 %v3010
        %3706 = vmatmul.mubr.bf16.gmra.mxu0 %v3009
        %v3707 = vpop.f32.mrf.mxu0
        %v3708 = vadd.f32 %v3611, %v3707
        %v3709 = vpop.f32.mrf.mxu0
        %v3710 = vpop.f32.mrf.mxu0
        %v3711 = vadd.f32 %v3614, %v3710
        %v3712 = vpop.f32.mrf.mxu0
        %3713 = vdwg.mxu0
        %3714 = vmatprep.subr.bf16.mxu0 0
        %3715 = vmatpush1.bf16.msra.mxu0 %v3415
        %3716 = vmatprep.subr.bf16.mxu0 0
        %3717 = vmatpush1.bf16.msra.mxu0 %v3414
        %3718 = vmatprep.subr.bf16.mxu0 0
        %3719 = vmatpush1.bf16.msra.mxu0 %v3413
        %3720 = vmatprep.subr.bf16.mxu0 0
        %3721 = vmatpush1.bf16.msra.mxu0 %v3412
        %3722 = vmatprep.subr.bf16.mxu0 0
        %3723 = vmatpush1.bf16.msra.mxu0 %v3411
        %3724 = vmatprep.subr.bf16.mxu0 0
        %3725 = vmatpush1.bf16.msra.mxu0 %v3410
        %3726 = vmatprep.subr.bf16.mxu0 0
        %3727 = vmatpush1.bf16.msra.mxu0 %v3409
        %3728 = vmatprep.subr.bf16.mxu0 0
        %3729 = vmatpush1.bf16.msra.mxu0 %v3408
        %3730 = vmatprep.subr.bf16.mxu0 0
        %3731 = vmatpush2.bf16.msra.mxu0 %v3423
        %3732 = vmatprep.subr.bf16.mxu0 0
        %3733 = vmatpush2.bf16.msra.mxu0 %v3422
        %3734 = vmatprep.subr.bf16.mxu0 0
        %3735 = vmatpush2.bf16.msra.mxu0 %v3421
        %3736 = vmatprep.subr.bf16.mxu0 0
        %3737 = vmatpush2.bf16.msra.mxu0 %v3420
        %3738 = vmatprep.subr.bf16.mxu0 0
        %3739 = vmatpush2.bf16.msra.mxu0 %v3419
        %3740 = vmatprep.subr.bf16.mxu0 0
        %3741 = vmatpush2.bf16.msra.mxu0 %v3418
        %3742 = vmatprep.subr.bf16.mxu0 0
        %3743 = vmatpush2.bf16.msra.mxu0 %v3417
        %3744 = vmatprep.subr.bf16.mxu0 0
        %3745 = vmatpush2.bf16.msra.mxu0 %v3416
        %3746 = vmatprep.mubr.bf16.mxu0 %v2949
        %3747 = vmatmul.mubr.bf16.gmra.mxu0 %v2948
        %v3748 = vpop.f32.mrf.mxu0
        %v3749 = vadd.f32 %v3652, %v3748
        %v3750 = vpop.f32.mrf.mxu0
        %v3751 = vpop.f32.mrf.mxu0
        %v3752 = vadd.f32 %v3655, %v3751
        %v3753 = vpop.f32.mrf.mxu0
        %3754 = vmatprep.mubr.bf16.mxu0 %v2958
        %3755 = vmatmul.mubr.bf16.gmra.mxu0 %v2957
        %v3756 = vpop.f32.mrf.mxu0
        %v3757 = vadd.f32 %v3660, %v3756
        %v3758 = vpop.f32.mrf.mxu0
        %v3759 = vpop.f32.mrf.mxu0
        %v3760 = vadd.f32 %v3663, %v3759
        %v3761 = vpop.f32.mrf.mxu0
        %3762 = vmatprep.mubr.bf16.mxu0 %v2967
        %3763 = vmatmul.mubr.bf16.gmra.mxu0 %v2966
        %v3764 = vpop.f32.mrf.mxu0
        %v3765 = vadd.f32 %v3668, %v3764
        %v3766 = vpop.f32.mrf.mxu0
        %v3767 = vpop.f32.mrf.mxu0
        %v3768 = vadd.f32 %v3671, %v3767
        %v3769 = vpop.f32.mrf.mxu0
        %3770 = vmatprep.mubr.bf16.mxu0 %v2976
        %3771 = vmatmul.mubr.bf16.gmra.mxu0 %v2975
        %v3772 = vpop.f32.mrf.mxu0
        %v3773 = vadd.f32 %v3676, %v3772
        %v3774 = vpop.f32.mrf.mxu0
        %v3775 = vpop.f32.mrf.mxu0
        %v3776 = vadd.f32 %v3679, %v3775
        %v3777 = vpop.f32.mrf.mxu0
        %3778 = vmatprep.mubr.bf16.mxu0 %v2985
        %3779 = vmatmul.mubr.bf16.gmra.mxu0 %v2984
        %v3780 = vpop.f32.mrf.mxu0
        %v3781 = vadd.f32 %v3684, %v3780
        %v3782 = vpop.f32.mrf.mxu0
        %v3783 = vpop.f32.mrf.mxu0
        %v3784 = vadd.f32 %v3687, %v3783
        %v3785 = vpop.f32.mrf.mxu0
        %3786 = vmatprep.mubr.bf16.mxu0 %v2994
        %3787 = vmatmul.mubr.bf16.gmra.mxu0 %v2993
        %v3788 = vpop.f32.mrf.mxu0
        %v3789 = vadd.f32 %v3692, %v3788
        %v3790 = vpop.f32.mrf.mxu0
        %v3791 = vpop.f32.mrf.mxu0
        %v3792 = vadd.f32 %v3695, %v3791
        %v3793 = vpop.f32.mrf.mxu0
        %3794 = vmatprep.mubr.bf16.mxu0 %v3003
        %3795 = vmatmul.mubr.bf16.gmra.mxu0 %v3002
        %v3796 = vpop.f32.mrf.mxu0
        %v3797 = vadd.f32 %v3700, %v3796
        %v3798 = vpop.f32.mrf.mxu0
        %v3799 = vpop.f32.mrf.mxu0
        %v3800 = vadd.f32 %v3703, %v3799
        %v3801 = vpop.f32.mrf.mxu0
        %3802 = vmatprep.mubr.bf16.mxu0 %v3012
        %3803 = vmatmul.mubr.bf16.gmra.mxu0 %v3011
        %v3804 = vpop.f32.mrf.mxu0
        %v3805 = vadd.f32 %v3708, %v3804
        %v3806 = vpop.f32.mrf.mxu0
        %v3807 = vpop.f32.mrf.mxu0
        %v3808 = vadd.f32 %v3711, %v3807
        %v3809 = vpop.f32.mrf.mxu0
        %3810 = vdwg.mxu0
        %3811 = vmatprep.subr.bf16.mxu0 0
        %3812 = vmatpush1.bf16.msra.mxu0 %v3431
        %3813 = vmatprep.subr.bf16.mxu0 0
        %3814 = vmatpush1.bf16.msra.mxu0 %v3430
        %3815 = vmatprep.subr.bf16.mxu0 0
        %3816 = vmatpush1.bf16.msra.mxu0 %v3429
        %3817 = vmatprep.subr.bf16.mxu0 0
        %3818 = vmatpush1.bf16.msra.mxu0 %v3428
        %3819 = vmatprep.subr.bf16.mxu0 0
        %3820 = vmatpush1.bf16.msra.mxu0 %v3427
        %3821 = vmatprep.subr.bf16.mxu0 0
        %3822 = vmatpush1.bf16.msra.mxu0 %v3426
        %3823 = vmatprep.subr.bf16.mxu0 0
        %3824 = vmatpush1.bf16.msra.mxu0 %v3425
        %3825 = vmatprep.subr.bf16.mxu0 0
        %3826 = vmatpush1.bf16.msra.mxu0 %v3424
        %3827 = vmatprep.subr.bf16.mxu0 0
        %3828 = vmatpush2.bf16.msra.mxu0 %v3439
        %3829 = vmatprep.subr.bf16.mxu0 0
        %3830 = vmatpush2.bf16.msra.mxu0 %v3438
        %3831 = vmatprep.subr.bf16.mxu0 0
        %3832 = vmatpush2.bf16.msra.mxu0 %v3437
        %3833 = vmatprep.subr.bf16.mxu0 0
        %3834 = vmatpush2.bf16.msra.mxu0 %v3436
        %3835 = vmatprep.subr.bf16.mxu0 0
        %3836 = vmatpush2.bf16.msra.mxu0 %v3435
        %3837 = vmatprep.subr.bf16.mxu0 0
        %3838 = vmatpush2.bf16.msra.mxu0 %v3434
        %3839 = vmatprep.subr.bf16.mxu0 0
        %3840 = vmatpush2.bf16.msra.mxu0 %v3433
        %3841 = vmatprep.subr.bf16.mxu0 0
        %3842 = vmatpush2.bf16.msra.mxu0 %v3432
        %3843 = vmatprep.mubr.bf16.mxu0 %v2951
        %3844 = vmatmul.mubr.bf16.gmra.mxu0 %v2950
        %v3845 = vpop.f32.mrf.mxu0
        %v3846 = vadd.f32 %v3749, %v3845
        %v3847 = vpop.f32.mrf.mxu0
        %v3848 = vpop.f32.mrf.mxu0
        %v3849 = vadd.f32 %v3752, %v3848
        %v3850 = vpop.f32.mrf.mxu0
        %3851 = vmatprep.mubr.bf16.mxu0 %v2960
        %3852 = vmatmul.mubr.bf16.gmra.mxu0 %v2959
        %v3853 = vpop.f32.mrf.mxu0
        %v3854 = vadd.f32 %v3757, %v3853
        %v3855 = vpop.f32.mrf.mxu0
        %v3856 = vpop.f32.mrf.mxu0
        %v3857 = vadd.f32 %v3760, %v3856
        %v3858 = vpop.f32.mrf.mxu0
        %3859 = vmatprep.mubr.bf16.mxu0 %v2969
        %3860 = vmatmul.mubr.bf16.gmra.mxu0 %v2968
        %v3861 = vpop.f32.mrf.mxu0
        %v3862 = vadd.f32 %v3765, %v3861
        %v3863 = vpop.f32.mrf.mxu0
        %v3864 = vpop.f32.mrf.mxu0
        %v3865 = vadd.f32 %v3768, %v3864
        %v3866 = vpop.f32.mrf.mxu0
        %3867 = vmatprep.mubr.bf16.mxu0 %v2978
        %3868 = vmatmul.mubr.bf16.gmra.mxu0 %v2977
        %v3869 = vpop.f32.mrf.mxu0
        %v3870 = vadd.f32 %v3773, %v3869
        %v3871 = vpop.f32.mrf.mxu0
        %v3872 = vpop.f32.mrf.mxu0
        %v3873 = vadd.f32 %v3776, %v3872
        %v3874 = vpop.f32.mrf.mxu0
        %3875 = vmatprep.mubr.bf16.mxu0 %v2987
        %3876 = vmatmul.mubr.bf16.gmra.mxu0 %v2986
        %v3877 = vpop.f32.mrf.mxu0
        %v3878 = vadd.f32 %v3781, %v3877
        %v3879 = vpop.f32.mrf.mxu0
        %v3880 = vpop.f32.mrf.mxu0
        %v3881 = vadd.f32 %v3784, %v3880
        %v3882 = vpop.f32.mrf.mxu0
        %3883 = vmatprep.mubr.bf16.mxu0 %v2996
        %3884 = vmatmul.mubr.bf16.gmra.mxu0 %v2995
        %v3885 = vpop.f32.mrf.mxu0
        %v3886 = vadd.f32 %v3789, %v3885
        %v3887 = vpop.f32.mrf.mxu0
        %v3888 = vpop.f32.mrf.mxu0
        %v3889 = vadd.f32 %v3792, %v3888
        %v3890 = vpop.f32.mrf.mxu0
        %3891 = vmatprep.mubr.bf16.mxu0 %v3005
        %3892 = vmatmul.mubr.bf16.gmra.mxu0 %v3004
        %v3893 = vpop.f32.mrf.mxu0
        %v3894 = vadd.f32 %v3797, %v3893
        %v3895 = vpop.f32.mrf.mxu0
        %v3896 = vpop.f32.mrf.mxu0
        %v3897 = vadd.f32 %v3800, %v3896
        %v3898 = vpop.f32.mrf.mxu0
        %3899 = vmatprep.mubr.bf16.mxu0 %v3014
        %3900 = vmatmul.mubr.bf16.gmra.mxu0 %v3013
        %v3901 = vpop.f32.mrf.mxu0
        %v3902 = vadd.f32 %v3805, %v3901
        %v3903 = vpop.f32.mrf.mxu0
        %v3904 = vpop.f32.mrf.mxu0
        %v3905 = vadd.f32 %v3808, %v3904
        %v3906 = vpop.f32.mrf.mxu0
        %3907 = vdwg.mxu0
        %3908 = vmatprep.subr.bf16.mxu0 0
        %3909 = vmatpush1.bf16.msra.mxu0 %v3447
        %3910 = vmatprep.subr.bf16.mxu0 0
        %3911 = vmatpush1.bf16.msra.mxu0 %v3446
        %3912 = vmatprep.subr.bf16.mxu0 0
        %3913 = vmatpush1.bf16.msra.mxu0 %v3445
        %3914 = vmatprep.subr.bf16.mxu0 0
        %3915 = vmatpush1.bf16.msra.mxu0 %v3444
        %3916 = vmatprep.subr.bf16.mxu0 0
        %3917 = vmatpush1.bf16.msra.mxu0 %v3443
        %3918 = vmatprep.subr.bf16.mxu0 0
        %3919 = vmatpush1.bf16.msra.mxu0 %v3442
        %3920 = vmatprep.subr.bf16.mxu0 0
        %3921 = vmatpush1.bf16.msra.mxu0 %v3441
        %3922 = vmatprep.subr.bf16.mxu0 0
        %3923 = vmatpush1.bf16.msra.mxu0 %v3440
        %3924 = vmatprep.subr.bf16.mxu0 0
        %3925 = vmatpush2.bf16.msra.mxu0 0
        %3926 = vmatprep.subr.bf16.mxu0 0
        %3927 = vmatpush2.bf16.msra.mxu0 0
        %3928 = vmatprep.subr.bf16.mxu0 0
        %3929 = vmatpush2.bf16.msra.mxu0 0
        %3930 = vmatprep.subr.bf16.mxu0 0
        %3931 = vmatpush2.bf16.msra.mxu0 0
        %3932 = vmatprep.subr.bf16.mxu0 0
        %3933 = vmatpush2.bf16.msra.mxu0 0
        %3934 = vmatprep.subr.bf16.mxu0 0
        %3935 = vmatpush2.bf16.msra.mxu0 0
        %3936 = vmatprep.subr.bf16.mxu0 0
        %3937 = vmatpush2.bf16.msra.mxu0 0
        %3938 = vmatprep.subr.bf16.mxu0 0
        %3939 = vmatpush2.bf16.msra.mxu0 0
        %3940 = vmatprep.mubr.bf16.mxu0 0
        %3941 = vmatmul.mubr.bf16.gmra.mxu0 %v2952
        %v3942 = vpop.f32.mrf.mxu0
        %v3943 = vadd.f32 %v3846, %v3942
        %v3944 = vpop.f32.mrf.mxu0
        %v3945 = vpop.f32.mrf.mxu0
        %v3946 = vadd.f32 %v3849, %v3945
        %v3947 = vpop.f32.mrf.mxu0
        %3948 = vmatprep.mubr.bf16.mxu0 0
        %3949 = vmatmul.mubr.bf16.gmra.mxu0 %v2961
        %v3950 = vpop.f32.mrf.mxu0
        %v3951 = vadd.f32 %v3854, %v3950
        %v3952 = vpop.f32.mrf.mxu0
        %v3953 = vpop.f32.mrf.mxu0
        %v3954 = vadd.f32 %v3857, %v3953
        %v3955 = vpop.f32.mrf.mxu0
        %3956 = vmatprep.mubr.bf16.mxu0 0
        %3957 = vmatmul.mubr.bf16.gmra.mxu0 %v2970
        %v3958 = vpop.f32.mrf.mxu0
        %v3959 = vadd.f32 %v3862, %v3958
        %v3960 = vpop.f32.mrf.mxu0
        %v3961 = vpop.f32.mrf.mxu0
        %v3962 = vadd.f32 %v3865, %v3961
        %v3963 = vpop.f32.mrf.mxu0
        %3964 = vmatprep.mubr.bf16.mxu0 0
        %3965 = vmatmul.mubr.bf16.gmra.mxu0 %v2979
        %v3966 = vpop.f32.mrf.mxu0
        %v3967 = vadd.f32 %v3870, %v3966
        %v3968 = vpop.f32.mrf.mxu0
        %v3969 = vpop.f32.mrf.mxu0
        %v3970 = vadd.f32 %v3873, %v3969
        %v3971 = vpop.f32.mrf.mxu0
        %3972 = vmatprep.mubr.bf16.mxu0 0
        %3973 = vmatmul.mubr.bf16.gmra.mxu0 %v2988
        %v3974 = vpop.f32.mrf.mxu0
        %v3975 = vadd.f32 %v3878, %v3974
        %v3976 = vpop.f32.mrf.mxu0
        %v3977 = vpop.f32.mrf.mxu0
        %v3978 = vadd.f32 %v3881, %v3977
        %v3979 = vpop.f32.mrf.mxu0
        %3980 = vmatprep.mubr.bf16.mxu0 0
        %3981 = vmatmul.mubr.bf16.gmra.mxu0 %v2997
        %v3982 = vpop.f32.mrf.mxu0
        %v3983 = vadd.f32 %v3886, %v3982
        %v3984 = vpop.f32.mrf.mxu0
        %v3985 = vpop.f32.mrf.mxu0
        %v3986 = vadd.f32 %v3889, %v3985
        %v3987 = vpop.f32.mrf.mxu0
        %3988 = vmatprep.mubr.bf16.mxu0 0
        %3989 = vmatmul.mubr.bf16.gmra.mxu0 %v3006
        %v3990 = vpop.f32.mrf.mxu0
        %v3991 = vadd.f32 %v3894, %v3990
        %v3992 = vpop.f32.mrf.mxu0
        %v3993 = vpop.f32.mrf.mxu0
        %v3994 = vadd.f32 %v3897, %v3993
        %v3995 = vpop.f32.mrf.mxu0
        %3996 = vmatprep.mubr.bf16.mxu0 0
        %3997 = vmatmul.mubr.bf16.gmra.mxu0 %v3015
        %v3998 = vpop.f32.mrf.mxu0
        %v3999 = vadd.f32 %v3902, %v3998
        %v4000 = vpop.f32.mrf.mxu0
        %v4001 = vpop.f32.mrf.mxu0
        %v4002 = vadd.f32 %v3905, %v4001
        %v4003 = vpop.f32.mrf.mxu0
        %4004 = vdwg.mxu0
        %v4005 = vadd.f32 %v2480, %v3943
        %v4006 = vadd.f32 %v2481, %v3946
        %v4007 = vadd.f32 %v2482, %v3951
        %v4008 = vadd.f32 %v2483, %v3954
        %v4009 = vadd.f32 %v2484, %v3959
        %v4010 = vadd.f32 %v2485, %v3962
        %v4011 = vadd.f32 %v2486, %v3967
        %v4012 = vadd.f32 %v2487, %v3970
        %v4013 = vadd.f32 %v2488, %v3975
        %v4014 = vadd.f32 %v2489, %v3978
        %v4015 = vadd.f32 %v2490, %v3983
        %v4016 = vadd.f32 %v2491, %v3986
        %v4017 = vadd.f32 %v2492, %v3991
        %v4018 = vadd.f32 %v2493, %v3994
        %v4019 = vadd.f32 %v2494, %v3999
        %v4020 = vadd.f32 %v2495, %v4002
        %4021 = vst [vmem:[#allocation4] sm:$0xff] %v4005
        %4022 = vst [vmem:[#allocation4 + $0x8] sm:$0xff] %v4006
        %4023 = vst [vmem:[#allocation4 + $0x10] sm:$0xff] %v4007
        %4024 = vst [vmem:[#allocation4 + $0x18] sm:$0xff] %v4008
        %4025 = vst [vmem:[#allocation4 + $0x20] sm:$0xff] %v4009
        %4026 = vst [vmem:[#allocation4 + $0x28] sm:$0xff] %v4010
        %4027 = vst [vmem:[#allocation4 + $0x30] sm:$0xff] %v4011
        %4028 = vst [vmem:[#allocation4 + $0x38] sm:$0xff] %v4012
        %4029 = vst [vmem:[#allocation4 + $0x40] sm:$0xff] %v4013
        %4030 = vst [vmem:[#allocation4 + $0x48] sm:$0xff] %v4014
        %4031 = vst [vmem:[#allocation4 + $0x50] sm:$0xff] %v4015
        %4032 = vst [vmem:[#allocation4 + $0x58] sm:$0xff] %v4016
        %4033 = vst [vmem:[#allocation4 + $0x60] sm:$0xff] %v4017
        %4034 = vst [vmem:[#allocation4 + $0x68] sm:$0xff] %v4018
        %4035 = vst [vmem:[#allocation4 + $0x70] sm:$0xff] %v4019
        %4036 = vst [vmem:[#allocation4 + $0x78] sm:$0xff] %v4020
        %s4037 = sadd.s32 %s925, 12
        %s4038 = smul.u32 %s4037, 10
        %s4039 = smul.addr %s4038, 4
        %s4040 = scalar_lea.vmem [#allocation2], %s4039
        %v4041 = vld [vmem:[%s4040 + $0xc] sm:$0xe]
        %v4042 = vld [vmem:[%s4040 + $0x10] sm:$0xf]
        %v4043 = vld [vmem:[%s4040 + $0x14] sm:$0x1]
        %v4044 = vld [vmem:[%s4040 + $0x34] sm:$0xe]
        %v4045 = vld [vmem:[%s4040 + $0x38] sm:$0xf]
        %v4046 = vld [vmem:[%s4040 + $0x3c] sm:$0x1]
        %v4047 = vld [vmem:[%s4040 + $0x5c] sm:$0xe]
        %v4048 = vld [vmem:[%s4040 + $0x60] sm:$0xf]
        %v4049 = vld [vmem:[%s4040 + $0x64] sm:$0x1]
        %v4050 = vld [vmem:[%s4040 + $0x84] sm:$0xe]
        %v4051 = vld [vmem:[%s4040 + $0x88] sm:$0xf]
        %v4052 = vld [vmem:[%s4040 + $0x8c] sm:$0x1]
        %v4053 = vld [vmem:[%s4040 + $0xac] sm:$0xe]
        %v4054 = vld [vmem:[%s4040 + $0xb0] sm:$0xf]
        %v4055 = vld [vmem:[%s4040 + $0xb4] sm:$0x1]
        %v4056 = vld [vmem:[%s4040 + $0xd4] sm:$0xe]
        %v4057 = vld [vmem:[%s4040 + $0xd8] sm:$0xf]
        %v4058 = vld [vmem:[%s4040 + $0xdc] sm:$0x1]
        %v4059 = vld [vmem:[%s4040 + $0xfc] sm:$0xe]
        %v4060 = vld [vmem:[%s4040 + $0x100] sm:$0xf]
        %v4061 = vld [vmem:[%s4040 + $0x104] sm:$0x1]
        %v4062 = vld [vmem:[%s4040 + $0x124] sm:$0xe]
        %v4063 = vld [vmem:[%s4040 + $0x128] sm:$0xf]
        %v4064 = vld [vmem:[%s4040 + $0x12c] sm:$0x1]
        %vm4089 = vcmask 1042432
        %vm4090 = vcmask 1046532
        %vm4091 = vmor %vm4089, %vm4090
        %v4092 = vrot.slane %v4041, 5
        %v4093 = vrot.slane %v4092, 4
        %v4094 = vrot.slane %v4042, 5
        %v4095 = vsel %vm4091, %v4093, %v4094
        %v4096 = vrot.slane %v4094, 4
        %v4097 = vrot.slane %v4043, 5
        %v4098 = vsel %vm4091, %v4096, %v4097
        %v4099 = vrot.slane %v4044, 5
        %v4100 = vrot.slane %v4099, 4
        %v4101 = vrot.slane %v4045, 5
        %v4102 = vsel %vm4091, %v4100, %v4101
        %v4103 = vrot.slane %v4101, 4
        %v4104 = vrot.slane %v4046, 5
        %v4105 = vsel %vm4091, %v4103, %v4104
        %v4106 = vrot.slane %v4047, 5
        %v4107 = vrot.slane %v4106, 4
        %v4108 = vrot.slane %v4048, 5
        %v4109 = vsel %vm4091, %v4107, %v4108
        %v4110 = vrot.slane %v4108, 4
        %v4111 = vrot.slane %v4049, 5
        %v4112 = vsel %vm4091, %v4110, %v4111
        %v4113 = vrot.slane %v4050, 5
        %v4114 = vrot.slane %v4113, 4
        %v4115 = vrot.slane %v4051, 5
        %v4116 = vsel %vm4091, %v4114, %v4115
        %v4117 = vrot.slane %v4115, 4
        %v4118 = vrot.slane %v4052, 5
        %v4119 = vsel %vm4091, %v4117, %v4118
        %v4120 = vrot.slane %v4053, 5
        %v4121 = vrot.slane %v4120, 4
        %v4122 = vrot.slane %v4054, 5
        %v4123 = vsel %vm4091, %v4121, %v4122
        %v4124 = vrot.slane %v4122, 4
        %v4125 = vrot.slane %v4055, 5
        %v4126 = vsel %vm4091, %v4124, %v4125
        %v4127 = vrot.slane %v4056, 5
        %v4128 = vrot.slane %v4127, 4
        %v4129 = vrot.slane %v4057, 5
        %v4130 = vsel %vm4091, %v4128, %v4129
        %v4131 = vrot.slane %v4129, 4
        %v4132 = vrot.slane %v4058, 5
        %v4133 = vsel %vm4091, %v4131, %v4132
        %v4134 = vrot.slane %v4059, 5
        %v4135 = vrot.slane %v4134, 4
        %v4136 = vrot.slane %v4060, 5
        %v4137 = vsel %vm4091, %v4135, %v4136
        %v4138 = vrot.slane %v4136, 4
        %v4139 = vrot.slane %v4061, 5
        %v4140 = vsel %vm4091, %v4138, %v4139
        %v4141 = vrot.slane %v4062, 5
        %v4142 = vrot.slane %v4141, 4
        %v4143 = vrot.slane %v4063, 5
        %v4144 = vsel %vm4091, %v4142, %v4143
        %v4145 = vrot.slane %v4143, 4
        %v4146 = vrot.slane %v4064, 5
        %v4147 = vsel %vm4091, %v4145, %v4146
        %4164 = vst [vmem:[#allocation3] sm:$0xf] %v4095
        %4165 = vst [vmem:[#allocation3 + $0x24] sm:$0xf] %v4098
        %4166 = vst [vmem:[#allocation3 + $0x48] sm:$0xf] %v4102
        %4167 = vst [vmem:[#allocation3 + $0x6c] sm:$0xf] %v4105
        %4168 = vst [vmem:[#allocation3 + $0x90] sm:$0xf] %v4109
        %4169 = vst [vmem:[#allocation3 + $0xb4] sm:$0xf] %v4112
        %4170 = vst [vmem:[#allocation3 + $0xd8] sm:$0xf] %v4116
        %4171 = vst [vmem:[#allocation3 + $0xfc] sm:$0xf] %v4119
        %4172 = vst [vmem:[#allocation3 + $0x120] sm:$0xf] %v4123
        %4173 = vst [vmem:[#allocation3 + $0x144] sm:$0xf] %v4126
        %4174 = vst [vmem:[#allocation3 + $0x168] sm:$0xf] %v4130
        %4175 = vst [vmem:[#allocation3 + $0x18c] sm:$0xf] %v4133
        %4176 = vst [vmem:[#allocation3 + $0x1b0] sm:$0xf] %v4137
        %4177 = vst [vmem:[#allocation3 + $0x1d4] sm:$0xf] %v4140
        %4178 = vst [vmem:[#allocation3 + $0x1f8] sm:$0xf] %v4144
        %4179 = vst [vmem:[#allocation3 + $0x21c] sm:$0xf] %v4147
        %v4180 = vld [vmem:[%s4040 + $0x10] sm:$0xf]
        %v4181 = vld [vmem:[%s4040 + $0x14] sm:$0xf]
        %v4182 = vld [vmem:[%s4040 + $0x38] sm:$0xf]
        %v4183 = vld [vmem:[%s4040 + $0x3c] sm:$0xf]
        %v4184 = vld [vmem:[%s4040 + $0x60] sm:$0xf]
        %v4185 = vld [vmem:[%s4040 + $0x64] sm:$0xf]
        %v4186 = vld [vmem:[%s4040 + $0x88] sm:$0xf]
        %v4187 = vld [vmem:[%s4040 + $0x8c] sm:$0xf]
        %v4188 = vld [vmem:[%s4040 + $0xb0] sm:$0xf]
        %v4189 = vld [vmem:[%s4040 + $0xb4] sm:$0xf]
        %v4190 = vld [vmem:[%s4040 + $0xd8] sm:$0xf]
        %v4191 = vld [vmem:[%s4040 + $0xdc] sm:$0xf]
        %v4192 = vld [vmem:[%s4040 + $0x100] sm:$0xf]
        %v4193 = vld [vmem:[%s4040 + $0x104] sm:$0xf]
        %v4194 = vld [vmem:[%s4040 + $0x128] sm:$0xf]
        %v4195 = vld [vmem:[%s4040 + $0x12c] sm:$0xf]
        %4196 = vst [vmem:[#allocation3 + $0x4] sm:$0xf] %v4180
        %4197 = vst [vmem:[#allocation3 + $0x28] sm:$0xf] %v4181
        %4198 = vst [vmem:[#allocation3 + $0x4c] sm:$0xf] %v4182
        %4199 = vst [vmem:[#allocation3 + $0x70] sm:$0xf] %v4183
        %4200 = vst [vmem:[#allocation3 + $0x94] sm:$0xf] %v4184
        %4201 = vst [vmem:[#allocation3 + $0xb8] sm:$0xf] %v4185
        %4202 = vst [vmem:[#allocation3 + $0xdc] sm:$0xf] %v4186
        %4203 = vst [vmem:[#allocation3 + $0x100] sm:$0xf] %v4187
        %4204 = vst [vmem:[#allocation3 + $0x124] sm:$0xf] %v4188
        %4205 = vst [vmem:[#allocation3 + $0x148] sm:$0xf] %v4189
        %4206 = vst [vmem:[#allocation3 + $0x16c] sm:$0xf] %v4190
        %4207 = vst [vmem:[#allocation3 + $0x190] sm:$0xf] %v4191
        %4208 = vst [vmem:[#allocation3 + $0x1b4] sm:$0xf] %v4192
        %4209 = vst [vmem:[#allocation3 + $0x1d8] sm:$0xf] %v4193
        %4210 = vst [vmem:[#allocation3 + $0x1fc] sm:$0xf] %v4194
        %4211 = vst [vmem:[#allocation3 + $0x220] sm:$0xf] %v4195
        %v4212 = vld [vmem:[%s4040 + $0x10] sm:$0x8]
        %v4213 = vld [vmem:[%s4040 + $0x14] sm:$0xf]
        %v4214 = vld [vmem:[%s4040 + $0x18] sm:$0x7]
        %v4215 = vld [vmem:[%s4040 + $0x38] sm:$0x8]
        %v4216 = vld [vmem:[%s4040 + $0x3c] sm:$0xf]
        %v4217 = vld [vmem:[%s4040 + $0x40] sm:$0x7]
        %v4218 = vld [vmem:[%s4040 + $0x60] sm:$0x8]
        %v4219 = vld [vmem:[%s4040 + $0x64] sm:$0xf]
        %v4220 = vld [vmem:[%s4040 + $0x68] sm:$0x7]
        %v4221 = vld [vmem:[%s4040 + $0x88] sm:$0x8]
        %v4222 = vld [vmem:[%s4040 + $0x8c] sm:$0xf]
        %v4223 = vld [vmem:[%s4040 + $0x90] sm:$0x7]
        %v4224 = vld [vmem:[%s4040 + $0xb0] sm:$0x8]
        %v4225 = vld [vmem:[%s4040 + $0xb4] sm:$0xf]
        %v4226 = vld [vmem:[%s4040 + $0xb8] sm:$0x7]
        %v4227 = vld [vmem:[%s4040 + $0xd8] sm:$0x8]
        %v4228 = vld [vmem:[%s4040 + $0xdc] sm:$0xf]
        %v4229 = vld [vmem:[%s4040 + $0xe0] sm:$0x7]
        %v4230 = vld [vmem:[%s4040 + $0x100] sm:$0x8]
        %v4231 = vld [vmem:[%s4040 + $0x104] sm:$0xf]
        %v4232 = vld [vmem:[%s4040 + $0x108] sm:$0x7]
        %v4233 = vld [vmem:[%s4040 + $0x128] sm:$0x8]
        %v4234 = vld [vmem:[%s4040 + $0x12c] sm:$0xf]
        %v4235 = vld [vmem:[%s4040 + $0x130] sm:$0x7]
        %vm4260 = vcmask 1040384
        %vm4261 = vcmask 1044484
        %vm4262 = vmor %vm4260, %vm4261
        %v4263 = vrot.slane %v4212, 7
        %v4264 = vrot.slane %v4263, 4
        %v4265 = vrot.slane %v4213, 7
        %v4266 = vsel %vm4262, %v4264, %v4265
        %v4267 = vrot.slane %v4265, 4
        %v4268 = vrot.slane %v4214, 7
        %v4269 = vsel %vm4262, %v4267, %v4268
        %v4270 = vrot.slane %v4215, 7
        %v4271 = vrot.slane %v4270, 4
        %v4272 = vrot.slane %v4216, 7
        %v4273 = vsel %vm4262, %v4271, %v4272
        %v4274 = vrot.slane %v4272, 4
        %v4275 = vrot.slane %v4217, 7
        %v4276 = vsel %vm4262, %v4274, %v4275
        %v4277 = vrot.slane %v4218, 7
        %v4278 = vrot.slane %v4277, 4
        %v4279 = vrot.slane %v4219, 7
        %v4280 = vsel %vm4262, %v4278, %v4279
        %v4281 = vrot.slane %v4279, 4
        %v4282 = vrot.slane %v4220, 7
        %v4283 = vsel %vm4262, %v4281, %v4282
        %v4284 = vrot.slane %v4221, 7
        %v4285 = vrot.slane %v4284, 4
        %v4286 = vrot.slane %v4222, 7
        %v4287 = vsel %vm4262, %v4285, %v4286
        %v4288 = vrot.slane %v4286, 4
        %v4289 = vrot.slane %v4223, 7
        %v4290 = vsel %vm4262, %v4288, %v4289
        %v4291 = vrot.slane %v4224, 7
        %v4292 = vrot.slane %v4291, 4
        %v4293 = vrot.slane %v4225, 7
        %v4294 = vsel %vm4262, %v4292, %v4293
        %v4295 = vrot.slane %v4293, 4
        %v4296 = vrot.slane %v4226, 7
        %v4297 = vsel %vm4262, %v4295, %v4296
        %v4298 = vrot.slane %v4227, 7
        %v4299 = vrot.slane %v4298, 4
        %v4300 = vrot.slane %v4228, 7
        %v4301 = vsel %vm4262, %v4299, %v4300
        %v4302 = vrot.slane %v4300, 4
        %v4303 = vrot.slane %v4229, 7
        %v4304 = vsel %vm4262, %v4302, %v4303
        %v4305 = vrot.slane %v4230, 7
        %v4306 = vrot.slane %v4305, 4
        %v4307 = vrot.slane %v4231, 7
        %v4308 = vsel %vm4262, %v4306, %v4307
        %v4309 = vrot.slane %v4307, 4
        %v4310 = vrot.slane %v4232, 7
        %v4311 = vsel %vm4262, %v4309, %v4310
        %v4312 = vrot.slane %v4233, 7
        %v4313 = vrot.slane %v4312, 4
        %v4314 = vrot.slane %v4234, 7
        %v4315 = vsel %vm4262, %v4313, %v4314
        %v4316 = vrot.slane %v4314, 4
        %v4317 = vrot.slane %v4235, 7
        %v4318 = vsel %vm4262, %v4316, %v4317
        %4335 = vst [vmem:[#allocation3 + $0x8] sm:$0xf] %v4266
        %4336 = vst [vmem:[#allocation3 + $0x2c] sm:$0xf] %v4269
        %4337 = vst [vmem:[#allocation3 + $0x50] sm:$0xf] %v4273
        %4338 = vst [vmem:[#allocation3 + $0x74] sm:$0xf] %v4276
        %4339 = vst [vmem:[#allocation3 + $0x98] sm:$0xf] %v4280
        %4340 = vst [vmem:[#allocation3 + $0xbc] sm:$0xf] %v4283
        %4341 = vst [vmem:[#allocation3 + $0xe0] sm:$0xf] %v4287
        %4342 = vst [vmem:[#allocation3 + $0x104] sm:$0xf] %v4290
        %4343 = vst [vmem:[#allocation3 + $0x128] sm:$0xf] %v4294
        %4344 = vst [vmem:[#allocation3 + $0x14c] sm:$0xf] %v4297
        %4345 = vst [vmem:[#allocation3 + $0x170] sm:$0xf] %v4301
        %4346 = vst [vmem:[#allocation3 + $0x194] sm:$0xf] %v4304
        %4347 = vst [vmem:[#allocation3 + $0x1b8] sm:$0xf] %v4308
        %4348 = vst [vmem:[#allocation3 + $0x1dc] sm:$0xf] %v4311
        %4349 = vst [vmem:[#allocation3 + $0x200] sm:$0xf] %v4315
        %4350 = vst [vmem:[#allocation3 + $0x224] sm:$0xf] %v4318
        %v4351 = vld [vmem:[%s1451 + $0xc] sm:$0xe]
        %v4352 = vld [vmem:[%s1451 + $0x10] sm:$0xf]
        %v4353 = vld [vmem:[%s1451 + $0x14] sm:$0x1]
        %v4354 = vld [vmem:[%s1451 + $0x34] sm:$0xe]
        %v4355 = vld [vmem:[%s1451 + $0x38] sm:$0xf]
        %v4356 = vld [vmem:[%s1451 + $0x3c] sm:$0x1]
        %v4357 = vld [vmem:[%s1451 + $0x5c] sm:$0xe]
        %v4358 = vld [vmem:[%s1451 + $0x60] sm:$0xf]
        %v4359 = vld [vmem:[%s1451 + $0x64] sm:$0x1]
        %v4360 = vld [vmem:[%s1451 + $0x84] sm:$0xe]
        %v4361 = vld [vmem:[%s1451 + $0x88] sm:$0xf]
        %v4362 = vld [vmem:[%s1451 + $0x8c] sm:$0x1]
        %v4363 = vld [vmem:[%s1451 + $0xac] sm:$0xe]
        %v4364 = vld [vmem:[%s1451 + $0xb0] sm:$0xf]
        %v4365 = vld [vmem:[%s1451 + $0xb4] sm:$0x1]
        %v4366 = vld [vmem:[%s1451 + $0xd4] sm:$0xe]
        %v4367 = vld [vmem:[%s1451 + $0xd8] sm:$0xf]
        %v4368 = vld [vmem:[%s1451 + $0xdc] sm:$0x1]
        %v4369 = vld [vmem:[%s1451 + $0xfc] sm:$0xe]
        %v4370 = vld [vmem:[%s1451 + $0x100] sm:$0xf]
        %v4371 = vld [vmem:[%s1451 + $0x104] sm:$0x1]
        %v4372 = vld [vmem:[%s1451 + $0x124] sm:$0xe]
        %v4373 = vld [vmem:[%s1451 + $0x128] sm:$0xf]
        %v4374 = vld [vmem:[%s1451 + $0x12c] sm:$0x1]
        %v4399 = vrot.slane %v4351, 5
        %v4400 = vrot.slane %v4399, 4
        %v4401 = vrot.slane %v4352, 5
        %v4402 = vsel %vm4091, %v4400, %v4401
        %v4403 = vrot.slane %v4401, 4
        %v4404 = vrot.slane %v4353, 5
        %v4405 = vsel %vm4091, %v4403, %v4404
        %v4406 = vrot.slane %v4354, 5
        %v4407 = vrot.slane %v4406, 4
        %v4408 = vrot.slane %v4355, 5
        %v4409 = vsel %vm4091, %v4407, %v4408
        %v4410 = vrot.slane %v4408, 4
        %v4411 = vrot.slane %v4356, 5
        %v4412 = vsel %vm4091, %v4410, %v4411
        %v4413 = vrot.slane %v4357, 5
        %v4414 = vrot.slane %v4413, 4
        %v4415 = vrot.slane %v4358, 5
        %v4416 = vsel %vm4091, %v4414, %v4415
        %v4417 = vrot.slane %v4415, 4
        %v4418 = vrot.slane %v4359, 5
        %v4419 = vsel %vm4091, %v4417, %v4418
        %v4420 = vrot.slane %v4360, 5
        %v4421 = vrot.slane %v4420, 4
        %v4422 = vrot.slane %v4361, 5
        %v4423 = vsel %vm4091, %v4421, %v4422
        %v4424 = vrot.slane %v4422, 4
        %v4425 = vrot.slane %v4362, 5
        %v4426 = vsel %vm4091, %v4424, %v4425
        %v4427 = vrot.slane %v4363, 5
        %v4428 = vrot.slane %v4427, 4
        %v4429 = vrot.slane %v4364, 5
        %v4430 = vsel %vm4091, %v4428, %v4429
        %v4431 = vrot.slane %v4429, 4
        %v4432 = vrot.slane %v4365, 5
        %v4433 = vsel %vm4091, %v4431, %v4432
        %v4434 = vrot.slane %v4366, 5
        %v4435 = vrot.slane %v4434, 4
        %v4436 = vrot.slane %v4367, 5
        %v4437 = vsel %vm4091, %v4435, %v4436
        %v4438 = vrot.slane %v4436, 4
        %v4439 = vrot.slane %v4368, 5
        %v4440 = vsel %vm4091, %v4438, %v4439
        %v4441 = vrot.slane %v4369, 5
        %v4442 = vrot.slane %v4441, 4
        %v4443 = vrot.slane %v4370, 5
        %v4444 = vsel %vm4091, %v4442, %v4443
        %v4445 = vrot.slane %v4443, 4
        %v4446 = vrot.slane %v4371, 5
        %v4447 = vsel %vm4091, %v4445, %v4446
        %v4448 = vrot.slane %v4372, 5
        %v4449 = vrot.slane %v4448, 4
        %v4450 = vrot.slane %v4373, 5
        %v4451 = vsel %vm4091, %v4449, %v4450
        %v4452 = vrot.slane %v4450, 4
        %v4453 = vrot.slane %v4374, 5
        %v4454 = vsel %vm4091, %v4452, %v4453
        %4471 = vst [vmem:[#allocation3 + $0xc] sm:$0xf] %v4402
        %4472 = vst [vmem:[#allocation3 + $0x30] sm:$0xf] %v4405
        %4473 = vst [vmem:[#allocation3 + $0x54] sm:$0xf] %v4409
        %4474 = vst [vmem:[#allocation3 + $0x78] sm:$0xf] %v4412
        %4475 = vst [vmem:[#allocation3 + $0x9c] sm:$0xf] %v4416
        %4476 = vst [vmem:[#allocation3 + $0xc0] sm:$0xf] %v4419
        %4477 = vst [vmem:[#allocation3 + $0xe4] sm:$0xf] %v4423
        %4478 = vst [vmem:[#allocation3 + $0x108] sm:$0xf] %v4426
        %4479 = vst [vmem:[#allocation3 + $0x12c] sm:$0xf] %v4430
        %4480 = vst [vmem:[#allocation3 + $0x150] sm:$0xf] %v4433
        %4481 = vst [vmem:[#allocation3 + $0x174] sm:$0xf] %v4437
        %4482 = vst [vmem:[#allocation3 + $0x198] sm:$0xf] %v4440
        %4483 = vst [vmem:[#allocation3 + $0x1bc] sm:$0xf] %v4444
        %4484 = vst [vmem:[#allocation3 + $0x1e0] sm:$0xf] %v4447
        %4485 = vst [vmem:[#allocation3 + $0x204] sm:$0xf] %v4451
        %4486 = vst [vmem:[#allocation3 + $0x228] sm:$0xf] %v4454
        %v4487 = vld [vmem:[%s1451 + $0x10] sm:$0xf]
        %v4488 = vld [vmem:[%s1451 + $0x14] sm:$0xf]
        %v4489 = vld [vmem:[%s1451 + $0x38] sm:$0xf]
        %v4490 = vld [vmem:[%s1451 + $0x3c] sm:$0xf]
        %v4491 = vld [vmem:[%s1451 + $0x60] sm:$0xf]
        %v4492 = vld [vmem:[%s1451 + $0x64] sm:$0xf]
        %v4493 = vld [vmem:[%s1451 + $0x88] sm:$0xf]
        %v4494 = vld [vmem:[%s1451 + $0x8c] sm:$0xf]
        %v4495 = vld [vmem:[%s1451 + $0xb0] sm:$0xf]
        %v4496 = vld [vmem:[%s1451 + $0xb4] sm:$0xf]
        %v4497 = vld [vmem:[%s1451 + $0xd8] sm:$0xf]
        %v4498 = vld [vmem:[%s1451 + $0xdc] sm:$0xf]
        %v4499 = vld [vmem:[%s1451 + $0x100] sm:$0xf]
        %v4500 = vld [vmem:[%s1451 + $0x104] sm:$0xf]
        %v4501 = vld [vmem:[%s1451 + $0x128] sm:$0xf]
        %v4502 = vld [vmem:[%s1451 + $0x12c] sm:$0xf]
        %4503 = vst [vmem:[#allocation3 + $0x10] sm:$0xf] %v4487
        %4504 = vst [vmem:[#allocation3 + $0x34] sm:$0xf] %v4488
        %4505 = vst [vmem:[#allocation3 + $0x58] sm:$0xf] %v4489
        %4506 = vst [vmem:[#allocation3 + $0x7c] sm:$0xf] %v4490
        %4507 = vst [vmem:[#allocation3 + $0xa0] sm:$0xf] %v4491
        %4508 = vst [vmem:[#allocation3 + $0xc4] sm:$0xf] %v4492
        %4509 = vst [vmem:[#allocation3 + $0xe8] sm:$0xf] %v4493
        %4510 = vst [vmem:[#allocation3 + $0x10c] sm:$0xf] %v4494
        %4511 = vst [vmem:[#allocation3 + $0x130] sm:$0xf] %v4495
        %4512 = vst [vmem:[#allocation3 + $0x154] sm:$0xf] %v4496
        %4513 = vst [vmem:[#allocation3 + $0x178] sm:$0xf] %v4497
        %4514 = vst [vmem:[#allocation3 + $0x19c] sm:$0xf] %v4498
        %4515 = vst [vmem:[#allocation3 + $0x1c0] sm:$0xf] %v4499
        %4516 = vst [vmem:[#allocation3 + $0x1e4] sm:$0xf] %v4500
        %4517 = vst [vmem:[#allocation3 + $0x208] sm:$0xf] %v4501
        %4518 = vst [vmem:[#allocation3 + $0x22c] sm:$0xf] %v4502
        %v4519 = vld [vmem:[%s1451 + $0x10] sm:$0x8]
        %v4520 = vld [vmem:[%s1451 + $0x14] sm:$0xf]
        %v4521 = vld [vmem:[%s1451 + $0x18] sm:$0x7]
        %v4522 = vld [vmem:[%s1451 + $0x38] sm:$0x8]
        %v4523 = vld [vmem:[%s1451 + $0x3c] sm:$0xf]
        %v4524 = vld [vmem:[%s1451 + $0x40] sm:$0x7]
        %v4525 = vld [vmem:[%s1451 + $0x60] sm:$0x8]
        %v4526 = vld [vmem:[%s1451 + $0x64] sm:$0xf]
        %v4527 = vld [vmem:[%s1451 + $0x68] sm:$0x7]
        %v4528 = vld [vmem:[%s1451 + $0x88] sm:$0x8]
        %v4529 = vld [vmem:[%s1451 + $0x8c] sm:$0xf]
        %v4530 = vld [vmem:[%s1451 + $0x90] sm:$0x7]
        %v4531 = vld [vmem:[%s1451 + $0xb0] sm:$0x8]
        %v4532 = vld [vmem:[%s1451 + $0xb4] sm:$0xf]
        %v4533 = vld [vmem:[%s1451 + $0xb8] sm:$0x7]
        %v4534 = vld [vmem:[%s1451 + $0xd8] sm:$0x8]
        %v4535 = vld [vmem:[%s1451 + $0xdc] sm:$0xf]
        %v4536 = vld [vmem:[%s1451 + $0xe0] sm:$0x7]
        %v4537 = vld [vmem:[%s1451 + $0x100] sm:$0x8]
        %v4538 = vld [vmem:[%s1451 + $0x104] sm:$0xf]
        %v4539 = vld [vmem:[%s1451 + $0x108] sm:$0x7]
        %v4540 = vld [vmem:[%s1451 + $0x128] sm:$0x8]
        %v4541 = vld [vmem:[%s1451 + $0x12c] sm:$0xf]
        %v4542 = vld [vmem:[%s1451 + $0x130] sm:$0x7]
        %v4567 = vrot.slane %v4519, 7
        %v4568 = vrot.slane %v4567, 4
        %v4569 = vrot.slane %v4520, 7
        %v4570 = vsel %vm4262, %v4568, %v4569
        %v4571 = vrot.slane %v4569, 4
        %v4572 = vrot.slane %v4521, 7
        %v4573 = vsel %vm4262, %v4571, %v4572
        %v4574 = vrot.slane %v4522, 7
        %v4575 = vrot.slane %v4574, 4
        %v4576 = vrot.slane %v4523, 7
        %v4577 = vsel %vm4262, %v4575, %v4576
        %v4578 = vrot.slane %v4576, 4
        %v4579 = vrot.slane %v4524, 7
        %v4580 = vsel %vm4262, %v4578, %v4579
        %v4581 = vrot.slane %v4525, 7
        %v4582 = vrot.slane %v4581, 4
        %v4583 = vrot.slane %v4526, 7
        %v4584 = vsel %vm4262, %v4582, %v4583
        %v4585 = vrot.slane %v4583, 4
        %v4586 = vrot.slane %v4527, 7
        %v4587 = vsel %vm4262, %v4585, %v4586
        %v4588 = vrot.slane %v4528, 7
        %v4589 = vrot.slane %v4588, 4
        %v4590 = vrot.slane %v4529, 7
        %v4591 = vsel %vm4262, %v4589, %v4590
        %v4592 = vrot.slane %v4590, 4
        %v4593 = vrot.slane %v4530, 7
        %v4594 = vsel %vm4262, %v4592, %v4593
        %v4595 = vrot.slane %v4531, 7
        %v4596 = vrot.slane %v4595, 4
        %v4597 = vrot.slane %v4532, 7
        %v4598 = vsel %vm4262, %v4596, %v4597
        %v4599 = vrot.slane %v4597, 4
        %v4600 = vrot.slane %v4533, 7
        %v4601 = vsel %vm4262, %v4599, %v4600
        %v4602 = vrot.slane %v4534, 7
        %v4603 = vrot.slane %v4602, 4
        %v4604 = vrot.slane %v4535, 7
        %v4605 = vsel %vm4262, %v4603, %v4604
        %v4606 = vrot.slane %v4604, 4
        %v4607 = vrot.slane %v4536, 7
        %v4608 = vsel %vm4262, %v4606, %v4607
        %v4609 = vrot.slane %v4537, 7
        %v4610 = vrot.slane %v4609, 4
        %v4611 = vrot.slane %v4538, 7
        %v4612 = vsel %vm4262, %v4610, %v4611
        %v4613 = vrot.slane %v4611, 4
        %v4614 = vrot.slane %v4539, 7
        %v4615 = vsel %vm4262, %v4613, %v4614
        %v4616 = vrot.slane %v4540, 7
        %v4617 = vrot.slane %v4616, 4
        %v4618 = vrot.slane %v4541, 7
        %v4619 = vsel %vm4262, %v4617, %v4618
        %v4620 = vrot.slane %v4618, 4
        %v4621 = vrot.slane %v4542, 7
        %v4622 = vsel %vm4262, %v4620, %v4621
        %4639 = vst [vmem:[#allocation3 + $0x14] sm:$0xf] %v4570
        %4640 = vst [vmem:[#allocation3 + $0x38] sm:$0xf] %v4573
        %4641 = vst [vmem:[#allocation3 + $0x5c] sm:$0xf] %v4577
        %4642 = vst [vmem:[#allocation3 + $0x80] sm:$0xf] %v4580
        %4643 = vst [vmem:[#allocation3 + $0xa4] sm:$0xf] %v4584
        %4644 = vst [vmem:[#allocation3 + $0xc8] sm:$0xf] %v4587
        %4645 = vst [vmem:[#allocation3 + $0xec] sm:$0xf] %v4591
        %4646 = vst [vmem:[#allocation3 + $0x110] sm:$0xf] %v4594
        %4647 = vst [vmem:[#allocation3 + $0x134] sm:$0xf] %v4598
        %4648 = vst [vmem:[#allocation3 + $0x158] sm:$0xf] %v4601
        %4649 = vst [vmem:[#allocation3 + $0x17c] sm:$0xf] %v4605
        %4650 = vst [vmem:[#allocation3 + $0x1a0] sm:$0xf] %v4608
        %4651 = vst [vmem:[#allocation3 + $0x1c4] sm:$0xf] %v4612
        %4652 = vst [vmem:[#allocation3 + $0x1e8] sm:$0xf] %v4615
        %4653 = vst [vmem:[#allocation3 + $0x20c] sm:$0xf] %v4619
        %4654 = vst [vmem:[#allocation3 + $0x230] sm:$0xf] %v4622
        %s4655 = sadd.s32 %s925, 24
        %s4656 = smul.u32 %s4655, 10
        %s4657 = smul.addr %s4656, 4
        %s4658 = scalar_lea.vmem [#allocation2], %s4657
        %v4659 = vld [vmem:[%s4658 + $0xc] sm:$0xe]
        %v4660 = vld [vmem:[%s4658 + $0x10] sm:$0xf]
        %v4661 = vld [vmem:[%s4658 + $0x14] sm:$0x1]
        %v4662 = vld [vmem:[%s4658 + $0x34] sm:$0xe]
        %v4663 = vld [vmem:[%s4658 + $0x38] sm:$0xf]
        %v4664 = vld [vmem:[%s4658 + $0x3c] sm:$0x1]
        %v4665 = vld [vmem:[%s4658 + $0x5c] sm:$0xe]
        %v4666 = vld [vmem:[%s4658 + $0x60] sm:$0xf]
        %v4667 = vld [vmem:[%s4658 + $0x64] sm:$0x1]
        %v4668 = vld [vmem:[%s4658 + $0x84] sm:$0xe]
        %v4669 = vld [vmem:[%s4658 + $0x88] sm:$0xf]
        %v4670 = vld [vmem:[%s4658 + $0x8c] sm:$0x1]
        %v4671 = vld [vmem:[%s4658 + $0xac] sm:$0xe]
        %v4672 = vld [vmem:[%s4658 + $0xb0] sm:$0xf]
        %v4673 = vld [vmem:[%s4658 + $0xb4] sm:$0x1]
        %v4674 = vld [vmem:[%s4658 + $0xd4] sm:$0xe]
        %v4675 = vld [vmem:[%s4658 + $0xd8] sm:$0xf]
        %v4676 = vld [vmem:[%s4658 + $0xdc] sm:$0x1]
        %v4677 = vld [vmem:[%s4658 + $0xfc] sm:$0xe]
        %v4678 = vld [vmem:[%s4658 + $0x100] sm:$0xf]
        %v4679 = vld [vmem:[%s4658 + $0x104] sm:$0x1]
        %v4680 = vld [vmem:[%s4658 + $0x124] sm:$0xe]
        %v4681 = vld [vmem:[%s4658 + $0x128] sm:$0xf]
        %v4682 = vld [vmem:[%s4658 + $0x12c] sm:$0x1]
        %v4707 = vrot.slane %v4659, 5
        %v4708 = vrot.slane %v4707, 4
        %v4709 = vrot.slane %v4660, 5
        %v4710 = vsel %vm4091, %v4708, %v4709
        %v4711 = vrot.slane %v4709, 4
        %v4712 = vrot.slane %v4661, 5
        %v4713 = vsel %vm4091, %v4711, %v4712
        %v4714 = vrot.slane %v4662, 5
        %v4715 = vrot.slane %v4714, 4
        %v4716 = vrot.slane %v4663, 5
        %v4717 = vsel %vm4091, %v4715, %v4716
        %v4718 = vrot.slane %v4716, 4
        %v4719 = vrot.slane %v4664, 5
        %v4720 = vsel %vm4091, %v4718, %v4719
        %v4721 = vrot.slane %v4665, 5
        %v4722 = vrot.slane %v4721, 4
        %v4723 = vrot.slane %v4666, 5
        %v4724 = vsel %vm4091, %v4722, %v4723
        %v4725 = vrot.slane %v4723, 4
        %v4726 = vrot.slane %v4667, 5
        %v4727 = vsel %vm4091, %v4725, %v4726
        %v4728 = vrot.slane %v4668, 5
        %v4729 = vrot.slane %v4728, 4
        %v4730 = vrot.slane %v4669, 5
        %v4731 = vsel %vm4091, %v4729, %v4730
        %v4732 = vrot.slane %v4730, 4
        %v4733 = vrot.slane %v4670, 5
        %v4734 = vsel %vm4091, %v4732, %v4733
        %v4735 = vrot.slane %v4671, 5
        %v4736 = vrot.slane %v4735, 4
        %v4737 = vrot.slane %v4672, 5
        %v4738 = vsel %vm4091, %v4736, %v4737
        %v4739 = vrot.slane %v4737, 4
        %v4740 = vrot.slane %v4673, 5
        %v4741 = vsel %vm4091, %v4739, %v4740
        %v4742 = vrot.slane %v4674, 5
        %v4743 = vrot.slane %v4742, 4
        %v4744 = vrot.slane %v4675, 5
        %v4745 = vsel %vm4091, %v4743, %v4744
        %v4746 = vrot.slane %v4744, 4
        %v4747 = vrot.slane %v4676, 5
        %v4748 = vsel %vm4091, %v4746, %v4747
        %v4749 = vrot.slane %v4677, 5
        %v4750 = vrot.slane %v4749, 4
        %v4751 = vrot.slane %v4678, 5
        %v4752 = vsel %vm4091, %v4750, %v4751
        %v4753 = vrot.slane %v4751, 4
        %v4754 = vrot.slane %v4679, 5
        %v4755 = vsel %vm4091, %v4753, %v4754
        %v4756 = vrot.slane %v4680, 5
        %v4757 = vrot.slane %v4756, 4
        %v4758 = vrot.slane %v4681, 5
        %v4759 = vsel %vm4091, %v4757, %v4758
        %v4760 = vrot.slane %v4758, 4
        %v4761 = vrot.slane %v4682, 5
        %v4762 = vsel %vm4091, %v4760, %v4761
        %4779 = vst [vmem:[#allocation3 + $0x18] sm:$0xf] %v4710
        %4780 = vst [vmem:[#allocation3 + $0x3c] sm:$0xf] %v4713
        %4781 = vst [vmem:[#allocation3 + $0x60] sm:$0xf] %v4717
        %4782 = vst [vmem:[#allocation3 + $0x84] sm:$0xf] %v4720
        %4783 = vst [vmem:[#allocation3 + $0xa8] sm:$0xf] %v4724
        %4784 = vst [vmem:[#allocation3 + $0xcc] sm:$0xf] %v4727
        %4785 = vst [vmem:[#allocation3 + $0xf0] sm:$0xf] %v4731
        %4786 = vst [vmem:[#allocation3 + $0x114] sm:$0xf] %v4734
        %4787 = vst [vmem:[#allocation3 + $0x138] sm:$0xf] %v4738
        %4788 = vst [vmem:[#allocation3 + $0x15c] sm:$0xf] %v4741
        %4789 = vst [vmem:[#allocation3 + $0x180] sm:$0xf] %v4745
        %4790 = vst [vmem:[#allocation3 + $0x1a4] sm:$0xf] %v4748
        %4791 = vst [vmem:[#allocation3 + $0x1c8] sm:$0xf] %v4752
        %4792 = vst [vmem:[#allocation3 + $0x1ec] sm:$0xf] %v4755
        %4793 = vst [vmem:[#allocation3 + $0x210] sm:$0xf] %v4759
        %4794 = vst [vmem:[#allocation3 + $0x234] sm:$0xf] %v4762
        %v4795 = vld [vmem:[%s4658 + $0x10] sm:$0xf]
        %v4796 = vld [vmem:[%s4658 + $0x14] sm:$0xf]
        %v4797 = vld [vmem:[%s4658 + $0x38] sm:$0xf]
        %v4798 = vld [vmem:[%s4658 + $0x3c] sm:$0xf]
        %v4799 = vld [vmem:[%s4658 + $0x60] sm:$0xf]
        %v4800 = vld [vmem:[%s4658 + $0x64] sm:$0xf]
        %v4801 = vld [vmem:[%s4658 + $0x88] sm:$0xf]
        %v4802 = vld [vmem:[%s4658 + $0x8c] sm:$0xf]
        %v4803 = vld [vmem:[%s4658 + $0xb0] sm:$0xf]
        %v4804 = vld [vmem:[%s4658 + $0xb4] sm:$0xf]
        %v4805 = vld [vmem:[%s4658 + $0xd8] sm:$0xf]
        %v4806 = vld [vmem:[%s4658 + $0xdc] sm:$0xf]
        %v4807 = vld [vmem:[%s4658 + $0x100] sm:$0xf]
        %v4808 = vld [vmem:[%s4658 + $0x104] sm:$0xf]
        %v4809 = vld [vmem:[%s4658 + $0x128] sm:$0xf]
        %v4810 = vld [vmem:[%s4658 + $0x12c] sm:$0xf]
        %4811 = vst [vmem:[#allocation3 + $0x1c] sm:$0xf] %v4795
        %4812 = vst [vmem:[#allocation3 + $0x40] sm:$0xf] %v4796
        %4813 = vst [vmem:[#allocation3 + $0x64] sm:$0xf] %v4797
        %4814 = vst [vmem:[#allocation3 + $0x88] sm:$0xf] %v4798
        %4815 = vst [vmem:[#allocation3 + $0xac] sm:$0xf] %v4799
        %4816 = vst [vmem:[#allocation3 + $0xd0] sm:$0xf] %v4800
        %4817 = vst [vmem:[#allocation3 + $0xf4] sm:$0xf] %v4801
        %4818 = vst [vmem:[#allocation3 + $0x118] sm:$0xf] %v4802
        %4819 = vst [vmem:[#allocation3 + $0x13c] sm:$0xf] %v4803
        %4820 = vst [vmem:[#allocation3 + $0x160] sm:$0xf] %v4804
        %4821 = vst [vmem:[#allocation3 + $0x184] sm:$0xf] %v4805
        %4822 = vst [vmem:[#allocation3 + $0x1a8] sm:$0xf] %v4806
        %4823 = vst [vmem:[#allocation3 + $0x1cc] sm:$0xf] %v4807
        %4824 = vst [vmem:[#allocation3 + $0x1f0] sm:$0xf] %v4808
        %4825 = vst [vmem:[#allocation3 + $0x214] sm:$0xf] %v4809
        %4826 = vst [vmem:[#allocation3 + $0x238] sm:$0xf] %v4810
        %v4827 = vld [vmem:[%s4658 + $0x10] sm:$0x8]
        %v4828 = vld [vmem:[%s4658 + $0x14] sm:$0xf]
        %v4829 = vld [vmem:[%s4658 + $0x18] sm:$0x7]
        %v4830 = vld [vmem:[%s4658 + $0x38] sm:$0x8]
        %v4831 = vld [vmem:[%s4658 + $0x3c] sm:$0xf]
        %v4832 = vld [vmem:[%s4658 + $0x40] sm:$0x7]
        %v4833 = vld [vmem:[%s4658 + $0x60] sm:$0x8]
        %v4834 = vld [vmem:[%s4658 + $0x64] sm:$0xf]
        %v4835 = vld [vmem:[%s4658 + $0x68] sm:$0x7]
        %v4836 = vld [vmem:[%s4658 + $0x88] sm:$0x8]
        %v4837 = vld [vmem:[%s4658 + $0x8c] sm:$0xf]
        %v4838 = vld [vmem:[%s4658 + $0x90] sm:$0x7]
        %v4839 = vld [vmem:[%s4658 + $0xb0] sm:$0x8]
        %v4840 = vld [vmem:[%s4658 + $0xb4] sm:$0xf]
        %v4841 = vld [vmem:[%s4658 + $0xb8] sm:$0x7]
        %v4842 = vld [vmem:[%s4658 + $0xd8] sm:$0x8]
        %v4843 = vld [vmem:[%s4658 + $0xdc] sm:$0xf]
        %v4844 = vld [vmem:[%s4658 + $0xe0] sm:$0x7]
        %v4845 = vld [vmem:[%s4658 + $0x100] sm:$0x8]
        %v4846 = vld [vmem:[%s4658 + $0x104] sm:$0xf]
        %v4847 = vld [vmem:[%s4658 + $0x108] sm:$0x7]
        %v4848 = vld [vmem:[%s4658 + $0x128] sm:$0x8]
        %v4849 = vld [vmem:[%s4658 + $0x12c] sm:$0xf]
        %v4850 = vld [vmem:[%s4658 + $0x130] sm:$0x7]
        %v4875 = vrot.slane %v4827, 7
        %v4876 = vrot.slane %v4875, 4
        %v4877 = vrot.slane %v4828, 7
        %v4878 = vsel %vm4262, %v4876, %v4877
        %v4879 = vrot.slane %v4877, 4
        %v4880 = vrot.slane %v4829, 7
        %v4881 = vsel %vm4262, %v4879, %v4880
        %v4882 = vrot.slane %v4830, 7
        %v4883 = vrot.slane %v4882, 4
        %v4884 = vrot.slane %v4831, 7
        %v4885 = vsel %vm4262, %v4883, %v4884
        %v4886 = vrot.slane %v4884, 4
        %v4887 = vrot.slane %v4832, 7
        %v4888 = vsel %vm4262, %v4886, %v4887
        %v4889 = vrot.slane %v4833, 7
        %v4890 = vrot.slane %v4889, 4
        %v4891 = vrot.slane %v4834, 7
        %v4892 = vsel %vm4262, %v4890, %v4891
        %v4893 = vrot.slane %v4891, 4
        %v4894 = vrot.slane %v4835, 7
        %v4895 = vsel %vm4262, %v4893, %v4894
        %v4896 = vrot.slane %v4836, 7
        %v4897 = vrot.slane %v4896, 4
        %v4898 = vrot.slane %v4837, 7
        %v4899 = vsel %vm4262, %v4897, %v4898
        %v4900 = vrot.slane %v4898, 4
        %v4901 = vrot.slane %v4838, 7
        %v4902 = vsel %vm4262, %v4900, %v4901
        %v4903 = vrot.slane %v4839, 7
        %v4904 = vrot.slane %v4903, 4
        %v4905 = vrot.slane %v4840, 7
        %v4906 = vsel %vm4262, %v4904, %v4905
        %v4907 = vrot.slane %v4905, 4
        %v4908 = vrot.slane %v4841, 7
        %v4909 = vsel %vm4262, %v4907, %v4908
        %v4910 = vrot.slane %v4842, 7
        %v4911 = vrot.slane %v4910, 4
        %v4912 = vrot.slane %v4843, 7
        %v4913 = vsel %vm4262, %v4911, %v4912
        %v4914 = vrot.slane %v4912, 4
        %v4915 = vrot.slane %v4844, 7
        %v4916 = vsel %vm4262, %v4914, %v4915
        %v4917 = vrot.slane %v4845, 7
        %v4918 = vrot.slane %v4917, 4
        %v4919 = vrot.slane %v4846, 7
        %v4920 = vsel %vm4262, %v4918, %v4919
        %v4921 = vrot.slane %v4919, 4
        %v4922 = vrot.slane %v4847, 7
        %v4923 = vsel %vm4262, %v4921, %v4922
        %v4924 = vrot.slane %v4848, 7
        %v4925 = vrot.slane %v4924, 4
        %v4926 = vrot.slane %v4849, 7
        %v4927 = vsel %vm4262, %v4925, %v4926
        %v4928 = vrot.slane %v4926, 4
        %v4929 = vrot.slane %v4850, 7
        %v4930 = vsel %vm4262, %v4928, %v4929
        %4947 = vst [vmem:[#allocation3 + $0x20] sm:$0xf] %v4878
        %4948 = vst [vmem:[#allocation3 + $0x44] sm:$0xf] %v4881
        %4949 = vst [vmem:[#allocation3 + $0x68] sm:$0xf] %v4885
        %4950 = vst [vmem:[#allocation3 + $0x8c] sm:$0xf] %v4888
        %4951 = vst [vmem:[#allocation3 + $0xb0] sm:$0xf] %v4892
        %4952 = vst [vmem:[#allocation3 + $0xd4] sm:$0xf] %v4895
        %4953 = vst [vmem:[#allocation3 + $0xf8] sm:$0xf] %v4899
        %4954 = vst [vmem:[#allocation3 + $0x11c] sm:$0xf] %v4902
        %4955 = vst [vmem:[#allocation3 + $0x140] sm:$0xf] %v4906
        %4956 = vst [vmem:[#allocation3 + $0x164] sm:$0xf] %v4909
        %4957 = vst [vmem:[#allocation3 + $0x188] sm:$0xf] %v4913
        %4958 = vst [vmem:[#allocation3 + $0x1ac] sm:$0xf] %v4916
        %4959 = vst [vmem:[#allocation3 + $0x1d0] sm:$0xf] %v4920
        %4960 = vst [vmem:[#allocation3 + $0x1f4] sm:$0xf] %v4923
        %4961 = vst [vmem:[#allocation3 + $0x218] sm:$0xf] %v4927
        %4962 = vst [vmem:[#allocation3 + $0x23c] sm:$0xf] %v4930
        %v4963 = vld [vmem:[#allocation4] sm:$0xff]
        %v4964 = vld [vmem:[#allocation4 + $0x8] sm:$0xff]
        %v4965 = vld [vmem:[#allocation4 + $0x10] sm:$0xff]
        %v4966 = vld [vmem:[#allocation4 + $0x18] sm:$0xff]
        %v4967 = vld [vmem:[#allocation4 + $0x20] sm:$0xff]
        %v4968 = vld [vmem:[#allocation4 + $0x28] sm:$0xff]
        %v4969 = vld [vmem:[#allocation4 + $0x30] sm:$0xff]
        %v4970 = vld [vmem:[#allocation4 + $0x38] sm:$0xff]
        %v4971 = vld [vmem:[#allocation4 + $0x40] sm:$0xff]
        %v4972 = vld [vmem:[#allocation4 + $0x48] sm:$0xff]
        %v4973 = vld [vmem:[#allocation4 + $0x50] sm:$0xff]
        %v4974 = vld [vmem:[#allocation4 + $0x58] sm:$0xff]
        %v4975 = vld [vmem:[#allocation4 + $0x60] sm:$0xff]
        %v4976 = vld [vmem:[#allocation4 + $0x68] sm:$0xff]
        %v4977 = vld [vmem:[#allocation4 + $0x70] sm:$0xff]
        %v4978 = vld [vmem:[#allocation4 + $0x78] sm:$0xff]
        %v4979 = vld [vmem:[#allocation3] sm:$0xff]
        %v4980 = vld [vmem:[#allocation3 + $0x8] sm:$0xff]
        %v4981 = vld [vmem:[#allocation3 + $0x10] sm:$0xff]
        %v4982 = vld [vmem:[#allocation3 + $0x18] sm:$0xff]
        %v4983 = vld [vmem:[#allocation3 + $0x20] sm:$0xf]
        %v4984 = vld [vmem:[#allocation3 + $0x24] sm:$0xff]
        %v4985 = vld [vmem:[#allocation3 + $0x2c] sm:$0xff]
        %v4986 = vld [vmem:[#allocation3 + $0x34] sm:$0xff]
        %v4987 = vld [vmem:[#allocation3 + $0x3c] sm:$0xff]
        %v4988 = vld [vmem:[#allocation3 + $0x44] sm:$0xf]
        %v4989 = vld [vmem:[#allocation3 + $0x48] sm:$0xff]
        %v4990 = vld [vmem:[#allocation3 + $0x50] sm:$0xff]
        %v4991 = vld [vmem:[#allocation3 + $0x58] sm:$0xff]
        %v4992 = vld [vmem:[#allocation3 + $0x60] sm:$0xff]
        %v4993 = vld [vmem:[#allocation3 + $0x68] sm:$0xf]
        %v4994 = vld [vmem:[#allocation3 + $0x6c] sm:$0xff]
        %v4995 = vld [vmem:[#allocation3 + $0x74] sm:$0xff]
        %v4996 = vld [vmem:[#allocation3 + $0x7c] sm:$0xff]
        %v4997 = vld [vmem:[#allocation3 + $0x84] sm:$0xff]
        %v4998 = vld [vmem:[#allocation3 + $0x8c] sm:$0xf]
        %v4999 = vld [vmem:[#allocation3 + $0x90] sm:$0xff]
        %v5000 = vld [vmem:[#allocation3 + $0x98] sm:$0xff]
        %v5001 = vld [vmem:[#allocation3 + $0xa0] sm:$0xff]
        %v5002 = vld [vmem:[#allocation3 + $0xa8] sm:$0xff]
        %v5003 = vld [vmem:[#allocation3 + $0xb0] sm:$0xf]
        %v5004 = vld [vmem:[#allocation3 + $0xb4] sm:$0xff]
        %v5005 = vld [vmem:[#allocation3 + $0xbc] sm:$0xff]
        %v5006 = vld [vmem:[#allocation3 + $0xc4] sm:$0xff]
        %v5007 = vld [vmem:[#allocation3 + $0xcc] sm:$0xff]
        %v5008 = vld [vmem:[#allocation3 + $0xd4] sm:$0xf]
        %v5009 = vld [vmem:[#allocation3 + $0xd8] sm:$0xff]
        %v5010 = vld [vmem:[#allocation3 + $0xe0] sm:$0xff]
        %v5011 = vld [vmem:[#allocation3 + $0xe8] sm:$0xff]
        %v5012 = vld [vmem:[#allocation3 + $0xf0] sm:$0xff]
        %v5013 = vld [vmem:[#allocation3 + $0xf8] sm:$0xf]
        %v5014 = vld [vmem:[#allocation3 + $0xfc] sm:$0xff]
        %v5015 = vld [vmem:[#allocation3 + $0x104] sm:$0xff]
        %v5016 = vld [vmem:[#allocation3 + $0x10c] sm:$0xff]
        %v5017 = vld [vmem:[#allocation3 + $0x114] sm:$0xff]
        %v5018 = vld [vmem:[#allocation3 + $0x11c] sm:$0xf]
        %v5019 = vld [vmem:[#allocation3 + $0x120] sm:$0xff]
        %v5020 = vld [vmem:[#allocation3 + $0x128] sm:$0xff]
        %v5021 = vld [vmem:[#allocation3 + $0x130] sm:$0xff]
        %v5022 = vld [vmem:[#allocation3 + $0x138] sm:$0xff]
        %v5023 = vld [vmem:[#allocation3 + $0x140] sm:$0xf]
        %v5024 = vld [vmem:[#allocation3 + $0x144] sm:$0xff]
        %v5025 = vld [vmem:[#allocation3 + $0x14c] sm:$0xff]
        %v5026 = vld [vmem:[#allocation3 + $0x154] sm:$0xff]
        %v5027 = vld [vmem:[#allocation3 + $0x15c] sm:$0xff]
        %v5028 = vld [vmem:[#allocation3 + $0x164] sm:$0xf]
        %v5029 = vld [vmem:[#allocation3 + $0x168] sm:$0xff]
        %v5030 = vld [vmem:[#allocation3 + $0x170] sm:$0xff]
        %v5031 = vld [vmem:[#allocation3 + $0x178] sm:$0xff]
        %v5032 = vld [vmem:[#allocation3 + $0x180] sm:$0xff]
        %v5033 = vld [vmem:[#allocation3 + $0x188] sm:$0xf]
        %v5034 = vld [vmem:[#allocation3 + $0x18c] sm:$0xff]
        %v5035 = vld [vmem:[#allocation3 + $0x194] sm:$0xff]
        %v5036 = vld [vmem:[#allocation3 + $0x19c] sm:$0xff]
        %v5037 = vld [vmem:[#allocation3 + $0x1a4] sm:$0xff]
        %v5038 = vld [vmem:[#allocation3 + $0x1ac] sm:$0xf]
        %v5039 = vld [vmem:[#allocation3 + $0x1b0] sm:$0xff]
        %v5040 = vld [vmem:[#allocation3 + $0x1b8] sm:$0xff]
        %v5041 = vld [vmem:[#allocation3 + $0x1c0] sm:$0xff]
        %v5042 = vld [vmem:[#allocation3 + $0x1c8] sm:$0xff]
        %v5043 = vld [vmem:[#allocation3 + $0x1d0] sm:$0xf]
        %v5044 = vld [vmem:[#allocation3 + $0x1d4] sm:$0xff]
        %v5045 = vld [vmem:[#allocation3 + $0x1dc] sm:$0xff]
        %v5046 = vld [vmem:[#allocation3 + $0x1e4] sm:$0xff]
        %v5047 = vld [vmem:[#allocation3 + $0x1ec] sm:$0xff]
        %v5048 = vld [vmem:[#allocation3 + $0x1f4] sm:$0xf]
        %v5049 = vld [vmem:[#allocation3 + $0x1f8] sm:$0xff]
        %v5050 = vld [vmem:[#allocation3 + $0x200] sm:$0xff]
        %v5051 = vld [vmem:[#allocation3 + $0x208] sm:$0xff]
        %v5052 = vld [vmem:[#allocation3 + $0x210] sm:$0xff]
        %v5053 = vld [vmem:[#allocation3 + $0x218] sm:$0xf]
        %v5054 = vld [vmem:[#allocation3 + $0x21c] sm:$0xff]
        %v5055 = vld [vmem:[#allocation3 + $0x224] sm:$0xff]
        %v5056 = vld [vmem:[#allocation3 + $0x22c] sm:$0xff]
        %v5057 = vld [vmem:[#allocation3 + $0x234] sm:$0xff]
        %v5058 = vld [vmem:[#allocation3 + $0x23c] sm:$0xf]
        %s5059 = scalar_lea.vmem [#allocation8], 576
        %v5060 = vld [vmem:[%s5059] sm:$0xf]
        %v5061 = vld [vmem:[%s5059 + $0x4] sm:$0xf]
        %v5062 = vld [vmem:[%s5059 + $0x8] sm:$0xf]
        %v5063 = vld [vmem:[%s5059 + $0xc] sm:$0xf]
        %v5064 = vld [vmem:[%s5059 + $0x10] sm:$0xf]
        %v5065 = vld [vmem:[%s5059 + $0x14] sm:$0xf]
        %v5066 = vld [vmem:[%s5059 + $0x18] sm:$0xf]
        %v5067 = vld [vmem:[%s5059 + $0x1c] sm:$0xf]
        %v5068 = vld [vmem:[%s5059 + $0x20] sm:$0xf]
        %v5069 = vld [vmem:[%s5059 + $0x24] sm:$0xf]
        %v5070 = vld [vmem:[%s5059 + $0x28] sm:$0xf]
        %v5071 = vld [vmem:[%s5059 + $0x2c] sm:$0xf]
        %v5072 = vld [vmem:[%s5059 + $0x30] sm:$0xf]
        %v5073 = vld [vmem:[%s5059 + $0x34] sm:$0xf]
        %v5074 = vld [vmem:[%s5059 + $0x38] sm:$0xf]
        %v5075 = vld [vmem:[%s5059 + $0x3c] sm:$0xf]
        %v5076 = vld [vmem:[%s5059 + $0x40] sm:$0xf]
        %v5077 = vld [vmem:[%s5059 + $0x44] sm:$0xf]
        %v5078 = vld [vmem:[%s5059 + $0x48] sm:$0xf]
        %v5079 = vld [vmem:[%s5059 + $0x4c] sm:$0xf]
        %v5080 = vld [vmem:[%s5059 + $0x50] sm:$0xf]
        %v5081 = vld [vmem:[%s5059 + $0x54] sm:$0xf]
        %v5082 = vld [vmem:[%s5059 + $0x58] sm:$0xf]
        %v5083 = vld [vmem:[%s5059 + $0x5c] sm:$0xf]
        %v5084 = vld [vmem:[%s5059 + $0x60] sm:$0xf]
        %v5085 = vld [vmem:[%s5059 + $0x64] sm:$0xf]
        %v5086 = vld [vmem:[%s5059 + $0x68] sm:$0xf]
        %v5087 = vld [vmem:[%s5059 + $0x6c] sm:$0xf]
        %v5088 = vld [vmem:[%s5059 + $0x70] sm:$0xf]
        %v5089 = vld [vmem:[%s5059 + $0x74] sm:$0xf]
        %v5090 = vld [vmem:[%s5059 + $0x78] sm:$0xf]
        %v5091 = vld [vmem:[%s5059 + $0x7c] sm:$0xf]
        %v5092 = vld [vmem:[%s5059 + $0x80] sm:$0xf]
        %v5093 = vld [vmem:[%s5059 + $0x84] sm:$0xf]
        %v5094 = vld [vmem:[%s5059 + $0x88] sm:$0xf]
        %v5095 = vld [vmem:[%s5059 + $0x8c] sm:$0xf]
        %v5096 = vld [vmem:[%s5059 + $0x90] sm:$0xf]
        %v5097 = vld [vmem:[%s5059 + $0x94] sm:$0xf]
        %v5098 = vld [vmem:[%s5059 + $0x98] sm:$0xf]
        %v5099 = vld [vmem:[%s5059 + $0x9c] sm:$0xf]
        %v5100 = vld [vmem:[%s5059 + $0xa0] sm:$0xf]
        %v5101 = vld [vmem:[%s5059 + $0xa4] sm:$0xf]
        %v5102 = vld [vmem:[%s5059 + $0xa8] sm:$0xf]
        %v5103 = vld [vmem:[%s5059 + $0xac] sm:$0xf]
        %v5104 = vld [vmem:[%s5059 + $0xb0] sm:$0xf]
        %v5105 = vld [vmem:[%s5059 + $0xb4] sm:$0xf]
        %v5106 = vld [vmem:[%s5059 + $0xb8] sm:$0xf]
        %v5107 = vld [vmem:[%s5059 + $0xbc] sm:$0xf]
        %v5108 = vld [vmem:[%s5059 + $0xc0] sm:$0xf]
        %v5109 = vld [vmem:[%s5059 + $0xc4] sm:$0xf]
        %v5110 = vld [vmem:[%s5059 + $0xc8] sm:$0xf]
        %v5111 = vld [vmem:[%s5059 + $0xcc] sm:$0xf]
        %v5112 = vld [vmem:[%s5059 + $0xd0] sm:$0xf]
        %v5113 = vld [vmem:[%s5059 + $0xd4] sm:$0xf]
        %v5114 = vld [vmem:[%s5059 + $0xd8] sm:$0xf]
        %v5115 = vld [vmem:[%s5059 + $0xdc] sm:$0xf]
        %v5116 = vld [vmem:[%s5059 + $0xe0] sm:$0xf]
        %v5117 = vld [vmem:[%s5059 + $0xe4] sm:$0xf]
        %v5118 = vld [vmem:[%s5059 + $0xe8] sm:$0xf]
        %v5119 = vld [vmem:[%s5059 + $0xec] sm:$0xf]
        %v5120 = vld [vmem:[%s5059 + $0xf0] sm:$0xf]
        %v5121 = vld [vmem:[%s5059 + $0xf4] sm:$0xf]
        %v5122 = vld [vmem:[%s5059 + $0xf8] sm:$0xf]
        %v5123 = vld [vmem:[%s5059 + $0xfc] sm:$0xf]
        %v5124 = vld [vmem:[%s5059 + $0x100] sm:$0xf]
        %v5125 = vld [vmem:[%s5059 + $0x104] sm:$0xf]
        %v5126 = vld [vmem:[%s5059 + $0x108] sm:$0xf]
        %v5127 = vld [vmem:[%s5059 + $0x10c] sm:$0xf]
        %v5128 = vld [vmem:[%s5059 + $0x110] sm:$0xf]
        %v5129 = vld [vmem:[%s5059 + $0x114] sm:$0xf]
        %v5130 = vld [vmem:[%s5059 + $0x118] sm:$0xf]
        %v5131 = vld [vmem:[%s5059 + $0x11c] sm:$0xf]
        %v5132 = vld [vmem:[%s5059 + $0x120] sm:$0xf]
        %v5133 = vld [vmem:[%s5059 + $0x124] sm:$0xf]
        %v5134 = vld [vmem:[%s5059 + $0x128] sm:$0xf]
        %v5135 = vld [vmem:[%s5059 + $0x12c] sm:$0xf]
        %v5136 = vld [vmem:[%s5059 + $0x130] sm:$0xf]
        %v5137 = vld [vmem:[%s5059 + $0x134] sm:$0xf]
        %v5138 = vld [vmem:[%s5059 + $0x138] sm:$0xf]
        %v5139 = vld [vmem:[%s5059 + $0x13c] sm:$0xf]
        %v5140 = vld [vmem:[%s5059 + $0x140] sm:$0xf]
        %v5141 = vld [vmem:[%s5059 + $0x144] sm:$0xf]
        %v5142 = vld [vmem:[%s5059 + $0x148] sm:$0xf]
        %v5143 = vld [vmem:[%s5059 + $0x14c] sm:$0xf]
        %v5144 = vld [vmem:[%s5059 + $0x150] sm:$0xf]
        %v5145 = vld [vmem:[%s5059 + $0x154] sm:$0xf]
        %v5146 = vld [vmem:[%s5059 + $0x158] sm:$0xf]
        %v5147 = vld [vmem:[%s5059 + $0x15c] sm:$0xf]
        %v5148 = vld [vmem:[%s5059 + $0x160] sm:$0xf]
        %v5149 = vld [vmem:[%s5059 + $0x164] sm:$0xf]
        %v5150 = vld [vmem:[%s5059 + $0x168] sm:$0xf]
        %v5151 = vld [vmem:[%s5059 + $0x16c] sm:$0xf]
        %v5152 = vld [vmem:[%s5059 + $0x170] sm:$0xf]
        %v5153 = vld [vmem:[%s5059 + $0x174] sm:$0xf]
        %v5154 = vld [vmem:[%s5059 + $0x178] sm:$0xf]
        %v5155 = vld [vmem:[%s5059 + $0x17c] sm:$0xf]
        %v5156 = vld [vmem:[%s5059 + $0x180] sm:$0xf]
        %v5157 = vld [vmem:[%s5059 + $0x184] sm:$0xf]
        %v5158 = vld [vmem:[%s5059 + $0x188] sm:$0xf]
        %v5159 = vld [vmem:[%s5059 + $0x18c] sm:$0xf]
        %v5160 = vld [vmem:[%s5059 + $0x190] sm:$0xf]
        %v5161 = vld [vmem:[%s5059 + $0x194] sm:$0xf]
        %v5162 = vld [vmem:[%s5059 + $0x198] sm:$0xf]
        %v5163 = vld [vmem:[%s5059 + $0x19c] sm:$0xf]
        %v5164 = vld [vmem:[%s5059 + $0x1a0] sm:$0xf]
        %v5165 = vld [vmem:[%s5059 + $0x1a4] sm:$0xf]
        %v5166 = vld [vmem:[%s5059 + $0x1a8] sm:$0xf]
        %v5167 = vld [vmem:[%s5059 + $0x1ac] sm:$0xf]
        %v5168 = vld [vmem:[%s5059 + $0x1b0] sm:$0xf]
        %v5169 = vld [vmem:[%s5059 + $0x1b4] sm:$0xf]
        %v5170 = vld [vmem:[%s5059 + $0x1b8] sm:$0xf]
        %v5171 = vld [vmem:[%s5059 + $0x1bc] sm:$0xf]
        %v5172 = vld [vmem:[%s5059 + $0x1c0] sm:$0xf]
        %v5173 = vld [vmem:[%s5059 + $0x1c4] sm:$0xf]
        %v5174 = vld [vmem:[%s5059 + $0x1c8] sm:$0xf]
        %v5175 = vld [vmem:[%s5059 + $0x1cc] sm:$0xf]
        %v5176 = vld [vmem:[%s5059 + $0x1d0] sm:$0xf]
        %v5177 = vld [vmem:[%s5059 + $0x1d4] sm:$0xf]
        %v5178 = vld [vmem:[%s5059 + $0x1d8] sm:$0xf]
        %v5179 = vld [vmem:[%s5059 + $0x1dc] sm:$0xf]
        %v5180 = vld [vmem:[%s5059 + $0x1e0] sm:$0xf]
        %v5181 = vld [vmem:[%s5059 + $0x1e4] sm:$0xf]
        %v5182 = vld [vmem:[%s5059 + $0x1e8] sm:$0xf]
        %v5183 = vld [vmem:[%s5059 + $0x1ec] sm:$0xf]
        %v5184 = vld [vmem:[%s5059 + $0x1f0] sm:$0xf]
        %v5185 = vld [vmem:[%s5059 + $0x1f4] sm:$0xf]
        %v5186 = vld [vmem:[%s5059 + $0x1f8] sm:$0xf]
        %v5187 = vld [vmem:[%s5059 + $0x1fc] sm:$0xf]
        %v5188 = vld [vmem:[%s5059 + $0x200] sm:$0xf]
        %v5189 = vld [vmem:[%s5059 + $0x204] sm:$0xf]
        %v5190 = vld [vmem:[%s5059 + $0x208] sm:$0xf]
        %v5191 = vld [vmem:[%s5059 + $0x20c] sm:$0xf]
        %v5192 = vld [vmem:[%s5059 + $0x210] sm:$0xf]
        %v5193 = vld [vmem:[%s5059 + $0x214] sm:$0xf]
        %v5194 = vld [vmem:[%s5059 + $0x218] sm:$0xf]
        %v5195 = vld [vmem:[%s5059 + $0x21c] sm:$0xf]
        %v5196 = vld [vmem:[%s5059 + $0x220] sm:$0xf]
        %v5197 = vld [vmem:[%s5059 + $0x224] sm:$0xf]
        %v5198 = vld [vmem:[%s5059 + $0x228] sm:$0xf]
        %v5199 = vld [vmem:[%s5059 + $0x22c] sm:$0xf]
        %v5200 = vld [vmem:[%s5059 + $0x230] sm:$0xf]
        %v5201 = vld [vmem:[%s5059 + $0x234] sm:$0xf]
        %v5202 = vld [vmem:[%s5059 + $0x238] sm:$0xf]
        %v5203 = vld [vmem:[%s5059 + $0x23c] sm:$0xf]
        %v5284 = vunpack.c.l.b16 %v4979
        %v5285 = vunpack.c.h.b16 %v4979
        %v5286 = vunpack.c.l.b16 %v4980
        %v5287 = vunpack.c.h.b16 %v4980
        %v5288 = vunpack.c.l.b16 %v4981
        %v5289 = vunpack.c.h.b16 %v4981
        %v5290 = vunpack.c.l.b16 %v4982
        %v5291 = vunpack.c.h.b16 %v4982
        %v5292 = vunpack.c.l.b16 %v4983
        %v5293 = vunpack.c.l.b16 %v4984
        %v5294 = vunpack.c.h.b16 %v4984
        %v5295 = vunpack.c.l.b16 %v4985
        %v5296 = vunpack.c.h.b16 %v4985
        %v5297 = vunpack.c.l.b16 %v4986
        %v5298 = vunpack.c.h.b16 %v4986
        %v5299 = vunpack.c.l.b16 %v4987
        %v5300 = vunpack.c.h.b16 %v4987
        %v5301 = vunpack.c.l.b16 %v4988
        %v5302 = vunpack.c.l.b16 %v4989
        %v5303 = vunpack.c.h.b16 %v4989
        %v5304 = vunpack.c.l.b16 %v4990
        %v5305 = vunpack.c.h.b16 %v4990
        %v5306 = vunpack.c.l.b16 %v4991
        %v5307 = vunpack.c.h.b16 %v4991
        %v5308 = vunpack.c.l.b16 %v4992
        %v5309 = vunpack.c.h.b16 %v4992
        %v5310 = vunpack.c.l.b16 %v4993
        %v5311 = vunpack.c.l.b16 %v4994
        %v5312 = vunpack.c.h.b16 %v4994
        %v5313 = vunpack.c.l.b16 %v4995
        %v5314 = vunpack.c.h.b16 %v4995
        %v5315 = vunpack.c.l.b16 %v4996
        %v5316 = vunpack.c.h.b16 %v4996
        %v5317 = vunpack.c.l.b16 %v4997
        %v5318 = vunpack.c.h.b16 %v4997
        %v5319 = vunpack.c.l.b16 %v4998
        %v5320 = vunpack.c.l.b16 %v4999
        %v5321 = vunpack.c.h.b16 %v4999
        %v5322 = vunpack.c.l.b16 %v5000
        %v5323 = vunpack.c.h.b16 %v5000
        %v5324 = vunpack.c.l.b16 %v5001
        %v5325 = vunpack.c.h.b16 %v5001
        %v5326 = vunpack.c.l.b16 %v5002
        %v5327 = vunpack.c.h.b16 %v5002
        %v5328 = vunpack.c.l.b16 %v5003
        %v5329 = vunpack.c.l.b16 %v5004
        %v5330 = vunpack.c.h.b16 %v5004
        %v5331 = vunpack.c.l.b16 %v5005
        %v5332 = vunpack.c.h.b16 %v5005
        %v5333 = vunpack.c.l.b16 %v5006
        %v5334 = vunpack.c.h.b16 %v5006
        %v5335 = vunpack.c.l.b16 %v5007
        %v5336 = vunpack.c.h.b16 %v5007
        %v5337 = vunpack.c.l.b16 %v5008
        %v5338 = vunpack.c.l.b16 %v5009
        %v5339 = vunpack.c.h.b16 %v5009
        %v5340 = vunpack.c.l.b16 %v5010
        %v5341 = vunpack.c.h.b16 %v5010
        %v5342 = vunpack.c.l.b16 %v5011
        %v5343 = vunpack.c.h.b16 %v5011
        %v5344 = vunpack.c.l.b16 %v5012
        %v5345 = vunpack.c.h.b16 %v5012
        %v5346 = vunpack.c.l.b16 %v5013
        %v5347 = vunpack.c.l.b16 %v5014
        %v5348 = vunpack.c.h.b16 %v5014
        %v5349 = vunpack.c.l.b16 %v5015
        %v5350 = vunpack.c.h.b16 %v5015
        %v5351 = vunpack.c.l.b16 %v5016
        %v5352 = vunpack.c.h.b16 %v5016
        %v5353 = vunpack.c.l.b16 %v5017
        %v5354 = vunpack.c.h.b16 %v5017
        %v5355 = vunpack.c.l.b16 %v5018
        %v5356 = vunpack.c.l.b16 %v5019
        %v5357 = vunpack.c.h.b16 %v5019
        %v5358 = vunpack.c.l.b16 %v5020
        %v5359 = vunpack.c.h.b16 %v5020
        %v5360 = vunpack.c.l.b16 %v5021
        %v5361 = vunpack.c.h.b16 %v5021
        %v5362 = vunpack.c.l.b16 %v5022
        %v5363 = vunpack.c.h.b16 %v5022
        %v5364 = vunpack.c.l.b16 %v5023
        %v5365 = vunpack.c.l.b16 %v5024
        %v5366 = vunpack.c.h.b16 %v5024
        %v5367 = vunpack.c.l.b16 %v5025
        %v5368 = vunpack.c.h.b16 %v5025
        %v5369 = vunpack.c.l.b16 %v5026
        %v5370 = vunpack.c.h.b16 %v5026
        %v5371 = vunpack.c.l.b16 %v5027
        %v5372 = vunpack.c.h.b16 %v5027
        %v5373 = vunpack.c.l.b16 %v5028
        %v5374 = vunpack.c.l.b16 %v5029
        %v5375 = vunpack.c.h.b16 %v5029
        %v5376 = vunpack.c.l.b16 %v5030
        %v5377 = vunpack.c.h.b16 %v5030
        %v5378 = vunpack.c.l.b16 %v5031
        %v5379 = vunpack.c.h.b16 %v5031
        %v5380 = vunpack.c.l.b16 %v5032
        %v5381 = vunpack.c.h.b16 %v5032
        %v5382 = vunpack.c.l.b16 %v5033
        %v5383 = vunpack.c.l.b16 %v5034
        %v5384 = vunpack.c.h.b16 %v5034
        %v5385 = vunpack.c.l.b16 %v5035
        %v5386 = vunpack.c.h.b16 %v5035
        %v5387 = vunpack.c.l.b16 %v5036
        %v5388 = vunpack.c.h.b16 %v5036
        %v5389 = vunpack.c.l.b16 %v5037
        %v5390 = vunpack.c.h.b16 %v5037
        %v5391 = vunpack.c.l.b16 %v5038
        %v5392 = vunpack.c.l.b16 %v5039
        %v5393 = vunpack.c.h.b16 %v5039
        %v5394 = vunpack.c.l.b16 %v5040
        %v5395 = vunpack.c.h.b16 %v5040
        %v5396 = vunpack.c.l.b16 %v5041
        %v5397 = vunpack.c.h.b16 %v5041
        %v5398 = vunpack.c.l.b16 %v5042
        %v5399 = vunpack.c.h.b16 %v5042
        %v5400 = vunpack.c.l.b16 %v5043
        %v5401 = vunpack.c.l.b16 %v5044
        %v5402 = vunpack.c.h.b16 %v5044
        %v5403 = vunpack.c.l.b16 %v5045
        %v5404 = vunpack.c.h.b16 %v5045
        %v5405 = vunpack.c.l.b16 %v5046
        %v5406 = vunpack.c.h.b16 %v5046
        %v5407 = vunpack.c.l.b16 %v5047
        %v5408 = vunpack.c.h.b16 %v5047
        %v5409 = vunpack.c.l.b16 %v5048
        %v5410 = vunpack.c.l.b16 %v5049
        %v5411 = vunpack.c.h.b16 %v5049
        %v5412 = vunpack.c.l.b16 %v5050
        %v5413 = vunpack.c.h.b16 %v5050
        %v5414 = vunpack.c.l.b16 %v5051
        %v5415 = vunpack.c.h.b16 %v5051
        %v5416 = vunpack.c.l.b16 %v5052
        %v5417 = vunpack.c.h.b16 %v5052
        %v5418 = vunpack.c.l.b16 %v5053
        %v5419 = vunpack.c.l.b16 %v5054
        %v5420 = vunpack.c.h.b16 %v5054
        %v5421 = vunpack.c.l.b16 %v5055
        %v5422 = vunpack.c.h.b16 %v5055
        %v5423 = vunpack.c.l.b16 %v5056
        %v5424 = vunpack.c.h.b16 %v5056
        %v5425 = vunpack.c.l.b16 %v5057
        %v5426 = vunpack.c.h.b16 %v5057
        %v5427 = vunpack.c.l.b16 %v5058
        %v5428 = vpack.c.b16 %v5293, %v5284
        %v5429 = vpack.c.b16 %v5294, %v5285
        %v5430 = vpack.c.b16 %v5295, %v5286
        %v5431 = vpack.c.b16 %v5296, %v5287
        %v5432 = vpack.c.b16 %v5297, %v5288
        %v5433 = vpack.c.b16 %v5298, %v5289
        %v5434 = vpack.c.b16 %v5299, %v5290
        %v5435 = vpack.c.b16 %v5300, %v5291
        %v5436 = vpack.c.b16 %v5301, %v5292
        %v5437 = vpack.c.b16 %v5311, %v5302
        %v5438 = vpack.c.b16 %v5312, %v5303
        %v5439 = vpack.c.b16 %v5313, %v5304
        %v5440 = vpack.c.b16 %v5314, %v5305
        %v5441 = vpack.c.b16 %v5315, %v5306
        %v5442 = vpack.c.b16 %v5316, %v5307
        %v5443 = vpack.c.b16 %v5317, %v5308
        %v5444 = vpack.c.b16 %v5318, %v5309
        %v5445 = vpack.c.b16 %v5319, %v5310
        %v5446 = vpack.c.b16 %v5329, %v5320
        %v5447 = vpack.c.b16 %v5330, %v5321
        %v5448 = vpack.c.b16 %v5331, %v5322
        %v5449 = vpack.c.b16 %v5332, %v5323
        %v5450 = vpack.c.b16 %v5333, %v5324
        %v5451 = vpack.c.b16 %v5334, %v5325
        %v5452 = vpack.c.b16 %v5335, %v5326
        %v5453 = vpack.c.b16 %v5336, %v5327
        %v5454 = vpack.c.b16 %v5337, %v5328
        %v5455 = vpack.c.b16 %v5347, %v5338
        %v5456 = vpack.c.b16 %v5348, %v5339
        %v5457 = vpack.c.b16 %v5349, %v5340
        %v5458 = vpack.c.b16 %v5350, %v5341
        %v5459 = vpack.c.b16 %v5351, %v5342
        %v5460 = vpack.c.b16 %v5352, %v5343
        %v5461 = vpack.c.b16 %v5353, %v5344
        %v5462 = vpack.c.b16 %v5354, %v5345
        %v5463 = vpack.c.b16 %v5355, %v5346
        %v5464 = vpack.c.b16 %v5365, %v5356
        %v5465 = vpack.c.b16 %v5366, %v5357
        %v5466 = vpack.c.b16 %v5367, %v5358
        %v5467 = vpack.c.b16 %v5368, %v5359
        %v5468 = vpack.c.b16 %v5369, %v5360
        %v5469 = vpack.c.b16 %v5370, %v5361
        %v5470 = vpack.c.b16 %v5371, %v5362
        %v5471 = vpack.c.b16 %v5372, %v5363
        %v5472 = vpack.c.b16 %v5373, %v5364
        %v5473 = vpack.c.b16 %v5383, %v5374
        %v5474 = vpack.c.b16 %v5384, %v5375
        %v5475 = vpack.c.b16 %v5385, %v5376
        %v5476 = vpack.c.b16 %v5386, %v5377
        %v5477 = vpack.c.b16 %v5387, %v5378
        %v5478 = vpack.c.b16 %v5388, %v5379
        %v5479 = vpack.c.b16 %v5389, %v5380
        %v5480 = vpack.c.b16 %v5390, %v5381
        %v5481 = vpack.c.b16 %v5391, %v5382
        %v5482 = vpack.c.b16 %v5401, %v5392
        %v5483 = vpack.c.b16 %v5402, %v5393
        %v5484 = vpack.c.b16 %v5403, %v5394
        %v5485 = vpack.c.b16 %v5404, %v5395
        %v5486 = vpack.c.b16 %v5405, %v5396
        %v5487 = vpack.c.b16 %v5406, %v5397
        %v5488 = vpack.c.b16 %v5407, %v5398
        %v5489 = vpack.c.b16 %v5408, %v5399
        %v5490 = vpack.c.b16 %v5409, %v5400
        %v5491 = vpack.c.b16 %v5419, %v5410
        %v5492 = vpack.c.b16 %v5420, %v5411
        %v5493 = vpack.c.b16 %v5421, %v5412
        %v5494 = vpack.c.b16 %v5422, %v5413
        %v5495 = vpack.c.b16 %v5423, %v5414
        %v5496 = vpack.c.b16 %v5424, %v5415
        %v5497 = vpack.c.b16 %v5425, %v5416
        %v5498 = vpack.c.b16 %v5426, %v5417
        %v5499 = vpack.c.b16 %v5427, %v5418
        %v5716 = vunpack.c.l.b16 %v5060
        %v5717 = vunpack.c.l.b16 %v5061
        %v5718 = vunpack.c.l.b16 %v5062
        %v5719 = vunpack.c.l.b16 %v5063
        %v5720 = vunpack.c.l.b16 %v5064
        %v5721 = vunpack.c.l.b16 %v5065
        %v5722 = vunpack.c.l.b16 %v5066
        %v5723 = vunpack.c.l.b16 %v5067
        %v5724 = vunpack.c.l.b16 %v5068
        %v5725 = vunpack.c.l.b16 %v5069
        %v5726 = vunpack.c.l.b16 %v5070
        %v5727 = vunpack.c.l.b16 %v5071
        %v5728 = vunpack.c.l.b16 %v5072
        %v5729 = vunpack.c.l.b16 %v5073
        %v5730 = vunpack.c.l.b16 %v5074
        %v5731 = vunpack.c.l.b16 %v5075
        %v5732 = vunpack.c.l.b16 %v5076
        %v5733 = vunpack.c.l.b16 %v5077
        %v5734 = vunpack.c.l.b16 %v5078
        %v5735 = vunpack.c.l.b16 %v5079
        %v5736 = vunpack.c.l.b16 %v5080
        %v5737 = vunpack.c.l.b16 %v5081
        %v5738 = vunpack.c.l.b16 %v5082
        %v5739 = vunpack.c.l.b16 %v5083
        %v5740 = vunpack.c.l.b16 %v5084
        %v5741 = vunpack.c.l.b16 %v5085
        %v5742 = vunpack.c.l.b16 %v5086
        %v5743 = vunpack.c.l.b16 %v5087
        %v5744 = vunpack.c.l.b16 %v5088
        %v5745 = vunpack.c.l.b16 %v5089
        %v5746 = vunpack.c.l.b16 %v5090
        %v5747 = vunpack.c.l.b16 %v5091
        %v5748 = vunpack.c.l.b16 %v5092
        %v5749 = vunpack.c.l.b16 %v5093
        %v5750 = vunpack.c.l.b16 %v5094
        %v5751 = vunpack.c.l.b16 %v5095
        %v5752 = vunpack.c.l.b16 %v5096
        %v5753 = vunpack.c.l.b16 %v5097
        %v5754 = vunpack.c.l.b16 %v5098
        %v5755 = vunpack.c.l.b16 %v5099
        %v5756 = vunpack.c.l.b16 %v5100
        %v5757 = vunpack.c.l.b16 %v5101
        %v5758 = vunpack.c.l.b16 %v5102
        %v5759 = vunpack.c.l.b16 %v5103
        %v5760 = vunpack.c.l.b16 %v5104
        %v5761 = vunpack.c.l.b16 %v5105
        %v5762 = vunpack.c.l.b16 %v5106
        %v5763 = vunpack.c.l.b16 %v5107
        %v5764 = vunpack.c.l.b16 %v5108
        %v5765 = vunpack.c.l.b16 %v5109
        %v5766 = vunpack.c.l.b16 %v5110
        %v5767 = vunpack.c.l.b16 %v5111
        %v5768 = vunpack.c.l.b16 %v5112
        %v5769 = vunpack.c.l.b16 %v5113
        %v5770 = vunpack.c.l.b16 %v5114
        %v5771 = vunpack.c.l.b16 %v5115
        %v5772 = vunpack.c.l.b16 %v5116
        %v5773 = vunpack.c.l.b16 %v5117
        %v5774 = vunpack.c.l.b16 %v5118
        %v5775 = vunpack.c.l.b16 %v5119
        %v5776 = vunpack.c.l.b16 %v5120
        %v5777 = vunpack.c.l.b16 %v5121
        %v5778 = vunpack.c.l.b16 %v5122
        %v5779 = vunpack.c.l.b16 %v5123
        %v5780 = vunpack.c.l.b16 %v5124
        %v5781 = vunpack.c.l.b16 %v5125
        %v5782 = vunpack.c.l.b16 %v5126
        %v5783 = vunpack.c.l.b16 %v5127
        %v5784 = vunpack.c.l.b16 %v5128
        %v5785 = vunpack.c.l.b16 %v5129
        %v5786 = vunpack.c.l.b16 %v5130
        %v5787 = vunpack.c.l.b16 %v5131
        %v5788 = vunpack.c.l.b16 %v5132
        %v5789 = vunpack.c.l.b16 %v5133
        %v5790 = vunpack.c.l.b16 %v5134
        %v5791 = vunpack.c.l.b16 %v5135
        %v5792 = vunpack.c.l.b16 %v5136
        %v5793 = vunpack.c.l.b16 %v5137
        %v5794 = vunpack.c.l.b16 %v5138
        %v5795 = vunpack.c.l.b16 %v5139
        %v5796 = vunpack.c.l.b16 %v5140
        %v5797 = vunpack.c.l.b16 %v5141
        %v5798 = vunpack.c.l.b16 %v5142
        %v5799 = vunpack.c.l.b16 %v5143
        %v5800 = vunpack.c.l.b16 %v5144
        %v5801 = vunpack.c.l.b16 %v5145
        %v5802 = vunpack.c.l.b16 %v5146
        %v5803 = vunpack.c.l.b16 %v5147
        %v5804 = vunpack.c.l.b16 %v5148
        %v5805 = vunpack.c.l.b16 %v5149
        %v5806 = vunpack.c.l.b16 %v5150
        %v5807 = vunpack.c.l.b16 %v5151
        %v5808 = vunpack.c.l.b16 %v5152
        %v5809 = vunpack.c.l.b16 %v5153
        %v5810 = vunpack.c.l.b16 %v5154
        %v5811 = vunpack.c.l.b16 %v5155
        %v5812 = vunpack.c.l.b16 %v5156
        %v5813 = vunpack.c.l.b16 %v5157
        %v5814 = vunpack.c.l.b16 %v5158
        %v5815 = vunpack.c.l.b16 %v5159
        %v5816 = vunpack.c.l.b16 %v5160
        %v5817 = vunpack.c.l.b16 %v5161
        %v5818 = vunpack.c.l.b16 %v5162
        %v5819 = vunpack.c.l.b16 %v5163
        %v5820 = vunpack.c.l.b16 %v5164
        %v5821 = vunpack.c.l.b16 %v5165
        %v5822 = vunpack.c.l.b16 %v5166
        %v5823 = vunpack.c.l.b16 %v5167
        %v5824 = vunpack.c.l.b16 %v5168
        %v5825 = vunpack.c.l.b16 %v5169
        %v5826 = vunpack.c.l.b16 %v5170
        %v5827 = vunpack.c.l.b16 %v5171
        %v5828 = vunpack.c.l.b16 %v5172
        %v5829 = vunpack.c.l.b16 %v5173
        %v5830 = vunpack.c.l.b16 %v5174
        %v5831 = vunpack.c.l.b16 %v5175
        %v5832 = vunpack.c.l.b16 %v5176
        %v5833 = vunpack.c.l.b16 %v5177
        %v5834 = vunpack.c.l.b16 %v5178
        %v5835 = vunpack.c.l.b16 %v5179
        %v5836 = vunpack.c.l.b16 %v5180
        %v5837 = vunpack.c.l.b16 %v5181
        %v5838 = vunpack.c.l.b16 %v5182
        %v5839 = vunpack.c.l.b16 %v5183
        %v5840 = vunpack.c.l.b16 %v5184
        %v5841 = vunpack.c.l.b16 %v5185
        %v5842 = vunpack.c.l.b16 %v5186
        %v5843 = vunpack.c.l.b16 %v5187
        %v5844 = vunpack.c.l.b16 %v5188
        %v5845 = vunpack.c.l.b16 %v5189
        %v5846 = vunpack.c.l.b16 %v5190
        %v5847 = vunpack.c.l.b16 %v5191
        %v5848 = vunpack.c.l.b16 %v5192
        %v5849 = vunpack.c.l.b16 %v5193
        %v5850 = vunpack.c.l.b16 %v5194
        %v5851 = vunpack.c.l.b16 %v5195
        %v5852 = vunpack.c.l.b16 %v5196
        %v5853 = vunpack.c.l.b16 %v5197
        %v5854 = vunpack.c.l.b16 %v5198
        %v5855 = vunpack.c.l.b16 %v5199
        %v5856 = vunpack.c.l.b16 %v5200
        %v5857 = vunpack.c.l.b16 %v5201
        %v5858 = vunpack.c.l.b16 %v5202
        %v5859 = vunpack.c.l.b16 %v5203
        %v5860 = vpack.c.b16 %v5717, %v5716
        %v5861 = vpack.c.b16 %v5719, %v5718
        %v5862 = vpack.c.b16 %v5721, %v5720
        %v5863 = vpack.c.b16 %v5723, %v5722
        %v5864 = vpack.c.b16 %v5725, %v5724
        %v5865 = vpack.c.b16 %v5727, %v5726
        %v5866 = vpack.c.b16 %v5729, %v5728
        %v5867 = vpack.c.b16 %v5731, %v5730
        %v5868 = vpack.c.b16 %v5733, %v5732
        %v5869 = vpack.c.b16 %v5735, %v5734
        %v5870 = vpack.c.b16 %v5737, %v5736
        %v5871 = vpack.c.b16 %v5739, %v5738
        %v5872 = vpack.c.b16 %v5741, %v5740
        %v5873 = vpack.c.b16 %v5743, %v5742
        %v5874 = vpack.c.b16 %v5745, %v5744
        %v5875 = vpack.c.b16 %v5747, %v5746
        %v5876 = vpack.c.b16 %v5749, %v5748
        %v5877 = vpack.c.b16 %v5751, %v5750
        %v5878 = vpack.c.b16 %v5753, %v5752
        %v5879 = vpack.c.b16 %v5755, %v5754
        %v5880 = vpack.c.b16 %v5757, %v5756
        %v5881 = vpack.c.b16 %v5759, %v5758
        %v5882 = vpack.c.b16 %v5761, %v5760
        %v5883 = vpack.c.b16 %v5763, %v5762
        %v5884 = vpack.c.b16 %v5765, %v5764
        %v5885 = vpack.c.b16 %v5767, %v5766
        %v5886 = vpack.c.b16 %v5769, %v5768
        %v5887 = vpack.c.b16 %v5771, %v5770
        %v5888 = vpack.c.b16 %v5773, %v5772
        %v5889 = vpack.c.b16 %v5775, %v5774
        %v5890 = vpack.c.b16 %v5777, %v5776
        %v5891 = vpack.c.b16 %v5779, %v5778
        %v5892 = vpack.c.b16 %v5781, %v5780
        %v5893 = vpack.c.b16 %v5783, %v5782
        %v5894 = vpack.c.b16 %v5785, %v5784
        %v5895 = vpack.c.b16 %v5787, %v5786
        %v5896 = vpack.c.b16 %v5789, %v5788
        %v5897 = vpack.c.b16 %v5791, %v5790
        %v5898 = vpack.c.b16 %v5793, %v5792
        %v5899 = vpack.c.b16 %v5795, %v5794
        %v5900 = vpack.c.b16 %v5797, %v5796
        %v5901 = vpack.c.b16 %v5799, %v5798
        %v5902 = vpack.c.b16 %v5801, %v5800
        %v5903 = vpack.c.b16 %v5803, %v5802
        %v5904 = vpack.c.b16 %v5805, %v5804
        %v5905 = vpack.c.b16 %v5807, %v5806
        %v5906 = vpack.c.b16 %v5809, %v5808
        %v5907 = vpack.c.b16 %v5811, %v5810
        %v5908 = vpack.c.b16 %v5813, %v5812
        %v5909 = vpack.c.b16 %v5815, %v5814
        %v5910 = vpack.c.b16 %v5817, %v5816
        %v5911 = vpack.c.b16 %v5819, %v5818
        %v5912 = vpack.c.b16 %v5821, %v5820
        %v5913 = vpack.c.b16 %v5823, %v5822
        %v5914 = vpack.c.b16 %v5825, %v5824
        %v5915 = vpack.c.b16 %v5827, %v5826
        %v5916 = vpack.c.b16 %v5829, %v5828
        %v5917 = vpack.c.b16 %v5831, %v5830
        %v5918 = vpack.c.b16 %v5833, %v5832
        %v5919 = vpack.c.b16 %v5835, %v5834
        %v5920 = vpack.c.b16 %v5837, %v5836
        %v5921 = vpack.c.b16 %v5839, %v5838
        %v5922 = vpack.c.b16 %v5841, %v5840
        %v5923 = vpack.c.b16 %v5843, %v5842
        %v5924 = vpack.c.b16 %v5845, %v5844
        %v5925 = vpack.c.b16 %v5847, %v5846
        %v5926 = vpack.c.b16 %v5849, %v5848
        %v5927 = vpack.c.b16 %v5851, %v5850
        %v5928 = vpack.c.b16 %v5853, %v5852
        %v5929 = vpack.c.b16 %v5855, %v5854
        %v5930 = vpack.c.b16 %v5857, %v5856
        %v5931 = vpack.c.b16 %v5859, %v5858
        %6004 = vmatprep.subr.bf16.mxu0 0
        %6005 = vmatpush1.bf16.msra.mxu0 %v5867
        %6006 = vmatprep.subr.bf16.mxu0 0
        %6007 = vmatpush1.bf16.msra.mxu0 %v5866
        %6008 = vmatprep.subr.bf16.mxu0 0
        %6009 = vmatpush1.bf16.msra.mxu0 %v5865
        %6010 = vmatprep.subr.bf16.mxu0 0
        %6011 = vmatpush1.bf16.msra.mxu0 %v5864
        %6012 = vmatprep.subr.bf16.mxu0 0
        %6013 = vmatpush1.bf16.msra.mxu0 %v5863
        %6014 = vmatprep.subr.bf16.mxu0 0
        %6015 = vmatpush1.bf16.msra.mxu0 %v5862
        %6016 = vmatprep.subr.bf16.mxu0 0
        %6017 = vmatpush1.bf16.msra.mxu0 %v5861
        %6018 = vmatprep.subr.bf16.mxu0 0
        %6019 = vmatpush1.bf16.msra.mxu0 %v5860
        %6020 = vmatprep.subr.bf16.mxu0 0
        %6021 = vmatpush2.bf16.msra.mxu0 %v5875
        %6022 = vmatprep.subr.bf16.mxu0 0
        %6023 = vmatpush2.bf16.msra.mxu0 %v5874
        %6024 = vmatprep.subr.bf16.mxu0 0
        %6025 = vmatpush2.bf16.msra.mxu0 %v5873
        %6026 = vmatprep.subr.bf16.mxu0 0
        %6027 = vmatpush2.bf16.msra.mxu0 %v5872
        %6028 = vmatprep.subr.bf16.mxu0 0
        %6029 = vmatpush2.bf16.msra.mxu0 %v5871
        %6030 = vmatprep.subr.bf16.mxu0 0
        %6031 = vmatpush2.bf16.msra.mxu0 %v5870
        %6032 = vmatprep.subr.bf16.mxu0 0
        %6033 = vmatpush2.bf16.msra.mxu0 %v5869
        %6034 = vmatprep.subr.bf16.mxu0 0
        %6035 = vmatpush2.bf16.msra.mxu0 %v5868
        %6036 = vmatprep.mubr.bf16.mxu0 %v5429
        %6037 = vmatmul.mubr.bf16.gmra.mxu0 %v5428
        %v6038 = vpop.f32.mrf.mxu0
        %v6039 = vadd.f32 0.0, %v6038
        %v6040 = vpop.f32.mrf.mxu0
        %v6041 = vpop.f32.mrf.mxu0
        %v6042 = vadd.f32 0.0, %v6041
        %v6043 = vpop.f32.mrf.mxu0
        %6044 = vmatprep.mubr.bf16.mxu0 %v5438
        %6045 = vmatmul.mubr.bf16.gmra.mxu0 %v5437
        %v6046 = vpop.f32.mrf.mxu0
        %v6047 = vadd.f32 0.0, %v6046
        %v6048 = vpop.f32.mrf.mxu0
        %v6049 = vpop.f32.mrf.mxu0
        %v6050 = vadd.f32 0.0, %v6049
        %v6051 = vpop.f32.mrf.mxu0
        %6052 = vmatprep.mubr.bf16.mxu0 %v5447
        %6053 = vmatmul.mubr.bf16.gmra.mxu0 %v5446
        %v6054 = vpop.f32.mrf.mxu0
        %v6055 = vadd.f32 0.0, %v6054
        %v6056 = vpop.f32.mrf.mxu0
        %v6057 = vpop.f32.mrf.mxu0
        %v6058 = vadd.f32 0.0, %v6057
        %v6059 = vpop.f32.mrf.mxu0
        %6060 = vmatprep.mubr.bf16.mxu0 %v5456
        %6061 = vmatmul.mubr.bf16.gmra.mxu0 %v5455
        %v6062 = vpop.f32.mrf.mxu0
        %v6063 = vadd.f32 0.0, %v6062
        %v6064 = vpop.f32.mrf.mxu0
        %v6065 = vpop.f32.mrf.mxu0
        %v6066 = vadd.f32 0.0, %v6065
        %v6067 = vpop.f32.mrf.mxu0
        %6068 = vmatprep.mubr.bf16.mxu0 %v5465
        %6069 = vmatmul.mubr.bf16.gmra.mxu0 %v5464
        %v6070 = vpop.f32.mrf.mxu0
        %v6071 = vadd.f32 0.0, %v6070
        %v6072 = vpop.f32.mrf.mxu0
        %v6073 = vpop.f32.mrf.mxu0
        %v6074 = vadd.f32 0.0, %v6073
        %v6075 = vpop.f32.mrf.mxu0
        %6076 = vmatprep.mubr.bf16.mxu0 %v5474
        %6077 = vmatmul.mubr.bf16.gmra.mxu0 %v5473
        %v6078 = vpop.f32.mrf.mxu0
        %v6079 = vadd.f32 0.0, %v6078
        %v6080 = vpop.f32.mrf.mxu0
        %v6081 = vpop.f32.mrf.mxu0
        %v6082 = vadd.f32 0.0, %v6081
        %v6083 = vpop.f32.mrf.mxu0
        %6084 = vmatprep.mubr.bf16.mxu0 %v5483
        %6085 = vmatmul.mubr.bf16.gmra.mxu0 %v5482
        %v6086 = vpop.f32.mrf.mxu0
        %v6087 = vadd.f32 0.0, %v6086
        %v6088 = vpop.f32.mrf.mxu0
        %v6089 = vpop.f32.mrf.mxu0
        %v6090 = vadd.f32 0.0, %v6089
        %v6091 = vpop.f32.mrf.mxu0
        %6092 = vmatprep.mubr.bf16.mxu0 %v5492
        %6093 = vmatmul.mubr.bf16.gmra.mxu0 %v5491
        %v6094 = vpop.f32.mrf.mxu0
        %v6095 = vadd.f32 0.0, %v6094
        %v6096 = vpop.f32.mrf.mxu0
        %v6097 = vpop.f32.mrf.mxu0
        %v6098 = vadd.f32 0.0, %v6097
        %v6099 = vpop.f32.mrf.mxu0
        %6100 = vdwg.mxu0
        %6101 = vmatprep.subr.bf16.mxu0 0
        %6102 = vmatpush1.bf16.msra.mxu0 %v5883
        %6103 = vmatprep.subr.bf16.mxu0 0
        %6104 = vmatpush1.bf16.msra.mxu0 %v5882
        %6105 = vmatprep.subr.bf16.mxu0 0
        %6106 = vmatpush1.bf16.msra.mxu0 %v5881
        %6107 = vmatprep.subr.bf16.mxu0 0
        %6108 = vmatpush1.bf16.msra.mxu0 %v5880
        %6109 = vmatprep.subr.bf16.mxu0 0
        %6110 = vmatpush1.bf16.msra.mxu0 %v5879
        %6111 = vmatprep.subr.bf16.mxu0 0
        %6112 = vmatpush1.bf16.msra.mxu0 %v5878
        %6113 = vmatprep.subr.bf16.mxu0 0
        %6114 = vmatpush1.bf16.msra.mxu0 %v5877
        %6115 = vmatprep.subr.bf16.mxu0 0
        %6116 = vmatpush1.bf16.msra.mxu0 %v5876
        %6117 = vmatprep.subr.bf16.mxu0 0
        %6118 = vmatpush2.bf16.msra.mxu0 %v5891
        %6119 = vmatprep.subr.bf16.mxu0 0
        %6120 = vmatpush2.bf16.msra.mxu0 %v5890
        %6121 = vmatprep.subr.bf16.mxu0 0
        %6122 = vmatpush2.bf16.msra.mxu0 %v5889
        %6123 = vmatprep.subr.bf16.mxu0 0
        %6124 = vmatpush2.bf16.msra.mxu0 %v5888
        %6125 = vmatprep.subr.bf16.mxu0 0
        %6126 = vmatpush2.bf16.msra.mxu0 %v5887
        %6127 = vmatprep.subr.bf16.mxu0 0
        %6128 = vmatpush2.bf16.msra.mxu0 %v5886
        %6129 = vmatprep.subr.bf16.mxu0 0
        %6130 = vmatpush2.bf16.msra.mxu0 %v5885
        %6131 = vmatprep.subr.bf16.mxu0 0
        %6132 = vmatpush2.bf16.msra.mxu0 %v5884
        %6133 = vmatprep.mubr.bf16.mxu0 %v5431
        %6134 = vmatmul.mubr.bf16.gmra.mxu0 %v5430
        %v6135 = vpop.f32.mrf.mxu0
        %v6136 = vadd.f32 %v6039, %v6135
        %v6137 = vpop.f32.mrf.mxu0
        %v6138 = vpop.f32.mrf.mxu0
        %v6139 = vadd.f32 %v6042, %v6138
        %v6140 = vpop.f32.mrf.mxu0
        %6141 = vmatprep.mubr.bf16.mxu0 %v5440
        %6142 = vmatmul.mubr.bf16.gmra.mxu0 %v5439
        %v6143 = vpop.f32.mrf.mxu0
        %v6144 = vadd.f32 %v6047, %v6143
        %v6145 = vpop.f32.mrf.mxu0
        %v6146 = vpop.f32.mrf.mxu0
        %v6147 = vadd.f32 %v6050, %v6146
        %v6148 = vpop.f32.mrf.mxu0
        %6149 = vmatprep.mubr.bf16.mxu0 %v5449
        %6150 = vmatmul.mubr.bf16.gmra.mxu0 %v5448
        %v6151 = vpop.f32.mrf.mxu0
        %v6152 = vadd.f32 %v6055, %v6151
        %v6153 = vpop.f32.mrf.mxu0
        %v6154 = vpop.f32.mrf.mxu0
        %v6155 = vadd.f32 %v6058, %v6154
        %v6156 = vpop.f32.mrf.mxu0
        %6157 = vmatprep.mubr.bf16.mxu0 %v5458
        %6158 = vmatmul.mubr.bf16.gmra.mxu0 %v5457
        %v6159 = vpop.f32.mrf.mxu0
        %v6160 = vadd.f32 %v6063, %v6159
        %v6161 = vpop.f32.mrf.mxu0
        %v6162 = vpop.f32.mrf.mxu0
        %v6163 = vadd.f32 %v6066, %v6162
        %v6164 = vpop.f32.mrf.mxu0
        %6165 = vmatprep.mubr.bf16.mxu0 %v5467
        %6166 = vmatmul.mubr.bf16.gmra.mxu0 %v5466
        %v6167 = vpop.f32.mrf.mxu0
        %v6168 = vadd.f32 %v6071, %v6167
        %v6169 = vpop.f32.mrf.mxu0
        %v6170 = vpop.f32.mrf.mxu0
        %v6171 = vadd.f32 %v6074, %v6170
        %v6172 = vpop.f32.mrf.mxu0
        %6173 = vmatprep.mubr.bf16.mxu0 %v5476
        %6174 = vmatmul.mubr.bf16.gmra.mxu0 %v5475
        %v6175 = vpop.f32.mrf.mxu0
        %v6176 = vadd.f32 %v6079, %v6175
        %v6177 = vpop.f32.mrf.mxu0
        %v6178 = vpop.f32.mrf.mxu0
        %v6179 = vadd.f32 %v6082, %v6178
        %v6180 = vpop.f32.mrf.mxu0
        %6181 = vmatprep.mubr.bf16.mxu0 %v5485
        %6182 = vmatmul.mubr.bf16.gmra.mxu0 %v5484
        %v6183 = vpop.f32.mrf.mxu0
        %v6184 = vadd.f32 %v6087, %v6183
        %v6185 = vpop.f32.mrf.mxu0
        %v6186 = vpop.f32.mrf.mxu0
        %v6187 = vadd.f32 %v6090, %v6186
        %v6188 = vpop.f32.mrf.mxu0
        %6189 = vmatprep.mubr.bf16.mxu0 %v5494
        %6190 = vmatmul.mubr.bf16.gmra.mxu0 %v5493
        %v6191 = vpop.f32.mrf.mxu0
        %v6192 = vadd.f32 %v6095, %v6191
        %v6193 = vpop.f32.mrf.mxu0
        %v6194 = vpop.f32.mrf.mxu0
        %v6195 = vadd.f32 %v6098, %v6194
        %v6196 = vpop.f32.mrf.mxu0
        %6197 = vdwg.mxu0
        %6198 = vmatprep.subr.bf16.mxu0 0
        %6199 = vmatpush1.bf16.msra.mxu0 %v5899
        %6200 = vmatprep.subr.bf16.mxu0 0
        %6201 = vmatpush1.bf16.msra.mxu0 %v5898
        %6202 = vmatprep.subr.bf16.mxu0 0
        %6203 = vmatpush1.bf16.msra.mxu0 %v5897
        %6204 = vmatprep.subr.bf16.mxu0 0
        %6205 = vmatpush1.bf16.msra.mxu0 %v5896
        %6206 = vmatprep.subr.bf16.mxu0 0
        %6207 = vmatpush1.bf16.msra.mxu0 %v5895
        %6208 = vmatprep.subr.bf16.mxu0 0
        %6209 = vmatpush1.bf16.msra.mxu0 %v5894
        %6210 = vmatprep.subr.bf16.mxu0 0
        %6211 = vmatpush1.bf16.msra.mxu0 %v5893
        %6212 = vmatprep.subr.bf16.mxu0 0
        %6213 = vmatpush1.bf16.msra.mxu0 %v5892
        %6214 = vmatprep.subr.bf16.mxu0 0
        %6215 = vmatpush2.bf16.msra.mxu0 %v5907
        %6216 = vmatprep.subr.bf16.mxu0 0
        %6217 = vmatpush2.bf16.msra.mxu0 %v5906
        %6218 = vmatprep.subr.bf16.mxu0 0
        %6219 = vmatpush2.bf16.msra.mxu0 %v5905
        %6220 = vmatprep.subr.bf16.mxu0 0
        %6221 = vmatpush2.bf16.msra.mxu0 %v5904
        %6222 = vmatprep.subr.bf16.mxu0 0
        %6223 = vmatpush2.bf16.msra.mxu0 %v5903
        %6224 = vmatprep.subr.bf16.mxu0 0
        %6225 = vmatpush2.bf16.msra.mxu0 %v5902
        %6226 = vmatprep.subr.bf16.mxu0 0
        %6227 = vmatpush2.bf16.msra.mxu0 %v5901
        %6228 = vmatprep.subr.bf16.mxu0 0
        %6229 = vmatpush2.bf16.msra.mxu0 %v5900
        %6230 = vmatprep.mubr.bf16.mxu0 %v5433
        %6231 = vmatmul.mubr.bf16.gmra.mxu0 %v5432
        %v6232 = vpop.f32.mrf.mxu0
        %v6233 = vadd.f32 %v6136, %v6232
        %v6234 = vpop.f32.mrf.mxu0
        %v6235 = vpop.f32.mrf.mxu0
        %v6236 = vadd.f32 %v6139, %v6235
        %v6237 = vpop.f32.mrf.mxu0
        %6238 = vmatprep.mubr.bf16.mxu0 %v5442
        %6239 = vmatmul.mubr.bf16.gmra.mxu0 %v5441
        %v6240 = vpop.f32.mrf.mxu0
        %v6241 = vadd.f32 %v6144, %v6240
        %v6242 = vpop.f32.mrf.mxu0
        %v6243 = vpop.f32.mrf.mxu0
        %v6244 = vadd.f32 %v6147, %v6243
        %v6245 = vpop.f32.mrf.mxu0
        %6246 = vmatprep.mubr.bf16.mxu0 %v5451
        %6247 = vmatmul.mubr.bf16.gmra.mxu0 %v5450
        %v6248 = vpop.f32.mrf.mxu0
        %v6249 = vadd.f32 %v6152, %v6248
        %v6250 = vpop.f32.mrf.mxu0
        %v6251 = vpop.f32.mrf.mxu0
        %v6252 = vadd.f32 %v6155, %v6251
        %v6253 = vpop.f32.mrf.mxu0
        %6254 = vmatprep.mubr.bf16.mxu0 %v5460
        %6255 = vmatmul.mubr.bf16.gmra.mxu0 %v5459
        %v6256 = vpop.f32.mrf.mxu0
        %v6257 = vadd.f32 %v6160, %v6256
        %v6258 = vpop.f32.mrf.mxu0
        %v6259 = vpop.f32.mrf.mxu0
        %v6260 = vadd.f32 %v6163, %v6259
        %v6261 = vpop.f32.mrf.mxu0
        %6262 = vmatprep.mubr.bf16.mxu0 %v5469
        %6263 = vmatmul.mubr.bf16.gmra.mxu0 %v5468
        %v6264 = vpop.f32.mrf.mxu0
        %v6265 = vadd.f32 %v6168, %v6264
        %v6266 = vpop.f32.mrf.mxu0
        %v6267 = vpop.f32.mrf.mxu0
        %v6268 = vadd.f32 %v6171, %v6267
        %v6269 = vpop.f32.mrf.mxu0
        %6270 = vmatprep.mubr.bf16.mxu0 %v5478
        %6271 = vmatmul.mubr.bf16.gmra.mxu0 %v5477
        %v6272 = vpop.f32.mrf.mxu0
        %v6273 = vadd.f32 %v6176, %v6272
        %v6274 = vpop.f32.mrf.mxu0
        %v6275 = vpop.f32.mrf.mxu0
        %v6276 = vadd.f32 %v6179, %v6275
        %v6277 = vpop.f32.mrf.mxu0
        %6278 = vmatprep.mubr.bf16.mxu0 %v5487
        %6279 = vmatmul.mubr.bf16.gmra.mxu0 %v5486
        %v6280 = vpop.f32.mrf.mxu0
        %v6281 = vadd.f32 %v6184, %v6280
        %v6282 = vpop.f32.mrf.mxu0
        %v6283 = vpop.f32.mrf.mxu0
        %v6284 = vadd.f32 %v6187, %v6283
        %v6285 = vpop.f32.mrf.mxu0
        %6286 = vmatprep.mubr.bf16.mxu0 %v5496
        %6287 = vmatmul.mubr.bf16.gmra.mxu0 %v5495
        %v6288 = vpop.f32.mrf.mxu0
        %v6289 = vadd.f32 %v6192, %v6288
        %v6290 = vpop.f32.mrf.mxu0
        %v6291 = vpop.f32.mrf.mxu0
        %v6292 = vadd.f32 %v6195, %v6291
        %v6293 = vpop.f32.mrf.mxu0
        %6294 = vdwg.mxu0
        %6295 = vmatprep.subr.bf16.mxu0 0
        %6296 = vmatpush1.bf16.msra.mxu0 %v5915
        %6297 = vmatprep.subr.bf16.mxu0 0
        %6298 = vmatpush1.bf16.msra.mxu0 %v5914
        %6299 = vmatprep.subr.bf16.mxu0 0
        %6300 = vmatpush1.bf16.msra.mxu0 %v5913
        %6301 = vmatprep.subr.bf16.mxu0 0
        %6302 = vmatpush1.bf16.msra.mxu0 %v5912
        %6303 = vmatprep.subr.bf16.mxu0 0
        %6304 = vmatpush1.bf16.msra.mxu0 %v5911
        %6305 = vmatprep.subr.bf16.mxu0 0
        %6306 = vmatpush1.bf16.msra.mxu0 %v5910
        %6307 = vmatprep.subr.bf16.mxu0 0
        %6308 = vmatpush1.bf16.msra.mxu0 %v5909
        %6309 = vmatprep.subr.bf16.mxu0 0
        %6310 = vmatpush1.bf16.msra.mxu0 %v5908
        %6311 = vmatprep.subr.bf16.mxu0 0
        %6312 = vmatpush2.bf16.msra.mxu0 %v5923
        %6313 = vmatprep.subr.bf16.mxu0 0
        %6314 = vmatpush2.bf16.msra.mxu0 %v5922
        %6315 = vmatprep.subr.bf16.mxu0 0
        %6316 = vmatpush2.bf16.msra.mxu0 %v5921
        %6317 = vmatprep.subr.bf16.mxu0 0
        %6318 = vmatpush2.bf16.msra.mxu0 %v5920
        %6319 = vmatprep.subr.bf16.mxu0 0
        %6320 = vmatpush2.bf16.msra.mxu0 %v5919
        %6321 = vmatprep.subr.bf16.mxu0 0
        %6322 = vmatpush2.bf16.msra.mxu0 %v5918
        %6323 = vmatprep.subr.bf16.mxu0 0
        %6324 = vmatpush2.bf16.msra.mxu0 %v5917
        %6325 = vmatprep.subr.bf16.mxu0 0
        %6326 = vmatpush2.bf16.msra.mxu0 %v5916
        %6327 = vmatprep.mubr.bf16.mxu0 %v5435
        %6328 = vmatmul.mubr.bf16.gmra.mxu0 %v5434
        %v6329 = vpop.f32.mrf.mxu0
        %v6330 = vadd.f32 %v6233, %v6329
        %v6331 = vpop.f32.mrf.mxu0
        %v6332 = vpop.f32.mrf.mxu0
        %v6333 = vadd.f32 %v6236, %v6332
        %v6334 = vpop.f32.mrf.mxu0
        %6335 = vmatprep.mubr.bf16.mxu0 %v5444
        %6336 = vmatmul.mubr.bf16.gmra.mxu0 %v5443
        %v6337 = vpop.f32.mrf.mxu0
        %v6338 = vadd.f32 %v6241, %v6337
        %v6339 = vpop.f32.mrf.mxu0
        %v6340 = vpop.f32.mrf.mxu0
        %v6341 = vadd.f32 %v6244, %v6340
        %v6342 = vpop.f32.mrf.mxu0
        %6343 = vmatprep.mubr.bf16.mxu0 %v5453
        %6344 = vmatmul.mubr.bf16.gmra.mxu0 %v5452
        %v6345 = vpop.f32.mrf.mxu0
        %v6346 = vadd.f32 %v6249, %v6345
        %v6347 = vpop.f32.mrf.mxu0
        %v6348 = vpop.f32.mrf.mxu0
        %v6349 = vadd.f32 %v6252, %v6348
        %v6350 = vpop.f32.mrf.mxu0
        %6351 = vmatprep.mubr.bf16.mxu0 %v5462
        %6352 = vmatmul.mubr.bf16.gmra.mxu0 %v5461
        %v6353 = vpop.f32.mrf.mxu0
        %v6354 = vadd.f32 %v6257, %v6353
        %v6355 = vpop.f32.mrf.mxu0
        %v6356 = vpop.f32.mrf.mxu0
        %v6357 = vadd.f32 %v6260, %v6356
        %v6358 = vpop.f32.mrf.mxu0
        %6359 = vmatprep.mubr.bf16.mxu0 %v5471
        %6360 = vmatmul.mubr.bf16.gmra.mxu0 %v5470
        %v6361 = vpop.f32.mrf.mxu0
        %v6362 = vadd.f32 %v6265, %v6361
        %v6363 = vpop.f32.mrf.mxu0
        %v6364 = vpop.f32.mrf.mxu0
        %v6365 = vadd.f32 %v6268, %v6364
        %v6366 = vpop.f32.mrf.mxu0
        %6367 = vmatprep.mubr.bf16.mxu0 %v5480
        %6368 = vmatmul.mubr.bf16.gmra.mxu0 %v5479
        %v6369 = vpop.f32.mrf.mxu0
        %v6370 = vadd.f32 %v6273, %v6369
        %v6371 = vpop.f32.mrf.mxu0
        %v6372 = vpop.f32.mrf.mxu0
        %v6373 = vadd.f32 %v6276, %v6372
        %v6374 = vpop.f32.mrf.mxu0
        %6375 = vmatprep.mubr.bf16.mxu0 %v5489
        %6376 = vmatmul.mubr.bf16.gmra.mxu0 %v5488
        %v6377 = vpop.f32.mrf.mxu0
        %v6378 = vadd.f32 %v6281, %v6377
        %v6379 = vpop.f32.mrf.mxu0
        %v6380 = vpop.f32.mrf.mxu0
        %v6381 = vadd.f32 %v6284, %v6380
        %v6382 = vpop.f32.mrf.mxu0
        %6383 = vmatprep.mubr.bf16.mxu0 %v5498
        %6384 = vmatmul.mubr.bf16.gmra.mxu0 %v5497
        %v6385 = vpop.f32.mrf.mxu0
        %v6386 = vadd.f32 %v6289, %v6385
        %v6387 = vpop.f32.mrf.mxu0
        %v6388 = vpop.f32.mrf.mxu0
        %v6389 = vadd.f32 %v6292, %v6388
        %v6390 = vpop.f32.mrf.mxu0
        %6391 = vdwg.mxu0
        %6392 = vmatprep.subr.bf16.mxu0 0
        %6393 = vmatpush1.bf16.msra.mxu0 %v5931
        %6394 = vmatprep.subr.bf16.mxu0 0
        %6395 = vmatpush1.bf16.msra.mxu0 %v5930
        %6396 = vmatprep.subr.bf16.mxu0 0
        %6397 = vmatpush1.bf16.msra.mxu0 %v5929
        %6398 = vmatprep.subr.bf16.mxu0 0
        %6399 = vmatpush1.bf16.msra.mxu0 %v5928
        %6400 = vmatprep.subr.bf16.mxu0 0
        %6401 = vmatpush1.bf16.msra.mxu0 %v5927
        %6402 = vmatprep.subr.bf16.mxu0 0
        %6403 = vmatpush1.bf16.msra.mxu0 %v5926
        %6404 = vmatprep.subr.bf16.mxu0 0
        %6405 = vmatpush1.bf16.msra.mxu0 %v5925
        %6406 = vmatprep.subr.bf16.mxu0 0
        %6407 = vmatpush1.bf16.msra.mxu0 %v5924
        %6408 = vmatprep.subr.bf16.mxu0 0
        %6409 = vmatpush2.bf16.msra.mxu0 0
        %6410 = vmatprep.subr.bf16.mxu0 0
        %6411 = vmatpush2.bf16.msra.mxu0 0
        %6412 = vmatprep.subr.bf16.mxu0 0
        %6413 = vmatpush2.bf16.msra.mxu0 0
        %6414 = vmatprep.subr.bf16.mxu0 0
        %6415 = vmatpush2.bf16.msra.mxu0 0
        %6416 = vmatprep.subr.bf16.mxu0 0
        %6417 = vmatpush2.bf16.msra.mxu0 0
        %6418 = vmatprep.subr.bf16.mxu0 0
        %6419 = vmatpush2.bf16.msra.mxu0 0
        %6420 = vmatprep.subr.bf16.mxu0 0
        %6421 = vmatpush2.bf16.msra.mxu0 0
        %6422 = vmatprep.subr.bf16.mxu0 0
        %6423 = vmatpush2.bf16.msra.mxu0 0
        %6424 = vmatprep.mubr.bf16.mxu0 0
        %6425 = vmatmul.mubr.bf16.gmra.mxu0 %v5436
        %v6426 = vpop.f32.mrf.mxu0
        %v6427 = vadd.f32 %v6330, %v6426
        %v6428 = vpop.f32.mrf.mxu0
        %v6429 = vpop.f32.mrf.mxu0
        %v6430 = vadd.f32 %v6333, %v6429
        %v6431 = vpop.f32.mrf.mxu0
        %6432 = vmatprep.mubr.bf16.mxu0 0
        %6433 = vmatmul.mubr.bf16.gmra.mxu0 %v5445
        %v6434 = vpop.f32.mrf.mxu0
        %v6435 = vadd.f32 %v6338, %v6434
        %v6436 = vpop.f32.mrf.mxu0
        %v6437 = vpop.f32.mrf.mxu0
        %v6438 = vadd.f32 %v6341, %v6437
        %v6439 = vpop.f32.mrf.mxu0
        %6440 = vmatprep.mubr.bf16.mxu0 0
        %6441 = vmatmul.mubr.bf16.gmra.mxu0 %v5454
        %v6442 = vpop.f32.mrf.mxu0
        %v6443 = vadd.f32 %v6346, %v6442
        %v6444 = vpop.f32.mrf.mxu0
        %v6445 = vpop.f32.mrf.mxu0
        %v6446 = vadd.f32 %v6349, %v6445
        %v6447 = vpop.f32.mrf.mxu0
        %6448 = vmatprep.mubr.bf16.mxu0 0
        %6449 = vmatmul.mubr.bf16.gmra.mxu0 %v5463
        %v6450 = vpop.f32.mrf.mxu0
        %v6451 = vadd.f32 %v6354, %v6450
        %v6452 = vpop.f32.mrf.mxu0
        %v6453 = vpop.f32.mrf.mxu0
        %v6454 = vadd.f32 %v6357, %v6453
        %v6455 = vpop.f32.mrf.mxu0
        %6456 = vmatprep.mubr.bf16.mxu0 0
        %6457 = vmatmul.mubr.bf16.gmra.mxu0 %v5472
        %v6458 = vpop.f32.mrf.mxu0
        %v6459 = vadd.f32 %v6362, %v6458
        %v6460 = vpop.f32.mrf.mxu0
        %v6461 = vpop.f32.mrf.mxu0
        %v6462 = vadd.f32 %v6365, %v6461
        %v6463 = vpop.f32.mrf.mxu0
        %6464 = vmatprep.mubr.bf16.mxu0 0
        %6465 = vmatmul.mubr.bf16.gmra.mxu0 %v5481
        %v6466 = vpop.f32.mrf.mxu0
        %v6467 = vadd.f32 %v6370, %v6466
        %v6468 = vpop.f32.mrf.mxu0
        %v6469 = vpop.f32.mrf.mxu0
        %v6470 = vadd.f32 %v6373, %v6469
        %v6471 = vpop.f32.mrf.mxu0
        %6472 = vmatprep.mubr.bf16.mxu0 0
        %6473 = vmatmul.mubr.bf16.gmra.mxu0 %v5490
        %v6474 = vpop.f32.mrf.mxu0
        %v6475 = vadd.f32 %v6378, %v6474
        %v6476 = vpop.f32.mrf.mxu0
        %v6477 = vpop.f32.mrf.mxu0
        %v6478 = vadd.f32 %v6381, %v6477
        %v6479 = vpop.f32.mrf.mxu0
        %6480 = vmatprep.mubr.bf16.mxu0 0
        %6481 = vmatmul.mubr.bf16.gmra.mxu0 %v5499
        %v6482 = vpop.f32.mrf.mxu0
        %v6483 = vadd.f32 %v6386, %v6482
        %v6484 = vpop.f32.mrf.mxu0
        %v6485 = vpop.f32.mrf.mxu0
        %v6486 = vadd.f32 %v6389, %v6485
        %v6487 = vpop.f32.mrf.mxu0
        %6488 = vdwg.mxu0
        %v6489 = vadd.f32 %v4963, %v6427
        %v6490 = vadd.f32 %v4964, %v6430
        %v6491 = vadd.f32 %v4965, %v6435
        %v6492 = vadd.f32 %v4966, %v6438
        %v6493 = vadd.f32 %v4967, %v6443
        %v6494 = vadd.f32 %v4968, %v6446
        %v6495 = vadd.f32 %v4969, %v6451
        %v6496 = vadd.f32 %v4970, %v6454
        %v6497 = vadd.f32 %v4971, %v6459
        %v6498 = vadd.f32 %v4972, %v6462
        %v6499 = vadd.f32 %v4973, %v6467
        %v6500 = vadd.f32 %v4974, %v6470
        %v6501 = vadd.f32 %v4975, %v6475
        %v6502 = vadd.f32 %v4976, %v6478
        %v6503 = vadd.f32 %v4977, %v6483
        %v6504 = vadd.f32 %v4978, %v6486
        %6505 = vst [vmem:[#allocation4] sm:$0xff] %v6489
        %6506 = vst [vmem:[#allocation4 + $0x8] sm:$0xff] %v6490
        %6507 = vst [vmem:[#allocation4 + $0x10] sm:$0xff] %v6491
        %6508 = vst [vmem:[#allocation4 + $0x18] sm:$0xff] %v6492
        %6509 = vst [vmem:[#allocation4 + $0x20] sm:$0xff] %v6493
        %6510 = vst [vmem:[#allocation4 + $0x28] sm:$0xff] %v6494
        %6511 = vst [vmem:[#allocation4 + $0x30] sm:$0xff] %v6495
        %6512 = vst [vmem:[#allocation4 + $0x38] sm:$0xff] %v6496
        %6513 = vst [vmem:[#allocation4 + $0x40] sm:$0xff] %v6497
        %6514 = vst [vmem:[#allocation4 + $0x48] sm:$0xff] %v6498
        %6515 = vst [vmem:[#allocation4 + $0x50] sm:$0xff] %v6499
        %6516 = vst [vmem:[#allocation4 + $0x58] sm:$0xff] %v6500
        %6517 = vst [vmem:[#allocation4 + $0x60] sm:$0xff] %v6501
        %6518 = vst [vmem:[#allocation4 + $0x68] sm:$0xff] %v6502
        %6519 = vst [vmem:[#allocation4 + $0x70] sm:$0xff] %v6503
        %6520 = vst [vmem:[#allocation4 + $0x78] sm:$0xff] %v6504
        %s6521 = sadd.s32 %s925, 6
        %s6522 = smul.u32 %s6521, 10
        %s6523 = smul.addr %s6522, 4
        %s6524 = scalar_lea.vmem [#allocation2], %s6523
        %v6525 = vld [vmem:[%s6524 + $0x8] sm:$0xc]
        %v6526 = vld [vmem:[%s6524 + $0xc] sm:$0xf]
        %v6527 = vld [vmem:[%s6524 + $0x10] sm:$0x3]
        %v6528 = vld [vmem:[%s6524 + $0x30] sm:$0xc]
        %v6529 = vld [vmem:[%s6524 + $0x34] sm:$0xf]
        %v6530 = vld [vmem:[%s6524 + $0x38] sm:$0x3]
        %v6531 = vld [vmem:[%s6524 + $0x58] sm:$0xc]
        %v6532 = vld [vmem:[%s6524 + $0x5c] sm:$0xf]
        %v6533 = vld [vmem:[%s6524 + $0x60] sm:$0x3]
        %v6534 = vld [vmem:[%s6524 + $0x80] sm:$0xc]
        %v6535 = vld [vmem:[%s6524 + $0x84] sm:$0xf]
        %v6536 = vld [vmem:[%s6524 + $0x88] sm:$0x3]
        %v6537 = vld [vmem:[%s6524 + $0xa8] sm:$0xc]
        %v6538 = vld [vmem:[%s6524 + $0xac] sm:$0xf]
        %v6539 = vld [vmem:[%s6524 + $0xb0] sm:$0x3]
        %v6540 = vld [vmem:[%s6524 + $0xd0] sm:$0xc]
        %v6541 = vld [vmem:[%s6524 + $0xd4] sm:$0xf]
        %v6542 = vld [vmem:[%s6524 + $0xd8] sm:$0x3]
        %v6543 = vld [vmem:[%s6524 + $0xf8] sm:$0xc]
        %v6544 = vld [vmem:[%s6524 + $0xfc] sm:$0xf]
        %v6545 = vld [vmem:[%s6524 + $0x100] sm:$0x3]
        %v6546 = vld [vmem:[%s6524 + $0x120] sm:$0xc]
        %v6547 = vld [vmem:[%s6524 + $0x124] sm:$0xf]
        %v6548 = vld [vmem:[%s6524 + $0x128] sm:$0x3]
        %vm6573 = vcmask 1041408
        %vm6574 = vcmask 1045508
        %vm6575 = vmor %vm6573, %vm6574
        %v6576 = vrot.slane %v6525, 6
        %v6577 = vrot.slane %v6576, 4
        %v6578 = vrot.slane %v6526, 6
        %v6579 = vsel %vm6575, %v6577, %v6578
        %v6580 = vrot.slane %v6578, 4
        %v6581 = vrot.slane %v6527, 6
        %v6582 = vsel %vm6575, %v6580, %v6581
        %v6583 = vrot.slane %v6528, 6
        %v6584 = vrot.slane %v6583, 4
        %v6585 = vrot.slane %v6529, 6
        %v6586 = vsel %vm6575, %v6584, %v6585
        %v6587 = vrot.slane %v6585, 4
        %v6588 = vrot.slane %v6530, 6
        %v6589 = vsel %vm6575, %v6587, %v6588
        %v6590 = vrot.slane %v6531, 6
        %v6591 = vrot.slane %v6590, 4
        %v6592 = vrot.slane %v6532, 6
        %v6593 = vsel %vm6575, %v6591, %v6592
        %v6594 = vrot.slane %v6592, 4
        %v6595 = vrot.slane %v6533, 6
        %v6596 = vsel %vm6575, %v6594, %v6595
        %v6597 = vrot.slane %v6534, 6
        %v6598 = vrot.slane %v6597, 4
        %v6599 = vrot.slane %v6535, 6
        %v6600 = vsel %vm6575, %v6598, %v6599
        %v6601 = vrot.slane %v6599, 4
        %v6602 = vrot.slane %v6536, 6
        %v6603 = vsel %vm6575, %v6601, %v6602
        %v6604 = vrot.slane %v6537, 6
        %v6605 = vrot.slane %v6604, 4
        %v6606 = vrot.slane %v6538, 6
        %v6607 = vsel %vm6575, %v6605, %v6606
        %v6608 = vrot.slane %v6606, 4
        %v6609 = vrot.slane %v6539, 6
        %v6610 = vsel %vm6575, %v6608, %v6609
        %v6611 = vrot.slane %v6540, 6
        %v6612 = vrot.slane %v6611, 4
        %v6613 = vrot.slane %v6541, 6
        %v6614 = vsel %vm6575, %v6612, %v6613
        %v6615 = vrot.slane %v6613, 4
        %v6616 = vrot.slane %v6542, 6
        %v6617 = vsel %vm6575, %v6615, %v6616
        %v6618 = vrot.slane %v6543, 6
        %v6619 = vrot.slane %v6618, 4
        %v6620 = vrot.slane %v6544, 6
        %v6621 = vsel %vm6575, %v6619, %v6620
        %v6622 = vrot.slane %v6620, 4
        %v6623 = vrot.slane %v6545, 6
        %v6624 = vsel %vm6575, %v6622, %v6623
        %v6625 = vrot.slane %v6546, 6
        %v6626 = vrot.slane %v6625, 4
        %v6627 = vrot.slane %v6547, 6
        %v6628 = vsel %vm6575, %v6626, %v6627
        %v6629 = vrot.slane %v6627, 4
        %v6630 = vrot.slane %v6548, 6
        %v6631 = vsel %vm6575, %v6629, %v6630
        %6648 = vst [vmem:[#allocation3] sm:$0xf] %v6579
        %6649 = vst [vmem:[#allocation3 + $0x24] sm:$0xf] %v6582
        %6650 = vst [vmem:[#allocation3 + $0x48] sm:$0xf] %v6586
        %6651 = vst [vmem:[#allocation3 + $0x6c] sm:$0xf] %v6589
        %6652 = vst [vmem:[#allocation3 + $0x90] sm:$0xf] %v6593
        %6653 = vst [vmem:[#allocation3 + $0xb4] sm:$0xf] %v6596
        %6654 = vst [vmem:[#allocation3 + $0xd8] sm:$0xf] %v6600
        %6655 = vst [vmem:[#allocation3 + $0xfc] sm:$0xf] %v6603
        %6656 = vst [vmem:[#allocation3 + $0x120] sm:$0xf] %v6607
        %6657 = vst [vmem:[#allocation3 + $0x144] sm:$0xf] %v6610
        %6658 = vst [vmem:[#allocation3 + $0x168] sm:$0xf] %v6614
        %6659 = vst [vmem:[#allocation3 + $0x18c] sm:$0xf] %v6617
        %6660 = vst [vmem:[#allocation3 + $0x1b0] sm:$0xf] %v6621
        %6661 = vst [vmem:[#allocation3 + $0x1d4] sm:$0xf] %v6624
        %6662 = vst [vmem:[#allocation3 + $0x1f8] sm:$0xf] %v6628
        %6663 = vst [vmem:[#allocation3 + $0x21c] sm:$0xf] %v6631
        %v6664 = vld [vmem:[%s6524 + $0x10] sm:$0xf]
        %v6665 = vld [vmem:[%s6524 + $0x14] sm:$0xf]
        %v6666 = vld [vmem:[%s6524 + $0x38] sm:$0xf]
        %v6667 = vld [vmem:[%s6524 + $0x3c] sm:$0xf]
        %v6668 = vld [vmem:[%s6524 + $0x60] sm:$0xf]
        %v6669 = vld [vmem:[%s6524 + $0x64] sm:$0xf]
        %v6670 = vld [vmem:[%s6524 + $0x88] sm:$0xf]
        %v6671 = vld [vmem:[%s6524 + $0x8c] sm:$0xf]
        %v6672 = vld [vmem:[%s6524 + $0xb0] sm:$0xf]
        %v6673 = vld [vmem:[%s6524 + $0xb4] sm:$0xf]
        %v6674 = vld [vmem:[%s6524 + $0xd8] sm:$0xf]
        %v6675 = vld [vmem:[%s6524 + $0xdc] sm:$0xf]
        %v6676 = vld [vmem:[%s6524 + $0x100] sm:$0xf]
        %v6677 = vld [vmem:[%s6524 + $0x104] sm:$0xf]
        %v6678 = vld [vmem:[%s6524 + $0x128] sm:$0xf]
        %v6679 = vld [vmem:[%s6524 + $0x12c] sm:$0xf]
        %6680 = vst [vmem:[#allocation3 + $0x4] sm:$0xf] %v6664
        %6681 = vst [vmem:[#allocation3 + $0x28] sm:$0xf] %v6665
        %6682 = vst [vmem:[#allocation3 + $0x4c] sm:$0xf] %v6666
        %6683 = vst [vmem:[#allocation3 + $0x70] sm:$0xf] %v6667
        %6684 = vst [vmem:[#allocation3 + $0x94] sm:$0xf] %v6668
        %6685 = vst [vmem:[#allocation3 + $0xb8] sm:$0xf] %v6669
        %6686 = vst [vmem:[#allocation3 + $0xdc] sm:$0xf] %v6670
        %6687 = vst [vmem:[#allocation3 + $0x100] sm:$0xf] %v6671
        %6688 = vst [vmem:[#allocation3 + $0x124] sm:$0xf] %v6672
        %6689 = vst [vmem:[#allocation3 + $0x148] sm:$0xf] %v6673
        %6690 = vst [vmem:[#allocation3 + $0x16c] sm:$0xf] %v6674
        %6691 = vst [vmem:[#allocation3 + $0x190] sm:$0xf] %v6675
        %6692 = vst [vmem:[#allocation3 + $0x1b4] sm:$0xf] %v6676
        %6693 = vst [vmem:[#allocation3 + $0x1d8] sm:$0xf] %v6677
        %6694 = vst [vmem:[#allocation3 + $0x1fc] sm:$0xf] %v6678
        %6695 = vst [vmem:[#allocation3 + $0x220] sm:$0xf] %v6679
        %v6696 = vld [vmem:[%s6524 + $0x14] sm:$0xc]
        %v6697 = vld [vmem:[%s6524 + $0x18] sm:$0xf]
        %v6698 = vld [vmem:[%s6524 + $0x1c] sm:$0x3]
        %v6699 = vld [vmem:[%s6524 + $0x3c] sm:$0xc]
        %v6700 = vld [vmem:[%s6524 + $0x40] sm:$0xf]
        %v6701 = vld [vmem:[%s6524 + $0x44] sm:$0x3]
        %v6702 = vld [vmem:[%s6524 + $0x64] sm:$0xc]
        %v6703 = vld [vmem:[%s6524 + $0x68] sm:$0xf]
        %v6704 = vld [vmem:[%s6524 + $0x6c] sm:$0x3]
        %v6705 = vld [vmem:[%s6524 + $0x8c] sm:$0xc]
        %v6706 = vld [vmem:[%s6524 + $0x90] sm:$0xf]
        %v6707 = vld [vmem:[%s6524 + $0x94] sm:$0x3]
        %v6708 = vld [vmem:[%s6524 + $0xb4] sm:$0xc]
        %v6709 = vld [vmem:[%s6524 + $0xb8] sm:$0xf]
        %v6710 = vld [vmem:[%s6524 + $0xbc] sm:$0x3]
        %v6711 = vld [vmem:[%s6524 + $0xdc] sm:$0xc]
        %v6712 = vld [vmem:[%s6524 + $0xe0] sm:$0xf]
        %v6713 = vld [vmem:[%s6524 + $0xe4] sm:$0x3]
        %v6714 = vld [vmem:[%s6524 + $0x104] sm:$0xc]
        %v6715 = vld [vmem:[%s6524 + $0x108] sm:$0xf]
        %v6716 = vld [vmem:[%s6524 + $0x10c] sm:$0x3]
        %v6717 = vld [vmem:[%s6524 + $0x12c] sm:$0xc]
        %v6718 = vld [vmem:[%s6524 + $0x130] sm:$0xf]
        %v6719 = vld [vmem:[%s6524 + $0x134] sm:$0x3]
        %v6744 = vrot.slane %v6696, 6
        %v6745 = vrot.slane %v6744, 4
        %v6746 = vrot.slane %v6697, 6
        %v6747 = vsel %vm6575, %v6745, %v6746
        %v6748 = vrot.slane %v6746, 4
        %v6749 = vrot.slane %v6698, 6
        %v6750 = vsel %vm6575, %v6748, %v6749
        %v6751 = vrot.slane %v6699, 6
        %v6752 = vrot.slane %v6751, 4
        %v6753 = vrot.slane %v6700, 6
        %v6754 = vsel %vm6575, %v6752, %v6753
        %v6755 = vrot.slane %v6753, 4
        %v6756 = vrot.slane %v6701, 6
        %v6757 = vsel %vm6575, %v6755, %v6756
        %v6758 = vrot.slane %v6702, 6
        %v6759 = vrot.slane %v6758, 4
        %v6760 = vrot.slane %v6703, 6
        %v6761 = vsel %vm6575, %v6759, %v6760
        %v6762 = vrot.slane %v6760, 4
        %v6763 = vrot.slane %v6704, 6
        %v6764 = vsel %vm6575, %v6762, %v6763
        %v6765 = vrot.slane %v6705, 6
        %v6766 = vrot.slane %v6765, 4
        %v6767 = vrot.slane %v6706, 6
        %v6768 = vsel %vm6575, %v6766, %v6767
        %v6769 = vrot.slane %v6767, 4
        %v6770 = vrot.slane %v6707, 6
        %v6771 = vsel %vm6575, %v6769, %v6770
        %v6772 = vrot.slane %v6708, 6
        %v6773 = vrot.slane %v6772, 4
        %v6774 = vrot.slane %v6709, 6
        %v6775 = vsel %vm6575, %v6773, %v6774
        %v6776 = vrot.slane %v6774, 4
        %v6777 = vrot.slane %v6710, 6
        %v6778 = vsel %vm6575, %v6776, %v6777
        %v6779 = vrot.slane %v6711, 6
        %v6780 = vrot.slane %v6779, 4
        %v6781 = vrot.slane %v6712, 6
        %v6782 = vsel %vm6575, %v6780, %v6781
        %v6783 = vrot.slane %v6781, 4
        %v6784 = vrot.slane %v6713, 6
        %v6785 = vsel %vm6575, %v6783, %v6784
        %v6786 = vrot.slane %v6714, 6
        %v6787 = vrot.slane %v6786, 4
        %v6788 = vrot.slane %v6715, 6
        %v6789 = vsel %vm6575, %v6787, %v6788
        %v6790 = vrot.slane %v6788, 4
        %v6791 = vrot.slane %v6716, 6
        %v6792 = vsel %vm6575, %v6790, %v6791
        %v6793 = vrot.slane %v6717, 6
        %v6794 = vrot.slane %v6793, 4
        %v6795 = vrot.slane %v6718, 6
        %v6796 = vsel %vm6575, %v6794, %v6795
        %v6797 = vrot.slane %v6795, 4
        %v6798 = vrot.slane %v6719, 6
        %v6799 = vsel %vm6575, %v6797, %v6798
        %6816 = vst [vmem:[#allocation3 + $0x8] sm:$0xf] %v6747
        %6817 = vst [vmem:[#allocation3 + $0x2c] sm:$0xf] %v6750
        %6818 = vst [vmem:[#allocation3 + $0x50] sm:$0xf] %v6754
        %6819 = vst [vmem:[#allocation3 + $0x74] sm:$0xf] %v6757
        %6820 = vst [vmem:[#allocation3 + $0x98] sm:$0xf] %v6761
        %6821 = vst [vmem:[#allocation3 + $0xbc] sm:$0xf] %v6764
        %6822 = vst [vmem:[#allocation3 + $0xe0] sm:$0xf] %v6768
        %6823 = vst [vmem:[#allocation3 + $0x104] sm:$0xf] %v6771
        %6824 = vst [vmem:[#allocation3 + $0x128] sm:$0xf] %v6775
        %6825 = vst [vmem:[#allocation3 + $0x14c] sm:$0xf] %v6778
        %6826 = vst [vmem:[#allocation3 + $0x170] sm:$0xf] %v6782
        %6827 = vst [vmem:[#allocation3 + $0x194] sm:$0xf] %v6785
        %6828 = vst [vmem:[#allocation3 + $0x1b8] sm:$0xf] %v6789
        %6829 = vst [vmem:[#allocation3 + $0x1dc] sm:$0xf] %v6792
        %6830 = vst [vmem:[#allocation3 + $0x200] sm:$0xf] %v6796
        %6831 = vst [vmem:[#allocation3 + $0x224] sm:$0xf] %v6799
        %v6832 = vld [vmem:[%s1451 + $0x8] sm:$0xc]
        %v6833 = vld [vmem:[%s1451 + $0xc] sm:$0xf]
        %v6834 = vld [vmem:[%s1451 + $0x10] sm:$0x3]
        %v6835 = vld [vmem:[%s1451 + $0x30] sm:$0xc]
        %v6836 = vld [vmem:[%s1451 + $0x34] sm:$0xf]
        %v6837 = vld [vmem:[%s1451 + $0x38] sm:$0x3]
        %v6838 = vld [vmem:[%s1451 + $0x58] sm:$0xc]
        %v6839 = vld [vmem:[%s1451 + $0x5c] sm:$0xf]
        %v6840 = vld [vmem:[%s1451 + $0x60] sm:$0x3]
        %v6841 = vld [vmem:[%s1451 + $0x80] sm:$0xc]
        %v6842 = vld [vmem:[%s1451 + $0x84] sm:$0xf]
        %v6843 = vld [vmem:[%s1451 + $0x88] sm:$0x3]
        %v6844 = vld [vmem:[%s1451 + $0xa8] sm:$0xc]
        %v6845 = vld [vmem:[%s1451 + $0xac] sm:$0xf]
        %v6846 = vld [vmem:[%s1451 + $0xb0] sm:$0x3]
        %v6847 = vld [vmem:[%s1451 + $0xd0] sm:$0xc]
        %v6848 = vld [vmem:[%s1451 + $0xd4] sm:$0xf]
        %v6849 = vld [vmem:[%s1451 + $0xd8] sm:$0x3]
        %v6850 = vld [vmem:[%s1451 + $0xf8] sm:$0xc]
        %v6851 = vld [vmem:[%s1451 + $0xfc] sm:$0xf]
        %v6852 = vld [vmem:[%s1451 + $0x100] sm:$0x3]
        %v6853 = vld [vmem:[%s1451 + $0x120] sm:$0xc]
        %v6854 = vld [vmem:[%s1451 + $0x124] sm:$0xf]
        %v6855 = vld [vmem:[%s1451 + $0x128] sm:$0x3]
        %v6880 = vrot.slane %v6832, 6
        %v6881 = vrot.slane %v6880, 4
        %v6882 = vrot.slane %v6833, 6
        %v6883 = vsel %vm6575, %v6881, %v6882
        %v6884 = vrot.slane %v6882, 4
        %v6885 = vrot.slane %v6834, 6
        %v6886 = vsel %vm6575, %v6884, %v6885
        %v6887 = vrot.slane %v6835, 6
        %v6888 = vrot.slane %v6887, 4
        %v6889 = vrot.slane %v6836, 6
        %v6890 = vsel %vm6575, %v6888, %v6889
        %v6891 = vrot.slane %v6889, 4
        %v6892 = vrot.slane %v6837, 6
        %v6893 = vsel %vm6575, %v6891, %v6892
        %v6894 = vrot.slane %v6838, 6
        %v6895 = vrot.slane %v6894, 4
        %v6896 = vrot.slane %v6839, 6
        %v6897 = vsel %vm6575, %v6895, %v6896
        %v6898 = vrot.slane %v6896, 4
        %v6899 = vrot.slane %v6840, 6
        %v6900 = vsel %vm6575, %v6898, %v6899
        %v6901 = vrot.slane %v6841, 6
        %v6902 = vrot.slane %v6901, 4
        %v6903 = vrot.slane %v6842, 6
        %v6904 = vsel %vm6575, %v6902, %v6903
        %v6905 = vrot.slane %v6903, 4
        %v6906 = vrot.slane %v6843, 6
        %v6907 = vsel %vm6575, %v6905, %v6906
        %v6908 = vrot.slane %v6844, 6
        %v6909 = vrot.slane %v6908, 4
        %v6910 = vrot.slane %v6845, 6
        %v6911 = vsel %vm6575, %v6909, %v6910
        %v6912 = vrot.slane %v6910, 4
        %v6913 = vrot.slane %v6846, 6
        %v6914 = vsel %vm6575, %v6912, %v6913
        %v6915 = vrot.slane %v6847, 6
        %v6916 = vrot.slane %v6915, 4
        %v6917 = vrot.slane %v6848, 6
        %v6918 = vsel %vm6575, %v6916, %v6917
        %v6919 = vrot.slane %v6917, 4
        %v6920 = vrot.slane %v6849, 6
        %v6921 = vsel %vm6575, %v6919, %v6920
        %v6922 = vrot.slane %v6850, 6
        %v6923 = vrot.slane %v6922, 4
        %v6924 = vrot.slane %v6851, 6
        %v6925 = vsel %vm6575, %v6923, %v6924
        %v6926 = vrot.slane %v6924, 4
        %v6927 = vrot.slane %v6852, 6
        %v6928 = vsel %vm6575, %v6926, %v6927
        %v6929 = vrot.slane %v6853, 6
        %v6930 = vrot.slane %v6929, 4
        %v6931 = vrot.slane %v6854, 6
        %v6932 = vsel %vm6575, %v6930, %v6931
        %v6933 = vrot.slane %v6931, 4
        %v6934 = vrot.slane %v6855, 6
        %v6935 = vsel %vm6575, %v6933, %v6934
        %6952 = vst [vmem:[#allocation3 + $0xc] sm:$0xf] %v6883
        %6953 = vst [vmem:[#allocation3 + $0x30] sm:$0xf] %v6886
        %6954 = vst [vmem:[#allocation3 + $0x54] sm:$0xf] %v6890
        %6955 = vst [vmem:[#allocation3 + $0x78] sm:$0xf] %v6893
        %6956 = vst [vmem:[#allocation3 + $0x9c] sm:$0xf] %v6897
        %6957 = vst [vmem:[#allocation3 + $0xc0] sm:$0xf] %v6900
        %6958 = vst [vmem:[#allocation3 + $0xe4] sm:$0xf] %v6904
        %6959 = vst [vmem:[#allocation3 + $0x108] sm:$0xf] %v6907
        %6960 = vst [vmem:[#allocation3 + $0x12c] sm:$0xf] %v6911
        %6961 = vst [vmem:[#allocation3 + $0x150] sm:$0xf] %v6914
        %6962 = vst [vmem:[#allocation3 + $0x174] sm:$0xf] %v6918
        %6963 = vst [vmem:[#allocation3 + $0x198] sm:$0xf] %v6921
        %6964 = vst [vmem:[#allocation3 + $0x1bc] sm:$0xf] %v6925
        %6965 = vst [vmem:[#allocation3 + $0x1e0] sm:$0xf] %v6928
        %6966 = vst [vmem:[#allocation3 + $0x204] sm:$0xf] %v6932
        %6967 = vst [vmem:[#allocation3 + $0x228] sm:$0xf] %v6935
        %v6968 = vld [vmem:[%s1451 + $0x10] sm:$0xf]
        %v6969 = vld [vmem:[%s1451 + $0x14] sm:$0xf]
        %v6970 = vld [vmem:[%s1451 + $0x38] sm:$0xf]
        %v6971 = vld [vmem:[%s1451 + $0x3c] sm:$0xf]
        %v6972 = vld [vmem:[%s1451 + $0x60] sm:$0xf]
        %v6973 = vld [vmem:[%s1451 + $0x64] sm:$0xf]
        %v6974 = vld [vmem:[%s1451 + $0x88] sm:$0xf]
        %v6975 = vld [vmem:[%s1451 + $0x8c] sm:$0xf]
        %v6976 = vld [vmem:[%s1451 + $0xb0] sm:$0xf]
        %v6977 = vld [vmem:[%s1451 + $0xb4] sm:$0xf]
        %v6978 = vld [vmem:[%s1451 + $0xd8] sm:$0xf]
        %v6979 = vld [vmem:[%s1451 + $0xdc] sm:$0xf]
        %v6980 = vld [vmem:[%s1451 + $0x100] sm:$0xf]
        %v6981 = vld [vmem:[%s1451 + $0x104] sm:$0xf]
        %v6982 = vld [vmem:[%s1451 + $0x128] sm:$0xf]
        %v6983 = vld [vmem:[%s1451 + $0x12c] sm:$0xf]
        %6984 = vst [vmem:[#allocation3 + $0x10] sm:$0xf] %v6968
        %6985 = vst [vmem:[#allocation3 + $0x34] sm:$0xf] %v6969
        %6986 = vst [vmem:[#allocation3 + $0x58] sm:$0xf] %v6970
        %6987 = vst [vmem:[#allocation3 + $0x7c] sm:$0xf] %v6971
        %6988 = vst [vmem:[#allocation3 + $0xa0] sm:$0xf] %v6972
        %6989 = vst [vmem:[#allocation3 + $0xc4] sm:$0xf] %v6973
        %6990 = vst [vmem:[#allocation3 + $0xe8] sm:$0xf] %v6974
        %6991 = vst [vmem:[#allocation3 + $0x10c] sm:$0xf] %v6975
        %6992 = vst [vmem:[#allocation3 + $0x130] sm:$0xf] %v6976
        %6993 = vst [vmem:[#allocation3 + $0x154] sm:$0xf] %v6977
        %6994 = vst [vmem:[#allocation3 + $0x178] sm:$0xf] %v6978
        %6995 = vst [vmem:[#allocation3 + $0x19c] sm:$0xf] %v6979
        %6996 = vst [vmem:[#allocation3 + $0x1c0] sm:$0xf] %v6980
        %6997 = vst [vmem:[#allocation3 + $0x1e4] sm:$0xf] %v6981
        %6998 = vst [vmem:[#allocation3 + $0x208] sm:$0xf] %v6982
        %6999 = vst [vmem:[#allocation3 + $0x22c] sm:$0xf] %v6983
        %v7000 = vld [vmem:[%s1451 + $0x14] sm:$0xc]
        %v7001 = vld [vmem:[%s1451 + $0x18] sm:$0xf]
        %v7002 = vld [vmem:[%s1451 + $0x1c] sm:$0x3]
        %v7003 = vld [vmem:[%s1451 + $0x3c] sm:$0xc]
        %v7004 = vld [vmem:[%s1451 + $0x40] sm:$0xf]
        %v7005 = vld [vmem:[%s1451 + $0x44] sm:$0x3]
        %v7006 = vld [vmem:[%s1451 + $0x64] sm:$0xc]
        %v7007 = vld [vmem:[%s1451 + $0x68] sm:$0xf]
        %v7008 = vld [vmem:[%s1451 + $0x6c] sm:$0x3]
        %v7009 = vld [vmem:[%s1451 + $0x8c] sm:$0xc]
        %v7010 = vld [vmem:[%s1451 + $0x90] sm:$0xf]
        %v7011 = vld [vmem:[%s1451 + $0x94] sm:$0x3]
        %v7012 = vld [vmem:[%s1451 + $0xb4] sm:$0xc]
        %v7013 = vld [vmem:[%s1451 + $0xb8] sm:$0xf]
        %v7014 = vld [vmem:[%s1451 + $0xbc] sm:$0x3]
        %v7015 = vld [vmem:[%s1451 + $0xdc] sm:$0xc]
        %v7016 = vld [vmem:[%s1451 + $0xe0] sm:$0xf]
        %v7017 = vld [vmem:[%s1451 + $0xe4] sm:$0x3]
        %v7018 = vld [vmem:[%s1451 + $0x104] sm:$0xc]
        %v7019 = vld [vmem:[%s1451 + $0x108] sm:$0xf]
        %v7020 = vld [vmem:[%s1451 + $0x10c] sm:$0x3]
        %v7021 = vld [vmem:[%s1451 + $0x12c] sm:$0xc]
        %v7022 = vld [vmem:[%s1451 + $0x130] sm:$0xf]
        %v7023 = vld [vmem:[%s1451 + $0x134] sm:$0x3]
        %v7048 = vrot.slane %v7000, 6
        %v7049 = vrot.slane %v7048, 4
        %v7050 = vrot.slane %v7001, 6
        %v7051 = vsel %vm6575, %v7049, %v7050
        %v7052 = vrot.slane %v7050, 4
        %v7053 = vrot.slane %v7002, 6
        %v7054 = vsel %vm6575, %v7052, %v7053
        %v7055 = vrot.slane %v7003, 6
        %v7056 = vrot.slane %v7055, 4
        %v7057 = vrot.slane %v7004, 6
        %v7058 = vsel %vm6575, %v7056, %v7057
        %v7059 = vrot.slane %v7057, 4
        %v7060 = vrot.slane %v7005, 6
        %v7061 = vsel %vm6575, %v7059, %v7060
        %v7062 = vrot.slane %v7006, 6
        %v7063 = vrot.slane %v7062, 4
        %v7064 = vrot.slane %v7007, 6
        %v7065 = vsel %vm6575, %v7063, %v7064
        %v7066 = vrot.slane %v7064, 4
        %v7067 = vrot.slane %v7008, 6
        %v7068 = vsel %vm6575, %v7066, %v7067
        %v7069 = vrot.slane %v7009, 6
        %v7070 = vrot.slane %v7069, 4
        %v7071 = vrot.slane %v7010, 6
        %v7072 = vsel %vm6575, %v7070, %v7071
        %v7073 = vrot.slane %v7071, 4
        %v7074 = vrot.slane %v7011, 6
        %v7075 = vsel %vm6575, %v7073, %v7074
        %v7076 = vrot.slane %v7012, 6
        %v7077 = vrot.slane %v7076, 4
        %v7078 = vrot.slane %v7013, 6
        %v7079 = vsel %vm6575, %v7077, %v7078
        %v7080 = vrot.slane %v7078, 4
        %v7081 = vrot.slane %v7014, 6
        %v7082 = vsel %vm6575, %v7080, %v7081
        %v7083 = vrot.slane %v7015, 6
        %v7084 = vrot.slane %v7083, 4
        %v7085 = vrot.slane %v7016, 6
        %v7086 = vsel %vm6575, %v7084, %v7085
        %v7087 = vrot.slane %v7085, 4
        %v7088 = vrot.slane %v7017, 6
        %v7089 = vsel %vm6575, %v7087, %v7088
        %v7090 = vrot.slane %v7018, 6
        %v7091 = vrot.slane %v7090, 4
        %v7092 = vrot.slane %v7019, 6
        %v7093 = vsel %vm6575, %v7091, %v7092
        %v7094 = vrot.slane %v7092, 4
        %v7095 = vrot.slane %v7020, 6
        %v7096 = vsel %vm6575, %v7094, %v7095
        %v7097 = vrot.slane %v7021, 6
        %v7098 = vrot.slane %v7097, 4
        %v7099 = vrot.slane %v7022, 6
        %v7100 = vsel %vm6575, %v7098, %v7099
        %v7101 = vrot.slane %v7099, 4
        %v7102 = vrot.slane %v7023, 6
        %v7103 = vsel %vm6575, %v7101, %v7102
        %7120 = vst [vmem:[#allocation3 + $0x14] sm:$0xf] %v7051
        %7121 = vst [vmem:[#allocation3 + $0x38] sm:$0xf] %v7054
        %7122 = vst [vmem:[#allocation3 + $0x5c] sm:$0xf] %v7058
        %7123 = vst [vmem:[#allocation3 + $0x80] sm:$0xf] %v7061
        %7124 = vst [vmem:[#allocation3 + $0xa4] sm:$0xf] %v7065
        %7125 = vst [vmem:[#allocation3 + $0xc8] sm:$0xf] %v7068
        %7126 = vst [vmem:[#allocation3 + $0xec] sm:$0xf] %v7072
        %7127 = vst [vmem:[#allocation3 + $0x110] sm:$0xf] %v7075
        %7128 = vst [vmem:[#allocation3 + $0x134] sm:$0xf] %v7079
        %7129 = vst [vmem:[#allocation3 + $0x158] sm:$0xf] %v7082
        %7130 = vst [vmem:[#allocation3 + $0x17c] sm:$0xf] %v7086
        %7131 = vst [vmem:[#allocation3 + $0x1a0] sm:$0xf] %v7089
        %7132 = vst [vmem:[#allocation3 + $0x1c4] sm:$0xf] %v7093
        %7133 = vst [vmem:[#allocation3 + $0x1e8] sm:$0xf] %v7096
        %7134 = vst [vmem:[#allocation3 + $0x20c] sm:$0xf] %v7100
        %7135 = vst [vmem:[#allocation3 + $0x230] sm:$0xf] %v7103
        %s7136 = sadd.s32 %s925, 30
        %s7137 = smul.u32 %s7136, 10
        %s7138 = smul.addr %s7137, 4
        %s7139 = scalar_lea.vmem [#allocation2], %s7138
        %v7140 = vld [vmem:[%s7139 + $0x8] sm:$0xc]
        %v7141 = vld [vmem:[%s7139 + $0xc] sm:$0xf]
        %v7142 = vld [vmem:[%s7139 + $0x10] sm:$0x3]
        %v7143 = vld [vmem:[%s7139 + $0x30] sm:$0xc]
        %v7144 = vld [vmem:[%s7139 + $0x34] sm:$0xf]
        %v7145 = vld [vmem:[%s7139 + $0x38] sm:$0x3]
        %v7146 = vld [vmem:[%s7139 + $0x58] sm:$0xc]
        %v7147 = vld [vmem:[%s7139 + $0x5c] sm:$0xf]
        %v7148 = vld [vmem:[%s7139 + $0x60] sm:$0x3]
        %v7149 = vld [vmem:[%s7139 + $0x80] sm:$0xc]
        %v7150 = vld [vmem:[%s7139 + $0x84] sm:$0xf]
        %v7151 = vld [vmem:[%s7139 + $0x88] sm:$0x3]
        %v7152 = vld [vmem:[%s7139 + $0xa8] sm:$0xc]
        %v7153 = vld [vmem:[%s7139 + $0xac] sm:$0xf]
        %v7154 = vld [vmem:[%s7139 + $0xb0] sm:$0x3]
        %v7155 = vld [vmem:[%s7139 + $0xd0] sm:$0xc]
        %v7156 = vld [vmem:[%s7139 + $0xd4] sm:$0xf]
        %v7157 = vld [vmem:[%s7139 + $0xd8] sm:$0x3]
        %v7158 = vld [vmem:[%s7139 + $0xf8] sm:$0xc]
        %v7159 = vld [vmem:[%s7139 + $0xfc] sm:$0xf]
        %v7160 = vld [vmem:[%s7139 + $0x100] sm:$0x3]
        %v7161 = vld [vmem:[%s7139 + $0x120] sm:$0xc]
        %v7162 = vld [vmem:[%s7139 + $0x124] sm:$0xf]
        %v7163 = vld [vmem:[%s7139 + $0x128] sm:$0x3]
        %v7188 = vrot.slane %v7140, 6
        %v7189 = vrot.slane %v7188, 4
        %v7190 = vrot.slane %v7141, 6
        %v7191 = vsel %vm6575, %v7189, %v7190
        %v7192 = vrot.slane %v7190, 4
        %v7193 = vrot.slane %v7142, 6
        %v7194 = vsel %vm6575, %v7192, %v7193
        %v7195 = vrot.slane %v7143, 6
        %v7196 = vrot.slane %v7195, 4
        %v7197 = vrot.slane %v7144, 6
        %v7198 = vsel %vm6575, %v7196, %v7197
        %v7199 = vrot.slane %v7197, 4
        %v7200 = vrot.slane %v7145, 6
        %v7201 = vsel %vm6575, %v7199, %v7200
        %v7202 = vrot.slane %v7146, 6
        %v7203 = vrot.slane %v7202, 4
        %v7204 = vrot.slane %v7147, 6
        %v7205 = vsel %vm6575, %v7203, %v7204
        %v7206 = vrot.slane %v7204, 4
        %v7207 = vrot.slane %v7148, 6
        %v7208 = vsel %vm6575, %v7206, %v7207
        %v7209 = vrot.slane %v7149, 6
        %v7210 = vrot.slane %v7209, 4
        %v7211 = vrot.slane %v7150, 6
        %v7212 = vsel %vm6575, %v7210, %v7211
        %v7213 = vrot.slane %v7211, 4
        %v7214 = vrot.slane %v7151, 6
        %v7215 = vsel %vm6575, %v7213, %v7214
        %v7216 = vrot.slane %v7152, 6
        %v7217 = vrot.slane %v7216, 4
        %v7218 = vrot.slane %v7153, 6
        %v7219 = vsel %vm6575, %v7217, %v7218
        %v7220 = vrot.slane %v7218, 4
        %v7221 = vrot.slane %v7154, 6
        %v7222 = vsel %vm6575, %v7220, %v7221
        %v7223 = vrot.slane %v7155, 6
        %v7224 = vrot.slane %v7223, 4
        %v7225 = vrot.slane %v7156, 6
        %v7226 = vsel %vm6575, %v7224, %v7225
        %v7227 = vrot.slane %v7225, 4
        %v7228 = vrot.slane %v7157, 6
        %v7229 = vsel %vm6575, %v7227, %v7228
        %v7230 = vrot.slane %v7158, 6
        %v7231 = vrot.slane %v7230, 4
        %v7232 = vrot.slane %v7159, 6
        %v7233 = vsel %vm6575, %v7231, %v7232
        %v7234 = vrot.slane %v7232, 4
        %v7235 = vrot.slane %v7160, 6
        %v7236 = vsel %vm6575, %v7234, %v7235
        %v7237 = vrot.slane %v7161, 6
        %v7238 = vrot.slane %v7237, 4
        %v7239 = vrot.slane %v7162, 6
        %v7240 = vsel %vm6575, %v7238, %v7239
        %v7241 = vrot.slane %v7239, 4
        %v7242 = vrot.slane %v7163, 6
        %v7243 = vsel %vm6575, %v7241, %v7242
        %7260 = vst [vmem:[#allocation3 + $0x18] sm:$0xf] %v7191
        %7261 = vst [vmem:[#allocation3 + $0x3c] sm:$0xf] %v7194
        %7262 = vst [vmem:[#allocation3 + $0x60] sm:$0xf] %v7198
        %7263 = vst [vmem:[#allocation3 + $0x84] sm:$0xf] %v7201
        %7264 = vst [vmem:[#allocation3 + $0xa8] sm:$0xf] %v7205
        %7265 = vst [vmem:[#allocation3 + $0xcc] sm:$0xf] %v7208
        %7266 = vst [vmem:[#allocation3 + $0xf0] sm:$0xf] %v7212
        %7267 = vst [vmem:[#allocation3 + $0x114] sm:$0xf] %v7215
        %7268 = vst [vmem:[#allocation3 + $0x138] sm:$0xf] %v7219
        %7269 = vst [vmem:[#allocation3 + $0x15c] sm:$0xf] %v7222
        %7270 = vst [vmem:[#allocation3 + $0x180] sm:$0xf] %v7226
        %7271 = vst [vmem:[#allocation3 + $0x1a4] sm:$0xf] %v7229
        %7272 = vst [vmem:[#allocation3 + $0x1c8] sm:$0xf] %v7233
        %7273 = vst [vmem:[#allocation3 + $0x1ec] sm:$0xf] %v7236
        %7274 = vst [vmem:[#allocation3 + $0x210] sm:$0xf] %v7240
        %7275 = vst [vmem:[#allocation3 + $0x234] sm:$0xf] %v7243
        %v7276 = vld [vmem:[%s7139 + $0x10] sm:$0xf]
        %v7277 = vld [vmem:[%s7139 + $0x14] sm:$0xf]
        %v7278 = vld [vmem:[%s7139 + $0x38] sm:$0xf]
        %v7279 = vld [vmem:[%s7139 + $0x3c] sm:$0xf]
        %v7280 = vld [vmem:[%s7139 + $0x60] sm:$0xf]
        %v7281 = vld [vmem:[%s7139 + $0x64] sm:$0xf]
        %v7282 = vld [vmem:[%s7139 + $0x88] sm:$0xf]
        %v7283 = vld [vmem:[%s7139 + $0x8c] sm:$0xf]
        %v7284 = vld [vmem:[%s7139 + $0xb0] sm:$0xf]
        %v7285 = vld [vmem:[%s7139 + $0xb4] sm:$0xf]
        %v7286 = vld [vmem:[%s7139 + $0xd8] sm:$0xf]
        %v7287 = vld [vmem:[%s7139 + $0xdc] sm:$0xf]
        %v7288 = vld [vmem:[%s7139 + $0x100] sm:$0xf]
        %v7289 = vld [vmem:[%s7139 + $0x104] sm:$0xf]
        %v7290 = vld [vmem:[%s7139 + $0x128] sm:$0xf]
        %v7291 = vld [vmem:[%s7139 + $0x12c] sm:$0xf]
        %7292 = vst [vmem:[#allocation3 + $0x1c] sm:$0xf] %v7276
        %7293 = vst [vmem:[#allocation3 + $0x40] sm:$0xf] %v7277
        %7294 = vst [vmem:[#allocation3 + $0x64] sm:$0xf] %v7278
        %7295 = vst [vmem:[#allocation3 + $0x88] sm:$0xf] %v7279
        %7296 = vst [vmem:[#allocation3 + $0xac] sm:$0xf] %v7280
        %7297 = vst [vmem:[#allocation3 + $0xd0] sm:$0xf] %v7281
        %7298 = vst [vmem:[#allocation3 + $0xf4] sm:$0xf] %v7282
        %7299 = vst [vmem:[#allocation3 + $0x118] sm:$0xf] %v7283
        %7300 = vst [vmem:[#allocation3 + $0x13c] sm:$0xf] %v7284
        %7301 = vst [vmem:[#allocation3 + $0x160] sm:$0xf] %v7285
        %7302 = vst [vmem:[#allocation3 + $0x184] sm:$0xf] %v7286
        %7303 = vst [vmem:[#allocation3 + $0x1a8] sm:$0xf] %v7287
        %7304 = vst [vmem:[#allocation3 + $0x1cc] sm:$0xf] %v7288
        %7305 = vst [vmem:[#allocation3 + $0x1f0] sm:$0xf] %v7289
        %7306 = vst [vmem:[#allocation3 + $0x214] sm:$0xf] %v7290
        %7307 = vst [vmem:[#allocation3 + $0x238] sm:$0xf] %v7291
        %v7308 = vld [vmem:[%s7139 + $0x14] sm:$0xc]
        %v7309 = vld [vmem:[%s7139 + $0x18] sm:$0xf]
        %v7310 = vld [vmem:[%s7139 + $0x1c] sm:$0x3]
        %v7311 = vld [vmem:[%s7139 + $0x3c] sm:$0xc]
        %v7312 = vld [vmem:[%s7139 + $0x40] sm:$0xf]
        %v7313 = vld [vmem:[%s7139 + $0x44] sm:$0x3]
        %v7314 = vld [vmem:[%s7139 + $0x64] sm:$0xc]
        %v7315 = vld [vmem:[%s7139 + $0x68] sm:$0xf]
        %v7316 = vld [vmem:[%s7139 + $0x6c] sm:$0x3]
        %v7317 = vld [vmem:[%s7139 + $0x8c] sm:$0xc]
        %v7318 = vld [vmem:[%s7139 + $0x90] sm:$0xf]
        %v7319 = vld [vmem:[%s7139 + $0x94] sm:$0x3]
        %v7320 = vld [vmem:[%s7139 + $0xb4] sm:$0xc]
        %v7321 = vld [vmem:[%s7139 + $0xb8] sm:$0xf]
        %v7322 = vld [vmem:[%s7139 + $0xbc] sm:$0x3]
        %v7323 = vld [vmem:[%s7139 + $0xdc] sm:$0xc]
        %v7324 = vld [vmem:[%s7139 + $0xe0] sm:$0xf]
        %v7325 = vld [vmem:[%s7139 + $0xe4] sm:$0x3]
        %v7326 = vld [vmem:[%s7139 + $0x104] sm:$0xc]
        %v7327 = vld [vmem:[%s7139 + $0x108] sm:$0xf]
        %v7328 = vld [vmem:[%s7139 + $0x10c] sm:$0x3]
        %v7329 = vld [vmem:[%s7139 + $0x12c] sm:$0xc]
        %v7330 = vld [vmem:[%s7139 + $0x130] sm:$0xf]
        %v7331 = vld [vmem:[%s7139 + $0x134] sm:$0x3]
        %v7356 = vrot.slane %v7308, 6
        %v7357 = vrot.slane %v7356, 4
        %v7358 = vrot.slane %v7309, 6
        %v7359 = vsel %vm6575, %v7357, %v7358
        %v7360 = vrot.slane %v7358, 4
        %v7361 = vrot.slane %v7310, 6
        %v7362 = vsel %vm6575, %v7360, %v7361
        %v7363 = vrot.slane %v7311, 6
        %v7364 = vrot.slane %v7363, 4
        %v7365 = vrot.slane %v7312, 6
        %v7366 = vsel %vm6575, %v7364, %v7365
        %v7367 = vrot.slane %v7365, 4
        %v7368 = vrot.slane %v7313, 6
        %v7369 = vsel %vm6575, %v7367, %v7368
        %v7370 = vrot.slane %v7314, 6
        %v7371 = vrot.slane %v7370, 4
        %v7372 = vrot.slane %v7315, 6
        %v7373 = vsel %vm6575, %v7371, %v7372
        %v7374 = vrot.slane %v7372, 4
        %v7375 = vrot.slane %v7316, 6
        %v7376 = vsel %vm6575, %v7374, %v7375
        %v7377 = vrot.slane %v7317, 6
        %v7378 = vrot.slane %v7377, 4
        %v7379 = vrot.slane %v7318, 6
        %v7380 = vsel %vm6575, %v7378, %v7379
        %v7381 = vrot.slane %v7379, 4
        %v7382 = vrot.slane %v7319, 6
        %v7383 = vsel %vm6575, %v7381, %v7382
        %v7384 = vrot.slane %v7320, 6
        %v7385 = vrot.slane %v7384, 4
        %v7386 = vrot.slane %v7321, 6
        %v7387 = vsel %vm6575, %v7385, %v7386
        %v7388 = vrot.slane %v7386, 4
        %v7389 = vrot.slane %v7322, 6
        %v7390 = vsel %vm6575, %v7388, %v7389
        %v7391 = vrot.slane %v7323, 6
        %v7392 = vrot.slane %v7391, 4
        %v7393 = vrot.slane %v7324, 6
        %v7394 = vsel %vm6575, %v7392, %v7393
        %v7395 = vrot.slane %v7393, 4
        %v7396 = vrot.slane %v7325, 6
        %v7397 = vsel %vm6575, %v7395, %v7396
        %v7398 = vrot.slane %v7326, 6
        %v7399 = vrot.slane %v7398, 4
        %v7400 = vrot.slane %v7327, 6
        %v7401 = vsel %vm6575, %v7399, %v7400
        %v7402 = vrot.slane %v7400, 4
        %v7403 = vrot.slane %v7328, 6
        %v7404 = vsel %vm6575, %v7402, %v7403
        %v7405 = vrot.slane %v7329, 6
        %v7406 = vrot.slane %v7405, 4
        %v7407 = vrot.slane %v7330, 6
        %v7408 = vsel %vm6575, %v7406, %v7407
        %v7409 = vrot.slane %v7407, 4
        %v7410 = vrot.slane %v7331, 6
        %v7411 = vsel %vm6575, %v7409, %v7410
        %7428 = vst [vmem:[#allocation3 + $0x20] sm:$0xf] %v7359
        %7429 = vst [vmem:[#allocation3 + $0x44] sm:$0xf] %v7362
        %7430 = vst [vmem:[#allocation3 + $0x68] sm:$0xf] %v7366
        %7431 = vst [vmem:[#allocation3 + $0x8c] sm:$0xf] %v7369
        %7432 = vst [vmem:[#allocation3 + $0xb0] sm:$0xf] %v7373
        %7433 = vst [vmem:[#allocation3 + $0xd4] sm:$0xf] %v7376
        %7434 = vst [vmem:[#allocation3 + $0xf8] sm:$0xf] %v7380
        %7435 = vst [vmem:[#allocation3 + $0x11c] sm:$0xf] %v7383
        %7436 = vst [vmem:[#allocation3 + $0x140] sm:$0xf] %v7387
        %7437 = vst [vmem:[#allocation3 + $0x164] sm:$0xf] %v7390
        %7438 = vst [vmem:[#allocation3 + $0x188] sm:$0xf] %v7394
        %7439 = vst [vmem:[#allocation3 + $0x1ac] sm:$0xf] %v7397
        %7440 = vst [vmem:[#allocation3 + $0x1d0] sm:$0xf] %v7401
        %7441 = vst [vmem:[#allocation3 + $0x1f4] sm:$0xf] %v7404
        %7442 = vst [vmem:[#allocation3 + $0x218] sm:$0xf] %v7408
        %7443 = vst [vmem:[#allocation3 + $0x23c] sm:$0xf] %v7411
        %v7444 = vld [vmem:[#allocation4] sm:$0xff]
        %v7445 = vld [vmem:[#allocation4 + $0x8] sm:$0xff]
        %v7446 = vld [vmem:[#allocation4 + $0x10] sm:$0xff]
        %v7447 = vld [vmem:[#allocation4 + $0x18] sm:$0xff]
        %v7448 = vld [vmem:[#allocation4 + $0x20] sm:$0xff]
        %v7449 = vld [vmem:[#allocation4 + $0x28] sm:$0xff]
        %v7450 = vld [vmem:[#allocation4 + $0x30] sm:$0xff]
        %v7451 = vld [vmem:[#allocation4 + $0x38] sm:$0xff]
        %v7452 = vld [vmem:[#allocation4 + $0x40] sm:$0xff]
        %v7453 = vld [vmem:[#allocation4 + $0x48] sm:$0xff]
        %v7454 = vld [vmem:[#allocation4 + $0x50] sm:$0xff]
        %v7455 = vld [vmem:[#allocation4 + $0x58] sm:$0xff]
        %v7456 = vld [vmem:[#allocation4 + $0x60] sm:$0xff]
        %v7457 = vld [vmem:[#allocation4 + $0x68] sm:$0xff]
        %v7458 = vld [vmem:[#allocation4 + $0x70] sm:$0xff]
        %v7459 = vld [vmem:[#allocation4 + $0x78] sm:$0xff]
        %v7460 = vld [vmem:[#allocation3] sm:$0xff]
        %v7461 = vld [vmem:[#allocation3 + $0x8] sm:$0xff]
        %v7462 = vld [vmem:[#allocation3 + $0x10] sm:$0xff]
        %v7463 = vld [vmem:[#allocation3 + $0x18] sm:$0xff]
        %v7464 = vld [vmem:[#allocation3 + $0x20] sm:$0xf]
        %v7465 = vld [vmem:[#allocation3 + $0x24] sm:$0xff]
        %v7466 = vld [vmem:[#allocation3 + $0x2c] sm:$0xff]
        %v7467 = vld [vmem:[#allocation3 + $0x34] sm:$0xff]
        %v7468 = vld [vmem:[#allocation3 + $0x3c] sm:$0xff]
        %v7469 = vld [vmem:[#allocation3 + $0x44] sm:$0xf]
        %v7470 = vld [vmem:[#allocation3 + $0x48] sm:$0xff]
        %v7471 = vld [vmem:[#allocation3 + $0x50] sm:$0xff]
        %v7472 = vld [vmem:[#allocation3 + $0x58] sm:$0xff]
        %v7473 = vld [vmem:[#allocation3 + $0x60] sm:$0xff]
        %v7474 = vld [vmem:[#allocation3 + $0x68] sm:$0xf]
        %v7475 = vld [vmem:[#allocation3 + $0x6c] sm:$0xff]
        %v7476 = vld [vmem:[#allocation3 + $0x74] sm:$0xff]
        %v7477 = vld [vmem:[#allocation3 + $0x7c] sm:$0xff]
        %v7478 = vld [vmem:[#allocation3 + $0x84] sm:$0xff]
        %v7479 = vld [vmem:[#allocation3 + $0x8c] sm:$0xf]
        %v7480 = vld [vmem:[#allocation3 + $0x90] sm:$0xff]
        %v7481 = vld [vmem:[#allocation3 + $0x98] sm:$0xff]
        %v7482 = vld [vmem:[#allocation3 + $0xa0] sm:$0xff]
        %v7483 = vld [vmem:[#allocation3 + $0xa8] sm:$0xff]
        %v7484 = vld [vmem:[#allocation3 + $0xb0] sm:$0xf]
        %v7485 = vld [vmem:[#allocation3 + $0xb4] sm:$0xff]
        %v7486 = vld [vmem:[#allocation3 + $0xbc] sm:$0xff]
        %v7487 = vld [vmem:[#allocation3 + $0xc4] sm:$0xff]
        %v7488 = vld [vmem:[#allocation3 + $0xcc] sm:$0xff]
        %v7489 = vld [vmem:[#allocation3 + $0xd4] sm:$0xf]
        %v7490 = vld [vmem:[#allocation3 + $0xd8] sm:$0xff]
        %v7491 = vld [vmem:[#allocation3 + $0xe0] sm:$0xff]
        %v7492 = vld [vmem:[#allocation3 + $0xe8] sm:$0xff]
        %v7493 = vld [vmem:[#allocation3 + $0xf0] sm:$0xff]
        %v7494 = vld [vmem:[#allocation3 + $0xf8] sm:$0xf]
        %v7495 = vld [vmem:[#allocation3 + $0xfc] sm:$0xff]
        %v7496 = vld [vmem:[#allocation3 + $0x104] sm:$0xff]
        %v7497 = vld [vmem:[#allocation3 + $0x10c] sm:$0xff]
        %v7498 = vld [vmem:[#allocation3 + $0x114] sm:$0xff]
        %v7499 = vld [vmem:[#allocation3 + $0x11c] sm:$0xf]
        %v7500 = vld [vmem:[#allocation3 + $0x120] sm:$0xff]
        %v7501 = vld [vmem:[#allocation3 + $0x128] sm:$0xff]
        %v7502 = vld [vmem:[#allocation3 + $0x130] sm:$0xff]
        %v7503 = vld [vmem:[#allocation3 + $0x138] sm:$0xff]
        %v7504 = vld [vmem:[#allocation3 + $0x140] sm:$0xf]
        %v7505 = vld [vmem:[#allocation3 + $0x144] sm:$0xff]
        %v7506 = vld [vmem:[#allocation3 + $0x14c] sm:$0xff]
        %v7507 = vld [vmem:[#allocation3 + $0x154] sm:$0xff]
        %v7508 = vld [vmem:[#allocation3 + $0x15c] sm:$0xff]
        %v7509 = vld [vmem:[#allocation3 + $0x164] sm:$0xf]
        %v7510 = vld [vmem:[#allocation3 + $0x168] sm:$0xff]
        %v7511 = vld [vmem:[#allocation3 + $0x170] sm:$0xff]
        %v7512 = vld [vmem:[#allocation3 + $0x178] sm:$0xff]
        %v7513 = vld [vmem:[#allocation3 + $0x180] sm:$0xff]
        %v7514 = vld [vmem:[#allocation3 + $0x188] sm:$0xf]
        %v7515 = vld [vmem:[#allocation3 + $0x18c] sm:$0xff]
        %v7516 = vld [vmem:[#allocation3 + $0x194] sm:$0xff]
        %v7517 = vld [vmem:[#allocation3 + $0x19c] sm:$0xff]
        %v7518 = vld [vmem:[#allocation3 + $0x1a4] sm:$0xff]
        %v7519 = vld [vmem:[#allocation3 + $0x1ac] sm:$0xf]
        %v7520 = vld [vmem:[#allocation3 + $0x1b0] sm:$0xff]
        %v7521 = vld [vmem:[#allocation3 + $0x1b8] sm:$0xff]
        %v7522 = vld [vmem:[#allocation3 + $0x1c0] sm:$0xff]
        %v7523 = vld [vmem:[#allocation3 + $0x1c8] sm:$0xff]
        %v7524 = vld [vmem:[#allocation3 + $0x1d0] sm:$0xf]
        %v7525 = vld [vmem:[#allocation3 + $0x1d4] sm:$0xff]
        %v7526 = vld [vmem:[#allocation3 + $0x1dc] sm:$0xff]
        %v7527 = vld [vmem:[#allocation3 + $0x1e4] sm:$0xff]
        %v7528 = vld [vmem:[#allocation3 + $0x1ec] sm:$0xff]
        %v7529 = vld [vmem:[#allocation3 + $0x1f4] sm:$0xf]
        %v7530 = vld [vmem:[#allocation3 + $0x1f8] sm:$0xff]
        %v7531 = vld [vmem:[#allocation3 + $0x200] sm:$0xff]
        %v7532 = vld [vmem:[#allocation3 + $0x208] sm:$0xff]
        %v7533 = vld [vmem:[#allocation3 + $0x210] sm:$0xff]
        %v7534 = vld [vmem:[#allocation3 + $0x218] sm:$0xf]
        %v7535 = vld [vmem:[#allocation3 + $0x21c] sm:$0xff]
        %v7536 = vld [vmem:[#allocation3 + $0x224] sm:$0xff]
        %v7537 = vld [vmem:[#allocation3 + $0x22c] sm:$0xff]
        %v7538 = vld [vmem:[#allocation3 + $0x234] sm:$0xff]
        %v7539 = vld [vmem:[#allocation3 + $0x23c] sm:$0xf]
        %s7540 = scalar_lea.vmem [#allocation8], 1152
        %v7541 = vld [vmem:[%s7540] sm:$0xf]
        %v7542 = vld [vmem:[%s7540 + $0x4] sm:$0xf]
        %v7543 = vld [vmem:[%s7540 + $0x8] sm:$0xf]
        %v7544 = vld [vmem:[%s7540 + $0xc] sm:$0xf]
        %v7545 = vld [vmem:[%s7540 + $0x10] sm:$0xf]
        %v7546 = vld [vmem:[%s7540 + $0x14] sm:$0xf]
        %v7547 = vld [vmem:[%s7540 + $0x18] sm:$0xf]
        %v7548 = vld [vmem:[%s7540 + $0x1c] sm:$0xf]
        %v7549 = vld [vmem:[%s7540 + $0x20] sm:$0xf]
        %v7550 = vld [vmem:[%s7540 + $0x24] sm:$0xf]
        %v7551 = vld [vmem:[%s7540 + $0x28] sm:$0xf]
        %v7552 = vld [vmem:[%s7540 + $0x2c] sm:$0xf]
        %v7553 = vld [vmem:[%s7540 + $0x30] sm:$0xf]
        %v7554 = vld [vmem:[%s7540 + $0x34] sm:$0xf]
        %v7555 = vld [vmem:[%s7540 + $0x38] sm:$0xf]
        %v7556 = vld [vmem:[%s7540 + $0x3c] sm:$0xf]
        %v7557 = vld [vmem:[%s7540 + $0x40] sm:$0xf]
        %v7558 = vld [vmem:[%s7540 + $0x44] sm:$0xf]
        %v7559 = vld [vmem:[%s7540 + $0x48] sm:$0xf]
        %v7560 = vld [vmem:[%s7540 + $0x4c] sm:$0xf]
        %v7561 = vld [vmem:[%s7540 + $0x50] sm:$0xf]
        %v7562 = vld [vmem:[%s7540 + $0x54] sm:$0xf]
        %v7563 = vld [vmem:[%s7540 + $0x58] sm:$0xf]
        %v7564 = vld [vmem:[%s7540 + $0x5c] sm:$0xf]
        %v7565 = vld [vmem:[%s7540 + $0x60] sm:$0xf]
        %v7566 = vld [vmem:[%s7540 + $0x64] sm:$0xf]
        %v7567 = vld [vmem:[%s7540 + $0x68] sm:$0xf]
        %v7568 = vld [vmem:[%s7540 + $0x6c] sm:$0xf]
        %v7569 = vld [vmem:[%s7540 + $0x70] sm:$0xf]
        %v7570 = vld [vmem:[%s7540 + $0x74] sm:$0xf]
        %v7571 = vld [vmem:[%s7540 + $0x78] sm:$0xf]
        %v7572 = vld [vmem:[%s7540 + $0x7c] sm:$0xf]
        %v7573 = vld [vmem:[%s7540 + $0x80] sm:$0xf]
        %v7574 = vld [vmem:[%s7540 + $0x84] sm:$0xf]
        %v7575 = vld [vmem:[%s7540 + $0x88] sm:$0xf]
        %v7576 = vld [vmem:[%s7540 + $0x8c] sm:$0xf]
        %v7577 = vld [vmem:[%s7540 + $0x90] sm:$0xf]
        %v7578 = vld [vmem:[%s7540 + $0x94] sm:$0xf]
        %v7579 = vld [vmem:[%s7540 + $0x98] sm:$0xf]
        %v7580 = vld [vmem:[%s7540 + $0x9c] sm:$0xf]
        %v7581 = vld [vmem:[%s7540 + $0xa0] sm:$0xf]
        %v7582 = vld [vmem:[%s7540 + $0xa4] sm:$0xf]
        %v7583 = vld [vmem:[%s7540 + $0xa8] sm:$0xf]
        %v7584 = vld [vmem:[%s7540 + $0xac] sm:$0xf]
        %v7585 = vld [vmem:[%s7540 + $0xb0] sm:$0xf]
        %v7586 = vld [vmem:[%s7540 + $0xb4] sm:$0xf]
        %v7587 = vld [vmem:[%s7540 + $0xb8] sm:$0xf]
        %v7588 = vld [vmem:[%s7540 + $0xbc] sm:$0xf]
        %v7589 = vld [vmem:[%s7540 + $0xc0] sm:$0xf]
        %v7590 = vld [vmem:[%s7540 + $0xc4] sm:$0xf]
        %v7591 = vld [vmem:[%s7540 + $0xc8] sm:$0xf]
        %v7592 = vld [vmem:[%s7540 + $0xcc] sm:$0xf]
        %v7593 = vld [vmem:[%s7540 + $0xd0] sm:$0xf]
        %v7594 = vld [vmem:[%s7540 + $0xd4] sm:$0xf]
        %v7595 = vld [vmem:[%s7540 + $0xd8] sm:$0xf]
        %v7596 = vld [vmem:[%s7540 + $0xdc] sm:$0xf]
        %v7597 = vld [vmem:[%s7540 + $0xe0] sm:$0xf]
        %v7598 = vld [vmem:[%s7540 + $0xe4] sm:$0xf]
        %v7599 = vld [vmem:[%s7540 + $0xe8] sm:$0xf]
        %v7600 = vld [vmem:[%s7540 + $0xec] sm:$0xf]
        %v7601 = vld [vmem:[%s7540 + $0xf0] sm:$0xf]
        %v7602 = vld [vmem:[%s7540 + $0xf4] sm:$0xf]
        %v7603 = vld [vmem:[%s7540 + $0xf8] sm:$0xf]
        %v7604 = vld [vmem:[%s7540 + $0xfc] sm:$0xf]
        %v7605 = vld [vmem:[%s7540 + $0x100] sm:$0xf]
        %v7606 = vld [vmem:[%s7540 + $0x104] sm:$0xf]
        %v7607 = vld [vmem:[%s7540 + $0x108] sm:$0xf]
        %v7608 = vld [vmem:[%s7540 + $0x10c] sm:$0xf]
        %v7609 = vld [vmem:[%s7540 + $0x110] sm:$0xf]
        %v7610 = vld [vmem:[%s7540 + $0x114] sm:$0xf]
        %v7611 = vld [vmem:[%s7540 + $0x118] sm:$0xf]
        %v7612 = vld [vmem:[%s7540 + $0x11c] sm:$0xf]
        %v7613 = vld [vmem:[%s7540 + $0x120] sm:$0xf]
        %v7614 = vld [vmem:[%s7540 + $0x124] sm:$0xf]
        %v7615 = vld [vmem:[%s7540 + $0x128] sm:$0xf]
        %v7616 = vld [vmem:[%s7540 + $0x12c] sm:$0xf]
        %v7617 = vld [vmem:[%s7540 + $0x130] sm:$0xf]
        %v7618 = vld [vmem:[%s7540 + $0x134] sm:$0xf]
        %v7619 = vld [vmem:[%s7540 + $0x138] sm:$0xf]
        %v7620 = vld [vmem:[%s7540 + $0x13c] sm:$0xf]
        %v7621 = vld [vmem:[%s7540 + $0x140] sm:$0xf]
        %v7622 = vld [vmem:[%s7540 + $0x144] sm:$0xf]
        %v7623 = vld [vmem:[%s7540 + $0x148] sm:$0xf]
        %v7624 = vld [vmem:[%s7540 + $0x14c] sm:$0xf]
        %v7625 = vld [vmem:[%s7540 + $0x150] sm:$0xf]
        %v7626 = vld [vmem:[%s7540 + $0x154] sm:$0xf]
        %v7627 = vld [vmem:[%s7540 + $0x158] sm:$0xf]
        %v7628 = vld [vmem:[%s7540 + $0x15c] sm:$0xf]
        %v7629 = vld [vmem:[%s7540 + $0x160] sm:$0xf]
        %v7630 = vld [vmem:[%s7540 + $0x164] sm:$0xf]
        %v7631 = vld [vmem:[%s7540 + $0x168] sm:$0xf]
        %v7632 = vld [vmem:[%s7540 + $0x16c] sm:$0xf]
        %v7633 = vld [vmem:[%s7540 + $0x170] sm:$0xf]
        %v7634 = vld [vmem:[%s7540 + $0x174] sm:$0xf]
        %v7635 = vld [vmem:[%s7540 + $0x178] sm:$0xf]
        %v7636 = vld [vmem:[%s7540 + $0x17c] sm:$0xf]
        %v7637 = vld [vmem:[%s7540 + $0x180] sm:$0xf]
        %v7638 = vld [vmem:[%s7540 + $0x184] sm:$0xf]
        %v7639 = vld [vmem:[%s7540 + $0x188] sm:$0xf]
        %v7640 = vld [vmem:[%s7540 + $0x18c] sm:$0xf]
        %v7641 = vld [vmem:[%s7540 + $0x190] sm:$0xf]
        %v7642 = vld [vmem:[%s7540 + $0x194] sm:$0xf]
        %v7643 = vld [vmem:[%s7540 + $0x198] sm:$0xf]
        %v7644 = vld [vmem:[%s7540 + $0x19c] sm:$0xf]
        %v7645 = vld [vmem:[%s7540 + $0x1a0] sm:$0xf]
        %v7646 = vld [vmem:[%s7540 + $0x1a4] sm:$0xf]
        %v7647 = vld [vmem:[%s7540 + $0x1a8] sm:$0xf]
        %v7648 = vld [vmem:[%s7540 + $0x1ac] sm:$0xf]
        %v7649 = vld [vmem:[%s7540 + $0x1b0] sm:$0xf]
        %v7650 = vld [vmem:[%s7540 + $0x1b4] sm:$0xf]
        %v7651 = vld [vmem:[%s7540 + $0x1b8] sm:$0xf]
        %v7652 = vld [vmem:[%s7540 + $0x1bc] sm:$0xf]
        %v7653 = vld [vmem:[%s7540 + $0x1c0] sm:$0xf]
        %v7654 = vld [vmem:[%s7540 + $0x1c4] sm:$0xf]
        %v7655 = vld [vmem:[%s7540 + $0x1c8] sm:$0xf]
        %v7656 = vld [vmem:[%s7540 + $0x1cc] sm:$0xf]
        %v7657 = vld [vmem:[%s7540 + $0x1d0] sm:$0xf]
        %v7658 = vld [vmem:[%s7540 + $0x1d4] sm:$0xf]
        %v7659 = vld [vmem:[%s7540 + $0x1d8] sm:$0xf]
        %v7660 = vld [vmem:[%s7540 + $0x1dc] sm:$0xf]
        %v7661 = vld [vmem:[%s7540 + $0x1e0] sm:$0xf]
        %v7662 = vld [vmem:[%s7540 + $0x1e4] sm:$0xf]
        %v7663 = vld [vmem:[%s7540 + $0x1e8] sm:$0xf]
        %v7664 = vld [vmem:[%s7540 + $0x1ec] sm:$0xf]
        %v7665 = vld [vmem:[%s7540 + $0x1f0] sm:$0xf]
        %v7666 = vld [vmem:[%s7540 + $0x1f4] sm:$0xf]
        %v7667 = vld [vmem:[%s7540 + $0x1f8] sm:$0xf]
        %v7668 = vld [vmem:[%s7540 + $0x1fc] sm:$0xf]
        %v7669 = vld [vmem:[%s7540 + $0x200] sm:$0xf]
        %v7670 = vld [vmem:[%s7540 + $0x204] sm:$0xf]
        %v7671 = vld [vmem:[%s7540 + $0x208] sm:$0xf]
        %v7672 = vld [vmem:[%s7540 + $0x20c] sm:$0xf]
        %v7673 = vld [vmem:[%s7540 + $0x210] sm:$0xf]
        %v7674 = vld [vmem:[%s7540 + $0x214] sm:$0xf]
        %v7675 = vld [vmem:[%s7540 + $0x218] sm:$0xf]
        %v7676 = vld [vmem:[%s7540 + $0x21c] sm:$0xf]
        %v7677 = vld [vmem:[%s7540 + $0x220] sm:$0xf]
        %v7678 = vld [vmem:[%s7540 + $0x224] sm:$0xf]
        %v7679 = vld [vmem:[%s7540 + $0x228] sm:$0xf]
        %v7680 = vld [vmem:[%s7540 + $0x22c] sm:$0xf]
        %v7681 = vld [vmem:[%s7540 + $0x230] sm:$0xf]
        %v7682 = vld [vmem:[%s7540 + $0x234] sm:$0xf]
        %v7683 = vld [vmem:[%s7540 + $0x238] sm:$0xf]
        %v7684 = vld [vmem:[%s7540 + $0x23c] sm:$0xf]
        %v7765 = vunpack.c.l.b16 %v7460
        %v7766 = vunpack.c.h.b16 %v7460
        %v7767 = vunpack.c.l.b16 %v7461
        %v7768 = vunpack.c.h.b16 %v7461
        %v7769 = vunpack.c.l.b16 %v7462
        %v7770 = vunpack.c.h.b16 %v7462
        %v7771 = vunpack.c.l.b16 %v7463
        %v7772 = vunpack.c.h.b16 %v7463
        %v7773 = vunpack.c.l.b16 %v7464
        %v7774 = vunpack.c.l.b16 %v7465
        %v7775 = vunpack.c.h.b16 %v7465
        %v7776 = vunpack.c.l.b16 %v7466
        %v7777 = vunpack.c.h.b16 %v7466
        %v7778 = vunpack.c.l.b16 %v7467
        %v7779 = vunpack.c.h.b16 %v7467
        %v7780 = vunpack.c.l.b16 %v7468
        %v7781 = vunpack.c.h.b16 %v7468
        %v7782 = vunpack.c.l.b16 %v7469
        %v7783 = vunpack.c.l.b16 %v7470
        %v7784 = vunpack.c.h.b16 %v7470
        %v7785 = vunpack.c.l.b16 %v7471
        %v7786 = vunpack.c.h.b16 %v7471
        %v7787 = vunpack.c.l.b16 %v7472
        %v7788 = vunpack.c.h.b16 %v7472
        %v7789 = vunpack.c.l.b16 %v7473
        %v7790 = vunpack.c.h.b16 %v7473
        %v7791 = vunpack.c.l.b16 %v7474
        %v7792 = vunpack.c.l.b16 %v7475
        %v7793 = vunpack.c.h.b16 %v7475
        %v7794 = vunpack.c.l.b16 %v7476
        %v7795 = vunpack.c.h.b16 %v7476
        %v7796 = vunpack.c.l.b16 %v7477
        %v7797 = vunpack.c.h.b16 %v7477
        %v7798 = vunpack.c.l.b16 %v7478
        %v7799 = vunpack.c.h.b16 %v7478
        %v7800 = vunpack.c.l.b16 %v7479
        %v7801 = vunpack.c.l.b16 %v7480
        %v7802 = vunpack.c.h.b16 %v7480
        %v7803 = vunpack.c.l.b16 %v7481
        %v7804 = vunpack.c.h.b16 %v7481
        %v7805 = vunpack.c.l.b16 %v7482
        %v7806 = vunpack.c.h.b16 %v7482
        %v7807 = vunpack.c.l.b16 %v7483
        %v7808 = vunpack.c.h.b16 %v7483
        %v7809 = vunpack.c.l.b16 %v7484
        %v7810 = vunpack.c.l.b16 %v7485
        %v7811 = vunpack.c.h.b16 %v7485
        %v7812 = vunpack.c.l.b16 %v7486
        %v7813 = vunpack.c.h.b16 %v7486
        %v7814 = vunpack.c.l.b16 %v7487
        %v7815 = vunpack.c.h.b16 %v7487
        %v7816 = vunpack.c.l.b16 %v7488
        %v7817 = vunpack.c.h.b16 %v7488
        %v7818 = vunpack.c.l.b16 %v7489
        %v7819 = vunpack.c.l.b16 %v7490
        %v7820 = vunpack.c.h.b16 %v7490
        %v7821 = vunpack.c.l.b16 %v7491
        %v7822 = vunpack.c.h.b16 %v7491
        %v7823 = vunpack.c.l.b16 %v7492
        %v7824 = vunpack.c.h.b16 %v7492
        %v7825 = vunpack.c.l.b16 %v7493
        %v7826 = vunpack.c.h.b16 %v7493
        %v7827 = vunpack.c.l.b16 %v7494
        %v7828 = vunpack.c.l.b16 %v7495
        %v7829 = vunpack.c.h.b16 %v7495
        %v7830 = vunpack.c.l.b16 %v7496
        %v7831 = vunpack.c.h.b16 %v7496
        %v7832 = vunpack.c.l.b16 %v7497
        %v7833 = vunpack.c.h.b16 %v7497
        %v7834 = vunpack.c.l.b16 %v7498
        %v7835 = vunpack.c.h.b16 %v7498
        %v7836 = vunpack.c.l.b16 %v7499
        %v7837 = vunpack.c.l.b16 %v7500
        %v7838 = vunpack.c.h.b16 %v7500
        %v7839 = vunpack.c.l.b16 %v7501
        %v7840 = vunpack.c.h.b16 %v7501
        %v7841 = vunpack.c.l.b16 %v7502
        %v7842 = vunpack.c.h.b16 %v7502
        %v7843 = vunpack.c.l.b16 %v7503
        %v7844 = vunpack.c.h.b16 %v7503
        %v7845 = vunpack.c.l.b16 %v7504
        %v7846 = vunpack.c.l.b16 %v7505
        %v7847 = vunpack.c.h.b16 %v7505
        %v7848 = vunpack.c.l.b16 %v7506
        %v7849 = vunpack.c.h.b16 %v7506
        %v7850 = vunpack.c.l.b16 %v7507
        %v7851 = vunpack.c.h.b16 %v7507
        %v7852 = vunpack.c.l.b16 %v7508
        %v7853 = vunpack.c.h.b16 %v7508
        %v7854 = vunpack.c.l.b16 %v7509
        %v7855 = vunpack.c.l.b16 %v7510
        %v7856 = vunpack.c.h.b16 %v7510
        %v7857 = vunpack.c.l.b16 %v7511
        %v7858 = vunpack.c.h.b16 %v7511
        %v7859 = vunpack.c.l.b16 %v7512
        %v7860 = vunpack.c.h.b16 %v7512
        %v7861 = vunpack.c.l.b16 %v7513
        %v7862 = vunpack.c.h.b16 %v7513
        %v7863 = vunpack.c.l.b16 %v7514
        %v7864 = vunpack.c.l.b16 %v7515
        %v7865 = vunpack.c.h.b16 %v7515
        %v7866 = vunpack.c.l.b16 %v7516
        %v7867 = vunpack.c.h.b16 %v7516
        %v7868 = vunpack.c.l.b16 %v7517
        %v7869 = vunpack.c.h.b16 %v7517
        %v7870 = vunpack.c.l.b16 %v7518
        %v7871 = vunpack.c.h.b16 %v7518
        %v7872 = vunpack.c.l.b16 %v7519
        %v7873 = vunpack.c.l.b16 %v7520
        %v7874 = vunpack.c.h.b16 %v7520
        %v7875 = vunpack.c.l.b16 %v7521
        %v7876 = vunpack.c.h.b16 %v7521
        %v7877 = vunpack.c.l.b16 %v7522
        %v7878 = vunpack.c.h.b16 %v7522
        %v7879 = vunpack.c.l.b16 %v7523
        %v7880 = vunpack.c.h.b16 %v7523
        %v7881 = vunpack.c.l.b16 %v7524
        %v7882 = vunpack.c.l.b16 %v7525
        %v7883 = vunpack.c.h.b16 %v7525
        %v7884 = vunpack.c.l.b16 %v7526
        %v7885 = vunpack.c.h.b16 %v7526
        %v7886 = vunpack.c.l.b16 %v7527
        %v7887 = vunpack.c.h.b16 %v7527
        %v7888 = vunpack.c.l.b16 %v7528
        %v7889 = vunpack.c.h.b16 %v7528
        %v7890 = vunpack.c.l.b16 %v7529
        %v7891 = vunpack.c.l.b16 %v7530
        %v7892 = vunpack.c.h.b16 %v7530
        %v7893 = vunpack.c.l.b16 %v7531
        %v7894 = vunpack.c.h.b16 %v7531
        %v7895 = vunpack.c.l.b16 %v7532
        %v7896 = vunpack.c.h.b16 %v7532
        %v7897 = vunpack.c.l.b16 %v7533
        %v7898 = vunpack.c.h.b16 %v7533
        %v7899 = vunpack.c.l.b16 %v7534
        %v7900 = vunpack.c.l.b16 %v7535
        %v7901 = vunpack.c.h.b16 %v7535
        %v7902 = vunpack.c.l.b16 %v7536
        %v7903 = vunpack.c.h.b16 %v7536
        %v7904 = vunpack.c.l.b16 %v7537
        %v7905 = vunpack.c.h.b16 %v7537
        %v7906 = vunpack.c.l.b16 %v7538
        %v7907 = vunpack.c.h.b16 %v7538
        %v7908 = vunpack.c.l.b16 %v7539
        %v7909 = vpack.c.b16 %v7774, %v7765
        %v7910 = vpack.c.b16 %v7775, %v7766
        %v7911 = vpack.c.b16 %v7776, %v7767
        %v7912 = vpack.c.b16 %v7777, %v7768
        %v7913 = vpack.c.b16 %v7778, %v7769
        %v7914 = vpack.c.b16 %v7779, %v7770
        %v7915 = vpack.c.b16 %v7780, %v7771
        %v7916 = vpack.c.b16 %v7781, %v7772
        %v7917 = vpack.c.b16 %v7782, %v7773
        %v7918 = vpack.c.b16 %v7792, %v7783
        %v7919 = vpack.c.b16 %v7793, %v7784
        %v7920 = vpack.c.b16 %v7794, %v7785
        %v7921 = vpack.c.b16 %v7795, %v7786
        %v7922 = vpack.c.b16 %v7796, %v7787
        %v7923 = vpack.c.b16 %v7797, %v7788
        %v7924 = vpack.c.b16 %v7798, %v7789
        %v7925 = vpack.c.b16 %v7799, %v7790
        %v7926 = vpack.c.b16 %v7800, %v7791
        %v7927 = vpack.c.b16 %v7810, %v7801
        %v7928 = vpack.c.b16 %v7811, %v7802
        %v7929 = vpack.c.b16 %v7812, %v7803
        %v7930 = vpack.c.b16 %v7813, %v7804
        %v7931 = vpack.c.b16 %v7814, %v7805
        %v7932 = vpack.c.b16 %v7815, %v7806
        %v7933 = vpack.c.b16 %v7816, %v7807
        %v7934 = vpack.c.b16 %v7817, %v7808
        %v7935 = vpack.c.b16 %v7818, %v7809
        %v7936 = vpack.c.b16 %v7828, %v7819
        %v7937 = vpack.c.b16 %v7829, %v7820
        %v7938 = vpack.c.b16 %v7830, %v7821
        %v7939 = vpack.c.b16 %v7831, %v7822
        %v7940 = vpack.c.b16 %v7832, %v7823
        %v7941 = vpack.c.b16 %v7833, %v7824
        %v7942 = vpack.c.b16 %v7834, %v7825
        %v7943 = vpack.c.b16 %v7835, %v7826
        %v7944 = vpack.c.b16 %v7836, %v7827
        %v7945 = vpack.c.b16 %v7846, %v7837
        %v7946 = vpack.c.b16 %v7847, %v7838
        %v7947 = vpack.c.b16 %v7848, %v7839
        %v7948 = vpack.c.b16 %v7849, %v7840
        %v7949 = vpack.c.b16 %v7850, %v7841
        %v7950 = vpack.c.b16 %v7851, %v7842
        %v7951 = vpack.c.b16 %v7852, %v7843
        %v7952 = vpack.c.b16 %v7853, %v7844
        %v7953 = vpack.c.b16 %v7854, %v7845
        %v7954 = vpack.c.b16 %v7864, %v7855
        %v7955 = vpack.c.b16 %v7865, %v7856
        %v7956 = vpack.c.b16 %v7866, %v7857
        %v7957 = vpack.c.b16 %v7867, %v7858
        %v7958 = vpack.c.b16 %v7868, %v7859
        %v7959 = vpack.c.b16 %v7869, %v7860
        %v7960 = vpack.c.b16 %v7870, %v7861
        %v7961 = vpack.c.b16 %v7871, %v7862
        %v7962 = vpack.c.b16 %v7872, %v7863
        %v7963 = vpack.c.b16 %v7882, %v7873
        %v7964 = vpack.c.b16 %v7883, %v7874
        %v7965 = vpack.c.b16 %v7884, %v7875
        %v7966 = vpack.c.b16 %v7885, %v7876
        %v7967 = vpack.c.b16 %v7886, %v7877
        %v7968 = vpack.c.b16 %v7887, %v7878
        %v7969 = vpack.c.b16 %v7888, %v7879
        %v7970 = vpack.c.b16 %v7889, %v7880
        %v7971 = vpack.c.b16 %v7890, %v7881
        %v7972 = vpack.c.b16 %v7900, %v7891
        %v7973 = vpack.c.b16 %v7901, %v7892
        %v7974 = vpack.c.b16 %v7902, %v7893
        %v7975 = vpack.c.b16 %v7903, %v7894
        %v7976 = vpack.c.b16 %v7904, %v7895
        %v7977 = vpack.c.b16 %v7905, %v7896
        %v7978 = vpack.c.b16 %v7906, %v7897
        %v7979 = vpack.c.b16 %v7907, %v7898
        %v7980 = vpack.c.b16 %v7908, %v7899
        %v8197 = vunpack.c.l.b16 %v7541
        %v8198 = vunpack.c.l.b16 %v7542
        %v8199 = vunpack.c.l.b16 %v7543
        %v8200 = vunpack.c.l.b16 %v7544
        %v8201 = vunpack.c.l.b16 %v7545
        %v8202 = vunpack.c.l.b16 %v7546
        %v8203 = vunpack.c.l.b16 %v7547
        %v8204 = vunpack.c.l.b16 %v7548
        %v8205 = vunpack.c.l.b16 %v7549
        %v8206 = vunpack.c.l.b16 %v7550
        %v8207 = vunpack.c.l.b16 %v7551
        %v8208 = vunpack.c.l.b16 %v7552
        %v8209 = vunpack.c.l.b16 %v7553
        %v8210 = vunpack.c.l.b16 %v7554
        %v8211 = vunpack.c.l.b16 %v7555
        %v8212 = vunpack.c.l.b16 %v7556
        %v8213 = vunpack.c.l.b16 %v7557
        %v8214 = vunpack.c.l.b16 %v7558
        %v8215 = vunpack.c.l.b16 %v7559
        %v8216 = vunpack.c.l.b16 %v7560
        %v8217 = vunpack.c.l.b16 %v7561
        %v8218 = vunpack.c.l.b16 %v7562
        %v8219 = vunpack.c.l.b16 %v7563
        %v8220 = vunpack.c.l.b16 %v7564
        %v8221 = vunpack.c.l.b16 %v7565
        %v8222 = vunpack.c.l.b16 %v7566
        %v8223 = vunpack.c.l.b16 %v7567
        %v8224 = vunpack.c.l.b16 %v7568
        %v8225 = vunpack.c.l.b16 %v7569
        %v8226 = vunpack.c.l.b16 %v7570
        %v8227 = vunpack.c.l.b16 %v7571
        %v8228 = vunpack.c.l.b16 %v7572
        %v8229 = vunpack.c.l.b16 %v7573
        %v8230 = vunpack.c.l.b16 %v7574
        %v8231 = vunpack.c.l.b16 %v7575
        %v8232 = vunpack.c.l.b16 %v7576
        %v8233 = vunpack.c.l.b16 %v7577
        %v8234 = vunpack.c.l.b16 %v7578
        %v8235 = vunpack.c.l.b16 %v7579
        %v8236 = vunpack.c.l.b16 %v7580
        %v8237 = vunpack.c.l.b16 %v7581
        %v8238 = vunpack.c.l.b16 %v7582
        %v8239 = vunpack.c.l.b16 %v7583
        %v8240 = vunpack.c.l.b16 %v7584
        %v8241 = vunpack.c.l.b16 %v7585
        %v8242 = vunpack.c.l.b16 %v7586
        %v8243 = vunpack.c.l.b16 %v7587
        %v8244 = vunpack.c.l.b16 %v7588
        %v8245 = vunpack.c.l.b16 %v7589
        %v8246 = vunpack.c.l.b16 %v7590
        %v8247 = vunpack.c.l.b16 %v7591
        %v8248 = vunpack.c.l.b16 %v7592
        %v8249 = vunpack.c.l.b16 %v7593
        %v8250 = vunpack.c.l.b16 %v7594
        %v8251 = vunpack.c.l.b16 %v7595
        %v8252 = vunpack.c.l.b16 %v7596
        %v8253 = vunpack.c.l.b16 %v7597
        %v8254 = vunpack.c.l.b16 %v7598
        %v8255 = vunpack.c.l.b16 %v7599
        %v8256 = vunpack.c.l.b16 %v7600
        %v8257 = vunpack.c.l.b16 %v7601
        %v8258 = vunpack.c.l.b16 %v7602
        %v8259 = vunpack.c.l.b16 %v7603
        %v8260 = vunpack.c.l.b16 %v7604
        %v8261 = vunpack.c.l.b16 %v7605
        %v8262 = vunpack.c.l.b16 %v7606
        %v8263 = vunpack.c.l.b16 %v7607
        %v8264 = vunpack.c.l.b16 %v7608
        %v8265 = vunpack.c.l.b16 %v7609
        %v8266 = vunpack.c.l.b16 %v7610
        %v8267 = vunpack.c.l.b16 %v7611
        %v8268 = vunpack.c.l.b16 %v7612
        %v8269 = vunpack.c.l.b16 %v7613
        %v8270 = vunpack.c.l.b16 %v7614
        %v8271 = vunpack.c.l.b16 %v7615
        %v8272 = vunpack.c.l.b16 %v7616
        %v8273 = vunpack.c.l.b16 %v7617
        %v8274 = vunpack.c.l.b16 %v7618
        %v8275 = vunpack.c.l.b16 %v7619
        %v8276 = vunpack.c.l.b16 %v7620
        %v8277 = vunpack.c.l.b16 %v7621
        %v8278 = vunpack.c.l.b16 %v7622
        %v8279 = vunpack.c.l.b16 %v7623
        %v8280 = vunpack.c.l.b16 %v7624
        %v8281 = vunpack.c.l.b16 %v7625
        %v8282 = vunpack.c.l.b16 %v7626
        %v8283 = vunpack.c.l.b16 %v7627
        %v8284 = vunpack.c.l.b16 %v7628
        %v8285 = vunpack.c.l.b16 %v7629
        %v8286 = vunpack.c.l.b16 %v7630
        %v8287 = vunpack.c.l.b16 %v7631
        %v8288 = vunpack.c.l.b16 %v7632
        %v8289 = vunpack.c.l.b16 %v7633
        %v8290 = vunpack.c.l.b16 %v7634
        %v8291 = vunpack.c.l.b16 %v7635
        %v8292 = vunpack.c.l.b16 %v7636
        %v8293 = vunpack.c.l.b16 %v7637
        %v8294 = vunpack.c.l.b16 %v7638
        %v8295 = vunpack.c.l.b16 %v7639
        %v8296 = vunpack.c.l.b16 %v7640
        %v8297 = vunpack.c.l.b16 %v7641
        %v8298 = vunpack.c.l.b16 %v7642
        %v8299 = vunpack.c.l.b16 %v7643
        %v8300 = vunpack.c.l.b16 %v7644
        %v8301 = vunpack.c.l.b16 %v7645
        %v8302 = vunpack.c.l.b16 %v7646
        %v8303 = vunpack.c.l.b16 %v7647
        %v8304 = vunpack.c.l.b16 %v7648
        %v8305 = vunpack.c.l.b16 %v7649
        %v8306 = vunpack.c.l.b16 %v7650
        %v8307 = vunpack.c.l.b16 %v7651
        %v8308 = vunpack.c.l.b16 %v7652
        %v8309 = vunpack.c.l.b16 %v7653
        %v8310 = vunpack.c.l.b16 %v7654
        %v8311 = vunpack.c.l.b16 %v7655
        %v8312 = vunpack.c.l.b16 %v7656
        %v8313 = vunpack.c.l.b16 %v7657
        %v8314 = vunpack.c.l.b16 %v7658
        %v8315 = vunpack.c.l.b16 %v7659
        %v8316 = vunpack.c.l.b16 %v7660
        %v8317 = vunpack.c.l.b16 %v7661
        %v8318 = vunpack.c.l.b16 %v7662
        %v8319 = vunpack.c.l.b16 %v7663
        %v8320 = vunpack.c.l.b16 %v7664
        %v8321 = vunpack.c.l.b16 %v7665
        %v8322 = vunpack.c.l.b16 %v7666
        %v8323 = vunpack.c.l.b16 %v7667
        %v8324 = vunpack.c.l.b16 %v7668
        %v8325 = vunpack.c.l.b16 %v7669
        %v8326 = vunpack.c.l.b16 %v7670
        %v8327 = vunpack.c.l.b16 %v7671
        %v8328 = vunpack.c.l.b16 %v7672
        %v8329 = vunpack.c.l.b16 %v7673
        %v8330 = vunpack.c.l.b16 %v7674
        %v8331 = vunpack.c.l.b16 %v7675
        %v8332 = vunpack.c.l.b16 %v7676
        %v8333 = vunpack.c.l.b16 %v7677
        %v8334 = vunpack.c.l.b16 %v7678
        %v8335 = vunpack.c.l.b16 %v7679
        %v8336 = vunpack.c.l.b16 %v7680
        %v8337 = vunpack.c.l.b16 %v7681
        %v8338 = vunpack.c.l.b16 %v7682
        %v8339 = vunpack.c.l.b16 %v7683
        %v8340 = vunpack.c.l.b16 %v7684
        %v8341 = vpack.c.b16 %v8198, %v8197
        %v8342 = vpack.c.b16 %v8200, %v8199
        %v8343 = vpack.c.b16 %v8202, %v8201
        %v8344 = vpack.c.b16 %v8204, %v8203
        %v8345 = vpack.c.b16 %v8206, %v8205
        %v8346 = vpack.c.b16 %v8208, %v8207
        %v8347 = vpack.c.b16 %v8210, %v8209
        %v8348 = vpack.c.b16 %v8212, %v8211
        %v8349 = vpack.c.b16 %v8214, %v8213
        %v8350 = vpack.c.b16 %v8216, %v8215
        %v8351 = vpack.c.b16 %v8218, %v8217
        %v8352 = vpack.c.b16 %v8220, %v8219
        %v8353 = vpack.c.b16 %v8222, %v8221
        %v8354 = vpack.c.b16 %v8224, %v8223
        %v8355 = vpack.c.b16 %v8226, %v8225
        %v8356 = vpack.c.b16 %v8228, %v8227
        %v8357 = vpack.c.b16 %v8230, %v8229
        %v8358 = vpack.c.b16 %v8232, %v8231
        %v8359 = vpack.c.b16 %v8234, %v8233
        %v8360 = vpack.c.b16 %v8236, %v8235
        %v8361 = vpack.c.b16 %v8238, %v8237
        %v8362 = vpack.c.b16 %v8240, %v8239
        %v8363 = vpack.c.b16 %v8242, %v8241
        %v8364 = vpack.c.b16 %v8244, %v8243
        %v8365 = vpack.c.b16 %v8246, %v8245
        %v8366 = vpack.c.b16 %v8248, %v8247
        %v8367 = vpack.c.b16 %v8250, %v8249
        %v8368 = vpack.c.b16 %v8252, %v8251
        %v8369 = vpack.c.b16 %v8254, %v8253
        %v8370 = vpack.c.b16 %v8256, %v8255
        %v8371 = vpack.c.b16 %v8258, %v8257
        %v8372 = vpack.c.b16 %v8260, %v8259
        %v8373 = vpack.c.b16 %v8262, %v8261
        %v8374 = vpack.c.b16 %v8264, %v8263
        %v8375 = vpack.c.b16 %v8266, %v8265
        %v8376 = vpack.c.b16 %v8268, %v8267
        %v8377 = vpack.c.b16 %v8270, %v8269
        %v8378 = vpack.c.b16 %v8272, %v8271
        %v8379 = vpack.c.b16 %v8274, %v8273
        %v8380 = vpack.c.b16 %v8276, %v8275
        %v8381 = vpack.c.b16 %v8278, %v8277
        %v8382 = vpack.c.b16 %v8280, %v8279
        %v8383 = vpack.c.b16 %v8282, %v8281
        %v8384 = vpack.c.b16 %v8284, %v8283
        %v8385 = vpack.c.b16 %v8286, %v8285
        %v8386 = vpack.c.b16 %v8288, %v8287
        %v8387 = vpack.c.b16 %v8290, %v8289
        %v8388 = vpack.c.b16 %v8292, %v8291
        %v8389 = vpack.c.b16 %v8294, %v8293
        %v8390 = vpack.c.b16 %v8296, %v8295
        %v8391 = vpack.c.b16 %v8298, %v8297
        %v8392 = vpack.c.b16 %v8300, %v8299
        %v8393 = vpack.c.b16 %v8302, %v8301
        %v8394 = vpack.c.b16 %v8304, %v8303
        %v8395 = vpack.c.b16 %v8306, %v8305
        %v8396 = vpack.c.b16 %v8308, %v8307
        %v8397 = vpack.c.b16 %v8310, %v8309
        %v8398 = vpack.c.b16 %v8312, %v8311
        %v8399 = vpack.c.b16 %v8314, %v8313
        %v8400 = vpack.c.b16 %v8316, %v8315
        %v8401 = vpack.c.b16 %v8318, %v8317
        %v8402 = vpack.c.b16 %v8320, %v8319
        %v8403 = vpack.c.b16 %v8322, %v8321
        %v8404 = vpack.c.b16 %v8324, %v8323
        %v8405 = vpack.c.b16 %v8326, %v8325
        %v8406 = vpack.c.b16 %v8328, %v8327
        %v8407 = vpack.c.b16 %v8330, %v8329
        %v8408 = vpack.c.b16 %v8332, %v8331
        %v8409 = vpack.c.b16 %v8334, %v8333
        %v8410 = vpack.c.b16 %v8336, %v8335
        %v8411 = vpack.c.b16 %v8338, %v8337
        %v8412 = vpack.c.b16 %v8340, %v8339
        %8485 = vmatprep.subr.bf16.mxu0 0
        %8486 = vmatpush1.bf16.msra.mxu0 %v8348
        %8487 = vmatprep.subr.bf16.mxu0 0
        %8488 = vmatpush1.bf16.msra.mxu0 %v8347
        %8489 = vmatprep.subr.bf16.mxu0 0
        %8490 = vmatpush1.bf16.msra.mxu0 %v8346
        %8491 = vmatprep.subr.bf16.mxu0 0
        %8492 = vmatpush1.bf16.msra.mxu0 %v8345
        %8493 = vmatprep.subr.bf16.mxu0 0
        %8494 = vmatpush1.bf16.msra.mxu0 %v8344
        %8495 = vmatprep.subr.bf16.mxu0 0
        %8496 = vmatpush1.bf16.msra.mxu0 %v8343
        %8497 = vmatprep.subr.bf16.mxu0 0
        %8498 = vmatpush1.bf16.msra.mxu0 %v8342
        %8499 = vmatprep.subr.bf16.mxu0 0
        %8500 = vmatpush1.bf16.msra.mxu0 %v8341
        %8501 = vmatprep.subr.bf16.mxu0 0
        %8502 = vmatpush2.bf16.msra.mxu0 %v8356
        %8503 = vmatprep.subr.bf16.mxu0 0
        %8504 = vmatpush2.bf16.msra.mxu0 %v8355
        %8505 = vmatprep.subr.bf16.mxu0 0
        %8506 = vmatpush2.bf16.msra.mxu0 %v8354
        %8507 = vmatprep.subr.bf16.mxu0 0
        %8508 = vmatpush2.bf16.msra.mxu0 %v8353
        %8509 = vmatprep.subr.bf16.mxu0 0
        %8510 = vmatpush2.bf16.msra.mxu0 %v8352
        %8511 = vmatprep.subr.bf16.mxu0 0
        %8512 = vmatpush2.bf16.msra.mxu0 %v8351
        %8513 = vmatprep.subr.bf16.mxu0 0
        %8514 = vmatpush2.bf16.msra.mxu0 %v8350
        %8515 = vmatprep.subr.bf16.mxu0 0
        %8516 = vmatpush2.bf16.msra.mxu0 %v8349
        %8517 = vmatprep.mubr.bf16.mxu0 %v7910
        %8518 = vmatmul.mubr.bf16.gmra.mxu0 %v7909
        %v8519 = vpop.f32.mrf.mxu0
        %v8520 = vadd.f32 0.0, %v8519
        %v8521 = vpop.f32.mrf.mxu0
        %v8522 = vpop.f32.mrf.mxu0
        %v8523 = vadd.f32 0.0, %v8522
        %v8524 = vpop.f32.mrf.mxu0
        %8525 = vmatprep.mubr.bf16.mxu0 %v7919
        %8526 = vmatmul.mubr.bf16.gmra.mxu0 %v7918
        %v8527 = vpop.f32.mrf.mxu0
        %v8528 = vadd.f32 0.0, %v8527
        %v8529 = vpop.f32.mrf.mxu0
        %v8530 = vpop.f32.mrf.mxu0
        %v8531 = vadd.f32 0.0, %v8530
        %v8532 = vpop.f32.mrf.mxu0
        %8533 = vmatprep.mubr.bf16.mxu0 %v7928
        %8534 = vmatmul.mubr.bf16.gmra.mxu0 %v7927
        %v8535 = vpop.f32.mrf.mxu0
        %v8536 = vadd.f32 0.0, %v8535
        %v8537 = vpop.f32.mrf.mxu0
        %v8538 = vpop.f32.mrf.mxu0
        %v8539 = vadd.f32 0.0, %v8538
        %v8540 = vpop.f32.mrf.mxu0
        %8541 = vmatprep.mubr.bf16.mxu0 %v7937
        %8542 = vmatmul.mubr.bf16.gmra.mxu0 %v7936
        %v8543 = vpop.f32.mrf.mxu0
        %v8544 = vadd.f32 0.0, %v8543
        %v8545 = vpop.f32.mrf.mxu0
        %v8546 = vpop.f32.mrf.mxu0
        %v8547 = vadd.f32 0.0, %v8546
        %v8548 = vpop.f32.mrf.mxu0
        %8549 = vmatprep.mubr.bf16.mxu0 %v7946
        %8550 = vmatmul.mubr.bf16.gmra.mxu0 %v7945
        %v8551 = vpop.f32.mrf.mxu0
        %v8552 = vadd.f32 0.0, %v8551
        %v8553 = vpop.f32.mrf.mxu0
        %v8554 = vpop.f32.mrf.mxu0
        %v8555 = vadd.f32 0.0, %v8554
        %v8556 = vpop.f32.mrf.mxu0
        %8557 = vmatprep.mubr.bf16.mxu0 %v7955
        %8558 = vmatmul.mubr.bf16.gmra.mxu0 %v7954
        %v8559 = vpop.f32.mrf.mxu0
        %v8560 = vadd.f32 0.0, %v8559
        %v8561 = vpop.f32.mrf.mxu0
        %v8562 = vpop.f32.mrf.mxu0
        %v8563 = vadd.f32 0.0, %v8562
        %v8564 = vpop.f32.mrf.mxu0
        %8565 = vmatprep.mubr.bf16.mxu0 %v7964
        %8566 = vmatmul.mubr.bf16.gmra.mxu0 %v7963
        %v8567 = vpop.f32.mrf.mxu0
        %v8568 = vadd.f32 0.0, %v8567
        %v8569 = vpop.f32.mrf.mxu0
        %v8570 = vpop.f32.mrf.mxu0
        %v8571 = vadd.f32 0.0, %v8570
        %v8572 = vpop.f32.mrf.mxu0
        %8573 = vmatprep.mubr.bf16.mxu0 %v7973
        %8574 = vmatmul.mubr.bf16.gmra.mxu0 %v7972
        %v8575 = vpop.f32.mrf.mxu0
        %v8576 = vadd.f32 0.0, %v8575
        %v8577 = vpop.f32.mrf.mxu0
        %v8578 = vpop.f32.mrf.mxu0
        %v8579 = vadd.f32 0.0, %v8578
        %v8580 = vpop.f32.mrf.mxu0
        %8581 = vdwg.mxu0
        %8582 = vmatprep.subr.bf16.mxu0 0
        %8583 = vmatpush1.bf16.msra.mxu0 %v8364
        %8584 = vmatprep.subr.bf16.mxu0 0
        %8585 = vmatpush1.bf16.msra.mxu0 %v8363
        %8586 = vmatprep.subr.bf16.mxu0 0
        %8587 = vmatpush1.bf16.msra.mxu0 %v8362
        %8588 = vmatprep.subr.bf16.mxu0 0
        %8589 = vmatpush1.bf16.msra.mxu0 %v8361
        %8590 = vmatprep.subr.bf16.mxu0 0
        %8591 = vmatpush1.bf16.msra.mxu0 %v8360
        %8592 = vmatprep.subr.bf16.mxu0 0
        %8593 = vmatpush1.bf16.msra.mxu0 %v8359
        %8594 = vmatprep.subr.bf16.mxu0 0
        %8595 = vmatpush1.bf16.msra.mxu0 %v8358
        %8596 = vmatprep.subr.bf16.mxu0 0
        %8597 = vmatpush1.bf16.msra.mxu0 %v8357
        %8598 = vmatprep.subr.bf16.mxu0 0
        %8599 = vmatpush2.bf16.msra.mxu0 %v8372
        %8600 = vmatprep.subr.bf16.mxu0 0
        %8601 = vmatpush2.bf16.msra.mxu0 %v8371
        %8602 = vmatprep.subr.bf16.mxu0 0
        %8603 = vmatpush2.bf16.msra.mxu0 %v8370
        %8604 = vmatprep.subr.bf16.mxu0 0
        %8605 = vmatpush2.bf16.msra.mxu0 %v8369
        %8606 = vmatprep.subr.bf16.mxu0 0
        %8607 = vmatpush2.bf16.msra.mxu0 %v8368
        %8608 = vmatprep.subr.bf16.mxu0 0
        %8609 = vmatpush2.bf16.msra.mxu0 %v8367
        %8610 = vmatprep.subr.bf16.mxu0 0
        %8611 = vmatpush2.bf16.msra.mxu0 %v8366
        %8612 = vmatprep.subr.bf16.mxu0 0
        %8613 = vmatpush2.bf16.msra.mxu0 %v8365
        %8614 = vmatprep.mubr.bf16.mxu0 %v7912
        %8615 = vmatmul.mubr.bf16.gmra.mxu0 %v7911
        %v8616 = vpop.f32.mrf.mxu0
        %v8617 = vadd.f32 %v8520, %v8616
        %v8618 = vpop.f32.mrf.mxu0
        %v8619 = vpop.f32.mrf.mxu0
        %v8620 = vadd.f32 %v8523, %v8619
        %v8621 = vpop.f32.mrf.mxu0
        %8622 = vmatprep.mubr.bf16.mxu0 %v7921
        %8623 = vmatmul.mubr.bf16.gmra.mxu0 %v7920
        %v8624 = vpop.f32.mrf.mxu0
        %v8625 = vadd.f32 %v8528, %v8624
        %v8626 = vpop.f32.mrf.mxu0
        %v8627 = vpop.f32.mrf.mxu0
        %v8628 = vadd.f32 %v8531, %v8627
        %v8629 = vpop.f32.mrf.mxu0
        %8630 = vmatprep.mubr.bf16.mxu0 %v7930
        %8631 = vmatmul.mubr.bf16.gmra.mxu0 %v7929
        %v8632 = vpop.f32.mrf.mxu0
        %v8633 = vadd.f32 %v8536, %v8632
        %v8634 = vpop.f32.mrf.mxu0
        %v8635 = vpop.f32.mrf.mxu0
        %v8636 = vadd.f32 %v8539, %v8635
        %v8637 = vpop.f32.mrf.mxu0
        %8638 = vmatprep.mubr.bf16.mxu0 %v7939
        %8639 = vmatmul.mubr.bf16.gmra.mxu0 %v7938
        %v8640 = vpop.f32.mrf.mxu0
        %v8641 = vadd.f32 %v8544, %v8640
        %v8642 = vpop.f32.mrf.mxu0
        %v8643 = vpop.f32.mrf.mxu0
        %v8644 = vadd.f32 %v8547, %v8643
        %v8645 = vpop.f32.mrf.mxu0
        %8646 = vmatprep.mubr.bf16.mxu0 %v7948
        %8647 = vmatmul.mubr.bf16.gmra.mxu0 %v7947
        %v8648 = vpop.f32.mrf.mxu0
        %v8649 = vadd.f32 %v8552, %v8648
        %v8650 = vpop.f32.mrf.mxu0
        %v8651 = vpop.f32.mrf.mxu0
        %v8652 = vadd.f32 %v8555, %v8651
        %v8653 = vpop.f32.mrf.mxu0
        %8654 = vmatprep.mubr.bf16.mxu0 %v7957
        %8655 = vmatmul.mubr.bf16.gmra.mxu0 %v7956
        %v8656 = vpop.f32.mrf.mxu0
        %v8657 = vadd.f32 %v8560, %v8656
        %v8658 = vpop.f32.mrf.mxu0
        %v8659 = vpop.f32.mrf.mxu0
        %v8660 = vadd.f32 %v8563, %v8659
        %v8661 = vpop.f32.mrf.mxu0
        %8662 = vmatprep.mubr.bf16.mxu0 %v7966
        %8663 = vmatmul.mubr.bf16.gmra.mxu0 %v7965
        %v8664 = vpop.f32.mrf.mxu0
        %v8665 = vadd.f32 %v8568, %v8664
        %v8666 = vpop.f32.mrf.mxu0
        %v8667 = vpop.f32.mrf.mxu0
        %v8668 = vadd.f32 %v8571, %v8667
        %v8669 = vpop.f32.mrf.mxu0
        %8670 = vmatprep.mubr.bf16.mxu0 %v7975
        %8671 = vmatmul.mubr.bf16.gmra.mxu0 %v7974
        %v8672 = vpop.f32.mrf.mxu0
        %v8673 = vadd.f32 %v8576, %v8672
        %v8674 = vpop.f32.mrf.mxu0
        %v8675 = vpop.f32.mrf.mxu0
        %v8676 = vadd.f32 %v8579, %v8675
        %v8677 = vpop.f32.mrf.mxu0
        %8678 = vdwg.mxu0
        %8679 = vmatprep.subr.bf16.mxu0 0
        %8680 = vmatpush1.bf16.msra.mxu0 %v8380
        %8681 = vmatprep.subr.bf16.mxu0 0
        %8682 = vmatpush1.bf16.msra.mxu0 %v8379
        %8683 = vmatprep.subr.bf16.mxu0 0
        %8684 = vmatpush1.bf16.msra.mxu0 %v8378
        %8685 = vmatprep.subr.bf16.mxu0 0
        %8686 = vmatpush1.bf16.msra.mxu0 %v8377
        %8687 = vmatprep.subr.bf16.mxu0 0
        %8688 = vmatpush1.bf16.msra.mxu0 %v8376
        %8689 = vmatprep.subr.bf16.mxu0 0
        %8690 = vmatpush1.bf16.msra.mxu0 %v8375
        %8691 = vmatprep.subr.bf16.mxu0 0
        %8692 = vmatpush1.bf16.msra.mxu0 %v8374
        %8693 = vmatprep.subr.bf16.mxu0 0
        %8694 = vmatpush1.bf16.msra.mxu0 %v8373
        %8695 = vmatprep.subr.bf16.mxu0 0
        %8696 = vmatpush2.bf16.msra.mxu0 %v8388
        %8697 = vmatprep.subr.bf16.mxu0 0
        %8698 = vmatpush2.bf16.msra.mxu0 %v8387
        %8699 = vmatprep.subr.bf16.mxu0 0
        %8700 = vmatpush2.bf16.msra.mxu0 %v8386
        %8701 = vmatprep.subr.bf16.mxu0 0
        %8702 = vmatpush2.bf16.msra.mxu0 %v8385
        %8703 = vmatprep.subr.bf16.mxu0 0
        %8704 = vmatpush2.bf16.msra.mxu0 %v8384
        %8705 = vmatprep.subr.bf16.mxu0 0
        %8706 = vmatpush2.bf16.msra.mxu0 %v8383
        %8707 = vmatprep.subr.bf16.mxu0 0
        %8708 = vmatpush2.bf16.msra.mxu0 %v8382
        %8709 = vmatprep.subr.bf16.mxu0 0
        %8710 = vmatpush2.bf16.msra.mxu0 %v8381
        %8711 = vmatprep.mubr.bf16.mxu0 %v7914
        %8712 = vmatmul.mubr.bf16.gmra.mxu0 %v7913
        %v8713 = vpop.f32.mrf.mxu0
        %v8714 = vadd.f32 %v8617, %v8713
        %v8715 = vpop.f32.mrf.mxu0
        %v8716 = vpop.f32.mrf.mxu0
        %v8717 = vadd.f32 %v8620, %v8716
        %v8718 = vpop.f32.mrf.mxu0
        %8719 = vmatprep.mubr.bf16.mxu0 %v7923
        %8720 = vmatmul.mubr.bf16.gmra.mxu0 %v7922
        %v8721 = vpop.f32.mrf.mxu0
        %v8722 = vadd.f32 %v8625, %v8721
        %v8723 = vpop.f32.mrf.mxu0
        %v8724 = vpop.f32.mrf.mxu0
        %v8725 = vadd.f32 %v8628, %v8724
        %v8726 = vpop.f32.mrf.mxu0
        %8727 = vmatprep.mubr.bf16.mxu0 %v7932
        %8728 = vmatmul.mubr.bf16.gmra.mxu0 %v7931
        %v8729 = vpop.f32.mrf.mxu0
        %v8730 = vadd.f32 %v8633, %v8729
        %v8731 = vpop.f32.mrf.mxu0
        %v8732 = vpop.f32.mrf.mxu0
        %v8733 = vadd.f32 %v8636, %v8732
        %v8734 = vpop.f32.mrf.mxu0
        %8735 = vmatprep.mubr.bf16.mxu0 %v7941
        %8736 = vmatmul.mubr.bf16.gmra.mxu0 %v7940
        %v8737 = vpop.f32.mrf.mxu0
        %v8738 = vadd.f32 %v8641, %v8737
        %v8739 = vpop.f32.mrf.mxu0
        %v8740 = vpop.f32.mrf.mxu0
        %v8741 = vadd.f32 %v8644, %v8740
        %v8742 = vpop.f32.mrf.mxu0
        %8743 = vmatprep.mubr.bf16.mxu0 %v7950
        %8744 = vmatmul.mubr.bf16.gmra.mxu0 %v7949
        %v8745 = vpop.f32.mrf.mxu0
        %v8746 = vadd.f32 %v8649, %v8745
        %v8747 = vpop.f32.mrf.mxu0
        %v8748 = vpop.f32.mrf.mxu0
        %v8749 = vadd.f32 %v8652, %v8748
        %v8750 = vpop.f32.mrf.mxu0
        %8751 = vmatprep.mubr.bf16.mxu0 %v7959
        %8752 = vmatmul.mubr.bf16.gmra.mxu0 %v7958
        %v8753 = vpop.f32.mrf.mxu0
        %v8754 = vadd.f32 %v8657, %v8753
        %v8755 = vpop.f32.mrf.mxu0
        %v8756 = vpop.f32.mrf.mxu0
        %v8757 = vadd.f32 %v8660, %v8756
        %v8758 = vpop.f32.mrf.mxu0
        %8759 = vmatprep.mubr.bf16.mxu0 %v7968
        %8760 = vmatmul.mubr.bf16.gmra.mxu0 %v7967
        %v8761 = vpop.f32.mrf.mxu0
        %v8762 = vadd.f32 %v8665, %v8761
        %v8763 = vpop.f32.mrf.mxu0
        %v8764 = vpop.f32.mrf.mxu0
        %v8765 = vadd.f32 %v8668, %v8764
        %v8766 = vpop.f32.mrf.mxu0
        %8767 = vmatprep.mubr.bf16.mxu0 %v7977
        %8768 = vmatmul.mubr.bf16.gmra.mxu0 %v7976
        %v8769 = vpop.f32.mrf.mxu0
        %v8770 = vadd.f32 %v8673, %v8769
        %v8771 = vpop.f32.mrf.mxu0
        %v8772 = vpop.f32.mrf.mxu0
        %v8773 = vadd.f32 %v8676, %v8772
        %v8774 = vpop.f32.mrf.mxu0
        %8775 = vdwg.mxu0
        %8776 = vmatprep.subr.bf16.mxu0 0
        %8777 = vmatpush1.bf16.msra.mxu0 %v8396
        %8778 = vmatprep.subr.bf16.mxu0 0
        %8779 = vmatpush1.bf16.msra.mxu0 %v8395
        %8780 = vmatprep.subr.bf16.mxu0 0
        %8781 = vmatpush1.bf16.msra.mxu0 %v8394
        %8782 = vmatprep.subr.bf16.mxu0 0
        %8783 = vmatpush1.bf16.msra.mxu0 %v8393
        %8784 = vmatprep.subr.bf16.mxu0 0
        %8785 = vmatpush1.bf16.msra.mxu0 %v8392
        %8786 = vmatprep.subr.bf16.mxu0 0
        %8787 = vmatpush1.bf16.msra.mxu0 %v8391
        %8788 = vmatprep.subr.bf16.mxu0 0
        %8789 = vmatpush1.bf16.msra.mxu0 %v8390
        %8790 = vmatprep.subr.bf16.mxu0 0
        %8791 = vmatpush1.bf16.msra.mxu0 %v8389
        %8792 = vmatprep.subr.bf16.mxu0 0
        %8793 = vmatpush2.bf16.msra.mxu0 %v8404
        %8794 = vmatprep.subr.bf16.mxu0 0
        %8795 = vmatpush2.bf16.msra.mxu0 %v8403
        %8796 = vmatprep.subr.bf16.mxu0 0
        %8797 = vmatpush2.bf16.msra.mxu0 %v8402
        %8798 = vmatprep.subr.bf16.mxu0 0
        %8799 = vmatpush2.bf16.msra.mxu0 %v8401
        %8800 = vmatprep.subr.bf16.mxu0 0
        %8801 = vmatpush2.bf16.msra.mxu0 %v8400
        %8802 = vmatprep.subr.bf16.mxu0 0
        %8803 = vmatpush2.bf16.msra.mxu0 %v8399
        %8804 = vmatprep.subr.bf16.mxu0 0
        %8805 = vmatpush2.bf16.msra.mxu0 %v8398
        %8806 = vmatprep.subr.bf16.mxu0 0
        %8807 = vmatpush2.bf16.msra.mxu0 %v8397
        %8808 = vmatprep.mubr.bf16.mxu0 %v7916
        %8809 = vmatmul.mubr.bf16.gmra.mxu0 %v7915
        %v8810 = vpop.f32.mrf.mxu0
        %v8811 = vadd.f32 %v8714, %v8810
        %v8812 = vpop.f32.mrf.mxu0
        %v8813 = vpop.f32.mrf.mxu0
        %v8814 = vadd.f32 %v8717, %v8813
        %v8815 = vpop.f32.mrf.mxu0
        %8816 = vmatprep.mubr.bf16.mxu0 %v7925
        %8817 = vmatmul.mubr.bf16.gmra.mxu0 %v7924
        %v8818 = vpop.f32.mrf.mxu0
        %v8819 = vadd.f32 %v8722, %v8818
        %v8820 = vpop.f32.mrf.mxu0
        %v8821 = vpop.f32.mrf.mxu0
        %v8822 = vadd.f32 %v8725, %v8821
        %v8823 = vpop.f32.mrf.mxu0
        %8824 = vmatprep.mubr.bf16.mxu0 %v7934
        %8825 = vmatmul.mubr.bf16.gmra.mxu0 %v7933
        %v8826 = vpop.f32.mrf.mxu0
        %v8827 = vadd.f32 %v8730, %v8826
        %v8828 = vpop.f32.mrf.mxu0
        %v8829 = vpop.f32.mrf.mxu0
        %v8830 = vadd.f32 %v8733, %v8829
        %v8831 = vpop.f32.mrf.mxu0
        %8832 = vmatprep.mubr.bf16.mxu0 %v7943
        %8833 = vmatmul.mubr.bf16.gmra.mxu0 %v7942
        %v8834 = vpop.f32.mrf.mxu0
        %v8835 = vadd.f32 %v8738, %v8834
        %v8836 = vpop.f32.mrf.mxu0
        %v8837 = vpop.f32.mrf.mxu0
        %v8838 = vadd.f32 %v8741, %v8837
        %v8839 = vpop.f32.mrf.mxu0
        %8840 = vmatprep.mubr.bf16.mxu0 %v7952
        %8841 = vmatmul.mubr.bf16.gmra.mxu0 %v7951
        %v8842 = vpop.f32.mrf.mxu0
        %v8843 = vadd.f32 %v8746, %v8842
        %v8844 = vpop.f32.mrf.mxu0
        %v8845 = vpop.f32.mrf.mxu0
        %v8846 = vadd.f32 %v8749, %v8845
        %v8847 = vpop.f32.mrf.mxu0
        %8848 = vmatprep.mubr.bf16.mxu0 %v7961
        %8849 = vmatmul.mubr.bf16.gmra.mxu0 %v7960
        %v8850 = vpop.f32.mrf.mxu0
        %v8851 = vadd.f32 %v8754, %v8850
        %v8852 = vpop.f32.mrf.mxu0
        %v8853 = vpop.f32.mrf.mxu0
        %v8854 = vadd.f32 %v8757, %v8853
        %v8855 = vpop.f32.mrf.mxu0
        %8856 = vmatprep.mubr.bf16.mxu0 %v7970
        %8857 = vmatmul.mubr.bf16.gmra.mxu0 %v7969
        %v8858 = vpop.f32.mrf.mxu0
        %v8859 = vadd.f32 %v8762, %v8858
        %v8860 = vpop.f32.mrf.mxu0
        %v8861 = vpop.f32.mrf.mxu0
        %v8862 = vadd.f32 %v8765, %v8861
        %v8863 = vpop.f32.mrf.mxu0
        %8864 = vmatprep.mubr.bf16.mxu0 %v7979
        %8865 = vmatmul.mubr.bf16.gmra.mxu0 %v7978
        %v8866 = vpop.f32.mrf.mxu0
        %v8867 = vadd.f32 %v8770, %v8866
        %v8868 = vpop.f32.mrf.mxu0
        %v8869 = vpop.f32.mrf.mxu0
        %v8870 = vadd.f32 %v8773, %v8869
        %v8871 = vpop.f32.mrf.mxu0
        %8872 = vdwg.mxu0
        %8873 = vmatprep.subr.bf16.mxu0 0
        %8874 = vmatpush1.bf16.msra.mxu0 %v8412
        %8875 = vmatprep.subr.bf16.mxu0 0
        %8876 = vmatpush1.bf16.msra.mxu0 %v8411
        %8877 = vmatprep.subr.bf16.mxu0 0
        %8878 = vmatpush1.bf16.msra.mxu0 %v8410
        %8879 = vmatprep.subr.bf16.mxu0 0
        %8880 = vmatpush1.bf16.msra.mxu0 %v8409
        %8881 = vmatprep.subr.bf16.mxu0 0
        %8882 = vmatpush1.bf16.msra.mxu0 %v8408
        %8883 = vmatprep.subr.bf16.mxu0 0
        %8884 = vmatpush1.bf16.msra.mxu0 %v8407
        %8885 = vmatprep.subr.bf16.mxu0 0
        %8886 = vmatpush1.bf16.msra.mxu0 %v8406
        %8887 = vmatprep.subr.bf16.mxu0 0
        %8888 = vmatpush1.bf16.msra.mxu0 %v8405
        %8889 = vmatprep.subr.bf16.mxu0 0
        %8890 = vmatpush2.bf16.msra.mxu0 0
        %8891 = vmatprep.subr.bf16.mxu0 0
        %8892 = vmatpush2.bf16.msra.mxu0 0
        %8893 = vmatprep.subr.bf16.mxu0 0
        %8894 = vmatpush2.bf16.msra.mxu0 0
        %8895 = vmatprep.subr.bf16.mxu0 0
        %8896 = vmatpush2.bf16.msra.mxu0 0
        %8897 = vmatprep.subr.bf16.mxu0 0
        %8898 = vmatpush2.bf16.msra.mxu0 0
        %8899 = vmatprep.subr.bf16.mxu0 0
        %8900 = vmatpush2.bf16.msra.mxu0 0
        %8901 = vmatprep.subr.bf16.mxu0 0
        %8902 = vmatpush2.bf16.msra.mxu0 0
        %8903 = vmatprep.subr.bf16.mxu0 0
        %8904 = vmatpush2.bf16.msra.mxu0 0
        %8905 = vmatprep.mubr.bf16.mxu0 0
        %8906 = vmatmul.mubr.bf16.gmra.mxu0 %v7917
        %v8907 = vpop.f32.mrf.mxu0
        %v8908 = vadd.f32 %v8811, %v8907
        %v8909 = vpop.f32.mrf.mxu0
        %v8910 = vpop.f32.mrf.mxu0
        %v8911 = vadd.f32 %v8814, %v8910
        %v8912 = vpop.f32.mrf.mxu0
        %8913 = vmatprep.mubr.bf16.mxu0 0
        %8914 = vmatmul.mubr.bf16.gmra.mxu0 %v7926
        %v8915 = vpop.f32.mrf.mxu0
        %v8916 = vadd.f32 %v8819, %v8915
        %v8917 = vpop.f32.mrf.mxu0
        %v8918 = vpop.f32.mrf.mxu0
        %v8919 = vadd.f32 %v8822, %v8918
        %v8920 = vpop.f32.mrf.mxu0
        %8921 = vmatprep.mubr.bf16.mxu0 0
        %8922 = vmatmul.mubr.bf16.gmra.mxu0 %v7935
        %v8923 = vpop.f32.mrf.mxu0
        %v8924 = vadd.f32 %v8827, %v8923
        %v8925 = vpop.f32.mrf.mxu0
        %v8926 = vpop.f32.mrf.mxu0
        %v8927 = vadd.f32 %v8830, %v8926
        %v8928 = vpop.f32.mrf.mxu0
        %8929 = vmatprep.mubr.bf16.mxu0 0
        %8930 = vmatmul.mubr.bf16.gmra.mxu0 %v7944
        %v8931 = vpop.f32.mrf.mxu0
        %v8932 = vadd.f32 %v8835, %v8931
        %v8933 = vpop.f32.mrf.mxu0
        %v8934 = vpop.f32.mrf.mxu0
        %v8935 = vadd.f32 %v8838, %v8934
        %v8936 = vpop.f32.mrf.mxu0
        %8937 = vmatprep.mubr.bf16.mxu0 0
        %8938 = vmatmul.mubr.bf16.gmra.mxu0 %v7953
        %v8939 = vpop.f32.mrf.mxu0
        %v8940 = vadd.f32 %v8843, %v8939
        %v8941 = vpop.f32.mrf.mxu0
        %v8942 = vpop.f32.mrf.mxu0
        %v8943 = vadd.f32 %v8846, %v8942
        %v8944 = vpop.f32.mrf.mxu0
        %8945 = vmatprep.mubr.bf16.mxu0 0
        %8946 = vmatmul.mubr.bf16.gmra.mxu0 %v7962
        %v8947 = vpop.f32.mrf.mxu0
        %v8948 = vadd.f32 %v8851, %v8947
        %v8949 = vpop.f32.mrf.mxu0
        %v8950 = vpop.f32.mrf.mxu0
        %v8951 = vadd.f32 %v8854, %v8950
        %v8952 = vpop.f32.mrf.mxu0
        %8953 = vmatprep.mubr.bf16.mxu0 0
        %8954 = vmatmul.mubr.bf16.gmra.mxu0 %v7971
        %v8955 = vpop.f32.mrf.mxu0
        %v8956 = vadd.f32 %v8859, %v8955
        %v8957 = vpop.f32.mrf.mxu0
        %v8958 = vpop.f32.mrf.mxu0
        %v8959 = vadd.f32 %v8862, %v8958
        %v8960 = vpop.f32.mrf.mxu0
        %8961 = vmatprep.mubr.bf16.mxu0 0
        %8962 = vmatmul.mubr.bf16.gmra.mxu0 %v7980
        %v8963 = vpop.f32.mrf.mxu0
        %v8964 = vadd.f32 %v8867, %v8963
        %v8965 = vpop.f32.mrf.mxu0
        %v8966 = vpop.f32.mrf.mxu0
        %v8967 = vadd.f32 %v8870, %v8966
        %v8968 = vpop.f32.mrf.mxu0
        %8969 = vdwg.mxu0
        %v8970 = vadd.f32 %v7444, %v8908
        %v8971 = vadd.f32 %v7445, %v8911
        %v8972 = vadd.f32 %v7446, %v8916
        %v8973 = vadd.f32 %v7447, %v8919
        %v8974 = vadd.f32 %v7448, %v8924
        %v8975 = vadd.f32 %v7449, %v8927
        %v8976 = vadd.f32 %v7450, %v8932
        %v8977 = vadd.f32 %v7451, %v8935
        %v8978 = vadd.f32 %v7452, %v8940
        %v8979 = vadd.f32 %v7453, %v8943
        %v8980 = vadd.f32 %v7454, %v8948
        %v8981 = vadd.f32 %v7455, %v8951
        %v8982 = vadd.f32 %v7456, %v8956
        %v8983 = vadd.f32 %v7457, %v8959
        %v8984 = vadd.f32 %v7458, %v8964
        %v8985 = vadd.f32 %v7459, %v8967
        %8986 = vst [vmem:[#allocation4] sm:$0xff] %v8970
        %8987 = vst [vmem:[#allocation4 + $0x8] sm:$0xff] %v8971
        %8988 = vst [vmem:[#allocation4 + $0x10] sm:$0xff] %v8972
        %8989 = vst [vmem:[#allocation4 + $0x18] sm:$0xff] %v8973
        %8990 = vst [vmem:[#allocation4 + $0x20] sm:$0xff] %v8974
        %8991 = vst [vmem:[#allocation4 + $0x28] sm:$0xff] %v8975
        %8992 = vst [vmem:[#allocation4 + $0x30] sm:$0xff] %v8976
        %8993 = vst [vmem:[#allocation4 + $0x38] sm:$0xff] %v8977
        %8994 = vst [vmem:[#allocation4 + $0x40] sm:$0xff] %v8978
        %8995 = vst [vmem:[#allocation4 + $0x48] sm:$0xff] %v8979
        %8996 = vst [vmem:[#allocation4 + $0x50] sm:$0xff] %v8980
        %8997 = vst [vmem:[#allocation4 + $0x58] sm:$0xff] %v8981
        %8998 = vst [vmem:[#allocation4 + $0x60] sm:$0xff] %v8982
        %8999 = vst [vmem:[#allocation4 + $0x68] sm:$0xff] %v8983
        %9000 = vst [vmem:[#allocation4 + $0x70] sm:$0xff] %v8984
        %9001 = vst [vmem:[#allocation4 + $0x78] sm:$0xff] %v8985
        %s9002 = smul.u32 %s925, 10
        %s9003 = smul.addr %s9002, 4
        %s9004 = scalar_lea.vmem [#allocation2], %s9003
        %v9005 = vld [vmem:[%s9004 + $0x4] sm:$0x8]
        %v9006 = vld [vmem:[%s9004 + $0x8] sm:$0xf]
        %v9007 = vld [vmem:[%s9004 + $0xc] sm:$0x7]
        %v9008 = vld [vmem:[%s9004 + $0x2c] sm:$0x8]
        %v9009 = vld [vmem:[%s9004 + $0x30] sm:$0xf]
        %v9010 = vld [vmem:[%s9004 + $0x34] sm:$0x7]
        %v9011 = vld [vmem:[%s9004 + $0x54] sm:$0x8]
        %v9012 = vld [vmem:[%s9004 + $0x58] sm:$0xf]
        %v9013 = vld [vmem:[%s9004 + $0x5c] sm:$0x7]
        %v9014 = vld [vmem:[%s9004 + $0x7c] sm:$0x8]
        %v9015 = vld [vmem:[%s9004 + $0x80] sm:$0xf]
        %v9016 = vld [vmem:[%s9004 + $0x84] sm:$0x7]
        %v9017 = vld [vmem:[%s9004 + $0xa4] sm:$0x8]
        %v9018 = vld [vmem:[%s9004 + $0xa8] sm:$0xf]
        %v9019 = vld [vmem:[%s9004 + $0xac] sm:$0x7]
        %v9020 = vld [vmem:[%s9004 + $0xcc] sm:$0x8]
        %v9021 = vld [vmem:[%s9004 + $0xd0] sm:$0xf]
        %v9022 = vld [vmem:[%s9004 + $0xd4] sm:$0x7]
        %v9023 = vld [vmem:[%s9004 + $0xf4] sm:$0x8]
        %v9024 = vld [vmem:[%s9004 + $0xf8] sm:$0xf]
        %v9025 = vld [vmem:[%s9004 + $0xfc] sm:$0x7]
        %v9026 = vld [vmem:[%s9004 + $0x11c] sm:$0x8]
        %v9027 = vld [vmem:[%s9004 + $0x120] sm:$0xf]
        %v9028 = vld [vmem:[%s9004 + $0x124] sm:$0x7]
        %v9053 = vrot.slane %v9005, 7
        %v9054 = vrot.slane %v9053, 4
        %v9055 = vrot.slane %v9006, 7
        %v9056 = vsel %vm4262, %v9054, %v9055
        %v9057 = vrot.slane %v9055, 4
        %v9058 = vrot.slane %v9007, 7
        %v9059 = vsel %vm4262, %v9057, %v9058
        %v9060 = vrot.slane %v9008, 7
        %v9061 = vrot.slane %v9060, 4
        %v9062 = vrot.slane %v9009, 7
        %v9063 = vsel %vm4262, %v9061, %v9062
        %v9064 = vrot.slane %v9062, 4
        %v9065 = vrot.slane %v9010, 7
        %v9066 = vsel %vm4262, %v9064, %v9065
        %v9067 = vrot.slane %v9011, 7
        %v9068 = vrot.slane %v9067, 4
        %v9069 = vrot.slane %v9012, 7
        %v9070 = vsel %vm4262, %v9068, %v9069
        %v9071 = vrot.slane %v9069, 4
        %v9072 = vrot.slane %v9013, 7
        %v9073 = vsel %vm4262, %v9071, %v9072
        %v9074 = vrot.slane %v9014, 7
        %v9075 = vrot.slane %v9074, 4
        %v9076 = vrot.slane %v9015, 7
        %v9077 = vsel %vm4262, %v9075, %v9076
        %v9078 = vrot.slane %v9076, 4
        %v9079 = vrot.slane %v9016, 7
        %v9080 = vsel %vm4262, %v9078, %v9079
        %v9081 = vrot.slane %v9017, 7
        %v9082 = vrot.slane %v9081, 4
        %v9083 = vrot.slane %v9018, 7
        %v9084 = vsel %vm4262, %v9082, %v9083
        %v9085 = vrot.slane %v9083, 4
        %v9086 = vrot.slane %v9019, 7
        %v9087 = vsel %vm4262, %v9085, %v9086
        %v9088 = vrot.slane %v9020, 7
        %v9089 = vrot.slane %v9088, 4
        %v9090 = vrot.slane %v9021, 7
        %v9091 = vsel %vm4262, %v9089, %v9090
        %v9092 = vrot.slane %v9090, 4
        %v9093 = vrot.slane %v9022, 7
        %v9094 = vsel %vm4262, %v9092, %v9093
        %v9095 = vrot.slane %v9023, 7
        %v9096 = vrot.slane %v9095, 4
        %v9097 = vrot.slane %v9024, 7
        %v9098 = vsel %vm4262, %v9096, %v9097
        %v9099 = vrot.slane %v9097, 4
        %v9100 = vrot.slane %v9025, 7
        %v9101 = vsel %vm4262, %v9099, %v9100
        %v9102 = vrot.slane %v9026, 7
        %v9103 = vrot.slane %v9102, 4
        %v9104 = vrot.slane %v9027, 7
        %v9105 = vsel %vm4262, %v9103, %v9104
        %v9106 = vrot.slane %v9104, 4
        %v9107 = vrot.slane %v9028, 7
        %v9108 = vsel %vm4262, %v9106, %v9107
        %9125 = vst [vmem:[#allocation3] sm:$0xf] %v9056
        %9126 = vst [vmem:[#allocation3 + $0x24] sm:$0xf] %v9059
        %9127 = vst [vmem:[#allocation3 + $0x48] sm:$0xf] %v9063
        %9128 = vst [vmem:[#allocation3 + $0x6c] sm:$0xf] %v9066
        %9129 = vst [vmem:[#allocation3 + $0x90] sm:$0xf] %v9070
        %9130 = vst [vmem:[#allocation3 + $0xb4] sm:$0xf] %v9073
        %9131 = vst [vmem:[#allocation3 + $0xd8] sm:$0xf] %v9077
        %9132 = vst [vmem:[#allocation3 + $0xfc] sm:$0xf] %v9080
        %9133 = vst [vmem:[#allocation3 + $0x120] sm:$0xf] %v9084
        %9134 = vst [vmem:[#allocation3 + $0x144] sm:$0xf] %v9087
        %9135 = vst [vmem:[#allocation3 + $0x168] sm:$0xf] %v9091
        %9136 = vst [vmem:[#allocation3 + $0x18c] sm:$0xf] %v9094
        %9137 = vst [vmem:[#allocation3 + $0x1b0] sm:$0xf] %v9098
        %9138 = vst [vmem:[#allocation3 + $0x1d4] sm:$0xf] %v9101
        %9139 = vst [vmem:[#allocation3 + $0x1f8] sm:$0xf] %v9105
        %9140 = vst [vmem:[#allocation3 + $0x21c] sm:$0xf] %v9108
        %v9141 = vld [vmem:[%s9004 + $0x10] sm:$0xf]
        %v9142 = vld [vmem:[%s9004 + $0x14] sm:$0xf]
        %v9143 = vld [vmem:[%s9004 + $0x38] sm:$0xf]
        %v9144 = vld [vmem:[%s9004 + $0x3c] sm:$0xf]
        %v9145 = vld [vmem:[%s9004 + $0x60] sm:$0xf]
        %v9146 = vld [vmem:[%s9004 + $0x64] sm:$0xf]
        %v9147 = vld [vmem:[%s9004 + $0x88] sm:$0xf]
        %v9148 = vld [vmem:[%s9004 + $0x8c] sm:$0xf]
        %v9149 = vld [vmem:[%s9004 + $0xb0] sm:$0xf]
        %v9150 = vld [vmem:[%s9004 + $0xb4] sm:$0xf]
        %v9151 = vld [vmem:[%s9004 + $0xd8] sm:$0xf]
        %v9152 = vld [vmem:[%s9004 + $0xdc] sm:$0xf]
        %v9153 = vld [vmem:[%s9004 + $0x100] sm:$0xf]
        %v9154 = vld [vmem:[%s9004 + $0x104] sm:$0xf]
        %v9155 = vld [vmem:[%s9004 + $0x128] sm:$0xf]
        %v9156 = vld [vmem:[%s9004 + $0x12c] sm:$0xf]
        %9157 = vst [vmem:[#allocation3 + $0x4] sm:$0xf] %v9141
        %9158 = vst [vmem:[#allocation3 + $0x28] sm:$0xf] %v9142
        %9159 = vst [vmem:[#allocation3 + $0x4c] sm:$0xf] %v9143
        %9160 = vst [vmem:[#allocation3 + $0x70] sm:$0xf] %v9144
        %9161 = vst [vmem:[#allocation3 + $0x94] sm:$0xf] %v9145
        %9162 = vst [vmem:[#allocation3 + $0xb8] sm:$0xf] %v9146
        %9163 = vst [vmem:[#allocation3 + $0xdc] sm:$0xf] %v9147
        %9164 = vst [vmem:[#allocation3 + $0x100] sm:$0xf] %v9148
        %9165 = vst [vmem:[#allocation3 + $0x124] sm:$0xf] %v9149
        %9166 = vst [vmem:[#allocation3 + $0x148] sm:$0xf] %v9150
        %9167 = vst [vmem:[#allocation3 + $0x16c] sm:$0xf] %v9151
        %9168 = vst [vmem:[#allocation3 + $0x190] sm:$0xf] %v9152
        %9169 = vst [vmem:[#allocation3 + $0x1b4] sm:$0xf] %v9153
        %9170 = vst [vmem:[#allocation3 + $0x1d8] sm:$0xf] %v9154
        %9171 = vst [vmem:[#allocation3 + $0x1fc] sm:$0xf] %v9155
        %9172 = vst [vmem:[#allocation3 + $0x220] sm:$0xf] %v9156
        %v9173 = vld [vmem:[%s9004 + $0x18] sm:$0xe]
        %v9174 = vld [vmem:[%s9004 + $0x1c] sm:$0xf]
        %v9175 = vld [vmem:[%s9004 + $0x20] sm:$0x1]
        %v9176 = vld [vmem:[%s9004 + $0x40] sm:$0xe]
        %v9177 = vld [vmem:[%s9004 + $0x44] sm:$0xf]
        %v9178 = vld [vmem:[%s9004 + $0x48] sm:$0x1]
        %v9179 = vld [vmem:[%s9004 + $0x68] sm:$0xe]
        %v9180 = vld [vmem:[%s9004 + $0x6c] sm:$0xf]
        %v9181 = vld [vmem:[%s9004 + $0x70] sm:$0x1]
        %v9182 = vld [vmem:[%s9004 + $0x90] sm:$0xe]
        %v9183 = vld [vmem:[%s9004 + $0x94] sm:$0xf]
        %v9184 = vld [vmem:[%s9004 + $0x98] sm:$0x1]
        %v9185 = vld [vmem:[%s9004 + $0xb8] sm:$0xe]
        %v9186 = vld [vmem:[%s9004 + $0xbc] sm:$0xf]
        %v9187 = vld [vmem:[%s9004 + $0xc0] sm:$0x1]
        %v9188 = vld [vmem:[%s9004 + $0xe0] sm:$0xe]
        %v9189 = vld [vmem:[%s9004 + $0xe4] sm:$0xf]
        %v9190 = vld [vmem:[%s9004 + $0xe8] sm:$0x1]
        %v9191 = vld [vmem:[%s9004 + $0x108] sm:$0xe]
        %v9192 = vld [vmem:[%s9004 + $0x10c] sm:$0xf]
        %v9193 = vld [vmem:[%s9004 + $0x110] sm:$0x1]
        %v9194 = vld [vmem:[%s9004 + $0x130] sm:$0xe]
        %v9195 = vld [vmem:[%s9004 + $0x134] sm:$0xf]
        %v9196 = vld [vmem:[%s9004 + $0x138] sm:$0x1]
        %v9221 = vrot.slane %v9173, 5
        %v9222 = vrot.slane %v9221, 4
        %v9223 = vrot.slane %v9174, 5
        %v9224 = vsel %vm4091, %v9222, %v9223
        %v9225 = vrot.slane %v9223, 4
        %v9226 = vrot.slane %v9175, 5
        %v9227 = vsel %vm4091, %v9225, %v9226
        %v9228 = vrot.slane %v9176, 5
        %v9229 = vrot.slane %v9228, 4
        %v9230 = vrot.slane %v9177, 5
        %v9231 = vsel %vm4091, %v9229, %v9230
        %v9232 = vrot.slane %v9230, 4
        %v9233 = vrot.slane %v9178, 5
        %v9234 = vsel %vm4091, %v9232, %v9233
        %v9235 = vrot.slane %v9179, 5
        %v9236 = vrot.slane %v9235, 4
        %v9237 = vrot.slane %v9180, 5
        %v9238 = vsel %vm4091, %v9236, %v9237
        %v9239 = vrot.slane %v9237, 4
        %v9240 = vrot.slane %v9181, 5
        %v9241 = vsel %vm4091, %v9239, %v9240
        %v9242 = vrot.slane %v9182, 5
        %v9243 = vrot.slane %v9242, 4
        %v9244 = vrot.slane %v9183, 5
        %v9245 = vsel %vm4091, %v9243, %v9244
        %v9246 = vrot.slane %v9244, 4
        %v9247 = vrot.slane %v9184, 5
        %v9248 = vsel %vm4091, %v9246, %v9247
        %v9249 = vrot.slane %v9185, 5
        %v9250 = vrot.slane %v9249, 4
        %v9251 = vrot.slane %v9186, 5
        %v9252 = vsel %vm4091, %v9250, %v9251
        %v9253 = vrot.slane %v9251, 4
        %v9254 = vrot.slane %v9187, 5
        %v9255 = vsel %vm4091, %v9253, %v9254
        %v9256 = vrot.slane %v9188, 5
        %v9257 = vrot.slane %v9256, 4
        %v9258 = vrot.slane %v9189, 5
        %v9259 = vsel %vm4091, %v9257, %v9258
        %v9260 = vrot.slane %v9258, 4
        %v9261 = vrot.slane %v9190, 5
        %v9262 = vsel %vm4091, %v9260, %v9261
        %v9263 = vrot.slane %v9191, 5
        %v9264 = vrot.slane %v9263, 4
        %v9265 = vrot.slane %v9192, 5
        %v9266 = vsel %vm4091, %v9264, %v9265
        %v9267 = vrot.slane %v9265, 4
        %v9268 = vrot.slane %v9193, 5
        %v9269 = vsel %vm4091, %v9267, %v9268
        %v9270 = vrot.slane %v9194, 5
        %v9271 = vrot.slane %v9270, 4
        %v9272 = vrot.slane %v9195, 5
        %v9273 = vsel %vm4091, %v9271, %v9272
        %v9274 = vrot.slane %v9272, 4
        %v9275 = vrot.slane %v9196, 5
        %v9276 = vsel %vm4091, %v9274, %v9275
        %9293 = vst [vmem:[#allocation3 + $0x8] sm:$0xf] %v9224
        %9294 = vst [vmem:[#allocation3 + $0x2c] sm:$0xf] %v9227
        %9295 = vst [vmem:[#allocation3 + $0x50] sm:$0xf] %v9231
        %9296 = vst [vmem:[#allocation3 + $0x74] sm:$0xf] %v9234
        %9297 = vst [vmem:[#allocation3 + $0x98] sm:$0xf] %v9238
        %9298 = vst [vmem:[#allocation3 + $0xbc] sm:$0xf] %v9241
        %9299 = vst [vmem:[#allocation3 + $0xe0] sm:$0xf] %v9245
        %9300 = vst [vmem:[#allocation3 + $0x104] sm:$0xf] %v9248
        %9301 = vst [vmem:[#allocation3 + $0x128] sm:$0xf] %v9252
        %9302 = vst [vmem:[#allocation3 + $0x14c] sm:$0xf] %v9255
        %9303 = vst [vmem:[#allocation3 + $0x170] sm:$0xf] %v9259
        %9304 = vst [vmem:[#allocation3 + $0x194] sm:$0xf] %v9262
        %9305 = vst [vmem:[#allocation3 + $0x1b8] sm:$0xf] %v9266
        %9306 = vst [vmem:[#allocation3 + $0x1dc] sm:$0xf] %v9269
        %9307 = vst [vmem:[#allocation3 + $0x200] sm:$0xf] %v9273
        %9308 = vst [vmem:[#allocation3 + $0x224] sm:$0xf] %v9276
        %v9309 = vld [vmem:[%s1451 + $0x4] sm:$0x8]
        %v9310 = vld [vmem:[%s1451 + $0x8] sm:$0xf]
        %v9311 = vld [vmem:[%s1451 + $0xc] sm:$0x7]
        %v9312 = vld [vmem:[%s1451 + $0x2c] sm:$0x8]
        %v9313 = vld [vmem:[%s1451 + $0x30] sm:$0xf]
        %v9314 = vld [vmem:[%s1451 + $0x34] sm:$0x7]
        %v9315 = vld [vmem:[%s1451 + $0x54] sm:$0x8]
        %v9316 = vld [vmem:[%s1451 + $0x58] sm:$0xf]
        %v9317 = vld [vmem:[%s1451 + $0x5c] sm:$0x7]
        %v9318 = vld [vmem:[%s1451 + $0x7c] sm:$0x8]
        %v9319 = vld [vmem:[%s1451 + $0x80] sm:$0xf]
        %v9320 = vld [vmem:[%s1451 + $0x84] sm:$0x7]
        %v9321 = vld [vmem:[%s1451 + $0xa4] sm:$0x8]
        %v9322 = vld [vmem:[%s1451 + $0xa8] sm:$0xf]
        %v9323 = vld [vmem:[%s1451 + $0xac] sm:$0x7]
        %v9324 = vld [vmem:[%s1451 + $0xcc] sm:$0x8]
        %v9325 = vld [vmem:[%s1451 + $0xd0] sm:$0xf]
        %v9326 = vld [vmem:[%s1451 + $0xd4] sm:$0x7]
        %v9327 = vld [vmem:[%s1451 + $0xf4] sm:$0x8]
        %v9328 = vld [vmem:[%s1451 + $0xf8] sm:$0xf]
        %v9329 = vld [vmem:[%s1451 + $0xfc] sm:$0x7]
        %v9330 = vld [vmem:[%s1451 + $0x11c] sm:$0x8]
        %v9331 = vld [vmem:[%s1451 + $0x120] sm:$0xf]
        %v9332 = vld [vmem:[%s1451 + $0x124] sm:$0x7]
        %v9357 = vrot.slane %v9309, 7
        %v9358 = vrot.slane %v9357, 4
        %v9359 = vrot.slane %v9310, 7
        %v9360 = vsel %vm4262, %v9358, %v9359
        %v9361 = vrot.slane %v9359, 4
        %v9362 = vrot.slane %v9311, 7
        %v9363 = vsel %vm4262, %v9361, %v9362
        %v9364 = vrot.slane %v9312, 7
        %v9365 = vrot.slane %v9364, 4
        %v9366 = vrot.slane %v9313, 7
        %v9367 = vsel %vm4262, %v9365, %v9366
        %v9368 = vrot.slane %v9366, 4
        %v9369 = vrot.slane %v9314, 7
        %v9370 = vsel %vm4262, %v9368, %v9369
        %v9371 = vrot.slane %v9315, 7
        %v9372 = vrot.slane %v9371, 4
        %v9373 = vrot.slane %v9316, 7
        %v9374 = vsel %vm4262, %v9372, %v9373
        %v9375 = vrot.slane %v9373, 4
        %v9376 = vrot.slane %v9317, 7
        %v9377 = vsel %vm4262, %v9375, %v9376
        %v9378 = vrot.slane %v9318, 7
        %v9379 = vrot.slane %v9378, 4
        %v9380 = vrot.slane %v9319, 7
        %v9381 = vsel %vm4262, %v9379, %v9380
        %v9382 = vrot.slane %v9380, 4
        %v9383 = vrot.slane %v9320, 7
        %v9384 = vsel %vm4262, %v9382, %v9383
        %v9385 = vrot.slane %v9321, 7
        %v9386 = vrot.slane %v9385, 4
        %v9387 = vrot.slane %v9322, 7
        %v9388 = vsel %vm4262, %v9386, %v9387
        %v9389 = vrot.slane %v9387, 4
        %v9390 = vrot.slane %v9323, 7
        %v9391 = vsel %vm4262, %v9389, %v9390
        %v9392 = vrot.slane %v9324, 7
        %v9393 = vrot.slane %v9392, 4
        %v9394 = vrot.slane %v9325, 7
        %v9395 = vsel %vm4262, %v9393, %v9394
        %v9396 = vrot.slane %v9394, 4
        %v9397 = vrot.slane %v9326, 7
        %v9398 = vsel %vm4262, %v9396, %v9397
        %v9399 = vrot.slane %v9327, 7
        %v9400 = vrot.slane %v9399, 4
        %v9401 = vrot.slane %v9328, 7
        %v9402 = vsel %vm4262, %v9400, %v9401
        %v9403 = vrot.slane %v9401, 4
        %v9404 = vrot.slane %v9329, 7
        %v9405 = vsel %vm4262, %v9403, %v9404
        %v9406 = vrot.slane %v9330, 7
        %v9407 = vrot.slane %v9406, 4
        %v9408 = vrot.slane %v9331, 7
        %v9409 = vsel %vm4262, %v9407, %v9408
        %v9410 = vrot.slane %v9408, 4
        %v9411 = vrot.slane %v9332, 7
        %v9412 = vsel %vm4262, %v9410, %v9411
        %9429 = vst [vmem:[#allocation3 + $0xc] sm:$0xf] %v9360
        %9430 = vst [vmem:[#allocation3 + $0x30] sm:$0xf] %v9363
        %9431 = vst [vmem:[#allocation3 + $0x54] sm:$0xf] %v9367
        %9432 = vst [vmem:[#allocation3 + $0x78] sm:$0xf] %v9370
        %9433 = vst [vmem:[#allocation3 + $0x9c] sm:$0xf] %v9374
        %9434 = vst [vmem:[#allocation3 + $0xc0] sm:$0xf] %v9377
        %9435 = vst [vmem:[#allocation3 + $0xe4] sm:$0xf] %v9381
        %9436 = vst [vmem:[#allocation3 + $0x108] sm:$0xf] %v9384
        %9437 = vst [vmem:[#allocation3 + $0x12c] sm:$0xf] %v9388
        %9438 = vst [vmem:[#allocation3 + $0x150] sm:$0xf] %v9391
        %9439 = vst [vmem:[#allocation3 + $0x174] sm:$0xf] %v9395
        %9440 = vst [vmem:[#allocation3 + $0x198] sm:$0xf] %v9398
        %9441 = vst [vmem:[#allocation3 + $0x1bc] sm:$0xf] %v9402
        %9442 = vst [vmem:[#allocation3 + $0x1e0] sm:$0xf] %v9405
        %9443 = vst [vmem:[#allocation3 + $0x204] sm:$0xf] %v9409
        %9444 = vst [vmem:[#allocation3 + $0x228] sm:$0xf] %v9412
        %v9445 = vld [vmem:[%s1451 + $0x10] sm:$0xf]
        %v9446 = vld [vmem:[%s1451 + $0x14] sm:$0xf]
        %v9447 = vld [vmem:[%s1451 + $0x38] sm:$0xf]
        %v9448 = vld [vmem:[%s1451 + $0x3c] sm:$0xf]
        %v9449 = vld [vmem:[%s1451 + $0x60] sm:$0xf]
        %v9450 = vld [vmem:[%s1451 + $0x64] sm:$0xf]
        %v9451 = vld [vmem:[%s1451 + $0x88] sm:$0xf]
        %v9452 = vld [vmem:[%s1451 + $0x8c] sm:$0xf]
        %v9453 = vld [vmem:[%s1451 + $0xb0] sm:$0xf]
        %v9454 = vld [vmem:[%s1451 + $0xb4] sm:$0xf]
        %v9455 = vld [vmem:[%s1451 + $0xd8] sm:$0xf]
        %v9456 = vld [vmem:[%s1451 + $0xdc] sm:$0xf]
        %v9457 = vld [vmem:[%s1451 + $0x100] sm:$0xf]
        %v9458 = vld [vmem:[%s1451 + $0x104] sm:$0xf]
        %v9459 = vld [vmem:[%s1451 + $0x128] sm:$0xf]
        %v9460 = vld [vmem:[%s1451 + $0x12c] sm:$0xf]
        %9461 = vst [vmem:[#allocation3 + $0x10] sm:$0xf] %v9445
        %9462 = vst [vmem:[#allocation3 + $0x34] sm:$0xf] %v9446
        %9463 = vst [vmem:[#allocation3 + $0x58] sm:$0xf] %v9447
        %9464 = vst [vmem:[#allocation3 + $0x7c] sm:$0xf] %v9448
        %9465 = vst [vmem:[#allocation3 + $0xa0] sm:$0xf] %v9449
        %9466 = vst [vmem:[#allocation3 + $0xc4] sm:$0xf] %v9450
        %9467 = vst [vmem:[#allocation3 + $0xe8] sm:$0xf] %v9451
        %9468 = vst [vmem:[#allocation3 + $0x10c] sm:$0xf] %v9452
        %9469 = vst [vmem:[#allocation3 + $0x130] sm:$0xf] %v9453
        %9470 = vst [vmem:[#allocation3 + $0x154] sm:$0xf] %v9454
        %9471 = vst [vmem:[#allocation3 + $0x178] sm:$0xf] %v9455
        %9472 = vst [vmem:[#allocation3 + $0x19c] sm:$0xf] %v9456
        %9473 = vst [vmem:[#allocation3 + $0x1c0] sm:$0xf] %v9457
        %9474 = vst [vmem:[#allocation3 + $0x1e4] sm:$0xf] %v9458
        %9475 = vst [vmem:[#allocation3 + $0x208] sm:$0xf] %v9459
        %9476 = vst [vmem:[#allocation3 + $0x22c] sm:$0xf] %v9460
        %v9477 = vld [vmem:[%s1451 + $0x18] sm:$0xe]
        %v9478 = vld [vmem:[%s1451 + $0x1c] sm:$0xf]
        %v9479 = vld [vmem:[%s1451 + $0x20] sm:$0x1]
        %v9480 = vld [vmem:[%s1451 + $0x40] sm:$0xe]
        %v9481 = vld [vmem:[%s1451 + $0x44] sm:$0xf]
        %v9482 = vld [vmem:[%s1451 + $0x48] sm:$0x1]
        %v9483 = vld [vmem:[%s1451 + $0x68] sm:$0xe]
        %v9484 = vld [vmem:[%s1451 + $0x6c] sm:$0xf]
        %v9485 = vld [vmem:[%s1451 + $0x70] sm:$0x1]
        %v9486 = vld [vmem:[%s1451 + $0x90] sm:$0xe]
        %v9487 = vld [vmem:[%s1451 + $0x94] sm:$0xf]
        %v9488 = vld [vmem:[%s1451 + $0x98] sm:$0x1]
        %v9489 = vld [vmem:[%s1451 + $0xb8] sm:$0xe]
        %v9490 = vld [vmem:[%s1451 + $0xbc] sm:$0xf]
        %v9491 = vld [vmem:[%s1451 + $0xc0] sm:$0x1]
        %v9492 = vld [vmem:[%s1451 + $0xe0] sm:$0xe]
        %v9493 = vld [vmem:[%s1451 + $0xe4] sm:$0xf]
        %v9494 = vld [vmem:[%s1451 + $0xe8] sm:$0x1]
        %v9495 = vld [vmem:[%s1451 + $0x108] sm:$0xe]
        %v9496 = vld [vmem:[%s1451 + $0x10c] sm:$0xf]
        %v9497 = vld [vmem:[%s1451 + $0x110] sm:$0x1]
        %v9498 = vld [vmem:[%s1451 + $0x130] sm:$0xe]
        %v9499 = vld [vmem:[%s1451 + $0x134] sm:$0xf]
        %v9500 = vld [vmem:[%s1451 + $0x138] sm:$0x1]
        %v9525 = vrot.slane %v9477, 5
        %v9526 = vrot.slane %v9525, 4
        %v9527 = vrot.slane %v9478, 5
        %v9528 = vsel %vm4091, %v9526, %v9527
        %v9529 = vrot.slane %v9527, 4
        %v9530 = vrot.slane %v9479, 5
        %v9531 = vsel %vm4091, %v9529, %v9530
        %v9532 = vrot.slane %v9480, 5
        %v9533 = vrot.slane %v9532, 4
        %v9534 = vrot.slane %v9481, 5
        %v9535 = vsel %vm4091, %v9533, %v9534
        %v9536 = vrot.slane %v9534, 4
        %v9537 = vrot.slane %v9482, 5
        %v9538 = vsel %vm4091, %v9536, %v9537
        %v9539 = vrot.slane %v9483, 5
        %v9540 = vrot.slane %v9539, 4
        %v9541 = vrot.slane %v9484, 5
        %v9542 = vsel %vm4091, %v9540, %v9541
        %v9543 = vrot.slane %v9541, 4
        %v9544 = vrot.slane %v9485, 5
        %v9545 = vsel %vm4091, %v9543, %v9544
        %v9546 = vrot.slane %v9486, 5
        %v9547 = vrot.slane %v9546, 4
        %v9548 = vrot.slane %v9487, 5
        %v9549 = vsel %vm4091, %v9547, %v9548
        %v9550 = vrot.slane %v9548, 4
        %v9551 = vrot.slane %v9488, 5
        %v9552 = vsel %vm4091, %v9550, %v9551
        %v9553 = vrot.slane %v9489, 5
        %v9554 = vrot.slane %v9553, 4
        %v9555 = vrot.slane %v9490, 5
        %v9556 = vsel %vm4091, %v9554, %v9555
        %v9557 = vrot.slane %v9555, 4
        %v9558 = vrot.slane %v9491, 5
        %v9559 = vsel %vm4091, %v9557, %v9558
        %v9560 = vrot.slane %v9492, 5
        %v9561 = vrot.slane %v9560, 4
        %v9562 = vrot.slane %v9493, 5
        %v9563 = vsel %vm4091, %v9561, %v9562
        %v9564 = vrot.slane %v9562, 4
        %v9565 = vrot.slane %v9494, 5
        %v9566 = vsel %vm4091, %v9564, %v9565
        %v9567 = vrot.slane %v9495, 5
        %v9568 = vrot.slane %v9567, 4
        %v9569 = vrot.slane %v9496, 5
        %v9570 = vsel %vm4091, %v9568, %v9569
        %v9571 = vrot.slane %v9569, 4
        %v9572 = vrot.slane %v9497, 5
        %v9573 = vsel %vm4091, %v9571, %v9572
        %v9574 = vrot.slane %v9498, 5
        %v9575 = vrot.slane %v9574, 4
        %v9576 = vrot.slane %v9499, 5
        %v9577 = vsel %vm4091, %v9575, %v9576
        %v9578 = vrot.slane %v9576, 4
        %v9579 = vrot.slane %v9500, 5
        %v9580 = vsel %vm4091, %v9578, %v9579
        %9597 = vst [vmem:[#allocation3 + $0x14] sm:$0xf] %v9528
        %9598 = vst [vmem:[#allocation3 + $0x38] sm:$0xf] %v9531
        %9599 = vst [vmem:[#allocation3 + $0x5c] sm:$0xf] %v9535
        %9600 = vst [vmem:[#allocation3 + $0x80] sm:$0xf] %v9538
        %9601 = vst [vmem:[#allocation3 + $0xa4] sm:$0xf] %v9542
        %9602 = vst [vmem:[#allocation3 + $0xc8] sm:$0xf] %v9545
        %9603 = vst [vmem:[#allocation3 + $0xec] sm:$0xf] %v9549
        %9604 = vst [vmem:[#allocation3 + $0x110] sm:$0xf] %v9552
        %9605 = vst [vmem:[#allocation3 + $0x134] sm:$0xf] %v9556
        %9606 = vst [vmem:[#allocation3 + $0x158] sm:$0xf] %v9559
        %9607 = vst [vmem:[#allocation3 + $0x17c] sm:$0xf] %v9563
        %9608 = vst [vmem:[#allocation3 + $0x1a0] sm:$0xf] %v9566
        %9609 = vst [vmem:[#allocation3 + $0x1c4] sm:$0xf] %v9570
        %9610 = vst [vmem:[#allocation3 + $0x1e8] sm:$0xf] %v9573
        %9611 = vst [vmem:[#allocation3 + $0x20c] sm:$0xf] %v9577
        %9612 = vst [vmem:[#allocation3 + $0x230] sm:$0xf] %v9580
        %s9613 = sadd.s32 %s925, 36
        %s9614 = smul.u32 %s9613, 10
        %s9615 = smul.addr %s9614, 4
        %s9616 = scalar_lea.vmem [#allocation2], %s9615
        %v9617 = vld [vmem:[%s9616 + $0x4] sm:$0x8]
        %v9618 = vld [vmem:[%s9616 + $0x8] sm:$0xf]
        %v9619 = vld [vmem:[%s9616 + $0xc] sm:$0x7]
        %v9620 = vld [vmem:[%s9616 + $0x2c] sm:$0x8]
        %v9621 = vld [vmem:[%s9616 + $0x30] sm:$0xf]
        %v9622 = vld [vmem:[%s9616 + $0x34] sm:$0x7]
        %v9623 = vld [vmem:[%s9616 + $0x54] sm:$0x8]
        %v9624 = vld [vmem:[%s9616 + $0x58] sm:$0xf]
        %v9625 = vld [vmem:[%s9616 + $0x5c] sm:$0x7]
        %v9626 = vld [vmem:[%s9616 + $0x7c] sm:$0x8]
        %v9627 = vld [vmem:[%s9616 + $0x80] sm:$0xf]
        %v9628 = vld [vmem:[%s9616 + $0x84] sm:$0x7]
        %v9629 = vld [vmem:[%s9616 + $0xa4] sm:$0x8]
        %v9630 = vld [vmem:[%s9616 + $0xa8] sm:$0xf]
        %v9631 = vld [vmem:[%s9616 + $0xac] sm:$0x7]
        %v9632 = vld [vmem:[%s9616 + $0xcc] sm:$0x8]
        %v9633 = vld [vmem:[%s9616 + $0xd0] sm:$0xf]
        %v9634 = vld [vmem:[%s9616 + $0xd4] sm:$0x7]
        %v9635 = vld [vmem:[%s9616 + $0xf4] sm:$0x8]
        %v9636 = vld [vmem:[%s9616 + $0xf8] sm:$0xf]
        %v9637 = vld [vmem:[%s9616 + $0xfc] sm:$0x7]
        %v9638 = vld [vmem:[%s9616 + $0x11c] sm:$0x8]
        %v9639 = vld [vmem:[%s9616 + $0x120] sm:$0xf]
        %v9640 = vld [vmem:[%s9616 + $0x124] sm:$0x7]
        %v9665 = vrot.slane %v9617, 7
        %v9666 = vrot.slane %v9665, 4
        %v9667 = vrot.slane %v9618, 7
        %v9668 = vsel %vm4262, %v9666, %v9667
        %v9669 = vrot.slane %v9667, 4
        %v9670 = vrot.slane %v9619, 7
        %v9671 = vsel %vm4262, %v9669, %v9670
        %v9672 = vrot.slane %v9620, 7
        %v9673 = vrot.slane %v9672, 4
        %v9674 = vrot.slane %v9621, 7
        %v9675 = vsel %vm4262, %v9673, %v9674
        %v9676 = vrot.slane %v9674, 4
        %v9677 = vrot.slane %v9622, 7
        %v9678 = vsel %vm4262, %v9676, %v9677
        %v9679 = vrot.slane %v9623, 7
        %v9680 = vrot.slane %v9679, 4
        %v9681 = vrot.slane %v9624, 7
        %v9682 = vsel %vm4262, %v9680, %v9681
        %v9683 = vrot.slane %v9681, 4
        %v9684 = vrot.slane %v9625, 7
        %v9685 = vsel %vm4262, %v9683, %v9684
        %v9686 = vrot.slane %v9626, 7
        %v9687 = vrot.slane %v9686, 4
        %v9688 = vrot.slane %v9627, 7
        %v9689 = vsel %vm4262, %v9687, %v9688
        %v9690 = vrot.slane %v9688, 4
        %v9691 = vrot.slane %v9628, 7
        %v9692 = vsel %vm4262, %v9690, %v9691
        %v9693 = vrot.slane %v9629, 7
        %v9694 = vrot.slane %v9693, 4
        %v9695 = vrot.slane %v9630, 7
        %v9696 = vsel %vm4262, %v9694, %v9695
        %v9697 = vrot.slane %v9695, 4
        %v9698 = vrot.slane %v9631, 7
        %v9699 = vsel %vm4262, %v9697, %v9698
        %v9700 = vrot.slane %v9632, 7
        %v9701 = vrot.slane %v9700, 4
        %v9702 = vrot.slane %v9633, 7
        %v9703 = vsel %vm4262, %v9701, %v9702
        %v9704 = vrot.slane %v9702, 4
        %v9705 = vrot.slane %v9634, 7
        %v9706 = vsel %vm4262, %v9704, %v9705
        %v9707 = vrot.slane %v9635, 7
        %v9708 = vrot.slane %v9707, 4
        %v9709 = vrot.slane %v9636, 7
        %v9710 = vsel %vm4262, %v9708, %v9709
        %v9711 = vrot.slane %v9709, 4
        %v9712 = vrot.slane %v9637, 7
        %v9713 = vsel %vm4262, %v9711, %v9712
        %v9714 = vrot.slane %v9638, 7
        %v9715 = vrot.slane %v9714, 4
        %v9716 = vrot.slane %v9639, 7
        %v9717 = vsel %vm4262, %v9715, %v9716
        %v9718 = vrot.slane %v9716, 4
        %v9719 = vrot.slane %v9640, 7
        %v9720 = vsel %vm4262, %v9718, %v9719
        %9737 = vst [vmem:[#allocation3 + $0x18] sm:$0xf] %v9668
        %9738 = vst [vmem:[#allocation3 + $0x3c] sm:$0xf] %v9671
        %9739 = vst [vmem:[#allocation3 + $0x60] sm:$0xf] %v9675
        %9740 = vst [vmem:[#allocation3 + $0x84] sm:$0xf] %v9678
        %9741 = vst [vmem:[#allocation3 + $0xa8] sm:$0xf] %v9682
        %9742 = vst [vmem:[#allocation3 + $0xcc] sm:$0xf] %v9685
        %9743 = vst [vmem:[#allocation3 + $0xf0] sm:$0xf] %v9689
        %9744 = vst [vmem:[#allocation3 + $0x114] sm:$0xf] %v9692
        %9745 = vst [vmem:[#allocation3 + $0x138] sm:$0xf] %v9696
        %9746 = vst [vmem:[#allocation3 + $0x15c] sm:$0xf] %v9699
        %9747 = vst [vmem:[#allocation3 + $0x180] sm:$0xf] %v9703
        %9748 = vst [vmem:[#allocation3 + $0x1a4] sm:$0xf] %v9706
        %9749 = vst [vmem:[#allocation3 + $0x1c8] sm:$0xf] %v9710
        %9750 = vst [vmem:[#allocation3 + $0x1ec] sm:$0xf] %v9713
        %9751 = vst [vmem:[#allocation3 + $0x210] sm:$0xf] %v9717
        %9752 = vst [vmem:[#allocation3 + $0x234] sm:$0xf] %v9720
        %v9753 = vld [vmem:[%s9616 + $0x10] sm:$0xf]
        %v9754 = vld [vmem:[%s9616 + $0x14] sm:$0xf]
        %v9755 = vld [vmem:[%s9616 + $0x38] sm:$0xf]
        %v9756 = vld [vmem:[%s9616 + $0x3c] sm:$0xf]
        %v9757 = vld [vmem:[%s9616 + $0x60] sm:$0xf]
        %v9758 = vld [vmem:[%s9616 + $0x64] sm:$0xf]
        %v9759 = vld [vmem:[%s9616 + $0x88] sm:$0xf]
        %v9760 = vld [vmem:[%s9616 + $0x8c] sm:$0xf]
        %v9761 = vld [vmem:[%s9616 + $0xb0] sm:$0xf]
        %v9762 = vld [vmem:[%s9616 + $0xb4] sm:$0xf]
        %v9763 = vld [vmem:[%s9616 + $0xd8] sm:$0xf]
        %v9764 = vld [vmem:[%s9616 + $0xdc] sm:$0xf]
        %v9765 = vld [vmem:[%s9616 + $0x100] sm:$0xf]
        %v9766 = vld [vmem:[%s9616 + $0x104] sm:$0xf]
        %v9767 = vld [vmem:[%s9616 + $0x128] sm:$0xf]
        %v9768 = vld [vmem:[%s9616 + $0x12c] sm:$0xf]
        %9769 = vst [vmem:[#allocation3 + $0x1c] sm:$0xf] %v9753
        %9770 = vst [vmem:[#allocation3 + $0x40] sm:$0xf] %v9754
        %9771 = vst [vmem:[#allocation3 + $0x64] sm:$0xf] %v9755
        %9772 = vst [vmem:[#allocation3 + $0x88] sm:$0xf] %v9756
        %9773 = vst [vmem:[#allocation3 + $0xac] sm:$0xf] %v9757
        %9774 = vst [vmem:[#allocation3 + $0xd0] sm:$0xf] %v9758
        %9775 = vst [vmem:[#allocation3 + $0xf4] sm:$0xf] %v9759
        %9776 = vst [vmem:[#allocation3 + $0x118] sm:$0xf] %v9760
        %9777 = vst [vmem:[#allocation3 + $0x13c] sm:$0xf] %v9761
        %9778 = vst [vmem:[#allocation3 + $0x160] sm:$0xf] %v9762
        %9779 = vst [vmem:[#allocation3 + $0x184] sm:$0xf] %v9763
        %9780 = vst [vmem:[#allocation3 + $0x1a8] sm:$0xf] %v9764
        %9781 = vst [vmem:[#allocation3 + $0x1cc] sm:$0xf] %v9765
        %9782 = vst [vmem:[#allocation3 + $0x1f0] sm:$0xf] %v9766
        %9783 = vst [vmem:[#allocation3 + $0x214] sm:$0xf] %v9767
        %9784 = vst [vmem:[#allocation3 + $0x238] sm:$0xf] %v9768
        %v9785 = vld [vmem:[%s9616 + $0x18] sm:$0xe]
        %v9786 = vld [vmem:[%s9616 + $0x1c] sm:$0xf]
        %v9787 = vld [vmem:[%s9616 + $0x20] sm:$0x1]
        %v9788 = vld [vmem:[%s9616 + $0x40] sm:$0xe]
        %v9789 = vld [vmem:[%s9616 + $0x44] sm:$0xf]
        %v9790 = vld [vmem:[%s9616 + $0x48] sm:$0x1]
        %v9791 = vld [vmem:[%s9616 + $0x68] sm:$0xe]
        %v9792 = vld [vmem:[%s9616 + $0x6c] sm:$0xf]
        %v9793 = vld [vmem:[%s9616 + $0x70] sm:$0x1]
        %v9794 = vld [vmem:[%s9616 + $0x90] sm:$0xe]
        %v9795 = vld [vmem:[%s9616 + $0x94] sm:$0xf]
        %v9796 = vld [vmem:[%s9616 + $0x98] sm:$0x1]
        %v9797 = vld [vmem:[%s9616 + $0xb8] sm:$0xe]
        %v9798 = vld [vmem:[%s9616 + $0xbc] sm:$0xf]
        %v9799 = vld [vmem:[%s9616 + $0xc0] sm:$0x1]
        %v9800 = vld [vmem:[%s9616 + $0xe0] sm:$0xe]
        %v9801 = vld [vmem:[%s9616 + $0xe4] sm:$0xf]
        %v9802 = vld [vmem:[%s9616 + $0xe8] sm:$0x1]
        %v9803 = vld [vmem:[%s9616 + $0x108] sm:$0xe]
        %v9804 = vld [vmem:[%s9616 + $0x10c] sm:$0xf]
        %v9805 = vld [vmem:[%s9616 + $0x110] sm:$0x1]
        %v9806 = vld [vmem:[%s9616 + $0x130] sm:$0xe]
        %v9807 = vld [vmem:[%s9616 + $0x134] sm:$0xf]
        %v9808 = vld [vmem:[%s9616 + $0x138] sm:$0x1]
        %v9833 = vrot.slane %v9785, 5
        %v9834 = vrot.slane %v9833, 4
        %v9835 = vrot.slane %v9786, 5
        %v9836 = vsel %vm4091, %v9834, %v9835
        %v9837 = vrot.slane %v9835, 4
        %v9838 = vrot.slane %v9787, 5
        %v9839 = vsel %vm4091, %v9837, %v9838
        %v9840 = vrot.slane %v9788, 5
        %v9841 = vrot.slane %v9840, 4
        %v9842 = vrot.slane %v9789, 5
        %v9843 = vsel %vm4091, %v9841, %v9842
        %v9844 = vrot.slane %v9842, 4
        %v9845 = vrot.slane %v9790, 5
        %v9846 = vsel %vm4091, %v9844, %v9845
        %v9847 = vrot.slane %v9791, 5
        %v9848 = vrot.slane %v9847, 4
        %v9849 = vrot.slane %v9792, 5
        %v9850 = vsel %vm4091, %v9848, %v9849
        %v9851 = vrot.slane %v9849, 4
        %v9852 = vrot.slane %v9793, 5
        %v9853 = vsel %vm4091, %v9851, %v9852
        %v9854 = vrot.slane %v9794, 5
        %v9855 = vrot.slane %v9854, 4
        %v9856 = vrot.slane %v9795, 5
        %v9857 = vsel %vm4091, %v9855, %v9856
        %v9858 = vrot.slane %v9856, 4
        %v9859 = vrot.slane %v9796, 5
        %v9860 = vsel %vm4091, %v9858, %v9859
        %v9861 = vrot.slane %v9797, 5
        %v9862 = vrot.slane %v9861, 4
        %v9863 = vrot.slane %v9798, 5
        %v9864 = vsel %vm4091, %v9862, %v9863
        %v9865 = vrot.slane %v9863, 4
        %v9866 = vrot.slane %v9799, 5
        %v9867 = vsel %vm4091, %v9865, %v9866
        %v9868 = vrot.slane %v9800, 5
        %v9869 = vrot.slane %v9868, 4
        %v9870 = vrot.slane %v9801, 5
        %v9871 = vsel %vm4091, %v9869, %v9870
        %v9872 = vrot.slane %v9870, 4
        %v9873 = vrot.slane %v9802, 5
        %v9874 = vsel %vm4091, %v9872, %v9873
        %v9875 = vrot.slane %v9803, 5
        %v9876 = vrot.slane %v9875, 4
        %v9877 = vrot.slane %v9804, 5
        %v9878 = vsel %vm4091, %v9876, %v9877
        %v9879 = vrot.slane %v9877, 4
        %v9880 = vrot.slane %v9805, 5
        %v9881 = vsel %vm4091, %v9879, %v9880
        %v9882 = vrot.slane %v9806, 5
        %v9883 = vrot.slane %v9882, 4
        %v9884 = vrot.slane %v9807, 5
        %v9885 = vsel %vm4091, %v9883, %v9884
        %v9886 = vrot.slane %v9884, 4
        %v9887 = vrot.slane %v9808, 5
        %v9888 = vsel %vm4091, %v9886, %v9887
        %9905 = vst [vmem:[#allocation3 + $0x20] sm:$0xf] %v9836
        %9906 = vst [vmem:[#allocation3 + $0x44] sm:$0xf] %v9839
        %9907 = vst [vmem:[#allocation3 + $0x68] sm:$0xf] %v9843
        %9908 = vst [vmem:[#allocation3 + $0x8c] sm:$0xf] %v9846
        %9909 = vst [vmem:[#allocation3 + $0xb0] sm:$0xf] %v9850
        %9910 = vst [vmem:[#allocation3 + $0xd4] sm:$0xf] %v9853
        %9911 = vst [vmem:[#allocation3 + $0xf8] sm:$0xf] %v9857
        %9912 = vst [vmem:[#allocation3 + $0x11c] sm:$0xf] %v9860
        %9913 = vst [vmem:[#allocation3 + $0x140] sm:$0xf] %v9864
        %9914 = vst [vmem:[#allocation3 + $0x164] sm:$0xf] %v9867
        %9915 = vst [vmem:[#allocation3 + $0x188] sm:$0xf] %v9871
        %9916 = vst [vmem:[#allocation3 + $0x1ac] sm:$0xf] %v9874
        %9917 = vst [vmem:[#allocation3 + $0x1d0] sm:$0xf] %v9878
        %9918 = vst [vmem:[#allocation3 + $0x1f4] sm:$0xf] %v9881
        %9919 = vst [vmem:[#allocation3 + $0x218] sm:$0xf] %v9885
        %9920 = vst [vmem:[#allocation3 + $0x23c] sm:$0xf] %v9888
        %v9921 = vld [vmem:[#allocation4] sm:$0xff]
        %v9922 = vld [vmem:[#allocation4 + $0x8] sm:$0xff]
        %v9923 = vld [vmem:[#allocation4 + $0x10] sm:$0xff]
        %v9924 = vld [vmem:[#allocation4 + $0x18] sm:$0xff]
        %v9925 = vld [vmem:[#allocation4 + $0x20] sm:$0xff]
        %v9926 = vld [vmem:[#allocation4 + $0x28] sm:$0xff]
        %v9927 = vld [vmem:[#allocation4 + $0x30] sm:$0xff]
        %v9928 = vld [vmem:[#allocation4 + $0x38] sm:$0xff]
        %v9929 = vld [vmem:[#allocation4 + $0x40] sm:$0xff]
        %v9930 = vld [vmem:[#allocation4 + $0x48] sm:$0xff]
        %v9931 = vld [vmem:[#allocation4 + $0x50] sm:$0xff]
        %v9932 = vld [vmem:[#allocation4 + $0x58] sm:$0xff]
        %v9933 = vld [vmem:[#allocation4 + $0x60] sm:$0xff]
        %v9934 = vld [vmem:[#allocation4 + $0x68] sm:$0xff]
        %v9935 = vld [vmem:[#allocation4 + $0x70] sm:$0xff]
        %v9936 = vld [vmem:[#allocation4 + $0x78] sm:$0xff]
        %v9937 = vld [vmem:[#allocation3] sm:$0xff]
        %v9938 = vld [vmem:[#allocation3 + $0x8] sm:$0xff]
        %v9939 = vld [vmem:[#allocation3 + $0x10] sm:$0xff]
        %v9940 = vld [vmem:[#allocation3 + $0x18] sm:$0xff]
        %v9941 = vld [vmem:[#allocation3 + $0x20] sm:$0xf]
        %v9942 = vld [vmem:[#allocation3 + $0x24] sm:$0xff]
        %v9943 = vld [vmem:[#allocation3 + $0x2c] sm:$0xff]
        %v9944 = vld [vmem:[#allocation3 + $0x34] sm:$0xff]
        %v9945 = vld [vmem:[#allocation3 + $0x3c] sm:$0xff]
        %v9946 = vld [vmem:[#allocation3 + $0x44] sm:$0xf]
        %v9947 = vld [vmem:[#allocation3 + $0x48] sm:$0xff]
        %v9948 = vld [vmem:[#allocation3 + $0x50] sm:$0xff]
        %v9949 = vld [vmem:[#allocation3 + $0x58] sm:$0xff]
        %v9950 = vld [vmem:[#allocation3 + $0x60] sm:$0xff]
        %v9951 = vld [vmem:[#allocation3 + $0x68] sm:$0xf]
        %v9952 = vld [vmem:[#allocation3 + $0x6c] sm:$0xff]
        %v9953 = vld [vmem:[#allocation3 + $0x74] sm:$0xff]
        %v9954 = vld [vmem:[#allocation3 + $0x7c] sm:$0xff]
        %v9955 = vld [vmem:[#allocation3 + $0x84] sm:$0xff]
        %v9956 = vld [vmem:[#allocation3 + $0x8c] sm:$0xf]
        %v9957 = vld [vmem:[#allocation3 + $0x90] sm:$0xff]
        %v9958 = vld [vmem:[#allocation3 + $0x98] sm:$0xff]
        %v9959 = vld [vmem:[#allocation3 + $0xa0] sm:$0xff]
        %v9960 = vld [vmem:[#allocation3 + $0xa8] sm:$0xff]
        %v9961 = vld [vmem:[#allocation3 + $0xb0] sm:$0xf]
        %v9962 = vld [vmem:[#allocation3 + $0xb4] sm:$0xff]
        %v9963 = vld [vmem:[#allocation3 + $0xbc] sm:$0xff]
        %v9964 = vld [vmem:[#allocation3 + $0xc4] sm:$0xff]
        %v9965 = vld [vmem:[#allocation3 + $0xcc] sm:$0xff]
        %v9966 = vld [vmem:[#allocation3 + $0xd4] sm:$0xf]
        %v9967 = vld [vmem:[#allocation3 + $0xd8] sm:$0xff]
        %v9968 = vld [vmem:[#allocation3 + $0xe0] sm:$0xff]
        %v9969 = vld [vmem:[#allocation3 + $0xe8] sm:$0xff]
        %v9970 = vld [vmem:[#allocation3 + $0xf0] sm:$0xff]
        %v9971 = vld [vmem:[#allocation3 + $0xf8] sm:$0xf]
        %v9972 = vld [vmem:[#allocation3 + $0xfc] sm:$0xff]
        %v9973 = vld [vmem:[#allocation3 + $0x104] sm:$0xff]
        %v9974 = vld [vmem:[#allocation3 + $0x10c] sm:$0xff]
        %v9975 = vld [vmem:[#allocation3 + $0x114] sm:$0xff]
        %v9976 = vld [vmem:[#allocation3 + $0x11c] sm:$0xf]
        %v9977 = vld [vmem:[#allocation3 + $0x120] sm:$0xff]
        %v9978 = vld [vmem:[#allocation3 + $0x128] sm:$0xff]
        %v9979 = vld [vmem:[#allocation3 + $0x130] sm:$0xff]
        %v9980 = vld [vmem:[#allocation3 + $0x138] sm:$0xff]
        %v9981 = vld [vmem:[#allocation3 + $0x140] sm:$0xf]
        %v9982 = vld [vmem:[#allocation3 + $0x144] sm:$0xff]
        %v9983 = vld [vmem:[#allocation3 + $0x14c] sm:$0xff]
        %v9984 = vld [vmem:[#allocation3 + $0x154] sm:$0xff]
        %v9985 = vld [vmem:[#allocation3 + $0x15c] sm:$0xff]
        %v9986 = vld [vmem:[#allocation3 + $0x164] sm:$0xf]
        %v9987 = vld [vmem:[#allocation3 + $0x168] sm:$0xff]
        %v9988 = vld [vmem:[#allocation3 + $0x170] sm:$0xff]
        %v9989 = vld [vmem:[#allocation3 + $0x178] sm:$0xff]
        %v9990 = vld [vmem:[#allocation3 + $0x180] sm:$0xff]
        %v9991 = vld [vmem:[#allocation3 + $0x188] sm:$0xf]
        %v9992 = vld [vmem:[#allocation3 + $0x18c] sm:$0xff]
        %v9993 = vld [vmem:[#allocation3 + $0x194] sm:$0xff]
        %v9994 = vld [vmem:[#allocation3 + $0x19c] sm:$0xff]
        %v9995 = vld [vmem:[#allocation3 + $0x1a4] sm:$0xff]
        %v9996 = vld [vmem:[#allocation3 + $0x1ac] sm:$0xf]
        %v9997 = vld [vmem:[#allocation3 + $0x1b0] sm:$0xff]
        %v9998 = vld [vmem:[#allocation3 + $0x1b8] sm:$0xff]
        %v9999 = vld [vmem:[#allocation3 + $0x1c0] sm:$0xff]
        %v10000 = vld [vmem:[#allocation3 + $0x1c8] sm:$0xff]
        %v10001 = vld [vmem:[#allocation3 + $0x1d0] sm:$0xf]
        %v10002 = vld [vmem:[#allocation3 + $0x1d4] sm:$0xff]
        %v10003 = vld [vmem:[#allocation3 + $0x1dc] sm:$0xff]
        %v10004 = vld [vmem:[#allocation3 + $0x1e4] sm:$0xff]
        %v10005 = vld [vmem:[#allocation3 + $0x1ec] sm:$0xff]
        %v10006 = vld [vmem:[#allocation3 + $0x1f4] sm:$0xf]
        %v10007 = vld [vmem:[#allocation3 + $0x1f8] sm:$0xff]
        %v10008 = vld [vmem:[#allocation3 + $0x200] sm:$0xff]
        %v10009 = vld [vmem:[#allocation3 + $0x208] sm:$0xff]
        %v10010 = vld [vmem:[#allocation3 + $0x210] sm:$0xff]
        %v10011 = vld [vmem:[#allocation3 + $0x218] sm:$0xf]
        %v10012 = vld [vmem:[#allocation3 + $0x21c] sm:$0xff]
        %v10013 = vld [vmem:[#allocation3 + $0x224] sm:$0xff]
        %v10014 = vld [vmem:[#allocation3 + $0x22c] sm:$0xff]
        %v10015 = vld [vmem:[#allocation3 + $0x234] sm:$0xff]
        %v10016 = vld [vmem:[#allocation3 + $0x23c] sm:$0xf]
        %s10017 = scalar_lea.vmem [#allocation8], 1728
        %v10018 = vld [vmem:[%s10017] sm:$0xf]
        %v10019 = vld [vmem:[%s10017 + $0x4] sm:$0xf]
        %v10020 = vld [vmem:[%s10017 + $0x8] sm:$0xf]
        %v10021 = vld [vmem:[%s10017 + $0xc] sm:$0xf]
        %v10022 = vld [vmem:[%s10017 + $0x10] sm:$0xf]
        %v10023 = vld [vmem:[%s10017 + $0x14] sm:$0xf]
        %v10024 = vld [vmem:[%s10017 + $0x18] sm:$0xf]
        %v10025 = vld [vmem:[%s10017 + $0x1c] sm:$0xf]
        %v10026 = vld [vmem:[%s10017 + $0x20] sm:$0xf]
        %v10027 = vld [vmem:[%s10017 + $0x24] sm:$0xf]
        %v10028 = vld [vmem:[%s10017 + $0x28] sm:$0xf]
        %v10029 = vld [vmem:[%s10017 + $0x2c] sm:$0xf]
        %v10030 = vld [vmem:[%s10017 + $0x30] sm:$0xf]
        %v10031 = vld [vmem:[%s10017 + $0x34] sm:$0xf]
        %v10032 = vld [vmem:[%s10017 + $0x38] sm:$0xf]
        %v10033 = vld [vmem:[%s10017 + $0x3c] sm:$0xf]
        %v10034 = vld [vmem:[%s10017 + $0x40] sm:$0xf]
        %v10035 = vld [vmem:[%s10017 + $0x44] sm:$0xf]
        %v10036 = vld [vmem:[%s10017 + $0x48] sm:$0xf]
        %v10037 = vld [vmem:[%s10017 + $0x4c] sm:$0xf]
        %v10038 = vld [vmem:[%s10017 + $0x50] sm:$0xf]
        %v10039 = vld [vmem:[%s10017 + $0x54] sm:$0xf]
        %v10040 = vld [vmem:[%s10017 + $0x58] sm:$0xf]
        %v10041 = vld [vmem:[%s10017 + $0x5c] sm:$0xf]
        %v10042 = vld [vmem:[%s10017 + $0x60] sm:$0xf]
        %v10043 = vld [vmem:[%s10017 + $0x64] sm:$0xf]
        %v10044 = vld [vmem:[%s10017 + $0x68] sm:$0xf]
        %v10045 = vld [vmem:[%s10017 + $0x6c] sm:$0xf]
        %v10046 = vld [vmem:[%s10017 + $0x70] sm:$0xf]
        %v10047 = vld [vmem:[%s10017 + $0x74] sm:$0xf]
        %v10048 = vld [vmem:[%s10017 + $0x78] sm:$0xf]
        %v10049 = vld [vmem:[%s10017 + $0x7c] sm:$0xf]
        %v10050 = vld [vmem:[%s10017 + $0x80] sm:$0xf]
        %v10051 = vld [vmem:[%s10017 + $0x84] sm:$0xf]
        %v10052 = vld [vmem:[%s10017 + $0x88] sm:$0xf]
        %v10053 = vld [vmem:[%s10017 + $0x8c] sm:$0xf]
        %v10054 = vld [vmem:[%s10017 + $0x90] sm:$0xf]
        %v10055 = vld [vmem:[%s10017 + $0x94] sm:$0xf]
        %v10056 = vld [vmem:[%s10017 + $0x98] sm:$0xf]
        %v10057 = vld [vmem:[%s10017 + $0x9c] sm:$0xf]
        %v10058 = vld [vmem:[%s10017 + $0xa0] sm:$0xf]
        %v10059 = vld [vmem:[%s10017 + $0xa4] sm:$0xf]
        %v10060 = vld [vmem:[%s10017 + $0xa8] sm:$0xf]
        %v10061 = vld [vmem:[%s10017 + $0xac] sm:$0xf]
        %v10062 = vld [vmem:[%s10017 + $0xb0] sm:$0xf]
        %v10063 = vld [vmem:[%s10017 + $0xb4] sm:$0xf]
        %v10064 = vld [vmem:[%s10017 + $0xb8] sm:$0xf]
        %v10065 = vld [vmem:[%s10017 + $0xbc] sm:$0xf]
        %v10066 = vld [vmem:[%s10017 + $0xc0] sm:$0xf]
        %v10067 = vld [vmem:[%s10017 + $0xc4] sm:$0xf]
        %v10068 = vld [vmem:[%s10017 + $0xc8] sm:$0xf]
        %v10069 = vld [vmem:[%s10017 + $0xcc] sm:$0xf]
        %v10070 = vld [vmem:[%s10017 + $0xd0] sm:$0xf]
        %v10071 = vld [vmem:[%s10017 + $0xd4] sm:$0xf]
        %v10072 = vld [vmem:[%s10017 + $0xd8] sm:$0xf]
        %v10073 = vld [vmem:[%s10017 + $0xdc] sm:$0xf]
        %v10074 = vld [vmem:[%s10017 + $0xe0] sm:$0xf]
        %v10075 = vld [vmem:[%s10017 + $0xe4] sm:$0xf]
        %v10076 = vld [vmem:[%s10017 + $0xe8] sm:$0xf]
        %v10077 = vld [vmem:[%s10017 + $0xec] sm:$0xf]
        %v10078 = vld [vmem:[%s10017 + $0xf0] sm:$0xf]
        %v10079 = vld [vmem:[%s10017 + $0xf4] sm:$0xf]
        %v10080 = vld [vmem:[%s10017 + $0xf8] sm:$0xf]
        %v10081 = vld [vmem:[%s10017 + $0xfc] sm:$0xf]
        %v10082 = vld [vmem:[%s10017 + $0x100] sm:$0xf]
        %v10083 = vld [vmem:[%s10017 + $0x104] sm:$0xf]
        %v10084 = vld [vmem:[%s10017 + $0x108] sm:$0xf]
        %v10085 = vld [vmem:[%s10017 + $0x10c] sm:$0xf]
        %v10086 = vld [vmem:[%s10017 + $0x110] sm:$0xf]
        %v10087 = vld [vmem:[%s10017 + $0x114] sm:$0xf]
        %v10088 = vld [vmem:[%s10017 + $0x118] sm:$0xf]
        %v10089 = vld [vmem:[%s10017 + $0x11c] sm:$0xf]
        %v10090 = vld [vmem:[%s10017 + $0x120] sm:$0xf]
        %v10091 = vld [vmem:[%s10017 + $0x124] sm:$0xf]
        %v10092 = vld [vmem:[%s10017 + $0x128] sm:$0xf]
        %v10093 = vld [vmem:[%s10017 + $0x12c] sm:$0xf]
        %v10094 = vld [vmem:[%s10017 + $0x130] sm:$0xf]
        %v10095 = vld [vmem:[%s10017 + $0x134] sm:$0xf]
        %v10096 = vld [vmem:[%s10017 + $0x138] sm:$0xf]
        %v10097 = vld [vmem:[%s10017 + $0x13c] sm:$0xf]
        %v10098 = vld [vmem:[%s10017 + $0x140] sm:$0xf]
        %v10099 = vld [vmem:[%s10017 + $0x144] sm:$0xf]
        %v10100 = vld [vmem:[%s10017 + $0x148] sm:$0xf]
        %v10101 = vld [vmem:[%s10017 + $0x14c] sm:$0xf]
        %v10102 = vld [vmem:[%s10017 + $0x150] sm:$0xf]
        %v10103 = vld [vmem:[%s10017 + $0x154] sm:$0xf]
        %v10104 = vld [vmem:[%s10017 + $0x158] sm:$0xf]
        %v10105 = vld [vmem:[%s10017 + $0x15c] sm:$0xf]
        %v10106 = vld [vmem:[%s10017 + $0x160] sm:$0xf]
        %v10107 = vld [vmem:[%s10017 + $0x164] sm:$0xf]
        %v10108 = vld [vmem:[%s10017 + $0x168] sm:$0xf]
        %v10109 = vld [vmem:[%s10017 + $0x16c] sm:$0xf]
        %v10110 = vld [vmem:[%s10017 + $0x170] sm:$0xf]
        %v10111 = vld [vmem:[%s10017 + $0x174] sm:$0xf]
        %v10112 = vld [vmem:[%s10017 + $0x178] sm:$0xf]
        %v10113 = vld [vmem:[%s10017 + $0x17c] sm:$0xf]
        %v10114 = vld [vmem:[%s10017 + $0x180] sm:$0xf]
        %v10115 = vld [vmem:[%s10017 + $0x184] sm:$0xf]
        %v10116 = vld [vmem:[%s10017 + $0x188] sm:$0xf]
        %v10117 = vld [vmem:[%s10017 + $0x18c] sm:$0xf]
        %v10118 = vld [vmem:[%s10017 + $0x190] sm:$0xf]
        %v10119 = vld [vmem:[%s10017 + $0x194] sm:$0xf]
        %v10120 = vld [vmem:[%s10017 + $0x198] sm:$0xf]
        %v10121 = vld [vmem:[%s10017 + $0x19c] sm:$0xf]
        %v10122 = vld [vmem:[%s10017 + $0x1a0] sm:$0xf]
        %v10123 = vld [vmem:[%s10017 + $0x1a4] sm:$0xf]
        %v10124 = vld [vmem:[%s10017 + $0x1a8] sm:$0xf]
        %v10125 = vld [vmem:[%s10017 + $0x1ac] sm:$0xf]
        %v10126 = vld [vmem:[%s10017 + $0x1b0] sm:$0xf]
        %v10127 = vld [vmem:[%s10017 + $0x1b4] sm:$0xf]
        %v10128 = vld [vmem:[%s10017 + $0x1b8] sm:$0xf]
        %v10129 = vld [vmem:[%s10017 + $0x1bc] sm:$0xf]
        %v10130 = vld [vmem:[%s10017 + $0x1c0] sm:$0xf]
        %v10131 = vld [vmem:[%s10017 + $0x1c4] sm:$0xf]
        %v10132 = vld [vmem:[%s10017 + $0x1c8] sm:$0xf]
        %v10133 = vld [vmem:[%s10017 + $0x1cc] sm:$0xf]
        %v10134 = vld [vmem:[%s10017 + $0x1d0] sm:$0xf]
        %v10135 = vld [vmem:[%s10017 + $0x1d4] sm:$0xf]
        %v10136 = vld [vmem:[%s10017 + $0x1d8] sm:$0xf]
        %v10137 = vld [vmem:[%s10017 + $0x1dc] sm:$0xf]
        %v10138 = vld [vmem:[%s10017 + $0x1e0] sm:$0xf]
        %v10139 = vld [vmem:[%s10017 + $0x1e4] sm:$0xf]
        %v10140 = vld [vmem:[%s10017 + $0x1e8] sm:$0xf]
        %v10141 = vld [vmem:[%s10017 + $0x1ec] sm:$0xf]
        %v10142 = vld [vmem:[%s10017 + $0x1f0] sm:$0xf]
        %v10143 = vld [vmem:[%s10017 + $0x1f4] sm:$0xf]
        %v10144 = vld [vmem:[%s10017 + $0x1f8] sm:$0xf]
        %v10145 = vld [vmem:[%s10017 + $0x1fc] sm:$0xf]
        %v10146 = vld [vmem:[%s10017 + $0x200] sm:$0xf]
        %v10147 = vld [vmem:[%s10017 + $0x204] sm:$0xf]
        %v10148 = vld [vmem:[%s10017 + $0x208] sm:$0xf]
        %v10149 = vld [vmem:[%s10017 + $0x20c] sm:$0xf]
        %v10150 = vld [vmem:[%s10017 + $0x210] sm:$0xf]
        %v10151 = vld [vmem:[%s10017 + $0x214] sm:$0xf]
        %v10152 = vld [vmem:[%s10017 + $0x218] sm:$0xf]
        %v10153 = vld [vmem:[%s10017 + $0x21c] sm:$0xf]
        %v10154 = vld [vmem:[%s10017 + $0x220] sm:$0xf]
        %v10155 = vld [vmem:[%s10017 + $0x224] sm:$0xf]
        %v10156 = vld [vmem:[%s10017 + $0x228] sm:$0xf]
        %v10157 = vld [vmem:[%s10017 + $0x22c] sm:$0xf]
        %v10158 = vld [vmem:[%s10017 + $0x230] sm:$0xf]
        %v10159 = vld [vmem:[%s10017 + $0x234] sm:$0xf]
        %v10160 = vld [vmem:[%s10017 + $0x238] sm:$0xf]
        %v10161 = vld [vmem:[%s10017 + $0x23c] sm:$0xf]
        %v10242 = vunpack.c.l.b16 %v9937
        %v10243 = vunpack.c.h.b16 %v9937
        %v10244 = vunpack.c.l.b16 %v9938
        %v10245 = vunpack.c.h.b16 %v9938
        %v10246 = vunpack.c.l.b16 %v9939
        %v10247 = vunpack.c.h.b16 %v9939
        %v10248 = vunpack.c.l.b16 %v9940
        %v10249 = vunpack.c.h.b16 %v9940
        %v10250 = vunpack.c.l.b16 %v9941
        %v10251 = vunpack.c.l.b16 %v9942
        %v10252 = vunpack.c.h.b16 %v9942
        %v10253 = vunpack.c.l.b16 %v9943
        %v10254 = vunpack.c.h.b16 %v9943
        %v10255 = vunpack.c.l.b16 %v9944
        %v10256 = vunpack.c.h.b16 %v9944
        %v10257 = vunpack.c.l.b16 %v9945
        %v10258 = vunpack.c.h.b16 %v9945
        %v10259 = vunpack.c.l.b16 %v9946
        %v10260 = vunpack.c.l.b16 %v9947
        %v10261 = vunpack.c.h.b16 %v9947
        %v10262 = vunpack.c.l.b16 %v9948
        %v10263 = vunpack.c.h.b16 %v9948
        %v10264 = vunpack.c.l.b16 %v9949
        %v10265 = vunpack.c.h.b16 %v9949
        %v10266 = vunpack.c.l.b16 %v9950
        %v10267 = vunpack.c.h.b16 %v9950
        %v10268 = vunpack.c.l.b16 %v9951
        %v10269 = vunpack.c.l.b16 %v9952
        %v10270 = vunpack.c.h.b16 %v9952
        %v10271 = vunpack.c.l.b16 %v9953
        %v10272 = vunpack.c.h.b16 %v9953
        %v10273 = vunpack.c.l.b16 %v9954
        %v10274 = vunpack.c.h.b16 %v9954
        %v10275 = vunpack.c.l.b16 %v9955
        %v10276 = vunpack.c.h.b16 %v9955
        %v10277 = vunpack.c.l.b16 %v9956
        %v10278 = vunpack.c.l.b16 %v9957
        %v10279 = vunpack.c.h.b16 %v9957
        %v10280 = vunpack.c.l.b16 %v9958
        %v10281 = vunpack.c.h.b16 %v9958
        %v10282 = vunpack.c.l.b16 %v9959
        %v10283 = vunpack.c.h.b16 %v9959
        %v10284 = vunpack.c.l.b16 %v9960
        %v10285 = vunpack.c.h.b16 %v9960
        %v10286 = vunpack.c.l.b16 %v9961
        %v10287 = vunpack.c.l.b16 %v9962
        %v10288 = vunpack.c.h.b16 %v9962
        %v10289 = vunpack.c.l.b16 %v9963
        %v10290 = vunpack.c.h.b16 %v9963
        %v10291 = vunpack.c.l.b16 %v9964
        %v10292 = vunpack.c.h.b16 %v9964
        %v10293 = vunpack.c.l.b16 %v9965
        %v10294 = vunpack.c.h.b16 %v9965
        %v10295 = vunpack.c.l.b16 %v9966
        %v10296 = vunpack.c.l.b16 %v9967
        %v10297 = vunpack.c.h.b16 %v9967
        %v10298 = vunpack.c.l.b16 %v9968
        %v10299 = vunpack.c.h.b16 %v9968
        %v10300 = vunpack.c.l.b16 %v9969
        %v10301 = vunpack.c.h.b16 %v9969
        %v10302 = vunpack.c.l.b16 %v9970
        %v10303 = vunpack.c.h.b16 %v9970
        %v10304 = vunpack.c.l.b16 %v9971
        %v10305 = vunpack.c.l.b16 %v9972
        %v10306 = vunpack.c.h.b16 %v9972
        %v10307 = vunpack.c.l.b16 %v9973
        %v10308 = vunpack.c.h.b16 %v9973
        %v10309 = vunpack.c.l.b16 %v9974
        %v10310 = vunpack.c.h.b16 %v9974
        %v10311 = vunpack.c.l.b16 %v9975
        %v10312 = vunpack.c.h.b16 %v9975
        %v10313 = vunpack.c.l.b16 %v9976
        %v10314 = vunpack.c.l.b16 %v9977
        %v10315 = vunpack.c.h.b16 %v9977
        %v10316 = vunpack.c.l.b16 %v9978
        %v10317 = vunpack.c.h.b16 %v9978
        %v10318 = vunpack.c.l.b16 %v9979
        %v10319 = vunpack.c.h.b16 %v9979
        %v10320 = vunpack.c.l.b16 %v9980
        %v10321 = vunpack.c.h.b16 %v9980
        %v10322 = vunpack.c.l.b16 %v9981
        %v10323 = vunpack.c.l.b16 %v9982
        %v10324 = vunpack.c.h.b16 %v9982
        %v10325 = vunpack.c.l.b16 %v9983
        %v10326 = vunpack.c.h.b16 %v9983
        %v10327 = vunpack.c.l.b16 %v9984
        %v10328 = vunpack.c.h.b16 %v9984
        %v10329 = vunpack.c.l.b16 %v9985
        %v10330 = vunpack.c.h.b16 %v9985
        %v10331 = vunpack.c.l.b16 %v9986
        %v10332 = vunpack.c.l.b16 %v9987
        %v10333 = vunpack.c.h.b16 %v9987
        %v10334 = vunpack.c.l.b16 %v9988
        %v10335 = vunpack.c.h.b16 %v9988
        %v10336 = vunpack.c.l.b16 %v9989
        %v10337 = vunpack.c.h.b16 %v9989
        %v10338 = vunpack.c.l.b16 %v9990
        %v10339 = vunpack.c.h.b16 %v9990
        %v10340 = vunpack.c.l.b16 %v9991
        %v10341 = vunpack.c.l.b16 %v9992
        %v10342 = vunpack.c.h.b16 %v9992
        %v10343 = vunpack.c.l.b16 %v9993
        %v10344 = vunpack.c.h.b16 %v9993
        %v10345 = vunpack.c.l.b16 %v9994
        %v10346 = vunpack.c.h.b16 %v9994
        %v10347 = vunpack.c.l.b16 %v9995
        %v10348 = vunpack.c.h.b16 %v9995
        %v10349 = vunpack.c.l.b16 %v9996
        %v10350 = vunpack.c.l.b16 %v9997
        %v10351 = vunpack.c.h.b16 %v9997
        %v10352 = vunpack.c.l.b16 %v9998
        %v10353 = vunpack.c.h.b16 %v9998
        %v10354 = vunpack.c.l.b16 %v9999
        %v10355 = vunpack.c.h.b16 %v9999
        %v10356 = vunpack.c.l.b16 %v10000
        %v10357 = vunpack.c.h.b16 %v10000
        %v10358 = vunpack.c.l.b16 %v10001
        %v10359 = vunpack.c.l.b16 %v10002
        %v10360 = vunpack.c.h.b16 %v10002
        %v10361 = vunpack.c.l.b16 %v10003
        %v10362 = vunpack.c.h.b16 %v10003
        %v10363 = vunpack.c.l.b16 %v10004
        %v10364 = vunpack.c.h.b16 %v10004
        %v10365 = vunpack.c.l.b16 %v10005
        %v10366 = vunpack.c.h.b16 %v10005
        %v10367 = vunpack.c.l.b16 %v10006
        %v10368 = vunpack.c.l.b16 %v10007
        %v10369 = vunpack.c.h.b16 %v10007
        %v10370 = vunpack.c.l.b16 %v10008
        %v10371 = vunpack.c.h.b16 %v10008
        %v10372 = vunpack.c.l.b16 %v10009
        %v10373 = vunpack.c.h.b16 %v10009
        %v10374 = vunpack.c.l.b16 %v10010
        %v10375 = vunpack.c.h.b16 %v10010
        %v10376 = vunpack.c.l.b16 %v10011
        %v10377 = vunpack.c.l.b16 %v10012
        %v10378 = vunpack.c.h.b16 %v10012
        %v10379 = vunpack.c.l.b16 %v10013
        %v10380 = vunpack.c.h.b16 %v10013
        %v10381 = vunpack.c.l.b16 %v10014
        %v10382 = vunpack.c.h.b16 %v10014
        %v10383 = vunpack.c.l.b16 %v10015
        %v10384 = vunpack.c.h.b16 %v10015
        %v10385 = vunpack.c.l.b16 %v10016
        %v10386 = vpack.c.b16 %v10251, %v10242
        %v10387 = vpack.c.b16 %v10252, %v10243
        %v10388 = vpack.c.b16 %v10253, %v10244
        %v10389 = vpack.c.b16 %v10254, %v10245
        %v10390 = vpack.c.b16 %v10255, %v10246
        %v10391 = vpack.c.b16 %v10256, %v10247
        %v10392 = vpack.c.b16 %v10257, %v10248
        %v10393 = vpack.c.b16 %v10258, %v10249
        %v10394 = vpack.c.b16 %v10259, %v10250
        %v10395 = vpack.c.b16 %v10269, %v10260
        %v10396 = vpack.c.b16 %v10270, %v10261
        %v10397 = vpack.c.b16 %v10271, %v10262
        %v10398 = vpack.c.b16 %v10272, %v10263
        %v10399 = vpack.c.b16 %v10273, %v10264
        %v10400 = vpack.c.b16 %v10274, %v10265
        %v10401 = vpack.c.b16 %v10275, %v10266
        %v10402 = vpack.c.b16 %v10276, %v10267
        %v10403 = vpack.c.b16 %v10277, %v10268
        %v10404 = vpack.c.b16 %v10287, %v10278
        %v10405 = vpack.c.b16 %v10288, %v10279
        %v10406 = vpack.c.b16 %v10289, %v10280
        %v10407 = vpack.c.b16 %v10290, %v10281
        %v10408 = vpack.c.b16 %v10291, %v10282
        %v10409 = vpack.c.b16 %v10292, %v10283
        %v10410 = vpack.c.b16 %v10293, %v10284
        %v10411 = vpack.c.b16 %v10294, %v10285
        %v10412 = vpack.c.b16 %v10295, %v10286
        %v10413 = vpack.c.b16 %v10305, %v10296
        %v10414 = vpack.c.b16 %v10306, %v10297
        %v10415 = vpack.c.b16 %v10307, %v10298
        %v10416 = vpack.c.b16 %v10308, %v10299
        %v10417 = vpack.c.b16 %v10309, %v10300
        %v10418 = vpack.c.b16 %v10310, %v10301
        %v10419 = vpack.c.b16 %v10311, %v10302
        %v10420 = vpack.c.b16 %v10312, %v10303
        %v10421 = vpack.c.b16 %v10313, %v10304
        %v10422 = vpack.c.b16 %v10323, %v10314
        %v10423 = vpack.c.b16 %v10324, %v10315
        %v10424 = vpack.c.b16 %v10325, %v10316
        %v10425 = vpack.c.b16 %v10326, %v10317
        %v10426 = vpack.c.b16 %v10327, %v10318
        %v10427 = vpack.c.b16 %v10328, %v10319
        %v10428 = vpack.c.b16 %v10329, %v10320
        %v10429 = vpack.c.b16 %v10330, %v10321
        %v10430 = vpack.c.b16 %v10331, %v10322
        %v10431 = vpack.c.b16 %v10341, %v10332
        %v10432 = vpack.c.b16 %v10342, %v10333
        %v10433 = vpack.c.b16 %v10343, %v10334
        %v10434 = vpack.c.b16 %v10344, %v10335
        %v10435 = vpack.c.b16 %v10345, %v10336
        %v10436 = vpack.c.b16 %v10346, %v10337
        %v10437 = vpack.c.b16 %v10347, %v10338
        %v10438 = vpack.c.b16 %v10348, %v10339
        %v10439 = vpack.c.b16 %v10349, %v10340
        %v10440 = vpack.c.b16 %v10359, %v10350
        %v10441 = vpack.c.b16 %v10360, %v10351
        %v10442 = vpack.c.b16 %v10361, %v10352
        %v10443 = vpack.c.b16 %v10362, %v10353
        %v10444 = vpack.c.b16 %v10363, %v10354
        %v10445 = vpack.c.b16 %v10364, %v10355
        %v10446 = vpack.c.b16 %v10365, %v10356
        %v10447 = vpack.c.b16 %v10366, %v10357
        %v10448 = vpack.c.b16 %v10367, %v10358
        %v10449 = vpack.c.b16 %v10377, %v10368
        %v10450 = vpack.c.b16 %v10378, %v10369
        %v10451 = vpack.c.b16 %v10379, %v10370
        %v10452 = vpack.c.b16 %v10380, %v10371
        %v10453 = vpack.c.b16 %v10381, %v10372
        %v10454 = vpack.c.b16 %v10382, %v10373
        %v10455 = vpack.c.b16 %v10383, %v10374
        %v10456 = vpack.c.b16 %v10384, %v10375
        %v10457 = vpack.c.b16 %v10385, %v10376
        %v10674 = vunpack.c.l.b16 %v10018
        %v10675 = vunpack.c.l.b16 %v10019
        %v10676 = vunpack.c.l.b16 %v10020
        %v10677 = vunpack.c.l.b16 %v10021
        %v10678 = vunpack.c.l.b16 %v10022
        %v10679 = vunpack.c.l.b16 %v10023
        %v10680 = vunpack.c.l.b16 %v10024
        %v10681 = vunpack.c.l.b16 %v10025
        %v10682 = vunpack.c.l.b16 %v10026
        %v10683 = vunpack.c.l.b16 %v10027
        %v10684 = vunpack.c.l.b16 %v10028
        %v10685 = vunpack.c.l.b16 %v10029
        %v10686 = vunpack.c.l.b16 %v10030
        %v10687 = vunpack.c.l.b16 %v10031
        %v10688 = vunpack.c.l.b16 %v10032
        %v10689 = vunpack.c.l.b16 %v10033
        %v10690 = vunpack.c.l.b16 %v10034
        %v10691 = vunpack.c.l.b16 %v10035
        %v10692 = vunpack.c.l.b16 %v10036
        %v10693 = vunpack.c.l.b16 %v10037
        %v10694 = vunpack.c.l.b16 %v10038
        %v10695 = vunpack.c.l.b16 %v10039
        %v10696 = vunpack.c.l.b16 %v10040
        %v10697 = vunpack.c.l.b16 %v10041
        %v10698 = vunpack.c.l.b16 %v10042
        %v10699 = vunpack.c.l.b16 %v10043
        %v10700 = vunpack.c.l.b16 %v10044
        %v10701 = vunpack.c.l.b16 %v10045
        %v10702 = vunpack.c.l.b16 %v10046
        %v10703 = vunpack.c.l.b16 %v10047
        %v10704 = vunpack.c.l.b16 %v10048
        %v10705 = vunpack.c.l.b16 %v10049
        %v10706 = vunpack.c.l.b16 %v10050
        %v10707 = vunpack.c.l.b16 %v10051
        %v10708 = vunpack.c.l.b16 %v10052
        %v10709 = vunpack.c.l.b16 %v10053
        %v10710 = vunpack.c.l.b16 %v10054
        %v10711 = vunpack.c.l.b16 %v10055
        %v10712 = vunpack.c.l.b16 %v10056
        %v10713 = vunpack.c.l.b16 %v10057
        %v10714 = vunpack.c.l.b16 %v10058
        %v10715 = vunpack.c.l.b16 %v10059
        %v10716 = vunpack.c.l.b16 %v10060
        %v10717 = vunpack.c.l.b16 %v10061
        %v10718 = vunpack.c.l.b16 %v10062
        %v10719 = vunpack.c.l.b16 %v10063
        %v10720 = vunpack.c.l.b16 %v10064
        %v10721 = vunpack.c.l.b16 %v10065
        %v10722 = vunpack.c.l.b16 %v10066
        %v10723 = vunpack.c.l.b16 %v10067
        %v10724 = vunpack.c.l.b16 %v10068
        %v10725 = vunpack.c.l.b16 %v10069
        %v10726 = vunpack.c.l.b16 %v10070
        %v10727 = vunpack.c.l.b16 %v10071
        %v10728 = vunpack.c.l.b16 %v10072
        %v10729 = vunpack.c.l.b16 %v10073
        %v10730 = vunpack.c.l.b16 %v10074
        %v10731 = vunpack.c.l.b16 %v10075
        %v10732 = vunpack.c.l.b16 %v10076
        %v10733 = vunpack.c.l.b16 %v10077
        %v10734 = vunpack.c.l.b16 %v10078
        %v10735 = vunpack.c.l.b16 %v10079
        %v10736 = vunpack.c.l.b16 %v10080
        %v10737 = vunpack.c.l.b16 %v10081
        %v10738 = vunpack.c.l.b16 %v10082
        %v10739 = vunpack.c.l.b16 %v10083
        %v10740 = vunpack.c.l.b16 %v10084
        %v10741 = vunpack.c.l.b16 %v10085
        %v10742 = vunpack.c.l.b16 %v10086
        %v10743 = vunpack.c.l.b16 %v10087
        %v10744 = vunpack.c.l.b16 %v10088
        %v10745 = vunpack.c.l.b16 %v10089
        %v10746 = vunpack.c.l.b16 %v10090
        %v10747 = vunpack.c.l.b16 %v10091
        %v10748 = vunpack.c.l.b16 %v10092
        %v10749 = vunpack.c.l.b16 %v10093
        %v10750 = vunpack.c.l.b16 %v10094
        %v10751 = vunpack.c.l.b16 %v10095
        %v10752 = vunpack.c.l.b16 %v10096
        %v10753 = vunpack.c.l.b16 %v10097
        %v10754 = vunpack.c.l.b16 %v10098
        %v10755 = vunpack.c.l.b16 %v10099
        %v10756 = vunpack.c.l.b16 %v10100
        %v10757 = vunpack.c.l.b16 %v10101
        %v10758 = vunpack.c.l.b16 %v10102
        %v10759 = vunpack.c.l.b16 %v10103
        %v10760 = vunpack.c.l.b16 %v10104
        %v10761 = vunpack.c.l.b16 %v10105
        %v10762 = vunpack.c.l.b16 %v10106
        %v10763 = vunpack.c.l.b16 %v10107
        %v10764 = vunpack.c.l.b16 %v10108
        %v10765 = vunpack.c.l.b16 %v10109
        %v10766 = vunpack.c.l.b16 %v10110
        %v10767 = vunpack.c.l.b16 %v10111
        %v10768 = vunpack.c.l.b16 %v10112
        %v10769 = vunpack.c.l.b16 %v10113
        %v10770 = vunpack.c.l.b16 %v10114
        %v10771 = vunpack.c.l.b16 %v10115
        %v10772 = vunpack.c.l.b16 %v10116
        %v10773 = vunpack.c.l.b16 %v10117
        %v10774 = vunpack.c.l.b16 %v10118
        %v10775 = vunpack.c.l.b16 %v10119
        %v10776 = vunpack.c.l.b16 %v10120
        %v10777 = vunpack.c.l.b16 %v10121
        %v10778 = vunpack.c.l.b16 %v10122
        %v10779 = vunpack.c.l.b16 %v10123
        %v10780 = vunpack.c.l.b16 %v10124
        %v10781 = vunpack.c.l.b16 %v10125
        %v10782 = vunpack.c.l.b16 %v10126
        %v10783 = vunpack.c.l.b16 %v10127
        %v10784 = vunpack.c.l.b16 %v10128
        %v10785 = vunpack.c.l.b16 %v10129
        %v10786 = vunpack.c.l.b16 %v10130
        %v10787 = vunpack.c.l.b16 %v10131
        %v10788 = vunpack.c.l.b16 %v10132
        %v10789 = vunpack.c.l.b16 %v10133
        %v10790 = vunpack.c.l.b16 %v10134
        %v10791 = vunpack.c.l.b16 %v10135
        %v10792 = vunpack.c.l.b16 %v10136
        %v10793 = vunpack.c.l.b16 %v10137
        %v10794 = vunpack.c.l.b16 %v10138
        %v10795 = vunpack.c.l.b16 %v10139
        %v10796 = vunpack.c.l.b16 %v10140
        %v10797 = vunpack.c.l.b16 %v10141
        %v10798 = vunpack.c.l.b16 %v10142
        %v10799 = vunpack.c.l.b16 %v10143
        %v10800 = vunpack.c.l.b16 %v10144
        %v10801 = vunpack.c.l.b16 %v10145
        %v10802 = vunpack.c.l.b16 %v10146
        %v10803 = vunpack.c.l.b16 %v10147
        %v10804 = vunpack.c.l.b16 %v10148
        %v10805 = vunpack.c.l.b16 %v10149
        %v10806 = vunpack.c.l.b16 %v10150
        %v10807 = vunpack.c.l.b16 %v10151
        %v10808 = vunpack.c.l.b16 %v10152
        %v10809 = vunpack.c.l.b16 %v10153
        %v10810 = vunpack.c.l.b16 %v10154
        %v10811 = vunpack.c.l.b16 %v10155
        %v10812 = vunpack.c.l.b16 %v10156
        %v10813 = vunpack.c.l.b16 %v10157
        %v10814 = vunpack.c.l.b16 %v10158
        %v10815 = vunpack.c.l.b16 %v10159
        %v10816 = vunpack.c.l.b16 %v10160
        %v10817 = vunpack.c.l.b16 %v10161
        %v10818 = vpack.c.b16 %v10675, %v10674
        %v10819 = vpack.c.b16 %v10677, %v10676
        %v10820 = vpack.c.b16 %v10679, %v10678
        %v10821 = vpack.c.b16 %v10681, %v10680
        %v10822 = vpack.c.b16 %v10683, %v10682
        %v10823 = vpack.c.b16 %v10685, %v10684
        %v10824 = vpack.c.b16 %v10687, %v10686
        %v10825 = vpack.c.b16 %v10689, %v10688
        %v10826 = vpack.c.b16 %v10691, %v10690
        %v10827 = vpack.c.b16 %v10693, %v10692
        %v10828 = vpack.c.b16 %v10695, %v10694
        %v10829 = vpack.c.b16 %v10697, %v10696
        %v10830 = vpack.c.b16 %v10699, %v10698
        %v10831 = vpack.c.b16 %v10701, %v10700
        %v10832 = vpack.c.b16 %v10703, %v10702
        %v10833 = vpack.c.b16 %v10705, %v10704
        %v10834 = vpack.c.b16 %v10707, %v10706
        %v10835 = vpack.c.b16 %v10709, %v10708
        %v10836 = vpack.c.b16 %v10711, %v10710
        %v10837 = vpack.c.b16 %v10713, %v10712
        %v10838 = vpack.c.b16 %v10715, %v10714
        %v10839 = vpack.c.b16 %v10717, %v10716
        %v10840 = vpack.c.b16 %v10719, %v10718
        %v10841 = vpack.c.b16 %v10721, %v10720
        %v10842 = vpack.c.b16 %v10723, %v10722
        %v10843 = vpack.c.b16 %v10725, %v10724
        %v10844 = vpack.c.b16 %v10727, %v10726
        %v10845 = vpack.c.b16 %v10729, %v10728
        %v10846 = vpack.c.b16 %v10731, %v10730
        %v10847 = vpack.c.b16 %v10733, %v10732
        %v10848 = vpack.c.b16 %v10735, %v10734
        %v10849 = vpack.c.b16 %v10737, %v10736
        %v10850 = vpack.c.b16 %v10739, %v10738
        %v10851 = vpack.c.b16 %v10741, %v10740
        %v10852 = vpack.c.b16 %v10743, %v10742
        %v10853 = vpack.c.b16 %v10745, %v10744
        %v10854 = vpack.c.b16 %v10747, %v10746
        %v10855 = vpack.c.b16 %v10749, %v10748
        %v10856 = vpack.c.b16 %v10751, %v10750
        %v10857 = vpack.c.b16 %v10753, %v10752
        %v10858 = vpack.c.b16 %v10755, %v10754
        %v10859 = vpack.c.b16 %v10757, %v10756
        %v10860 = vpack.c.b16 %v10759, %v10758
        %v10861 = vpack.c.b16 %v10761, %v10760
        %v10862 = vpack.c.b16 %v10763, %v10762
        %v10863 = vpack.c.b16 %v10765, %v10764
        %v10864 = vpack.c.b16 %v10767, %v10766
        %v10865 = vpack.c.b16 %v10769, %v10768
        %v10866 = vpack.c.b16 %v10771, %v10770
        %v10867 = vpack.c.b16 %v10773, %v10772
        %v10868 = vpack.c.b16 %v10775, %v10774
        %v10869 = vpack.c.b16 %v10777, %v10776
        %v10870 = vpack.c.b16 %v10779, %v10778
        %v10871 = vpack.c.b16 %v10781, %v10780
        %v10872 = vpack.c.b16 %v10783, %v10782
        %v10873 = vpack.c.b16 %v10785, %v10784
        %v10874 = vpack.c.b16 %v10787, %v10786
        %v10875 = vpack.c.b16 %v10789, %v10788
        %v10876 = vpack.c.b16 %v10791, %v10790
        %v10877 = vpack.c.b16 %v10793, %v10792
        %v10878 = vpack.c.b16 %v10795, %v10794
        %v10879 = vpack.c.b16 %v10797, %v10796
        %v10880 = vpack.c.b16 %v10799, %v10798
        %v10881 = vpack.c.b16 %v10801, %v10800
        %v10882 = vpack.c.b16 %v10803, %v10802
        %v10883 = vpack.c.b16 %v10805, %v10804
        %v10884 = vpack.c.b16 %v10807, %v10806
        %v10885 = vpack.c.b16 %v10809, %v10808
        %v10886 = vpack.c.b16 %v10811, %v10810
        %v10887 = vpack.c.b16 %v10813, %v10812
        %v10888 = vpack.c.b16 %v10815, %v10814
        %v10889 = vpack.c.b16 %v10817, %v10816
        %10962 = vmatprep.subr.bf16.mxu0 0
        %10963 = vmatpush1.bf16.msra.mxu0 %v10825
        %10964 = vmatprep.subr.bf16.mxu0 0
        %10965 = vmatpush1.bf16.msra.mxu0 %v10824
        %10966 = vmatprep.subr.bf16.mxu0 0
        %10967 = vmatpush1.bf16.msra.mxu0 %v10823
        %10968 = vmatprep.subr.bf16.mxu0 0
        %10969 = vmatpush1.bf16.msra.mxu0 %v10822
        %10970 = vmatprep.subr.bf16.mxu0 0
        %10971 = vmatpush1.bf16.msra.mxu0 %v10821
        %10972 = vmatprep.subr.bf16.mxu0 0
        %10973 = vmatpush1.bf16.msra.mxu0 %v10820
        %10974 = vmatprep.subr.bf16.mxu0 0
        %10975 = vmatpush1.bf16.msra.mxu0 %v10819
        %10976 = vmatprep.subr.bf16.mxu0 0
        %10977 = vmatpush1.bf16.msra.mxu0 %v10818
        %10978 = vmatprep.subr.bf16.mxu0 0
        %10979 = vmatpush2.bf16.msra.mxu0 %v10833
        %10980 = vmatprep.subr.bf16.mxu0 0
        %10981 = vmatpush2.bf16.msra.mxu0 %v10832
        %10982 = vmatprep.subr.bf16.mxu0 0
        %10983 = vmatpush2.bf16.msra.mxu0 %v10831
        %10984 = vmatprep.subr.bf16.mxu0 0
        %10985 = vmatpush2.bf16.msra.mxu0 %v10830
        %10986 = vmatprep.subr.bf16.mxu0 0
        %10987 = vmatpush2.bf16.msra.mxu0 %v10829
        %10988 = vmatprep.subr.bf16.mxu0 0
        %10989 = vmatpush2.bf16.msra.mxu0 %v10828
        %10990 = vmatprep.subr.bf16.mxu0 0
        %10991 = vmatpush2.bf16.msra.mxu0 %v10827
        %10992 = vmatprep.subr.bf16.mxu0 0
        %10993 = vmatpush2.bf16.msra.mxu0 %v10826
        %10994 = vmatprep.mubr.bf16.mxu0 %v10387
        %10995 = vmatmul.mubr.bf16.gmra.mxu0 %v10386
        %v10996 = vpop.f32.mrf.mxu0
        %v10997 = vadd.f32 0.0, %v10996
        %v10998 = vpop.f32.mrf.mxu0
        %v10999 = vpop.f32.mrf.mxu0
        %v11000 = vadd.f32 0.0, %v10999
        %v11001 = vpop.f32.mrf.mxu0
        %11002 = vmatprep.mubr.bf16.mxu0 %v10396
        %11003 = vmatmul.mubr.bf16.gmra.mxu0 %v10395
        %v11004 = vpop.f32.mrf.mxu0
        %v11005 = vadd.f32 0.0, %v11004
        %v11006 = vpop.f32.mrf.mxu0
        %v11007 = vpop.f32.mrf.mxu0
        %v11008 = vadd.f32 0.0, %v11007
        %v11009 = vpop.f32.mrf.mxu0
        %11010 = vmatprep.mubr.bf16.mxu0 %v10405
        %11011 = vmatmul.mubr.bf16.gmra.mxu0 %v10404
        %v11012 = vpop.f32.mrf.mxu0
        %v11013 = vadd.f32 0.0, %v11012
        %v11014 = vpop.f32.mrf.mxu0
        %v11015 = vpop.f32.mrf.mxu0
        %v11016 = vadd.f32 0.0, %v11015
        %v11017 = vpop.f32.mrf.mxu0
        %11018 = vmatprep.mubr.bf16.mxu0 %v10414
        %11019 = vmatmul.mubr.bf16.gmra.mxu0 %v10413
        %v11020 = vpop.f32.mrf.mxu0
        %v11021 = vadd.f32 0.0, %v11020
        %v11022 = vpop.f32.mrf.mxu0
        %v11023 = vpop.f32.mrf.mxu0
        %v11024 = vadd.f32 0.0, %v11023
        %v11025 = vpop.f32.mrf.mxu0
        %11026 = vmatprep.mubr.bf16.mxu0 %v10423
        %11027 = vmatmul.mubr.bf16.gmra.mxu0 %v10422
        %v11028 = vpop.f32.mrf.mxu0
        %v11029 = vadd.f32 0.0, %v11028
        %v11030 = vpop.f32.mrf.mxu0
        %v11031 = vpop.f32.mrf.mxu0
        %v11032 = vadd.f32 0.0, %v11031
        %v11033 = vpop.f32.mrf.mxu0
        %11034 = vmatprep.mubr.bf16.mxu0 %v10432
        %11035 = vmatmul.mubr.bf16.gmra.mxu0 %v10431
        %v11036 = vpop.f32.mrf.mxu0
        %v11037 = vadd.f32 0.0, %v11036
        %v11038 = vpop.f32.mrf.mxu0
        %v11039 = vpop.f32.mrf.mxu0
        %v11040 = vadd.f32 0.0, %v11039
        %v11041 = vpop.f32.mrf.mxu0
        %11042 = vmatprep.mubr.bf16.mxu0 %v10441
        %11043 = vmatmul.mubr.bf16.gmra.mxu0 %v10440
        %v11044 = vpop.f32.mrf.mxu0
        %v11045 = vadd.f32 0.0, %v11044
        %v11046 = vpop.f32.mrf.mxu0
        %v11047 = vpop.f32.mrf.mxu0
        %v11048 = vadd.f32 0.0, %v11047
        %v11049 = vpop.f32.mrf.mxu0
        %11050 = vmatprep.mubr.bf16.mxu0 %v10450
        %11051 = vmatmul.mubr.bf16.gmra.mxu0 %v10449
        %v11052 = vpop.f32.mrf.mxu0
        %v11053 = vadd.f32 0.0, %v11052
        %v11054 = vpop.f32.mrf.mxu0
        %v11055 = vpop.f32.mrf.mxu0
        %v11056 = vadd.f32 0.0, %v11055
        %v11057 = vpop.f32.mrf.mxu0
        %11058 = vdwg.mxu0
        %11059 = vmatprep.subr.bf16.mxu0 0
        %11060 = vmatpush1.bf16.msra.mxu0 %v10841
        %11061 = vmatprep.subr.bf16.mxu0 0
        %11062 = vmatpush1.bf16.msra.mxu0 %v10840
        %11063 = vmatprep.subr.bf16.mxu0 0
        %11064 = vmatpush1.bf16.msra.mxu0 %v10839
        %11065 = vmatprep.subr.bf16.mxu0 0
        %11066 = vmatpush1.bf16.msra.mxu0 %v10838
        %11067 = vmatprep.subr.bf16.mxu0 0
        %11068 = vmatpush1.bf16.msra.mxu0 %v10837
        %11069 = vmatprep.subr.bf16.mxu0 0
        %11070 = vmatpush1.bf16.msra.mxu0 %v10836
        %11071 = vmatprep.subr.bf16.mxu0 0
        %11072 = vmatpush1.bf16.msra.mxu0 %v10835
        %11073 = vmatprep.subr.bf16.mxu0 0
        %11074 = vmatpush1.bf16.msra.mxu0 %v10834
        %11075 = vmatprep.subr.bf16.mxu0 0
        %11076 = vmatpush2.bf16.msra.mxu0 %v10849
        %11077 = vmatprep.subr.bf16.mxu0 0
        %11078 = vmatpush2.bf16.msra.mxu0 %v10848
        %11079 = vmatprep.subr.bf16.mxu0 0
        %11080 = vmatpush2.bf16.msra.mxu0 %v10847
        %11081 = vmatprep.subr.bf16.mxu0 0
        %11082 = vmatpush2.bf16.msra.mxu0 %v10846
        %11083 = vmatprep.subr.bf16.mxu0 0
        %11084 = vmatpush2.bf16.msra.mxu0 %v10845
        %11085 = vmatprep.subr.bf16.mxu0 0
        %11086 = vmatpush2.bf16.msra.mxu0 %v10844
        %11087 = vmatprep.subr.bf16.mxu0 0
        %11088 = vmatpush2.bf16.msra.mxu0 %v10843
        %11089 = vmatprep.subr.bf16.mxu0 0
        %11090 = vmatpush2.bf16.msra.mxu0 %v10842
        %11091 = vmatprep.mubr.bf16.mxu0 %v10389
        %11092 = vmatmul.mubr.bf16.gmra.mxu0 %v10388
        %v11093 = vpop.f32.mrf.mxu0
        %v11094 = vadd.f32 %v10997, %v11093
        %v11095 = vpop.f32.mrf.mxu0
        %v11096 = vpop.f32.mrf.mxu0
        %v11097 = vadd.f32 %v11000, %v11096
        %v11098 = vpop.f32.mrf.mxu0
        %11099 = vmatprep.mubr.bf16.mxu0 %v10398
        %11100 = vmatmul.mubr.bf16.gmra.mxu0 %v10397
        %v11101 = vpop.f32.mrf.mxu0
        %v11102 = vadd.f32 %v11005, %v11101
        %v11103 = vpop.f32.mrf.mxu0
        %v11104 = vpop.f32.mrf.mxu0
        %v11105 = vadd.f32 %v11008, %v11104
        %v11106 = vpop.f32.mrf.mxu0
        %11107 = vmatprep.mubr.bf16.mxu0 %v10407
        %11108 = vmatmul.mubr.bf16.gmra.mxu0 %v10406
        %v11109 = vpop.f32.mrf.mxu0
        %v11110 = vadd.f32 %v11013, %v11109
        %v11111 = vpop.f32.mrf.mxu0
        %v11112 = vpop.f32.mrf.mxu0
        %v11113 = vadd.f32 %v11016, %v11112
        %v11114 = vpop.f32.mrf.mxu0
        %11115 = vmatprep.mubr.bf16.mxu0 %v10416
        %11116 = vmatmul.mubr.bf16.gmra.mxu0 %v10415
        %v11117 = vpop.f32.mrf.mxu0
        %v11118 = vadd.f32 %v11021, %v11117
        %v11119 = vpop.f32.mrf.mxu0
        %v11120 = vpop.f32.mrf.mxu0
        %v11121 = vadd.f32 %v11024, %v11120
        %v11122 = vpop.f32.mrf.mxu0
        %11123 = vmatprep.mubr.bf16.mxu0 %v10425
        %11124 = vmatmul.mubr.bf16.gmra.mxu0 %v10424
        %v11125 = vpop.f32.mrf.mxu0
        %v11126 = vadd.f32 %v11029, %v11125
        %v11127 = vpop.f32.mrf.mxu0
        %v11128 = vpop.f32.mrf.mxu0
        %v11129 = vadd.f32 %v11032, %v11128
        %v11130 = vpop.f32.mrf.mxu0
        %11131 = vmatprep.mubr.bf16.mxu0 %v10434
        %11132 = vmatmul.mubr.bf16.gmra.mxu0 %v10433
        %v11133 = vpop.f32.mrf.mxu0
        %v11134 = vadd.f32 %v11037, %v11133
        %v11135 = vpop.f32.mrf.mxu0
        %v11136 = vpop.f32.mrf.mxu0
        %v11137 = vadd.f32 %v11040, %v11136
        %v11138 = vpop.f32.mrf.mxu0
        %11139 = vmatprep.mubr.bf16.mxu0 %v10443
        %11140 = vmatmul.mubr.bf16.gmra.mxu0 %v10442
        %v11141 = vpop.f32.mrf.mxu0
        %v11142 = vadd.f32 %v11045, %v11141
        %v11143 = vpop.f32.mrf.mxu0
        %v11144 = vpop.f32.mrf.mxu0
        %v11145 = vadd.f32 %v11048, %v11144
        %v11146 = vpop.f32.mrf.mxu0
        %11147 = vmatprep.mubr.bf16.mxu0 %v10452
        %11148 = vmatmul.mubr.bf16.gmra.mxu0 %v10451
        %v11149 = vpop.f32.mrf.mxu0
        %v11150 = vadd.f32 %v11053, %v11149
        %v11151 = vpop.f32.mrf.mxu0
        %v11152 = vpop.f32.mrf.mxu0
        %v11153 = vadd.f32 %v11056, %v11152
        %v11154 = vpop.f32.mrf.mxu0
        %11155 = vdwg.mxu0
        %11156 = vmatprep.subr.bf16.mxu0 0
        %11157 = vmatpush1.bf16.msra.mxu0 %v10857
        %11158 = vmatprep.subr.bf16.mxu0 0
        %11159 = vmatpush1.bf16.msra.mxu0 %v10856
        %11160 = vmatprep.subr.bf16.mxu0 0
        %11161 = vmatpush1.bf16.msra.mxu0 %v10855
        %11162 = vmatprep.subr.bf16.mxu0 0
        %11163 = vmatpush1.bf16.msra.mxu0 %v10854
        %11164 = vmatprep.subr.bf16.mxu0 0
        %11165 = vmatpush1.bf16.msra.mxu0 %v10853
        %11166 = vmatprep.subr.bf16.mxu0 0
        %11167 = vmatpush1.bf16.msra.mxu0 %v10852
        %11168 = vmatprep.subr.bf16.mxu0 0
        %11169 = vmatpush1.bf16.msra.mxu0 %v10851
        %11170 = vmatprep.subr.bf16.mxu0 0
        %11171 = vmatpush1.bf16.msra.mxu0 %v10850
        %11172 = vmatprep.subr.bf16.mxu0 0
        %11173 = vmatpush2.bf16.msra.mxu0 %v10865
        %11174 = vmatprep.subr.bf16.mxu0 0
        %11175 = vmatpush2.bf16.msra.mxu0 %v10864
        %11176 = vmatprep.subr.bf16.mxu0 0
        %11177 = vmatpush2.bf16.msra.mxu0 %v10863
        %11178 = vmatprep.subr.bf16.mxu0 0
        %11179 = vmatpush2.bf16.msra.mxu0 %v10862
        %11180 = vmatprep.subr.bf16.mxu0 0
        %11181 = vmatpush2.bf16.msra.mxu0 %v10861
        %11182 = vmatprep.subr.bf16.mxu0 0
        %11183 = vmatpush2.bf16.msra.mxu0 %v10860
        %11184 = vmatprep.subr.bf16.mxu0 0
        %11185 = vmatpush2.bf16.msra.mxu0 %v10859
        %11186 = vmatprep.subr.bf16.mxu0 0
        %11187 = vmatpush2.bf16.msra.mxu0 %v10858
        %11188 = vmatprep.mubr.bf16.mxu0 %v10391
        %11189 = vmatmul.mubr.bf16.gmra.mxu0 %v10390
        %v11190 = vpop.f32.mrf.mxu0
        %v11191 = vadd.f32 %v11094, %v11190
        %v11192 = vpop.f32.mrf.mxu0
        %v11193 = vpop.f32.mrf.mxu0
        %v11194 = vadd.f32 %v11097, %v11193
        %v11195 = vpop.f32.mrf.mxu0
        %11196 = vmatprep.mubr.bf16.mxu0 %v10400
        %11197 = vmatmul.mubr.bf16.gmra.mxu0 %v10399
        %v11198 = vpop.f32.mrf.mxu0
        %v11199 = vadd.f32 %v11102, %v11198
        %v11200 = vpop.f32.mrf.mxu0
        %v11201 = vpop.f32.mrf.mxu0
        %v11202 = vadd.f32 %v11105, %v11201
        %v11203 = vpop.f32.mrf.mxu0
        %11204 = vmatprep.mubr.bf16.mxu0 %v10409
        %11205 = vmatmul.mubr.bf16.gmra.mxu0 %v10408
        %v11206 = vpop.f32.mrf.mxu0
        %v11207 = vadd.f32 %v11110, %v11206
        %v11208 = vpop.f32.mrf.mxu0
        %v11209 = vpop.f32.mrf.mxu0
        %v11210 = vadd.f32 %v11113, %v11209
        %v11211 = vpop.f32.mrf.mxu0
        %11212 = vmatprep.mubr.bf16.mxu0 %v10418
        %11213 = vmatmul.mubr.bf16.gmra.mxu0 %v10417
        %v11214 = vpop.f32.mrf.mxu0
        %v11215 = vadd.f32 %v11118, %v11214
        %v11216 = vpop.f32.mrf.mxu0
        %v11217 = vpop.f32.mrf.mxu0
        %v11218 = vadd.f32 %v11121, %v11217
        %v11219 = vpop.f32.mrf.mxu0
        %11220 = vmatprep.mubr.bf16.mxu0 %v10427
        %11221 = vmatmul.mubr.bf16.gmra.mxu0 %v10426
        %v11222 = vpop.f32.mrf.mxu0
        %v11223 = vadd.f32 %v11126, %v11222
        %v11224 = vpop.f32.mrf.mxu0
        %v11225 = vpop.f32.mrf.mxu0
        %v11226 = vadd.f32 %v11129, %v11225
        %v11227 = vpop.f32.mrf.mxu0
        %11228 = vmatprep.mubr.bf16.mxu0 %v10436
        %11229 = vmatmul.mubr.bf16.gmra.mxu0 %v10435
        %v11230 = vpop.f32.mrf.mxu0
        %v11231 = vadd.f32 %v11134, %v11230
        %v11232 = vpop.f32.mrf.mxu0
        %v11233 = vpop.f32.mrf.mxu0
        %v11234 = vadd.f32 %v11137, %v11233
        %v11235 = vpop.f32.mrf.mxu0
        %11236 = vmatprep.mubr.bf16.mxu0 %v10445
        %11237 = vmatmul.mubr.bf16.gmra.mxu0 %v10444
        %v11238 = vpop.f32.mrf.mxu0
        %v11239 = vadd.f32 %v11142, %v11238
        %v11240 = vpop.f32.mrf.mxu0
        %v11241 = vpop.f32.mrf.mxu0
        %v11242 = vadd.f32 %v11145, %v11241
        %v11243 = vpop.f32.mrf.mxu0
        %11244 = vmatprep.mubr.bf16.mxu0 %v10454
        %11245 = vmatmul.mubr.bf16.gmra.mxu0 %v10453
        %v11246 = vpop.f32.mrf.mxu0
        %v11247 = vadd.f32 %v11150, %v11246
        %v11248 = vpop.f32.mrf.mxu0
        %v11249 = vpop.f32.mrf.mxu0
        %v11250 = vadd.f32 %v11153, %v11249
        %v11251 = vpop.f32.mrf.mxu0
        %11252 = vdwg.mxu0
        %11253 = vmatprep.subr.bf16.mxu0 0
        %11254 = vmatpush1.bf16.msra.mxu0 %v10873
        %11255 = vmatprep.subr.bf16.mxu0 0
        %11256 = vmatpush1.bf16.msra.mxu0 %v10872
        %11257 = vmatprep.subr.bf16.mxu0 0
        %11258 = vmatpush1.bf16.msra.mxu0 %v10871
        %11259 = vmatprep.subr.bf16.mxu0 0
        %11260 = vmatpush1.bf16.msra.mxu0 %v10870
        %11261 = vmatprep.subr.bf16.mxu0 0
        %11262 = vmatpush1.bf16.msra.mxu0 %v10869
        %11263 = vmatprep.subr.bf16.mxu0 0
        %11264 = vmatpush1.bf16.msra.mxu0 %v10868
        %11265 = vmatprep.subr.bf16.mxu0 0
        %11266 = vmatpush1.bf16.msra.mxu0 %v10867
        %11267 = vmatprep.subr.bf16.mxu0 0
        %11268 = vmatpush1.bf16.msra.mxu0 %v10866
        %11269 = vmatprep.subr.bf16.mxu0 0
        %11270 = vmatpush2.bf16.msra.mxu0 %v10881
        %11271 = vmatprep.subr.bf16.mxu0 0
        %11272 = vmatpush2.bf16.msra.mxu0 %v10880
        %11273 = vmatprep.subr.bf16.mxu0 0
        %11274 = vmatpush2.bf16.msra.mxu0 %v10879
        %11275 = vmatprep.subr.bf16.mxu0 0
        %11276 = vmatpush2.bf16.msra.mxu0 %v10878
        %11277 = vmatprep.subr.bf16.mxu0 0
        %11278 = vmatpush2.bf16.msra.mxu0 %v10877
        %11279 = vmatprep.subr.bf16.mxu0 0
        %11280 = vmatpush2.bf16.msra.mxu0 %v10876
        %11281 = vmatprep.subr.bf16.mxu0 0
        %11282 = vmatpush2.bf16.msra.mxu0 %v10875
        %11283 = vmatprep.subr.bf16.mxu0 0
        %11284 = vmatpush2.bf16.msra.mxu0 %v10874
        %11285 = vmatprep.mubr.bf16.mxu0 %v10393
        %11286 = vmatmul.mubr.bf16.gmra.mxu0 %v10392
        %v11287 = vpop.f32.mrf.mxu0
        %v11288 = vadd.f32 %v11191, %v11287
        %v11289 = vpop.f32.mrf.mxu0
        %v11290 = vpop.f32.mrf.mxu0
        %v11291 = vadd.f32 %v11194, %v11290
        %v11292 = vpop.f32.mrf.mxu0
        %11293 = vmatprep.mubr.bf16.mxu0 %v10402
        %11294 = vmatmul.mubr.bf16.gmra.mxu0 %v10401
        %v11295 = vpop.f32.mrf.mxu0
        %v11296 = vadd.f32 %v11199, %v11295
        %v11297 = vpop.f32.mrf.mxu0
        %v11298 = vpop.f32.mrf.mxu0
        %v11299 = vadd.f32 %v11202, %v11298
        %v11300 = vpop.f32.mrf.mxu0
        %11301 = vmatprep.mubr.bf16.mxu0 %v10411
        %11302 = vmatmul.mubr.bf16.gmra.mxu0 %v10410
        %v11303 = vpop.f32.mrf.mxu0
        %v11304 = vadd.f32 %v11207, %v11303
        %v11305 = vpop.f32.mrf.mxu0
        %v11306 = vpop.f32.mrf.mxu0
        %v11307 = vadd.f32 %v11210, %v11306
        %v11308 = vpop.f32.mrf.mxu0
        %11309 = vmatprep.mubr.bf16.mxu0 %v10420
        %11310 = vmatmul.mubr.bf16.gmra.mxu0 %v10419
        %v11311 = vpop.f32.mrf.mxu0
        %v11312 = vadd.f32 %v11215, %v11311
        %v11313 = vpop.f32.mrf.mxu0
        %v11314 = vpop.f32.mrf.mxu0
        %v11315 = vadd.f32 %v11218, %v11314
        %v11316 = vpop.f32.mrf.mxu0
        %11317 = vmatprep.mubr.bf16.mxu0 %v10429
        %11318 = vmatmul.mubr.bf16.gmra.mxu0 %v10428
        %v11319 = vpop.f32.mrf.mxu0
        %v11320 = vadd.f32 %v11223, %v11319
        %v11321 = vpop.f32.mrf.mxu0
        %v11322 = vpop.f32.mrf.mxu0
        %v11323 = vadd.f32 %v11226, %v11322
        %v11324 = vpop.f32.mrf.mxu0
        %11325 = vmatprep.mubr.bf16.mxu0 %v10438
        %11326 = vmatmul.mubr.bf16.gmra.mxu0 %v10437
        %v11327 = vpop.f32.mrf.mxu0
        %v11328 = vadd.f32 %v11231, %v11327
        %v11329 = vpop.f32.mrf.mxu0
        %v11330 = vpop.f32.mrf.mxu0
        %v11331 = vadd.f32 %v11234, %v11330
        %v11332 = vpop.f32.mrf.mxu0
        %11333 = vmatprep.mubr.bf16.mxu0 %v10447
        %11334 = vmatmul.mubr.bf16.gmra.mxu0 %v10446
        %v11335 = vpop.f32.mrf.mxu0
        %v11336 = vadd.f32 %v11239, %v11335
        %v11337 = vpop.f32.mrf.mxu0
        %v11338 = vpop.f32.mrf.mxu0
        %v11339 = vadd.f32 %v11242, %v11338
        %v11340 = vpop.f32.mrf.mxu0
        %11341 = vmatprep.mubr.bf16.mxu0 %v10456
        %11342 = vmatmul.mubr.bf16.gmra.mxu0 %v10455
        %v11343 = vpop.f32.mrf.mxu0
        %v11344 = vadd.f32 %v11247, %v11343
        %v11345 = vpop.f32.mrf.mxu0
        %v11346 = vpop.f32.mrf.mxu0
        %v11347 = vadd.f32 %v11250, %v11346
        %v11348 = vpop.f32.mrf.mxu0
        %11349 = vdwg.mxu0
        %11350 = vmatprep.subr.bf16.mxu0 0
        %11351 = vmatpush1.bf16.msra.mxu0 %v10889
        %11352 = vmatprep.subr.bf16.mxu0 0
        %11353 = vmatpush1.bf16.msra.mxu0 %v10888
        %11354 = vmatprep.subr.bf16.mxu0 0
        %11355 = vmatpush1.bf16.msra.mxu0 %v10887
        %11356 = vmatprep.subr.bf16.mxu0 0
        %11357 = vmatpush1.bf16.msra.mxu0 %v10886
        %11358 = vmatprep.subr.bf16.mxu0 0
        %11359 = vmatpush1.bf16.msra.mxu0 %v10885
        %11360 = vmatprep.subr.bf16.mxu0 0
        %11361 = vmatpush1.bf16.msra.mxu0 %v10884
        %11362 = vmatprep.subr.bf16.mxu0 0
        %11363 = vmatpush1.bf16.msra.mxu0 %v10883
        %11364 = vmatprep.subr.bf16.mxu0 0
        %11365 = vmatpush1.bf16.msra.mxu0 %v10882
        %11366 = vmatprep.subr.bf16.mxu0 0
        %11367 = vmatpush2.bf16.msra.mxu0 0
        %11368 = vmatprep.subr.bf16.mxu0 0
        %11369 = vmatpush2.bf16.msra.mxu0 0
        %11370 = vmatprep.subr.bf16.mxu0 0
        %11371 = vmatpush2.bf16.msra.mxu0 0
        %11372 = vmatprep.subr.bf16.mxu0 0
        %11373 = vmatpush2.bf16.msra.mxu0 0
        %11374 = vmatprep.subr.bf16.mxu0 0
        %11375 = vmatpush2.bf16.msra.mxu0 0
        %11376 = vmatprep.subr.bf16.mxu0 0
        %11377 = vmatpush2.bf16.msra.mxu0 0
        %11378 = vmatprep.subr.bf16.mxu0 0
        %11379 = vmatpush2.bf16.msra.mxu0 0
        %11380 = vmatprep.subr.bf16.mxu0 0
        %11381 = vmatpush2.bf16.msra.mxu0 0
        %11382 = vmatprep.mubr.bf16.mxu0 0
        %11383 = vmatmul.mubr.bf16.gmra.mxu0 %v10394
        %v11384 = vpop.f32.mrf.mxu0
        %v11385 = vadd.f32 %v11288, %v11384
        %v11386 = vpop.f32.mrf.mxu0
        %v11387 = vpop.f32.mrf.mxu0
        %v11388 = vadd.f32 %v11291, %v11387
        %v11389 = vpop.f32.mrf.mxu0
        %11390 = vmatprep.mubr.bf16.mxu0 0
        %11391 = vmatmul.mubr.bf16.gmra.mxu0 %v10403
        %v11392 = vpop.f32.mrf.mxu0
        %v11393 = vadd.f32 %v11296, %v11392
        %v11394 = vpop.f32.mrf.mxu0
        %v11395 = vpop.f32.mrf.mxu0
        %v11396 = vadd.f32 %v11299, %v11395
        %v11397 = vpop.f32.mrf.mxu0
        %11398 = vmatprep.mubr.bf16.mxu0 0
        %11399 = vmatmul.mubr.bf16.gmra.mxu0 %v10412
        %v11400 = vpop.f32.mrf.mxu0
        %v11401 = vadd.f32 %v11304, %v11400
        %v11402 = vpop.f32.mrf.mxu0
        %v11403 = vpop.f32.mrf.mxu0
        %v11404 = vadd.f32 %v11307, %v11403
        %v11405 = vpop.f32.mrf.mxu0
        %11406 = vmatprep.mubr.bf16.mxu0 0
        %11407 = vmatmul.mubr.bf16.gmra.mxu0 %v10421
        %v11408 = vpop.f32.mrf.mxu0
        %v11409 = vadd.f32 %v11312, %v11408
        %v11410 = vpop.f32.mrf.mxu0
        %v11411 = vpop.f32.mrf.mxu0
        %v11412 = vadd.f32 %v11315, %v11411
        %v11413 = vpop.f32.mrf.mxu0
        %11414 = vmatprep.mubr.bf16.mxu0 0
        %11415 = vmatmul.mubr.bf16.gmra.mxu0 %v10430
        %v11416 = vpop.f32.mrf.mxu0
        %v11417 = vadd.f32 %v11320, %v11416
        %v11418 = vpop.f32.mrf.mxu0
        %v11419 = vpop.f32.mrf.mxu0
        %v11420 = vadd.f32 %v11323, %v11419
        %v11421 = vpop.f32.mrf.mxu0
        %11422 = vmatprep.mubr.bf16.mxu0 0
        %11423 = vmatmul.mubr.bf16.gmra.mxu0 %v10439
        %v11424 = vpop.f32.mrf.mxu0
        %v11425 = vadd.f32 %v11328, %v11424
        %v11426 = vpop.f32.mrf.mxu0
        %v11427 = vpop.f32.mrf.mxu0
        %v11428 = vadd.f32 %v11331, %v11427
        %v11429 = vpop.f32.mrf.mxu0
        %11430 = vmatprep.mubr.bf16.mxu0 0
        %11431 = vmatmul.mubr.bf16.gmra.mxu0 %v10448
        %v11432 = vpop.f32.mrf.mxu0
        %v11433 = vadd.f32 %v11336, %v11432
        %v11434 = vpop.f32.mrf.mxu0
        %v11435 = vpop.f32.mrf.mxu0
        %v11436 = vadd.f32 %v11339, %v11435
        %v11437 = vpop.f32.mrf.mxu0
        %11438 = vmatprep.mubr.bf16.mxu0 0
        %11439 = vmatmul.mubr.bf16.gmra.mxu0 %v10457
        %v11440 = vpop.f32.mrf.mxu0
        %v11441 = vadd.f32 %v11344, %v11440
        %v11442 = vpop.f32.mrf.mxu0
        %v11443 = vpop.f32.mrf.mxu0
        %v11444 = vadd.f32 %v11347, %v11443
        %v11445 = vpop.f32.mrf.mxu0
        %11446 = vdwg.mxu0
        %v11447 = vadd.f32 %v9921, %v11385
        %v11448 = vadd.f32 %v9922, %v11388
        %v11449 = vadd.f32 %v9923, %v11393
        %v11450 = vadd.f32 %v9924, %v11396
        %v11451 = vadd.f32 %v9925, %v11401
        %v11452 = vadd.f32 %v9926, %v11404
        %v11453 = vadd.f32 %v9927, %v11409
        %v11454 = vadd.f32 %v9928, %v11412
        %v11455 = vadd.f32 %v9929, %v11417
        %v11456 = vadd.f32 %v9930, %v11420
        %v11457 = vadd.f32 %v9931, %v11425
        %v11458 = vadd.f32 %v9932, %v11428
        %v11459 = vadd.f32 %v9933, %v11433
        %v11460 = vadd.f32 %v9934, %v11436
        %v11461 = vadd.f32 %v9935, %v11441
        %v11462 = vadd.f32 %v9936, %v11444
        %11463 = vst [vmem:[#allocation4] sm:$0xff] %v11447
        %11464 = vst [vmem:[#allocation4 + $0x8] sm:$0xff] %v11448
        %11465 = vst [vmem:[#allocation4 + $0x10] sm:$0xff] %v11449
        %11466 = vst [vmem:[#allocation4 + $0x18] sm:$0xff] %v11450
        %11467 = vst [vmem:[#allocation4 + $0x20] sm:$0xff] %v11451
        %11468 = vst [vmem:[#allocation4 + $0x28] sm:$0xff] %v11452
        %11469 = vst [vmem:[#allocation4 + $0x30] sm:$0xff] %v11453
        %11470 = vst [vmem:[#allocation4 + $0x38] sm:$0xff] %v11454
        %11471 = vst [vmem:[#allocation4 + $0x40] sm:$0xff] %v11455
        %11472 = vst [vmem:[#allocation4 + $0x48] sm:$0xff] %v11456
        %11473 = vst [vmem:[#allocation4 + $0x50] sm:$0xff] %v11457
        %11474 = vst [vmem:[#allocation4 + $0x58] sm:$0xff] %v11458
        %11475 = vst [vmem:[#allocation4 + $0x60] sm:$0xff] %v11459
        %11476 = vst [vmem:[#allocation4 + $0x68] sm:$0xff] %v11460
        %11477 = vst [vmem:[#allocation4 + $0x70] sm:$0xff] %v11461
        %11478 = vst [vmem:[#allocation4 + $0x78] sm:$0xff] %v11462
        %v11479 = vld [vmem:[#allocation4] sm:$0xff]
        %v11480 = vld [vmem:[#allocation4 + $0x8] sm:$0xff]
        %v11481 = vld [vmem:[#allocation4 + $0x10] sm:$0xff]
        %v11482 = vld [vmem:[#allocation4 + $0x18] sm:$0xff]
        %v11483 = vld [vmem:[#allocation4 + $0x20] sm:$0xff]
        %v11484 = vld [vmem:[#allocation4 + $0x28] sm:$0xff]
        %v11485 = vld [vmem:[#allocation4 + $0x30] sm:$0xff]
        %v11486 = vld [vmem:[#allocation4 + $0x38] sm:$0xff]
        %v11487 = vld [vmem:[#allocation4 + $0x40] sm:$0xff]
        %v11488 = vld [vmem:[#allocation4 + $0x48] sm:$0xff]
        %v11489 = vld [vmem:[#allocation4 + $0x50] sm:$0xff]
        %v11490 = vld [vmem:[#allocation4 + $0x58] sm:$0xff]
        %v11491 = vld [vmem:[#allocation4 + $0x60] sm:$0xff]
        %v11492 = vld [vmem:[#allocation4 + $0x68] sm:$0xff]
        %v11493 = vld [vmem:[#allocation4 + $0x70] sm:$0xff]
        %v11494 = vld [vmem:[#allocation4 + $0x78] sm:$0xff]
        %v11495 = vpack.c.bf16 %v11480, %v11479
        %v11496 = vpack.c.bf16 %v11482, %v11481
        %v11497 = vpack.c.bf16 %v11484, %v11483
        %v11498 = vpack.c.bf16 %v11486, %v11485
        %v11499 = vpack.c.bf16 %v11488, %v11487
        %v11500 = vpack.c.bf16 %v11490, %v11489
        %v11501 = vpack.c.bf16 %v11492, %v11491
        %v11502 = vpack.c.bf16 %v11494, %v11493
        %v11503 = vld [vmem:[#allocation11] sm:$0xf]
        %v11504 = vld [vmem:[#allocation11 + $0x4] sm:$0xf]
        %v11505 = vld [vmem:[#allocation11 + $0x8] sm:$0xf]
        %v11506 = vld [vmem:[#allocation11 + $0xc] sm:$0xf]
        %v11507 = vld [vmem:[#allocation11 + $0x10] sm:$0xf]
        %v11508 = vld [vmem:[#allocation11 + $0x14] sm:$0xf]
        %v11509 = vld [vmem:[#allocation11 + $0x18] sm:$0xf]
        %v11510 = vld [vmem:[#allocation11 + $0x1c] sm:$0xf]
        %v11511 = vld [vmem:[#allocation11 + $0x20] sm:$0xf]
        %v11512 = vld [vmem:[#allocation11 + $0x24] sm:$0xf]
        %v11513 = vld [vmem:[#allocation11 + $0x28] sm:$0xf]
        %v11514 = vld [vmem:[#allocation11 + $0x2c] sm:$0xf]
        %v11515 = vld [vmem:[#allocation11 + $0x30] sm:$0xf]
        %v11516 = vld [vmem:[#allocation11 + $0x34] sm:$0xf]
        %v11517 = vld [vmem:[#allocation11 + $0x38] sm:$0xf]
        %v11518 = vld [vmem:[#allocation11 + $0x3c] sm:$0xf]
        %v11519 = vld [vmem:[#allocation13] sm:$0x1]
        %v11521 = vlaneseq
        %v11522 = vshrl.u32 %v11521, 7
        %v11523 = vsub.s32 0, %v11522
        %v11524 = vrot.slane %v11519, %v11523
        %v11542 = vunpack.c.l.b16 %v11503
        %v11543 = vunpack.c.l.b16 %v11504
        %v11544 = vunpack.c.l.b16 %v11505
        %v11545 = vunpack.c.l.b16 %v11506
        %v11546 = vunpack.c.l.b16 %v11507
        %v11547 = vunpack.c.l.b16 %v11508
        %v11548 = vunpack.c.l.b16 %v11509
        %v11549 = vunpack.c.l.b16 %v11510
        %v11550 = vunpack.c.l.b16 %v11511
        %v11551 = vunpack.c.l.b16 %v11512
        %v11552 = vunpack.c.l.b16 %v11513
        %v11553 = vunpack.c.l.b16 %v11514
        %v11554 = vunpack.c.l.b16 %v11515
        %v11555 = vunpack.c.l.b16 %v11516
        %v11556 = vunpack.c.l.b16 %v11517
        %v11557 = vunpack.c.l.b16 %v11518
        %v11558 = vpack.c.b16 %v11543, %v11542
        %v11559 = vpack.c.b16 %v11545, %v11544
        %v11560 = vpack.c.b16 %v11547, %v11546
        %v11561 = vpack.c.b16 %v11549, %v11548
        %v11562 = vpack.c.b16 %v11551, %v11550
        %v11563 = vpack.c.b16 %v11553, %v11552
        %v11564 = vpack.c.b16 %v11555, %v11554
        %v11565 = vpack.c.b16 %v11557, %v11556
        %11574 = vmatprep.subr.bf16.mxu0 0
        %11575 = vmatpush1.bf16.msra.mxu0 %v11565
        %11576 = vmatprep.subr.bf16.mxu0 0
        %11577 = vmatpush1.bf16.msra.mxu0 %v11564
        %11578 = vmatprep.subr.bf16.mxu0 0
        %11579 = vmatpush1.bf16.msra.mxu0 %v11563
        %11580 = vmatprep.subr.bf16.mxu0 0
        %11581 = vmatpush1.bf16.msra.mxu0 %v11562
        %11582 = vmatprep.subr.bf16.mxu0 0
        %11583 = vmatpush1.bf16.msra.mxu0 %v11561
        %11584 = vmatprep.subr.bf16.mxu0 0
        %11585 = vmatpush1.bf16.msra.mxu0 %v11560
        %11586 = vmatprep.subr.bf16.mxu0 0
        %11587 = vmatpush1.bf16.msra.mxu0 %v11559
        %11588 = vmatprep.subr.bf16.mxu0 0
        %11589 = vmatpush1.bf16.msra.mxu0 %v11558
        %11590 = vmatprep.subr.bf16.mxu0 0
        %11591 = vmatpush2.bf16.msra.mxu0 0
        %11592 = vmatprep.subr.bf16.mxu0 0
        %11593 = vmatpush2.bf16.msra.mxu0 0
        %11594 = vmatprep.subr.bf16.mxu0 0
        %11595 = vmatpush2.bf16.msra.mxu0 0
        %11596 = vmatprep.subr.bf16.mxu0 0
        %11597 = vmatpush2.bf16.msra.mxu0 0
        %11598 = vmatprep.subr.bf16.mxu0 0
        %11599 = vmatpush2.bf16.msra.mxu0 0
        %11600 = vmatprep.subr.bf16.mxu0 0
        %11601 = vmatpush2.bf16.msra.mxu0 0
        %11602 = vmatprep.subr.bf16.mxu0 0
        %11603 = vmatpush2.bf16.msra.mxu0 0
        %11604 = vmatprep.subr.bf16.mxu0 0
        %11605 = vmatpush2.bf16.msra.mxu0 0
        %11606 = vmatprep.mubr.bf16.mxu0 0
        %11607 = vmatmul.mubr.bf16.gmra.mxu0 %v11495
        %v11608 = vpop.f32.mrf.mxu0
        %v11609 = vadd.f32 %v11524, %v11608
        %v11610 = vpop.f32.mrf.mxu0
        %v11611 = vpop.f32.mrf.mxu0
        %v11612 = vadd.f32 %v11524, %v11611
        %v11613 = vpop.f32.mrf.mxu0
        %11614 = vmatprep.mubr.bf16.mxu0 0
        %11615 = vmatmul.mubr.bf16.gmra.mxu0 %v11496
        %v11616 = vpop.f32.mrf.mxu0
        %v11617 = vadd.f32 %v11524, %v11616
        %v11618 = vpop.f32.mrf.mxu0
        %v11619 = vpop.f32.mrf.mxu0
        %v11620 = vadd.f32 %v11524, %v11619
        %v11621 = vpop.f32.mrf.mxu0
        %11622 = vmatprep.mubr.bf16.mxu0 0
        %11623 = vmatmul.mubr.bf16.gmra.mxu0 %v11497
        %v11624 = vpop.f32.mrf.mxu0
        %v11625 = vadd.f32 %v11524, %v11624
        %v11626 = vpop.f32.mrf.mxu0
        %v11627 = vpop.f32.mrf.mxu0
        %v11628 = vadd.f32 %v11524, %v11627
        %v11629 = vpop.f32.mrf.mxu0
        %11630 = vmatprep.mubr.bf16.mxu0 0
        %11631 = vmatmul.mubr.bf16.gmra.mxu0 %v11498
        %v11632 = vpop.f32.mrf.mxu0
        %v11633 = vadd.f32 %v11524, %v11632
        %v11634 = vpop.f32.mrf.mxu0
        %v11635 = vpop.f32.mrf.mxu0
        %v11636 = vadd.f32 %v11524, %v11635
        %v11637 = vpop.f32.mrf.mxu0
        %11638 = vmatprep.mubr.bf16.mxu0 0
        %11639 = vmatmul.mubr.bf16.gmra.mxu0 %v11499
        %v11640 = vpop.f32.mrf.mxu0
        %v11641 = vadd.f32 %v11524, %v11640
        %v11642 = vpop.f32.mrf.mxu0
        %v11643 = vpop.f32.mrf.mxu0
        %v11644 = vadd.f32 %v11524, %v11643
        %v11645 = vpop.f32.mrf.mxu0
        %11646 = vmatprep.mubr.bf16.mxu0 0
        %11647 = vmatmul.mubr.bf16.gmra.mxu0 %v11500
        %v11648 = vpop.f32.mrf.mxu0
        %v11649 = vadd.f32 %v11524, %v11648
        %v11650 = vpop.f32.mrf.mxu0
        %v11651 = vpop.f32.mrf.mxu0
        %v11652 = vadd.f32 %v11524, %v11651
        %v11653 = vpop.f32.mrf.mxu0
        %11654 = vmatprep.mubr.bf16.mxu0 0
        %11655 = vmatmul.mubr.bf16.gmra.mxu0 %v11501
        %v11656 = vpop.f32.mrf.mxu0
        %v11657 = vadd.f32 %v11524, %v11656
        %v11658 = vpop.f32.mrf.mxu0
        %v11659 = vpop.f32.mrf.mxu0
        %v11660 = vadd.f32 %v11524, %v11659
        %v11661 = vpop.f32.mrf.mxu0
        %11662 = vmatprep.mubr.bf16.mxu0 0
        %11663 = vmatmul.mubr.bf16.gmra.mxu0 %v11502
        %v11664 = vpop.f32.mrf.mxu0
        %v11665 = vadd.f32 %v11524, %v11664
        %v11666 = vpop.f32.mrf.mxu0
        %v11667 = vpop.f32.mrf.mxu0
        %v11668 = vadd.f32 %v11524, %v11667
        %v11669 = vpop.f32.mrf.mxu0
        %11670 = vdwg.mxu0
        %11671 = vst [vmem:[%s310] sm:$0xff] %v11609
        %11672 = vst [vmem:[%s310 + $0x8] sm:$0xff] %v11612
        %11673 = vst [vmem:[%s310 + $0x10] sm:$0xff] %v11617
        %11674 = vst [vmem:[%s310 + $0x18] sm:$0xff] %v11620
        %11675 = vst [vmem:[%s310 + $0x20] sm:$0xff] %v11625
        %11676 = vst [vmem:[%s310 + $0x28] sm:$0xff] %v11628
        %11677 = vst [vmem:[%s310 + $0x30] sm:$0xff] %v11633
        %11678 = vst [vmem:[%s310 + $0x38] sm:$0xff] %v11636
        %11679 = vst [vmem:[%s310 + $0x40] sm:$0xff] %v11641
        %11680 = vst [vmem:[%s310 + $0x48] sm:$0xff] %v11644
        %11681 = vst [vmem:[%s310 + $0x50] sm:$0xff] %v11649
        %11682 = vst [vmem:[%s310 + $0x58] sm:$0xff] %v11652
        %11683 = vst [vmem:[%s310 + $0x60] sm:$0xff] %v11657
        %11684 = vst [vmem:[%s310 + $0x68] sm:$0xff] %v11660
        %11685 = vst [vmem:[%s310 + $0x70] sm:$0xff] %v11665
        %11686 = vst [vmem:[%s310 + $0x78] sm:$0xff] %v11668
        %s11687 = sand.u32 %s156, 1
        %s11688 = scalar_lea.sflag [#allocation7], %s11687
        %s11689 = sand.u32 %s156, 1
        %s11690 = smul.addr %s11689, 128
        %s11691 = scalar_lea.vmem [#allocation14], %s11690
        // Predicated region
        $region65: #{tpu_custom_call.1} parent=39 // pred_check
          %p11692 = pneg %p166
        $region66: #{tpu_custom_call.1} parent=39 // pred_check_branch
          %11694 = sbr.rel (%p11692) target = $region68
        $region67: #{tpu_custom_call.1} parent=39 // pred_region
          %s11695 = smul.u32 8, %s29
          %s11697 = ssub.s32 2048, 2048
          %11698 = vsyncadd %s11688, %s11697
          %s11699 = smul.addr %s11695, 2
          %s11700 = smul.addr %s28, 32
          %s11701 = sadd.s32 %s11699, %s11700
          %s11702 = smul.addr %s11701, 128
          %s11703 = scalar_lea.hbm %s5, %s11702
          %s11704 = sshll.u32 %s11691, 4
          %s11705 = int_to_ptr.vmem [resolvable:$true] %s11704
          %11710 = dma.vmem_to_hbm [thread:$0]  %s11705, 2048, %s11703, %s11688, 128, 128, 8
        $region68: #{tpu_custom_call.1} parent=39 // pred_fallthru
          _
      $region40: #{tpu_custom_call.1} parent=5 // pred_fallthru
        _
      %p11711 = scmp.le.s32.totalorder 2, %s19
      // Predicated region
      $region69: #{tpu_custom_call.1} parent=5 // pred_check
        %p11712 = pneg %p11711
      $region70: #{tpu_custom_call.1} parent=5 // pred_check_branch
        %11714 = sbr.rel (%p11712) target = $region72
      $region71: #{tpu_custom_call.1} parent=5 // pred_region
        %s11715 = ssub.s32 %s19, 2
        // Predicated region
        $region73: #{tpu_custom_call.1} parent=71 // pred_check
          %p11716 = pneg %p172
        $region74: #{tpu_custom_call.1} parent=71 // pred_check_branch
          %11718 = sbr.rel (%p11716) target = $region76
        $region75: #{tpu_custom_call.1} parent=71 // pred_region
          %s11719 = sand.u32 %s157, 1
          %s11720 = scalar_lea.sflag [#allocation7], %s11719
          %s11721 = sand.u32 %s157, 1
          %s11722 = smul.addr %s11721, 128
          %s11723 = scalar_lea.vmem [#allocation14], %s11722
          %11724 = dma.done %s11720, 2048
        $region76: #{tpu_custom_call.1} parent=71 // pred_fallthru
          _
      $region72: #{tpu_custom_call.1} parent=5 // pred_fallthru
        _
    $region6: #{tpu_custom_call.1} parent=1 // loop_footer
      %s23 = sadd.s32 1, %s19
    $region7: #{tpu_custom_call.1} parent=1 // loop_footer_branch
      %18 = sbr.rel target = $region3
    $region8: #{tpu_custom_call.1} parent=1 // loop_exit
      _
    %11725 = vsyncpa [#allocation6], 1
    %s11726 = scalar_lea.sflag [#allocation6], 1
    %11727 = vsyncpa %s11726, 1
    %11728 = vsyncpa [#allocation9], 1
    %11729 = vsyncpa [#allocation12], 1
    %11730 = vsyncpa [#allocation7], 1
    %s11731 = scalar_lea.sflag [#allocation7], 1
    %11732 = vsyncpa %s11731, 1

</llo_original>
